<compile_context>
chip_gen: v6e
topology: v6e:2x2x1
jax: 0.10.0
libtpu: 0.0.40
codegen_flags: <defaults>
</compile_context>

<pallas_src>
import functools

import jax
import jax.numpy as jnp
from jax import lax
from jax.experimental import pallas as pl
from jax.experimental.pallas import tpu as pltpu


def _round_up(x, m):
    return (x + m - 1) // m * m


def _choose_rows(m, pref_tile):
    """Pick a row tile (multiple of 16 for bf16 packing) and padded row count."""
    base = _round_up(m, 16)
    tm = min(pref_tile, base)
    mp = _round_up(m, tm)
    return mp, tm


def _vlin_tiles():
    """Generation-specific (tn, tk) for the Linear(16384,1024) weight stream."""
    kind = ""
    try:
        kind = jax.devices()[0].device_kind.lower()
    except Exception:  # pragma: no cover - defensive, fall back to safe tiles
        pass
    if "v6" in kind:
        return 1024, 4096        # single N block, 4 grid steps (1 TC)
    # v7x (keep 2 parallel N blocks for the 2 TensorCores) and v5e
    # (2 x 4 MiB weight buffers stay inside scoped VMEM) and unknown chips.
    return 512, 4096


# --------------------------------------------------------------------------- #
# Kernel 1a: tiled matmul with K-reduction   out = A @ W + bias  (+ReLU)
#   A [Mp,Kp] bf16 (activations, padded by caller)
#   W [Kp,Np] bf16 (weights, padded/transposed ONCE at param-prep time)
#   b [1, Np] f32
# f32 accumulator in VMEM scratch; reduction (K) axis is last in the grid.
# --------------------------------------------------------------------------- #
def _matmul_bias_kernel(a_ref, w_ref, b_ref, o_ref, acc_ref, *, relu):
    k = pl.program_id(2)

    @pl.when(k == 0)
    def _():
        acc_ref[...] = jnp.zeros_like(acc_ref)

    acc_ref[...] += jnp.dot(a_ref[...], w_ref[...],
                            preferred_element_type=jnp.float32)

    @pl.when(k == pl.num_programs(2) - 1)
    def _():
        out = acc_ref[...] + b_ref[...]
        if relu:
            out = jnp.maximum(out, 0.0)
        o_ref[...] = out.astype(o_ref.dtype)


# --------------------------------------------------------------------------- #
# Kernel 1b: single-K-block specialization — no accumulator scratch, the
# dot + bias (+ReLU) is written straight to the output tile.
# --------------------------------------------------------------------------- #
def _matmul_bias_noacc_kernel(a_ref, w_ref, b_ref, o_ref, *, relu):
    out = jnp.dot(a_ref[...], w_ref[...],
                  preferred_element_type=jnp.float32) + b_ref[...]
    if relu:
        out = jnp.maximum(out, 0.0)
    o_ref[...] = out.astype(o_ref.dtype)


def matmul_pallas(a, w, b, *, relu, tm, tn, tk,
                  out_dtype=jnp.float32, vmem_limit_bytes=None):
    """a:[Mp,Kp] bf16, w:[Kp,Np] bf16, b:[1,Np] f32 — already tile-aligned."""
    Mp, Kp = a.shape
    Np = w.shape[1]
    nk = Kp // tk

    if nk == 1:
        return pl.pallas_call(
            functools.partial(_matmul_bias_noacc_kernel, relu=relu),
            out_shape=jax.ShapeDtypeStruct((Mp, Np), out_dtype),
            grid_spec=pltpu.PrefetchScalarGridSpec(
                num_scalar_prefetch=0,
                grid=(Mp // tm, Np // tn),
                in_specs=[
                    pl.BlockSpec((tm, tk), lambda i, j: (i, 0)),
                    pl.BlockSpec((tk, tn), lambda i, j: (0, j)),
                    pl.BlockSpec((1, tn), lambda i, j: (0, j)),
                ],
                out_specs=pl.BlockSpec((tm, tn), lambda i, j: (i, j)),
            ),
            compiler_params=pltpu.CompilerParams(
                dimension_semantics=("parallel", "parallel"),
                vmem_limit_bytes=vmem_limit_bytes),
        )(a, w, b)

    return pl.pallas_call(
        functools.partial(_matmul_bias_kernel, relu=relu),
        out_shape=jax.ShapeDtypeStruct((Mp, Np), out_dtype),
        grid_spec=pltpu.PrefetchScalarGridSpec(
            num_scalar_prefetch=0,
            grid=(Mp // tm, Np // tn, nk),
            in_specs=[
                pl.BlockSpec((tm, tk), lambda i, j, k: (i, k)),
                pl.BlockSpec((tk, tn), lambda i, j, k: (k, j)),
                pl.BlockSpec((1, tn), lambda i, j, k: (0, j)),
            ],
            out_specs=pl.BlockSpec((tm, tn), lambda i, j, k: (i, j)),
            scratch_shapes=[pltpu.VMEM((tm, tn), jnp.float32)],
        ),
        compiler_params=pltpu.CompilerParams(
            dimension_semantics=("parallel", "parallel", "arbitrary"),
            vmem_limit_bytes=vmem_limit_bytes),
    )(a, w, b)


# --------------------------------------------------------------------------- #
# Kernel 2: fused "head" — adapters, projections, L2-normalize, ITC similarity
# matrix and ITM head, all tiny-M layers kept resident in VMEM (one launch).
# bf16 inputs on the 1024->E adapter matmuls (f32 accumulation), rsqrt-based
# normalization (EUP), and lane-padded (>=128 lanes) sim / scores outputs.
# --------------------------------------------------------------------------- #
def _head_kernel(v_ref, t_ref, pmat_ref,
                 wva1, bva1, wva2, bva2,
                 wta1, bta1, wta2, bta2,
                 wvp, bvp, wtp, btp,
                 wi1, bi1, wi2, bi2,
                 sim_ref, scores_ref, *, pad_rows):
    f32 = jnp.float32
    Mp = v_ref.shape[0]

    def lin(x, w, b, relu=False):
        y = jnp.dot(x, w[...], preferred_element_type=f32) + b[...]
        return jnp.maximum(y, 0.0) if relu else y

    def pad_to_rows(x, n):
        if n == x.shape[0]:
            return x
        return jnp.concatenate(
            [x, jnp.zeros((n - x.shape[0], x.shape[1]), x.dtype)], axis=0)

    # adapters (nn.Dropout(0.1) treated as identity: eval semantics)
    # TODO(synk): Dropout is identity here (inference parity, not training parity).
    vcls = lin(lin(v_ref[...], wva1, bva1, relu=True), wva2, bva2)    # [Mp,E] f32
    tcls = lin(lin(t_ref[...], wta1, bta1, relu=True), wta2, bta2)    # [Mp,E] f32

    # contrastive projections + L2 normalize (F.normalize, eps=1e-12)
    vp = lin(vcls, wvp, bvp)
    tp = lin(tcls, wtp, btp)
    vp = vp * lax.rsqrt(jnp.maximum(jnp.sum(vp * vp, -1, keepdims=True), 1e-24))
    tp = tp * lax.rsqrt(jnp.maximum(jnp.sum(tp * tp, -1, keepdims=True), 1e-24))
    tp_pad = pad_to_rows(tp, pad_rows)                                # lane-dense sim
    sim_ref[...] = lax.dot_general(vp, tp_pad, (((1,), (1,)), ((), ())),
                                   preferred_element_type=f32)        # [Mp, pad_rows]

    # ITM head on pos pairs and permuted-vision neg pairs (perm as one-hot matrix)
    vcls_pad = pad_to_rows(vcls, pad_rows)
    neg_v = jnp.dot(pmat_ref[...], vcls_pad, preferred_element_type=f32)  # [Mp,E]
    allf = jnp.concatenate(
        [jnp.concatenate([vcls, tcls], axis=-1),
         jnp.concatenate([neg_v, tcls], axis=-1)], axis=0)            # [2Mp, 2E]
    scores_ref[...] = lin(lin(allf, wi1, bi1, relu=True), wi2, bi2)   # [2Mp,128] (cols 2: pad)


def head_pallas(v1024, t1024, pmat, p):
    Mp = v1024.shape[0]
    pad_rows = pmat.shape[1]
    sim, scores = pl.pallas_call(
        functools.partial(_head_kernel, pad_rows=pad_rows),
        out_shape=(jax.ShapeDtypeStruct((Mp, pad_rows), jnp.float32),
                   jax.ShapeDtypeStruct((2 * Mp, 128), jnp.float32)),
    )(v1024, t1024, pmat,
      p['va1_w'], p['va1_b'], p['va2_w'], p['va2_b'],
      p['ta1_w'], p['ta1_b'], p['ta2_w'], p['ta2_b'],
      p['vproj_w'], p['vproj_b'], p['tproj_w'], p['tproj_b'],
      p['itm1_w'], p['itm1_b'], p['itm2_w'], p['itm2_b'])
    return sim, scores


# ------------------------------- parameters -------------------------------- #
def init_raw_params(key, embed_dim=128, vocab=30522):
    """Same statistics as the PyTorch module's lazy _init_adapter_weights()."""
    ks = jax.random.split(key, 16)
    E = embed_dim

    def lin(k, fan_in, fan_out):  # xavier_uniform weight (PyTorch [out,in]), zero bias
        limit = (6.0 / (fan_in + fan_out)) ** 0.5
        w = jax.random.uniform(k, (fan_out, fan_in), jnp.float32, -limit, limit)
        return w, jnp.zeros((fan_out,), jnp.float32)

    p = {}
    # fallback_vision_encoder: Conv2d(3,64,7,s=2,p=3) — kaiming_normal(mode='fan_out', relu)
    p['conv_w'] = jax.random.normal(ks[0], (64, 3, 7, 7), jnp.float32) * (2.0 / (64 * 49)) ** 0.5
    p['conv_b'] = jnp.zeros((64,), jnp.float32)
    p['vlin_w'], p['vlin_b'] = lin(ks[1], 64 * 16 * 16, 1024)
    # fallback_text_encoder: Embedding(30522, 1024), N(0, 0.02)
    p['emb'] = jax.random.normal(ks[2], (vocab, 1024), jnp.float32) * 0.02
    # adapters (created lazily in torch for feature dim 1024)
    p['va1_w'], p['va1_b'] = lin(ks[3], 1024, E)
    p['va2_w'], p['va2_b'] = lin(ks[4], E, E)
    p['ta1_w'], p['ta1_b'] = lin(ks[5], 1024, E)
    p['ta2_w'], p['ta2_b'] = lin(ks[6], E, E)
    # heads
    p['vproj_w'], p['vproj_b'] = lin(ks[7], E, E)
    p['tproj_w'], p['tproj_b'] = lin(ks[8], E, E)
    p['itm1_w'], p['itm1_b'] = lin(ks[9], 2 * E, E)
    p['itm2_w'], p['itm2_b'] = lin(ks[10], E, 2)
    p['temp'] = jnp.float32(0.07)   # config['temp']
    return p


CONV_KP = 256   # 3*7*7 = 147 padded up to a lane-aligned K
CONV_NP = 128   # 64 output channels padded up to one lane tile


def prepare_params(raw):
    """One-time layout prep so forward() never copies/pads weights per call:
       - weights transposed to [in, out]
       - big streamed weights (and the 1024->E adapter weights) cast to bf16
         and pre-padded to tile-aligned shapes
       - biases reshaped to [1, N] (padded where the matmul output is padded)."""
    p = {}
    # conv-as-matmul weight: [147, 64] -> padded [256, 128] bf16
    wc = raw['conv_w'].reshape(64, 3 * 7 * 7).T
    p['conv_w'] = jnp.zeros((CONV_KP, CONV_NP), jnp.bfloat16).at[:147, :64].set(
        wc.astype(jnp.bfloat16))
    p['conv_b'] = jnp.zeros((1, CONV_NP), jnp.float32).at[0, :64].set(raw['conv_b'])
    # Linear(16384, 1024): reorder input columns from PyTorch Flatten order (C,H,W)
    # to (H,W,C) so the pooled NHWC activation flattens with no runtime transpose.
    wv = raw['vlin_w'].reshape(1024, 64, 16, 16).transpose(0, 2, 3, 1).reshape(1024, 16384)
    p['vlin_w'] = wv.T.astype(jnp.bfloat16)                 # [16384, 1024], tile-aligned
    p['vlin_b'] = raw['vlin_b'].reshape(1, 1024)
    p['emb'] = raw['emb']                                    # keep f32 (only B rows gathered)
    # 1024->E adapter weights streamed as bf16 (f32 accumulation inside the kernel)
    p['va1_w'] = raw['va1_w'].T.astype(jnp.bfloat16)
    p['ta1_w'] = raw['ta1_w'].T.astype(jnp.bfloat16)
    p['va1_b'] = raw['va1_b'].reshape(1, -1)
    p['ta1_b'] = raw['ta1_b'].reshape(1, -1)
    # remaining small head weights stay f32, transposed to [in, out]; biases -> [1, N]
    for name in ('va2', 'ta2', 'vproj', 'tproj', 'itm1'):
        p[name + '_w'] = raw[name + '_w'].T
        p[name + '_b'] = raw[name + '_b'].reshape(1, -1)
    # itm2 (E -> 2) padded to 128 output lanes for a lane-dense store; sliced outside.
    E = raw['itm2_w'].shape[1]
    p['itm2_w'] = jnp.zeros((E, 128), jnp.float32).at[:, :2].set(raw['itm2_w'].T)
    p['itm2_b'] = jnp.zeros((1, 128), jnp.float32).at[0, :2].set(raw['itm2_b'])
    p['temp'] = raw['temp']
    return p


# ------------------------------- forward ----------------------------------- #
def cross_entropy(logits, labels):
    logz = jax.nn.logsumexp(logits, axis=-1)
    picked = jnp.take_along_axis(logits, labels[:, None], axis=-1)[:, 0]
    return jnp.mean(logz - picked)


def forward(params, images, text_ids, text_atts, perm):
    del text_atts  # unused by the fallback text encoder (as in the PyTorch path)
    B = images.shape[0]
    f32, bf16 = jnp.float32, jnp.bfloat16

    # ---------------- fallback vision encoder ---------------- #
    # Conv2d(3,64,k=7,s=2,p=3)+ReLU: patch extraction (layout-only XLA primitive,
    # feature dim ordered (c,kh,kw) == PyTorch weight.reshape(64,147) order),
    # then a single-K-block Pallas matmul with fused bias+ReLU, bf16 output.
    H, W = images.shape[2], images.shape[3]
    OH = (H + 6 - 7) // 2 + 1
    OW = (W + 6 - 7) // 2 + 1
    patches = lax.conv_general_dilated_patches(
        images, filter_shape=(7, 7), window_strides=(2, 2),
        padding=((3, 3), (3, 3)),
        dimension_numbers=('NCHW', 'OIHW', 'NCHW'))             # [B, 147, OH, OW]
    patches = patches.transpose(0, 2, 3, 1).reshape(B * OH * OW, 3 * 49)
    M = B * OH * OW
    Mp_c, tm_c = _choose_rows(M, 512)                            # bigger row tile
    patches = jnp.pad(patches, ((0, Mp_c - M), (0, CONV_KP - 147))).astype(bf16)
    conv_out = matmul_pallas(patches, params['conv_w'], params['conv_b'],
                             relu=True, tm=tm_c, tn=CONV_NP, tk=CONV_KP,
                             out_dtype=bf16)                     # bf16 writeback
    conv_out = conv_out[:M, :64].reshape(B, OH, OW, 64)          # NHWC, bf16

    # AdaptiveAvgPool2d((16,16)) — integer-factor mean pooling (f32 accumulation).
    # TODO(synk): exact AdaptiveAvgPool2d parity only when OH, OW are multiples of 16.
    fh, fw = OH // 16, OW // 16
    pooled = conv_out.reshape(B, 16, fh, 16, fw, 64).mean(axis=(2, 4), dtype=f32)
    flat = pooled.reshape(B, 16 * 16 * 64)                       # (H, W, C) order

    # Linear(16384, 1024): dominant weight-streaming matmul (bf16 weight, f32 acc).
    # Generation-specific tiles: tk=4096 everywhere; tn=1024 on v6e (4 steps),
    # tn=512 on v7x/v5e (2 parallel N blocks / scoped-VMEM friendly).
    tn_v, tk_v = _vlin_tiles()
    Mp, tm_v = _choose_rows(B, 256)
    flat = jnp.pad(flat, ((0, Mp - B), (0, 0))).astype(bf16)
    v1024 = matmul_pallas(flat, params['vlin_w'], params['vlin_b'],
                          relu=False, tm=tm_v, tn=tn_v, tk=tk_v,
                          out_dtype=bf16,
                          vmem_limit_bytes=32 * 1024 * 1024)     # [Mp, 1024] bf16
    # (torch's .expand(-1, 257, -1) makes 257 identical tokens; only token 0 is
    #  consumed when pair=None, so downstream layers run once per image.)

    # ---------------- fallback text encoder ------------------ #
    # Embedding lookup (f32 table); only the CLS token (index 0) is consumed
    # downstream, so the text adapter is applied to it alone (identical result).
    t1024 = jnp.take(params['emb'], text_ids[:, 0], axis=0)      # [B, 1024] f32
    t1024 = jnp.pad(t1024, ((0, Mp - B), (0, 0))).astype(bf16)

    # deterministic permutation matrix standing in for torch.randperm,
    # lane-padded to >=128 columns for unmasked loads / lane-dense sim output.
    PAD = _round_up(max(Mp, 128), 128)
    pmat = jnp.zeros((Mp, PAD), f32).at[jnp.arange(B), perm].set(1.0)

    # --------- fused head: adapters / projections / ITC-sim / ITM --------- #
    sim_full, scores_full = head_pallas(v1024, t1024, pmat, params)

    # ---- ITC loss ----
    sim = sim_full[:B, :B] / params['temp']
    labels = jnp.arange(B)
    loss_itc = 0.5 * (cross_entropy(sim, labels) + cross_entropy(sim.T, labels))

    # ---- ITM loss ----
    scores = jnp.concatenate([scores_full[:B, :2], scores_full[Mp:Mp + B, :2]], axis=0)
    itm_labels = jnp.concatenate(
        [jnp.ones((B,), jnp.int32), jnp.zeros((B,), jnp.int32)])
    loss_itm = cross_entropy(scores, itm_labels)

    return loss_itc, loss_itm


# --------------------------------- demo ------------------------------------ #
if __name__ == "__main__":
    key = jax.random.PRNGKey(0)
    kimg, ktxt, kparam = jax.random.split(key, 3)

    B, L = 2, 8
    images = jax.random.normal(kimg, (B, 3, 32, 32), jnp.float32)   # NCHW (PyTorch)
    text_ids = jax.random.randint(ktxt, (B, L), 0, 30522)
    text_atts = jnp.ones((B, L), jnp.int32)

    raw = init_raw_params(kparam, embed_dim=128)
    params = prepare_params(raw)                                    # one-time weight layout prep
    perm = jax.random.permutation(jax.random.PRNGKey(1), B)         # deterministic "randperm"

    fwd = jax.jit(forward)
    loss_itc, loss_itm = fwd(params, images, text_ids, text_atts, perm)
    jax.block_until_ready((loss_itc, loss_itm))
    print("KERNEL_OK")
</pallas_src>

<mosaic_0001>
module attributes {stable_mosaic.version = 11 : i64} {
  func.func @_matmul_bias_noacc_kernel(%arg0: i32, %arg1: i32, %arg2: memref<512x256xbf16, #tpu.memory_space<vmem>>, %arg3: memref<256x128xbf16, #tpu.memory_space<vmem>>, %arg4: memref<1x128xf32, #tpu.memory_space<vmem>>, %arg5: memref<512x128xbf16, #tpu.memory_space<vmem>>) attributes {dimension_semantics = [#tpu.dimension_semantics<parallel>, #tpu.dimension_semantics<parallel>], iteration_bounds = array<i64: 1, 1>, scalar_prefetch = 0 : i64, scratch_operands = 0 : i64, tpu.core_type = #tpu.core_type<tc>, window_params = [{transform_indices = @transform_0, window_bounds = array<i64: 512, 256>}, {transform_indices = @transform_1, window_bounds = array<i64: 256, 128>}, {transform_indices = @transform_2, window_bounds = array<i64: 1, 128>}, {transform_indices = @transform_3, window_bounds = array<i64: 512, 128>}]} {
    %c0 = arith.constant 0 : index
    %c0_0 = arith.constant 0 : index
    %0 = vector.load %arg2[%c0, %c0_0] : memref<512x256xbf16, #tpu.memory_space<vmem>>, vector<512x256xbf16>
    %c0_1 = arith.constant 0 : index
    %c0_2 = arith.constant 0 : index
    %1 = vector.load %arg3[%c0_1, %c0_2] : memref<256x128xbf16, #tpu.memory_space<vmem>>, vector<256x128xbf16>
    %cst = arith.constant dense<0.000000e+00> : vector<512x128xf32>
    %2 = tpu.matmul %0, %1, %cst {dimension_numbers = #tpu.dot_dimension_numbers<[1], [0], [0], [1], [0, 0, 1, 1], [], []>} : vector<512x256xbf16>, vector<256x128xbf16>, vector<512x128xf32> -> vector<512x128xf32>
    %c0_3 = arith.constant 0 : index
    %c0_4 = arith.constant 0 : index
    %3 = vector.load %arg4[%c0_3, %c0_4] : memref<1x128xf32, #tpu.memory_space<vmem>>, vector<1x128xf32>
    %4 = vector.broadcast %3 : vector<1x128xf32> to vector<512x128xf32>
    %5 = arith.addf %2, %4 : vector<512x128xf32>
    %cst_5 = arith.constant 0.000000e+00 : f32
    %6 = vector.broadcast %cst_5 : f32 to vector<512x128xf32>
    %7 = arith.maximumf %5, %6 : vector<512x128xf32>
    %8 = arith.truncf %7 : vector<512x128xf32> to vector<512x128xbf16>
    %c0_6 = arith.constant 0 : index
    %c0_7 = arith.constant 0 : index
    %9 = vector.load %arg5[%c0_6, %c0_7] : memref<512x128xbf16, #tpu.memory_space<vmem>>, vector<512x128xbf16>
    tpu.vector_store %arg5[%c0_6, %c0_7], %8 {strides = array<i32>} : memref<512x128xbf16, #tpu.memory_space<vmem>>, vector<512x128xbf16>,
    return
  }
  func.func @transform_0(%arg0: i32, %arg1: i32) -> (i32, i32) {
    %c0_i32 = arith.constant 0 : i32
    %c0_i32_0 = arith.constant 0 : i32
    return %arg0, %c0_i32 : i32, i32
  }
  func.func @transform_1(%arg0: i32, %arg1: i32) -> (i32, i32) {
    %c0_i32 = arith.constant 0 : i32
    %c0_i32_0 = arith.constant 0 : i32
    return %c0_i32, %arg1 : i32, i32
  }
  func.func @transform_2(%arg0: i32, %arg1: i32) -> (i32, i32) {
    %c0_i32 = arith.constant 0 : i32
    %c0_i32_0 = arith.constant 0 : i32
    return %c0_i32, %arg1 : i32, i32
  }
  func.func @transform_3(%arg0: i32, %arg1: i32) -> (i32, i32) {
    %c0_i32 = arith.constant 0 : i32
    return %arg0, %arg1 : i32, i32
  }
}

module attributes {stable_mosaic.version = 11 : i64} {
  func.func @_matmul_bias_kernel(%arg0: i32, %arg1: i32, %arg2: i32, %arg3: memref<16x4096xbf16, #tpu.memory_space<vmem>>, %arg4: memref<4096x512xbf16, #tpu.memory_space<vmem>>, %arg5: memref<1x512xf32, #tpu.memory_space<vmem>>, %arg6: memref<16x512xbf16, #tpu.memory_space<vmem>>, %arg7: memref<16x512xf32, #tpu.memory_space<vmem>>) attributes {dimension_semantics = [#tpu.dimension_semantics<parallel>, #tpu.dimension_semantics<parallel>, #tpu.dimension_semantics<arbitrary>], iteration_bounds = array<i64: 1, 2, 4>, scalar_prefetch = 0 : i64, scratch_operands = 1 : i64, tpu.core_type = #tpu.core_type<tc>, window_params = [{transform_indices = @transform_0, window_bounds = array<i64: 16, 4096>}, {transform_indices = @transform_1, window_bounds = array<i64: 4096, 512>}, {transform_indices = @transform_2, window_bounds = array<i64: 1, 512>}, {transform_indices = @transform_3, window_bounds = array<i64: 16, 512>}]} {
    %c0_i32 = arith.constant 0 : i32
    %0 = arith.cmpi eq, %arg2, %c0_i32 : i32
    %1 = arith.extui %0 : i1 to i32
    %c0_i32_0 = arith.constant 0 : i32
    %2 = arith.cmpi ne, %1, %c0_i32_0 : i32
    scf.if %2 {
      %cst_9 = arith.constant 0.000000e+00 : f32
      %12 = vector.broadcast %cst_9 : f32 to vector<16x512xf32>
      %c0_10 = arith.constant 0 : index
      %c0_11 = arith.constant 0 : index
      %13 = vector.load %arg7[%c0_10, %c0_11] : memref<16x512xf32, #tpu.memory_space<vmem>>, vector<16x512xf32>
      tpu.vector_store %arg7[%c0_10, %c0_11], %12 {strides = array<i32>} : memref<16x512xf32, #tpu.memory_space<vmem>>, vector<16x512xf32>,
    } else {
    }
    %c0 = arith.constant 0 : index
    %c0_1 = arith.constant 0 : index
    %3 = vector.load %arg7[%c0, %c0_1] : memref<16x512xf32, #tpu.memory_space<vmem>>, vector<16x512xf32>
    %c0_2 = arith.constant 0 : index
    %c0_3 = arith.constant 0 : index
    %4 = vector.load %arg3[%c0_2, %c0_3] : memref<16x4096xbf16, #tpu.memory_space<vmem>>, vector<16x4096xbf16>
    %c0_4 = arith.constant 0 : index
    %c0_5 = arith.constant 0 : index
    %5 = vector.load %arg4[%c0_4, %c0_5] : memref<4096x512xbf16, #tpu.memory_space<vmem>>, vector<4096x512xbf16>
    %cst = arith.constant dense<0.000000e+00> : vector<16x512xf32>
    %6 = tpu.matmul %4, %5, %cst {dimension_numbers = #tpu.dot_dimension_numbers<[1], [0], [0], [1], [0, 0, 1, 1], [], []>} : vector<16x4096xbf16>, vector<4096x512xbf16>, vector<16x512xf32> -> vector<16x512xf32>
    %7 = arith.addf %3, %6 : vector<16x512xf32>
    %c0_6 = arith.constant 0 : index
    %c0_7 = arith.constant 0 : index
    %8 = vector.load %arg7[%c0_6, %c0_7] : memref<16x512xf32, #tpu.memory_space<vmem>>, vector<16x512xf32>
    tpu.vector_store %arg7[%c0_6, %c0_7], %7 {strides = array<i32>} : memref<16x512xf32, #tpu.memory_space<vmem>>, vector<16x512xf32>,
    %c3_i32 = arith.constant 3 : i32
    %9 = arith.cmpi eq, %arg2, %c3_i32 : i32
    %10 = arith.extui %9 : i1 to i32
    %c0_i32_8 = arith.constant 0 : i32
    %11 = arith.cmpi ne, %10, %c0_i32_8 : i32
    scf.if %11 {
      %c0_9 = arith.constant 0 : index
      %c0_10 = arith.constant 0 : index
      %12 = vector.load %arg7[%c0_9, %c0_10] : memref<16x512xf32, #tpu.memory_space<vmem>>, vector<16x512xf32>
      %c0_11 = arith.constant 0 : index
      %c0_12 = arith.constant 0 : index
      %13 = vector.load %arg5[%c0_11, %c0_12] : memref<1x512xf32, #tpu.memory_space<vmem>>, vector<1x512xf32>
      %14 = vector.broadcast %13 : vector<1x512xf32> to vector<16x512xf32>
      %15 = arith.addf %12, %14 : vector<16x512xf32>
      %16 = arith.truncf %15 : vector<16x512xf32> to vector<16x512xbf16>
      %c0_13 = arith.constant 0 : index
      %c0_14 = arith.constant 0 : index
      %17 = vector.load %arg6[%c0_13, %c0_14] : memref<16x512xbf16, #tpu.memory_space<vmem>>, vector<16x512xbf16>
      tpu.vector_store %arg6[%c0_13, %c0_14], %16 {strides = array<i32>} : memref<16x512xbf16, #tpu.memory_space<vmem>>, vector<16x512xbf16>,
    } else {
    }
    return
  }
  func.func @transform_0(%arg0: i32, %arg1: i32, %arg2: i32) -> (i32, i32) {
    %c0_i32 = arith.constant 0 : i32
    return %arg0, %arg2 : i32, i32
  }
  func.func @transform_1(%arg0: i32, %arg1: i32, %arg2: i32) -> (i32, i32) {
    %c0_i32 = arith.constant 0 : i32
    return %arg2, %arg1 : i32, i32
  }
  func.func @transform_2(%arg0: i32, %arg1: i32, %arg2: i32) -> (i32, i32) {
    %c0_i32 = arith.constant 0 : i32
    %c0_i32_0 = arith.constant 0 : i32
    return %c0_i32, %arg1 : i32, i32
  }
  func.func @transform_3(%arg0: i32, %arg1: i32, %arg2: i32) -> (i32, i32) {
    %c0_i32 = arith.constant 0 : i32
    return %arg0, %arg1 : i32, i32
  }
}

module attributes {stable_mosaic.version = 11 : i64} {
  func.func @_head_kernel(%arg0: memref<16x1024xbf16, #tpu.memory_space<vmem>>, %arg1: memref<16x1024xbf16, #tpu.memory_space<vmem>>, %arg2: memref<16x128xf32, #tpu.memory_space<vmem>>, %arg3: memref<1024x128xbf16, #tpu.memory_space<vmem>>, %arg4: memref<1x128xf32, #tpu.memory_space<vmem>>, %arg5: memref<128x128xf32, #tpu.memory_space<vmem>>, %arg6: memref<1x128xf32, #tpu.memory_space<vmem>>, %arg7: memref<1024x128xbf16, #tpu.memory_space<vmem>>, %arg8: memref<1x128xf32, #tpu.memory_space<vmem>>, %arg9: memref<128x128xf32, #tpu.memory_space<vmem>>, %arg10: memref<1x128xf32, #tpu.memory_space<vmem>>, %arg11: memref<128x128xf32, #tpu.memory_space<vmem>>, %arg12: memref<1x128xf32, #tpu.memory_space<vmem>>, %arg13: memref<128x128xf32, #tpu.memory_space<vmem>>, %arg14: memref<1x128xf32, #tpu.memory_space<vmem>>, %arg15: memref<256x128xf32, #tpu.memory_space<vmem>>, %arg16: memref<1x128xf32, #tpu.memory_space<vmem>>, %arg17: memref<128x128xf32, #tpu.memory_space<vmem>>, %arg18: memref<1x128xf32, #tpu.memory_space<vmem>>, %arg19: memref<16x128xf32, #tpu.memory_space<vmem>>, %arg20: memref<32x128xf32, #tpu.memory_space<vmem>>) attributes {dimension_semantics = [], scalar_prefetch = 0 : i64, scratch_operands = 0 : i64, tpu.core_type = #tpu.core_type<tc>} {
    %c0 = arith.constant 0 : index
    %c0_0 = arith.constant 0 : index
    %0 = vector.load %arg0[%c0, %c0_0] : memref<16x1024xbf16, #tpu.memory_space<vmem>>, vector<16x1024xbf16>
    %c0_1 = arith.constant 0 : index
    %c0_2 = arith.constant 0 : index
    %1 = vector.load %arg3[%c0_1, %c0_2] : memref<1024x128xbf16, #tpu.memory_space<vmem>>, vector<1024x128xbf16>
    %cst = arith.constant dense<0.000000e+00> : vector<16x128xf32>
    %2 = tpu.matmul %0, %1, %cst {dimension_numbers = #tpu.dot_dimension_numbers<[1], [0], [0], [1], [0, 0, 1, 1], [], []>} : vector<16x1024xbf16>, vector<1024x128xbf16>, vector<16x128xf32> -> vector<16x128xf32>
    %c0_3 = arith.constant 0 : index
    %c0_4 = arith.constant 0 : index
    %3 = vector.load %arg4[%c0_3, %c0_4] : memref<1x128xf32, #tpu.memory_space<vmem>>, vector<1x128xf32>
    %4 = vector.broadcast %3 : vector<1x128xf32> to vector<16x128xf32>
    %5 = arith.addf %2, %4 : vector<16x128xf32>
    %cst_5 = arith.constant 0.000000e+00 : f32
    %6 = vector.broadcast %cst_5 : f32 to vector<16x128xf32>
    %7 = arith.maximumf %5, %6 : vector<16x128xf32>
    %c0_6 = arith.constant 0 : index
    %c0_7 = arith.constant 0 : index
    %8 = vector.load %arg5[%c0_6, %c0_7] : memref<128x128xf32, #tpu.memory_space<vmem>>, vector<128x128xf32>
    %cst_8 = arith.constant dense<0.000000e+00> : vector<16x128xf32>
    %9 = tpu.matmul %7, %8, %cst_8 {dimension_numbers = #tpu.dot_dimension_numbers<[1], [0], [0], [1], [0, 0, 1, 1], [], []>} : vector<16x128xf32>, vector<128x128xf32>, vector<16x128xf32> -> vector<16x128xf32>
    %c0_9 = arith.constant 0 : index
    %c0_10 = arith.constant 0 : index
    %10 = vector.load %arg6[%c0_9, %c0_10] : memref<1x128xf32, #tpu.memory_space<vmem>>, vector<1x128xf32>
    %11 = vector.broadcast %10 : vector<1x128xf32> to vector<16x128xf32>
    %12 = arith.addf %9, %11 : vector<16x128xf32>
    %c0_11 = arith.constant 0 : index
    %c0_12 = arith.constant 0 : index
    %13 = vector.load %arg1[%c0_11, %c0_12] : memref<16x1024xbf16, #tpu.memory_space<vmem>>, vector<16x1024xbf16>
    %c0_13 = arith.constant 0 : index
    %c0_14 = arith.constant 0 : index
    %14 = vector.load %arg7[%c0_13, %c0_14] : memref<1024x128xbf16, #tpu.memory_space<vmem>>, vector<1024x128xbf16>
    %cst_15 = arith.constant dense<0.000000e+00> : vector<16x128xf32>
    %15 = tpu.matmul %13, %14, %cst_15 {dimension_numbers = #tpu.dot_dimension_numbers<[1], [0], [0], [1], [0, 0, 1, 1], [], []>} : vector<16x1024xbf16>, vector<1024x128xbf16>, vector<16x128xf32> -> vector<16x128xf32>
    %c0_16 = arith.constant 0 : index
    %c0_17 = arith.constant 0 : index
    %16 = vector.load %arg8[%c0_16, %c0_17] : memref<1x128xf32, #tpu.memory_space<vmem>>, vector<1x128xf32>
    %17 = vector.broadcast %16 : vector<1x128xf32> to vector<16x128xf32>
    %18 = arith.addf %15, %17 : vector<16x128xf32>
    %cst_18 = arith.constant 0.000000e+00 : f32
    %19 = vector.broadcast %cst_18 : f32 to vector<16x128xf32>
    %20 = arith.maximumf %18, %19 : vector<16x128xf32>
    %c0_19 = arith.constant 0 : index
    %c0_20 = arith.constant 0 : index
    %21 = vector.load %arg9[%c0_19, %c0_20] : memref<128x128xf32, #tpu.memory_space<vmem>>, vector<128x128xf32>
    %cst_21 = arith.constant dense<0.000000e+00> : vector<16x128xf32>
    %22 = tpu.matmul %20, %21, %cst_21 {dimension_numbers = #tpu.dot_dimension_numbers<[1], [0], [0], [1], [0, 0, 1, 1], [], []>} : vector<16x128xf32>, vector<128x128xf32>, vector<16x128xf32> -> vector<16x128xf32>
    %c0_22 = arith.constant 0 : index
    %c0_23 = arith.constant 0 : index
    %23 = vector.load %arg10[%c0_22, %c0_23] : memref<1x128xf32, #tpu.memory_space<vmem>>, vector<1x128xf32>
    %24 = vector.broadcast %23 : vector<1x128xf32> to vector<16x128xf32>
    %25 = arith.addf %22, %24 : vector<16x128xf32>
    %c0_24 = arith.constant 0 : index
    %c0_25 = arith.constant 0 : index
    %26 = vector.load %arg11[%c0_24, %c0_25] : memref<128x128xf32, #tpu.memory_space<vmem>>, vector<128x128xf32>
    %cst_26 = arith.constant dense<0.000000e+00> : vector<16x128xf32>
    %27 = tpu.matmul %12, %26, %cst_26 {dimension_numbers = #tpu.dot_dimension_numbers<[1], [0], [0], [1], [0, 0, 1, 1], [], []>} : vector<16x128xf32>, vector<128x128xf32>, vector<16x128xf32> -> vector<16x128xf32>
    %c0_27 = arith.constant 0 : index
    %c0_28 = arith.constant 0 : index
    %28 = vector.load %arg12[%c0_27, %c0_28] : memref<1x128xf32, #tpu.memory_space<vmem>>, vector<1x128xf32>
    %29 = vector.broadcast %28 : vector<1x128xf32> to vector<16x128xf32>
    %30 = arith.addf %27, %29 : vector<16x128xf32>
    %c0_29 = arith.constant 0 : index
    %c0_30 = arith.constant 0 : index
    %31 = vector.load %arg13[%c0_29, %c0_30] : memref<128x128xf32, #tpu.memory_space<vmem>>, vector<128x128xf32>
    %cst_31 = arith.constant dense<0.000000e+00> : vector<16x128xf32>
    %32 = tpu.matmul %25, %31, %cst_31 {dimension_numbers = #tpu.dot_dimension_numbers<[1], [0], [0], [1], [0, 0, 1, 1], [], []>} : vector<16x128xf32>, vector<128x128xf32>, vector<16x128xf32> -> vector<16x128xf32>
    %c0_32 = arith.constant 0 : index
    %c0_33 = arith.constant 0 : index
    %33 = vector.load %arg14[%c0_32, %c0_33] : memref<1x128xf32, #tpu.memory_space<vmem>>, vector<1x128xf32>
    %34 = vector.broadcast %33 : vector<1x128xf32> to vector<16x128xf32>
    %35 = arith.addf %32, %34 : vector<16x128xf32>
    %36 = arith.mulf %30, %30 : vector<16x128xf32>
    %cst_34 = arith.constant dense<0.000000e+00> : vector<16xf32>
    %37 = vector.multi_reduction <add>, %36, %cst_34 [1] : vector<16x128xf32> to vector<16xf32>
    %38 = vector.shape_cast %37 : vector<16xf32> to vector<16x1xf32>
    %cst_35 = arith.constant 1.000000e-24 : f32
    %39 = vector.broadcast %cst_35 : f32 to vector<16x1xf32>
    %40 = arith.maximumf %38, %39 : vector<16x1xf32>
    %41 = math.rsqrt %40 : vector<16x1xf32>
    %42 = vector.broadcast %41 : vector<16x1xf32> to vector<16x128xf32>
    %43 = arith.mulf %30, %42 : vector<16x128xf32>
    %44 = arith.mulf %35, %35 : vector<16x128xf32>
    %cst_36 = arith.constant dense<0.000000e+00> : vector<16xf32>
    %45 = vector.multi_reduction <add>, %44, %cst_36 [1] : vector<16x128xf32> to vector<16xf32>
    %46 = vector.shape_cast %45 : vector<16xf32> to vector<16x1xf32>
    %cst_37 = arith.constant 1.000000e-24 : f32
    %47 = vector.broadcast %cst_37 : f32 to vector<16x1xf32>
    %48 = arith.maximumf %46, %47 : vector<16x1xf32>
    %49 = math.rsqrt %48 : vector<16x1xf32>
    %50 = vector.broadcast %49 : vector<16x1xf32> to vector<16x128xf32>
    %51 = arith.mulf %35, %50 : vector<16x128xf32>
    %cst_38 = arith.constant 0.000000e+00 : f32
    %52 = vector.broadcast %cst_38 : f32 to vector<112x128xf32>
    %53 = tpu.concatenate %51, %52 in 0 : vector<16x128xf32>, vector<112x128xf32> -> vector<128x128xf32>
    %cst_39 = arith.constant dense<0.000000e+00> : vector<16x128xf32>
    %54 = tpu.matmul %43, %53, %cst_39 {dimension_numbers = #tpu.dot_dimension_numbers<[1], [1], [0], [0], [0, 0, 1, 0], [], []>} : vector<16x128xf32>, vector<128x128xf32>, vector<16x128xf32> -> vector<16x128xf32>
    %c0_40 = arith.constant 0 : index
    %c0_41 = arith.constant 0 : index
    %55 = vector.load %arg19[%c0_40, %c0_41] : memref<16x128xf32, #tpu.memory_space<vmem>>, vector<16x128xf32>
    tpu.vector_store %arg19[%c0_40, %c0_41], %54 {strides = array<i32>} : memref<16x128xf32, #tpu.memory_space<vmem>>, vector<16x128xf32>,
    %cst_42 = arith.constant 0.000000e+00 : f32
    %56 = vector.broadcast %cst_42 : f32 to vector<112x128xf32>
    %57 = tpu.concatenate %12, %56 in 0 : vector<16x128xf32>, vector<112x128xf32> -> vector<128x128xf32>
    %c0_43 = arith.constant 0 : index
    %c0_44 = arith.constant 0 : index
    %58 = vector.load %arg2[%c0_43, %c0_44] : memref<16x128xf32, #tpu.memory_space<vmem>>, vector<16x128xf32>
    %cst_45 = arith.constant dense<0.000000e+00> : vector<16x128xf32>
    %59 = tpu.matmul %58, %57, %cst_45 {dimension_numbers = #tpu.dot_dimension_numbers<[1], [0], [0], [1], [0, 0, 1, 1], [], []>} : vector<16x128xf32>, vector<128x128xf32>, vector<16x128xf32> -> vector<16x128xf32>
    %60 = tpu.concatenate %12, %25 in 1 : vector<16x128xf32>, vector<16x128xf32> -> vector<16x256xf32>
    %61 = tpu.concatenate %59, %25 in 1 : vector<16x128xf32>, vector<16x128xf32> -> vector<16x256xf32>
    %62 = tpu.concatenate %60, %61 in 0 : vector<16x256xf32>, vector<16x256xf32> -> vector<32x256xf32>
    %c0_46 = arith.constant 0 : index
    %c0_47 = arith.constant 0 : index
    %63 = vector.load %arg15[%c0_46, %c0_47] : memref<256x128xf32, #tpu.memory_space<vmem>>, vector<256x128xf32>
    %cst_48 = arith.constant dense<0.000000e+00> : vector<32x128xf32>
    %64 = tpu.matmul %62, %63, %cst_48 {dimension_numbers = #tpu.dot_dimension_numbers<[1], [0], [0], [1], [0, 0, 1, 1], [], []>} : vector<32x256xf32>, vector<256x128xf32>, vector<32x128xf32> -> vector<32x128xf32>
    %c0_49 = arith.constant 0 : index
    %c0_50 = arith.constant 0 : index
    %65 = vector.load %arg16[%c0_49, %c0_50] : memref<1x128xf32, #tpu.memory_space<vmem>>, vector<1x128xf32>
    %66 = vector.broadcast %65 : vector<1x128xf32> to vector<32x128xf32>
    %67 = arith.addf %64, %66 : vector<32x128xf32>
    %cst_51 = arith.constant 0.000000e+00 : f32
    %68 = vector.broadcast %cst_51 : f32 to vector<32x128xf32>
    %69 = arith.maximumf %67, %68 : vector<32x128xf32>
    %c0_52 = arith.constant 0 : index
    %c0_53 = arith.constant 0 : index
    %70 = vector.load %arg17[%c0_52, %c0_53] : memref<128x128xf32, #tpu.memory_space<vmem>>, vector<128x128xf32>
    %cst_54 = arith.constant dense<0.000000e+00> : vector<32x128xf32>
    %71 = tpu.matmul %69, %70, %cst_54 {dimension_numbers = #tpu.dot_dimension_numbers<[1], [0], [0], [1], [0, 0, 1, 1], [], []>} : vector<32x128xf32>, vector<128x128xf32>, vector<32x128xf32> -> vector<32x128xf32>
    %c0_55 = arith.constant 0 : index
    %c0_56 = arith.constant 0 : index
    %72 = vector.load %arg18[%c0_55, %c0_56] : memref<1x128xf32, #tpu.memory_space<vmem>>, vector<1x128xf32>
    %73 = vector.broadcast %72 : vector<1x128xf32> to vector<32x128xf32>
    %74 = arith.addf %71, %73 : vector<32x128xf32>
    %c0_57 = arith.constant 0 : index
    %c0_58 = arith.constant 0 : index
    %75 = vector.load %arg20[%c0_57, %c0_58] : memref<32x128xf32, #tpu.memory_space<vmem>>, vector<32x128xf32>
    tpu.vector_store %arg20[%c0_57, %c0_58], %74 {strides = array<i32>} : memref<32x128xf32, #tpu.memory_space<vmem>>, vector<32x128xf32>,
    return
  }
}

</mosaic_0001>

<llo_original>
// kernel: forward.3
$region0: #{forward.3}
  #allocation0 [shape = 'u32[]', space=smem, size = 0x4, offset = 0x4, fixed_abs, tag = 'smem constant byte address 0x4 - core index']
  #allocation1 [shape = 'u32[144,128]{1,0:T(1,128)}', space=vmem, size = 0x12000, scoped, tag = 'internal scratch']
  %s0 = inlined_call_operand.vmem [shape: bf16[512,256], index: 0, kind: input, shape index: {}]
  %s1 = inlined_call_operand.hbm [shape: bf16[256,128], index: 1, kind: input, shape index: {}]
  %s2 = inlined_call_operand.hbm [shape: f32[1,128], index: 2, kind: input, shape index: {}]
  %s3 = inlined_call_operand.vmem [shape: bf16[512,128], index: 3, kind: output, shape index: {}]
  %s4 = sld [smem:[#allocation0]]
  $region30: #{forward.3} parent=0
    _
  %s6 = ssub.s32 1, %s4
  %s7 = scalar_select 0, %s6, %s4
  $region1: #{forward.3} parent=0
    #allocation2 [shape = 'u8[65536]{0}', space=vmem, size = 0x10000, scoped, tag = 'input window, operand 1, single buffered']
    #allocation3 [shape = 's32[1]{0}', space=sflag, size = 0x4, scoped, tag = 'scoped memory for forward.3']
    #allocation4 [shape = 'u8[512]{0}', space=vmem, size = 0x400, scoped, tag = 'input window, operand 2, single buffered']
    #allocation5 [shape = 's32[1]{0}', space=sflag, size = 0x4, scoped, tag = 'scoped memory for forward.3']
    %8 = vsyncpa [#allocation3], 0
    %9 = vsyncpa [#allocation5], 0
    // Predicated region
    $region2: #{forward.3} parent=1 // pred_check
      _
    $region3: #{forward.3} parent=1 // pred_check_branch
      %11 = sbr.rel (0) target = $region5
    $region4: #{forward.3} parent=1 // pred_region
      _
    $region5: #{forward.3} parent=1 // pred_fallthru
      _
    // Predicated region
    $region6: #{forward.3} parent=1 // pred_check
      _
    $region7: #{forward.3} parent=1 // pred_check_branch
      %13 = sbr.rel (0) target = $region9
    $region8: #{forward.3} parent=1 // pred_region
      %s15 = ssub.s32 2048, 2048
      %16 = vsyncadd [#allocation3], %s15
      %s17 = sshll.u32 [#allocation2], 4
      %s18 = int_to_ptr.vmem [resolvable:$true] %s17
      %23 = dma.hbm_to_vmem [thread:$0]  %s1, 2048, %s18, [#allocation3], 64, 64, 4
    $region9: #{forward.3} parent=1 // pred_fallthru
      _
    // Predicated region
    $region10: #{forward.3} parent=1 // pred_check
      _
    $region11: #{forward.3} parent=1 // pred_check_branch
      %25 = sbr.rel (0) target = $region13
    $region12: #{forward.3} parent=1 // pred_region
      %s27 = ssub.s32 16, 16
      %28 = vsyncadd [#allocation5], %s27
      %s30 = sshll.u32 [#allocation4], 4
      %s31 = int_to_ptr.vmem [resolvable:$true] %s30
      %33 = dma.hbm_to_vmem [thread:$0]  %s2, 16, %s31, [#allocation5]
    $region13: #{forward.3} parent=1 // pred_fallthru
      _
    // Predicated region
    $region14: #{forward.3} parent=1 // pred_check
      _
    $region15: #{forward.3} parent=1 // pred_check_branch
      %35 = sbr.rel (0) target = $region17
    $region16: #{forward.3} parent=1 // pred_region
      %36 = dma.done [#allocation3], 2048
    $region17: #{forward.3} parent=1 // pred_fallthru
      _
    // Predicated region
    $region18: #{forward.3} parent=1 // pred_check
      _
    $region19: #{forward.3} parent=1 // pred_check_branch
      %38 = sbr.rel (0) target = $region21
    $region20: #{forward.3} parent=1 // pred_region
      %39 = dma.done [#allocation5], 16
    $region21: #{forward.3} parent=1 // pred_fallthru
      _
    %v41 = vld [vmem:[%s0] sm:$0xff]
    %v42 = vld [vmem:[%s0 + $0x8] sm:$0xff]
    %v43 = vld [vmem:[%s0 + $0x10] sm:$0xff]
    %v44 = vld [vmem:[%s0 + $0x18] sm:$0xff]
    %v45 = vld [vmem:[%s0 + $0x20] sm:$0xff]
    %v46 = vld [vmem:[%s0 + $0x28] sm:$0xff]
    %v47 = vld [vmem:[%s0 + $0x30] sm:$0xff]
    %v48 = vld [vmem:[%s0 + $0x38] sm:$0xff]
    %v49 = vld [vmem:[%s0 + $0x40] sm:$0xff]
    %v50 = vld [vmem:[%s0 + $0x48] sm:$0xff]
    %v51 = vld [vmem:[%s0 + $0x50] sm:$0xff]
    %v52 = vld [vmem:[%s0 + $0x58] sm:$0xff]
    %v53 = vld [vmem:[%s0 + $0x60] sm:$0xff]
    %v54 = vld [vmem:[%s0 + $0x68] sm:$0xff]
    %v55 = vld [vmem:[%s0 + $0x70] sm:$0xff]
    %v56 = vld [vmem:[%s0 + $0x78] sm:$0xff]
    %v57 = vld [vmem:[%s0 + $0x80] sm:$0xff]
    %v58 = vld [vmem:[%s0 + $0x88] sm:$0xff]
    %v59 = vld [vmem:[%s0 + $0x90] sm:$0xff]
    %v60 = vld [vmem:[%s0 + $0x98] sm:$0xff]
    %v61 = vld [vmem:[%s0 + $0xa0] sm:$0xff]
    %v62 = vld [vmem:[%s0 + $0xa8] sm:$0xff]
    %v63 = vld [vmem:[%s0 + $0xb0] sm:$0xff]
    %v64 = vld [vmem:[%s0 + $0xb8] sm:$0xff]
    %v65 = vld [vmem:[%s0 + $0xc0] sm:$0xff]
    %v66 = vld [vmem:[%s0 + $0xc8] sm:$0xff]
    %v67 = vld [vmem:[%s0 + $0xd0] sm:$0xff]
    %v68 = vld [vmem:[%s0 + $0xd8] sm:$0xff]
    %v69 = vld [vmem:[%s0 + $0xe0] sm:$0xff]
    %v70 = vld [vmem:[%s0 + $0xe8] sm:$0xff]
    %v71 = vld [vmem:[%s0 + $0xf0] sm:$0xff]
    %v72 = vld [vmem:[%s0 + $0xf8] sm:$0xff]
    %v73 = vld [vmem:[%s0 + $0x100] sm:$0xff]
    %v74 = vld [vmem:[%s0 + $0x108] sm:$0xff]
    %v75 = vld [vmem:[%s0 + $0x110] sm:$0xff]
    %v76 = vld [vmem:[%s0 + $0x118] sm:$0xff]
    %v77 = vld [vmem:[%s0 + $0x120] sm:$0xff]
    %v78 = vld [vmem:[%s0 + $0x128] sm:$0xff]
    %v79 = vld [vmem:[%s0 + $0x130] sm:$0xff]
    %v80 = vld [vmem:[%s0 + $0x138] sm:$0xff]
    %v81 = vld [vmem:[%s0 + $0x140] sm:$0xff]
    %v82 = vld [vmem:[%s0 + $0x148] sm:$0xff]
    %v83 = vld [vmem:[%s0 + $0x150] sm:$0xff]
    %v84 = vld [vmem:[%s0 + $0x158] sm:$0xff]
    %v85 = vld [vmem:[%s0 + $0x160] sm:$0xff]
    %v86 = vld [vmem:[%s0 + $0x168] sm:$0xff]
    %v87 = vld [vmem:[%s0 + $0x170] sm:$0xff]
    %v88 = vld [vmem:[%s0 + $0x178] sm:$0xff]
    %v89 = vld [vmem:[%s0 + $0x180] sm:$0xff]
    %v90 = vld [vmem:[%s0 + $0x188] sm:$0xff]
    %v91 = vld [vmem:[%s0 + $0x190] sm:$0xff]
    %v92 = vld [vmem:[%s0 + $0x198] sm:$0xff]
    %v93 = vld [vmem:[%s0 + $0x1a0] sm:$0xff]
    %v94 = vld [vmem:[%s0 + $0x1a8] sm:$0xff]
    %v95 = vld [vmem:[%s0 + $0x1b0] sm:$0xff]
    %v96 = vld [vmem:[%s0 + $0x1b8] sm:$0xff]
    %v97 = vld [vmem:[%s0 + $0x1c0] sm:$0xff]
    %v98 = vld [vmem:[%s0 + $0x1c8] sm:$0xff]
    %v99 = vld [vmem:[%s0 + $0x1d0] sm:$0xff]
    %v100 = vld [vmem:[%s0 + $0x1d8] sm:$0xff]
    %v101 = vld [vmem:[%s0 + $0x1e0] sm:$0xff]
    %v102 = vld [vmem:[%s0 + $0x1e8] sm:$0xff]
    %v103 = vld [vmem:[%s0 + $0x1f0] sm:$0xff]
    %v104 = vld [vmem:[%s0 + $0x1f8] sm:$0xff]
    %v105 = vld [vmem:[#allocation2] sm:$0xf]
    %v106 = vld [vmem:[#allocation2 + $0x4] sm:$0xf]
    %v107 = vld [vmem:[#allocation2 + $0x8] sm:$0xf]
    %v108 = vld [vmem:[#allocation2 + $0xc] sm:$0xf]
    %v109 = vld [vmem:[#allocation2 + $0x10] sm:$0xf]
    %v110 = vld [vmem:[#allocation2 + $0x14] sm:$0xf]
    %v111 = vld [vmem:[#allocation2 + $0x18] sm:$0xf]
    %v112 = vld [vmem:[#allocation2 + $0x1c] sm:$0xf]
    %v113 = vld [vmem:[#allocation2 + $0x20] sm:$0xf]
    %v114 = vld [vmem:[#allocation2 + $0x24] sm:$0xf]
    %v115 = vld [vmem:[#allocation2 + $0x28] sm:$0xf]
    %v116 = vld [vmem:[#allocation2 + $0x2c] sm:$0xf]
    %v117 = vld [vmem:[#allocation2 + $0x30] sm:$0xf]
    %v118 = vld [vmem:[#allocation2 + $0x34] sm:$0xf]
    %v119 = vld [vmem:[#allocation2 + $0x38] sm:$0xf]
    %v120 = vld [vmem:[#allocation2 + $0x3c] sm:$0xf]
    %v121 = vld [vmem:[#allocation2 + $0x40] sm:$0xf]
    %v122 = vld [vmem:[#allocation2 + $0x44] sm:$0xf]
    %v123 = vld [vmem:[#allocation2 + $0x48] sm:$0xf]
    %v124 = vld [vmem:[#allocation2 + $0x4c] sm:$0xf]
    %v125 = vld [vmem:[#allocation2 + $0x50] sm:$0xf]
    %v126 = vld [vmem:[#allocation2 + $0x54] sm:$0xf]
    %v127 = vld [vmem:[#allocation2 + $0x58] sm:$0xf]
    %v128 = vld [vmem:[#allocation2 + $0x5c] sm:$0xf]
    %v129 = vld [vmem:[#allocation2 + $0x60] sm:$0xf]
    %v130 = vld [vmem:[#allocation2 + $0x64] sm:$0xf]
    %v131 = vld [vmem:[#allocation2 + $0x68] sm:$0xf]
    %v132 = vld [vmem:[#allocation2 + $0x6c] sm:$0xf]
    %v133 = vld [vmem:[#allocation2 + $0x70] sm:$0xf]
    %v134 = vld [vmem:[#allocation2 + $0x74] sm:$0xf]
    %v135 = vld [vmem:[#allocation2 + $0x78] sm:$0xf]
    %v136 = vld [vmem:[#allocation2 + $0x7c] sm:$0xf]
    %v137 = vld [vmem:[#allocation4] sm:$0x1]
    %v139 = vlaneseq
    %v140 = vshrl.u32 %v139, 7
    %v141 = vsub.s32 0, %v140
    %v142 = vrot.slane %v137, %v141
    %v208 = vunpack.c.l.b16 %v41
    %v209 = vunpack.c.h.b16 %v41
    %v210 = vunpack.c.l.b16 %v42
    %v211 = vunpack.c.h.b16 %v42
    %v212 = vunpack.c.l.b16 %v43
    %v213 = vunpack.c.h.b16 %v43
    %v214 = vunpack.c.l.b16 %v44
    %v215 = vunpack.c.h.b16 %v44
    %v216 = vunpack.c.l.b16 %v45
    %v217 = vunpack.c.h.b16 %v45
    %v218 = vunpack.c.l.b16 %v46
    %v219 = vunpack.c.h.b16 %v46
    %v220 = vunpack.c.l.b16 %v47
    %v221 = vunpack.c.h.b16 %v47
    %v222 = vunpack.c.l.b16 %v48
    %v223 = vunpack.c.h.b16 %v48
    %v224 = vunpack.c.l.b16 %v49
    %v225 = vunpack.c.h.b16 %v49
    %v226 = vunpack.c.l.b16 %v50
    %v227 = vunpack.c.h.b16 %v50
    %v228 = vunpack.c.l.b16 %v51
    %v229 = vunpack.c.h.b16 %v51
    %v230 = vunpack.c.l.b16 %v52
    %v231 = vunpack.c.h.b16 %v52
    %v232 = vunpack.c.l.b16 %v53
    %v233 = vunpack.c.h.b16 %v53
    %v234 = vunpack.c.l.b16 %v54
    %v235 = vunpack.c.h.b16 %v54
    %v236 = vunpack.c.l.b16 %v55
    %v237 = vunpack.c.h.b16 %v55
    %v238 = vunpack.c.l.b16 %v56
    %v239 = vunpack.c.h.b16 %v56
    %v240 = vunpack.c.l.b16 %v57
    %v241 = vunpack.c.h.b16 %v57
    %v242 = vunpack.c.l.b16 %v58
    %v243 = vunpack.c.h.b16 %v58
    %v244 = vunpack.c.l.b16 %v59
    %v245 = vunpack.c.h.b16 %v59
    %v246 = vunpack.c.l.b16 %v60
    %v247 = vunpack.c.h.b16 %v60
    %v248 = vunpack.c.l.b16 %v61
    %v249 = vunpack.c.h.b16 %v61
    %v250 = vunpack.c.l.b16 %v62
    %v251 = vunpack.c.h.b16 %v62
    %v252 = vunpack.c.l.b16 %v63
    %v253 = vunpack.c.h.b16 %v63
    %v254 = vunpack.c.l.b16 %v64
    %v255 = vunpack.c.h.b16 %v64
    %v256 = vunpack.c.l.b16 %v65
    %v257 = vunpack.c.h.b16 %v65
    %v258 = vunpack.c.l.b16 %v66
    %v259 = vunpack.c.h.b16 %v66
    %v260 = vunpack.c.l.b16 %v67
    %v261 = vunpack.c.h.b16 %v67
    %v262 = vunpack.c.l.b16 %v68
    %v263 = vunpack.c.h.b16 %v68
    %v264 = vunpack.c.l.b16 %v69
    %v265 = vunpack.c.h.b16 %v69
    %v266 = vunpack.c.l.b16 %v70
    %v267 = vunpack.c.h.b16 %v70
    %v268 = vunpack.c.l.b16 %v71
    %v269 = vunpack.c.h.b16 %v71
    %v270 = vunpack.c.l.b16 %v72
    %v271 = vunpack.c.h.b16 %v72
    %v272 = vunpack.c.l.b16 %v73
    %v273 = vunpack.c.h.b16 %v73
    %v274 = vunpack.c.l.b16 %v74
    %v275 = vunpack.c.h.b16 %v74
    %v276 = vunpack.c.l.b16 %v75
    %v277 = vunpack.c.h.b16 %v75
    %v278 = vunpack.c.l.b16 %v76
    %v279 = vunpack.c.h.b16 %v76
    %v280 = vunpack.c.l.b16 %v77
    %v281 = vunpack.c.h.b16 %v77
    %v282 = vunpack.c.l.b16 %v78
    %v283 = vunpack.c.h.b16 %v78
    %v284 = vunpack.c.l.b16 %v79
    %v285 = vunpack.c.h.b16 %v79
    %v286 = vunpack.c.l.b16 %v80
    %v287 = vunpack.c.h.b16 %v80
    %v288 = vunpack.c.l.b16 %v81
    %v289 = vunpack.c.h.b16 %v81
    %v290 = vunpack.c.l.b16 %v82
    %v291 = vunpack.c.h.b16 %v82
    %v292 = vunpack.c.l.b16 %v83
    %v293 = vunpack.c.h.b16 %v83
    %v294 = vunpack.c.l.b16 %v84
    %v295 = vunpack.c.h.b16 %v84
    %v296 = vunpack.c.l.b16 %v85
    %v297 = vunpack.c.h.b16 %v85
    %v298 = vunpack.c.l.b16 %v86
    %v299 = vunpack.c.h.b16 %v86
    %v300 = vunpack.c.l.b16 %v87
    %v301 = vunpack.c.h.b16 %v87
    %v302 = vunpack.c.l.b16 %v88
    %v303 = vunpack.c.h.b16 %v88
    %v304 = vunpack.c.l.b16 %v89
    %v305 = vunpack.c.h.b16 %v89
    %v306 = vunpack.c.l.b16 %v90
    %v307 = vunpack.c.h.b16 %v90
    %v308 = vunpack.c.l.b16 %v91
    %v309 = vunpack.c.h.b16 %v91
    %v310 = vunpack.c.l.b16 %v92
    %v311 = vunpack.c.h.b16 %v92
    %v312 = vunpack.c.l.b16 %v93
    %v313 = vunpack.c.h.b16 %v93
    %v314 = vunpack.c.l.b16 %v94
    %v315 = vunpack.c.h.b16 %v94
    %v316 = vunpack.c.l.b16 %v95
    %v317 = vunpack.c.h.b16 %v95
    %v318 = vunpack.c.l.b16 %v96
    %v319 = vunpack.c.h.b16 %v96
    %v320 = vunpack.c.l.b16 %v97
    %v321 = vunpack.c.h.b16 %v97
    %v322 = vunpack.c.l.b16 %v98
    %v323 = vunpack.c.h.b16 %v98
    %v324 = vunpack.c.l.b16 %v99
    %v325 = vunpack.c.h.b16 %v99
    %v326 = vunpack.c.l.b16 %v100
    %v327 = vunpack.c.h.b16 %v100
    %v328 = vunpack.c.l.b16 %v101
    %v329 = vunpack.c.h.b16 %v101
    %v330 = vunpack.c.l.b16 %v102
    %v331 = vunpack.c.h.b16 %v102
    %v332 = vunpack.c.l.b16 %v103
    %v333 = vunpack.c.h.b16 %v103
    %v334 = vunpack.c.l.b16 %v104
    %v335 = vunpack.c.h.b16 %v104
    %v336 = vpack.c.b16 %v210, %v208
    %v337 = vpack.c.b16 %v211, %v209
    %v338 = vpack.c.b16 %v214, %v212
    %v339 = vpack.c.b16 %v215, %v213
    %v340 = vpack.c.b16 %v218, %v216
    %v341 = vpack.c.b16 %v219, %v217
    %v342 = vpack.c.b16 %v222, %v220
    %v343 = vpack.c.b16 %v223, %v221
    %v344 = vpack.c.b16 %v226, %v224
    %v345 = vpack.c.b16 %v227, %v225
    %v346 = vpack.c.b16 %v230, %v228
    %v347 = vpack.c.b16 %v231, %v229
    %v348 = vpack.c.b16 %v234, %v232
    %v349 = vpack.c.b16 %v235, %v233
    %v350 = vpack.c.b16 %v238, %v236
    %v351 = vpack.c.b16 %v239, %v237
    %v352 = vpack.c.b16 %v242, %v240
    %v353 = vpack.c.b16 %v243, %v241
    %v354 = vpack.c.b16 %v246, %v244
    %v355 = vpack.c.b16 %v247, %v245
    %v356 = vpack.c.b16 %v250, %v248
    %v357 = vpack.c.b16 %v251, %v249
    %v358 = vpack.c.b16 %v254, %v252
    %v359 = vpack.c.b16 %v255, %v253
    %v360 = vpack.c.b16 %v258, %v256
    %v361 = vpack.c.b16 %v259, %v257
    %v362 = vpack.c.b16 %v262, %v260
    %v363 = vpack.c.b16 %v263, %v261
    %v364 = vpack.c.b16 %v266, %v264
    %v365 = vpack.c.b16 %v267, %v265
    %v366 = vpack.c.b16 %v270, %v268
    %v367 = vpack.c.b16 %v271, %v269
    %v368 = vpack.c.b16 %v274, %v272
    %v369 = vpack.c.b16 %v275, %v273
    %v370 = vpack.c.b16 %v278, %v276
    %v371 = vpack.c.b16 %v279, %v277
    %v372 = vpack.c.b16 %v282, %v280
    %v373 = vpack.c.b16 %v283, %v281
    %v374 = vpack.c.b16 %v286, %v284
    %v375 = vpack.c.b16 %v287, %v285
    %v376 = vpack.c.b16 %v290, %v288
    %v377 = vpack.c.b16 %v291, %v289
    %v378 = vpack.c.b16 %v294, %v292
    %v379 = vpack.c.b16 %v295, %v293
    %v380 = vpack.c.b16 %v298, %v296
    %v381 = vpack.c.b16 %v299, %v297
    %v382 = vpack.c.b16 %v302, %v300
    %v383 = vpack.c.b16 %v303, %v301
    %v384 = vpack.c.b16 %v306, %v304
    %v385 = vpack.c.b16 %v307, %v305
    %v386 = vpack.c.b16 %v310, %v308
    %v387 = vpack.c.b16 %v311, %v309
    %v388 = vpack.c.b16 %v314, %v312
    %v389 = vpack.c.b16 %v315, %v313
    %v390 = vpack.c.b16 %v318, %v316
    %v391 = vpack.c.b16 %v319, %v317
    %v392 = vpack.c.b16 %v322, %v320
    %v393 = vpack.c.b16 %v323, %v321
    %v394 = vpack.c.b16 %v326, %v324
    %v395 = vpack.c.b16 %v327, %v325
    %v396 = vpack.c.b16 %v330, %v328
    %v397 = vpack.c.b16 %v331, %v329
    %v398 = vpack.c.b16 %v334, %v332
    %v399 = vpack.c.b16 %v335, %v333
    %v496 = vunpack.c.l.b16 %v105
    %v497 = vunpack.c.l.b16 %v106
    %v498 = vunpack.c.l.b16 %v107
    %v499 = vunpack.c.l.b16 %v108
    %v500 = vunpack.c.l.b16 %v109
    %v501 = vunpack.c.l.b16 %v110
    %v502 = vunpack.c.l.b16 %v111
    %v503 = vunpack.c.l.b16 %v112
    %v504 = vunpack.c.l.b16 %v113
    %v505 = vunpack.c.l.b16 %v114
    %v506 = vunpack.c.l.b16 %v115
    %v507 = vunpack.c.l.b16 %v116
    %v508 = vunpack.c.l.b16 %v117
    %v509 = vunpack.c.l.b16 %v118
    %v510 = vunpack.c.l.b16 %v119
    %v511 = vunpack.c.l.b16 %v120
    %v512 = vunpack.c.l.b16 %v121
    %v513 = vunpack.c.l.b16 %v122
    %v514 = vunpack.c.l.b16 %v123
    %v515 = vunpack.c.l.b16 %v124
    %v516 = vunpack.c.l.b16 %v125
    %v517 = vunpack.c.l.b16 %v126
    %v518 = vunpack.c.l.b16 %v127
    %v519 = vunpack.c.l.b16 %v128
    %v520 = vunpack.c.l.b16 %v129
    %v521 = vunpack.c.l.b16 %v130
    %v522 = vunpack.c.l.b16 %v131
    %v523 = vunpack.c.l.b16 %v132
    %v524 = vunpack.c.l.b16 %v133
    %v525 = vunpack.c.l.b16 %v134
    %v526 = vunpack.c.l.b16 %v135
    %v527 = vunpack.c.l.b16 %v136
    %v528 = vpack.c.b16 %v497, %v496
    %v529 = vpack.c.b16 %v499, %v498
    %v530 = vpack.c.b16 %v501, %v500
    %v531 = vpack.c.b16 %v503, %v502
    %v532 = vpack.c.b16 %v505, %v504
    %v533 = vpack.c.b16 %v507, %v506
    %v534 = vpack.c.b16 %v509, %v508
    %v535 = vpack.c.b16 %v511, %v510
    %v536 = vpack.c.b16 %v513, %v512
    %v537 = vpack.c.b16 %v515, %v514
    %v538 = vpack.c.b16 %v517, %v516
    %v539 = vpack.c.b16 %v519, %v518
    %v540 = vpack.c.b16 %v521, %v520
    %v541 = vpack.c.b16 %v523, %v522
    %v542 = vpack.c.b16 %v525, %v524
    %v543 = vpack.c.b16 %v527, %v526
    %560 = vmatprep.subr.bf16.mxu0 0
    %561 = vmatpush1.bf16.msra.mxu0 %v535
    %562 = vmatprep.subr.bf16.mxu0 0
    %563 = vmatpush1.bf16.msra.mxu0 %v534
    %564 = vmatprep.subr.bf16.mxu0 0
    %565 = vmatpush1.bf16.msra.mxu0 %v533
    %566 = vmatprep.subr.bf16.mxu0 0
    %567 = vmatpush1.bf16.msra.mxu0 %v532
    %568 = vmatprep.subr.bf16.mxu0 0
    %569 = vmatpush1.bf16.msra.mxu0 %v531
    %570 = vmatprep.subr.bf16.mxu0 0
    %571 = vmatpush1.bf16.msra.mxu0 %v530
    %572 = vmatprep.subr.bf16.mxu0 0
    %573 = vmatpush1.bf16.msra.mxu0 %v529
    %574 = vmatprep.subr.bf16.mxu0 0
    %575 = vmatpush1.bf16.msra.mxu0 %v528
    %576 = vmatprep.subr.bf16.mxu0 0
    %577 = vmatpush2.bf16.msra.mxu0 %v543
    %578 = vmatprep.subr.bf16.mxu0 0
    %579 = vmatpush2.bf16.msra.mxu0 %v542
    %580 = vmatprep.subr.bf16.mxu0 0
    %581 = vmatpush2.bf16.msra.mxu0 %v541
    %582 = vmatprep.subr.bf16.mxu0 0
    %583 = vmatpush2.bf16.msra.mxu0 %v540
    %584 = vmatprep.subr.bf16.mxu0 0
    %585 = vmatpush2.bf16.msra.mxu0 %v539
    %586 = vmatprep.subr.bf16.mxu0 0
    %587 = vmatpush2.bf16.msra.mxu0 %v538
    %588 = vmatprep.subr.bf16.mxu0 0
    %589 = vmatpush2.bf16.msra.mxu0 %v537
    %590 = vmatprep.subr.bf16.mxu0 0
    %591 = vmatpush2.bf16.msra.mxu0 %v536
    %592 = vmatprep.mubr.bf16.mxu0 %v337
    %593 = vmatmul.mubr.bf16.gmra.mxu0 %v336
    %v594 = vpop.f32.mrf.mxu0
    %v595 = vadd.f32 %v142, %v594
    %v596 = vpop.f32.mrf.mxu0
    %v597 = vpop.f32.mrf.mxu0
    %v598 = vadd.f32 %v142, %v597
    %v599 = vpop.f32.mrf.mxu0
    %600 = vmatprep.mubr.bf16.mxu0 %v339
    %601 = vmatmul.mubr.bf16.gmra.mxu0 %v338
    %v602 = vpop.f32.mrf.mxu0
    %v603 = vadd.f32 %v142, %v602
    %v604 = vpop.f32.mrf.mxu0
    %v605 = vpop.f32.mrf.mxu0
    %v606 = vadd.f32 %v142, %v605
    %v607 = vpop.f32.mrf.mxu0
    %608 = vmatprep.mubr.bf16.mxu0 %v341
    %609 = vmatmul.mubr.bf16.gmra.mxu0 %v340
    %v610 = vpop.f32.mrf.mxu0
    %v611 = vadd.f32 %v142, %v610
    %v612 = vpop.f32.mrf.mxu0
    %v613 = vpop.f32.mrf.mxu0
    %v614 = vadd.f32 %v142, %v613
    %v615 = vpop.f32.mrf.mxu0
    %616 = vmatprep.mubr.bf16.mxu0 %v343
    %617 = vmatmul.mubr.bf16.gmra.mxu0 %v342
    %v618 = vpop.f32.mrf.mxu0
    %v619 = vadd.f32 %v142, %v618
    %v620 = vpop.f32.mrf.mxu0
    %v621 = vpop.f32.mrf.mxu0
    %v622 = vadd.f32 %v142, %v621
    %v623 = vpop.f32.mrf.mxu0
    %624 = vmatprep.mubr.bf16.mxu0 %v345
    %625 = vmatmul.mubr.bf16.gmra.mxu0 %v344
    %v626 = vpop.f32.mrf.mxu0
    %v627 = vadd.f32 %v142, %v626
    %v628 = vpop.f32.mrf.mxu0
    %v629 = vpop.f32.mrf.mxu0
    %v630 = vadd.f32 %v142, %v629
    %v631 = vpop.f32.mrf.mxu0
    %632 = vmatprep.mubr.bf16.mxu0 %v347
    %633 = vmatmul.mubr.bf16.gmra.mxu0 %v346
    %v634 = vpop.f32.mrf.mxu0
    %v635 = vadd.f32 %v142, %v634
    %v636 = vpop.f32.mrf.mxu0
    %v637 = vpop.f32.mrf.mxu0
    %v638 = vadd.f32 %v142, %v637
    %v639 = vpop.f32.mrf.mxu0
    %640 = vmatprep.mubr.bf16.mxu0 %v349
    %641 = vmatmul.mubr.bf16.gmra.mxu0 %v348
    %v642 = vpop.f32.mrf.mxu0
    %v643 = vadd.f32 %v142, %v642
    %v644 = vpop.f32.mrf.mxu0
    %v645 = vpop.f32.mrf.mxu0
    %v646 = vadd.f32 %v142, %v645
    %v647 = vpop.f32.mrf.mxu0
    %648 = vmatprep.mubr.bf16.mxu0 %v351
    %649 = vmatmul.mubr.bf16.gmra.mxu0 %v350
    %v650 = vpop.f32.mrf.mxu0
    %v651 = vadd.f32 %v142, %v650
    %v652 = vpop.f32.mrf.mxu0
    %v653 = vpop.f32.mrf.mxu0
    %v654 = vadd.f32 %v142, %v653
    %v655 = vpop.f32.mrf.mxu0
    %656 = vmatprep.mubr.bf16.mxu0 %v353
    %657 = vmatmul.mubr.bf16.gmra.mxu0 %v352
    %v658 = vpop.f32.mrf.mxu0
    %v659 = vadd.f32 %v142, %v658
    %v660 = vpop.f32.mrf.mxu0
    %v661 = vpop.f32.mrf.mxu0
    %v662 = vadd.f32 %v142, %v661
    %v663 = vpop.f32.mrf.mxu0
    %664 = vmatprep.mubr.bf16.mxu0 %v355
    %665 = vmatmul.mubr.bf16.gmra.mxu0 %v354
    %v666 = vpop.f32.mrf.mxu0
    %v667 = vadd.f32 %v142, %v666
    %v668 = vpop.f32.mrf.mxu0
    %v669 = vpop.f32.mrf.mxu0
    %v670 = vadd.f32 %v142, %v669
    %v671 = vpop.f32.mrf.mxu0
    %672 = vmatprep.mubr.bf16.mxu0 %v357
    %673 = vmatmul.mubr.bf16.gmra.mxu0 %v356
    %v674 = vpop.f32.mrf.mxu0
    %v675 = vadd.f32 %v142, %v674
    %v676 = vpop.f32.mrf.mxu0
    %v677 = vpop.f32.mrf.mxu0
    %v678 = vadd.f32 %v142, %v677
    %v679 = vpop.f32.mrf.mxu0
    %680 = vmatprep.mubr.bf16.mxu0 %v359
    %681 = vmatmul.mubr.bf16.gmra.mxu0 %v358
    %v682 = vpop.f32.mrf.mxu0
    %v683 = vadd.f32 %v142, %v682
    %v684 = vpop.f32.mrf.mxu0
    %v685 = vpop.f32.mrf.mxu0
    %v686 = vadd.f32 %v142, %v685
    %v687 = vpop.f32.mrf.mxu0
    %688 = vmatprep.mubr.bf16.mxu0 %v361
    %689 = vmatmul.mubr.bf16.gmra.mxu0 %v360
    %v690 = vpop.f32.mrf.mxu0
    %v691 = vadd.f32 %v142, %v690
    %v692 = vpop.f32.mrf.mxu0
    %v693 = vpop.f32.mrf.mxu0
    %v694 = vadd.f32 %v142, %v693
    %v695 = vpop.f32.mrf.mxu0
    %696 = vmatprep.mubr.bf16.mxu0 %v363
    %697 = vmatmul.mubr.bf16.gmra.mxu0 %v362
    %v698 = vpop.f32.mrf.mxu0
    %v699 = vadd.f32 %v142, %v698
    %v700 = vpop.f32.mrf.mxu0
    %v701 = vpop.f32.mrf.mxu0
    %v702 = vadd.f32 %v142, %v701
    %v703 = vpop.f32.mrf.mxu0
    %704 = vmatprep.mubr.bf16.mxu0 %v365
    %705 = vmatmul.mubr.bf16.gmra.mxu0 %v364
    %v706 = vpop.f32.mrf.mxu0
    %v707 = vadd.f32 %v142, %v706
    %v708 = vpop.f32.mrf.mxu0
    %v709 = vpop.f32.mrf.mxu0
    %v710 = vadd.f32 %v142, %v709
    %v711 = vpop.f32.mrf.mxu0
    %712 = vmatprep.mubr.bf16.mxu0 %v367
    %713 = vmatmul.mubr.bf16.gmra.mxu0 %v366
    %v714 = vpop.f32.mrf.mxu0
    %v715 = vadd.f32 %v142, %v714
    %v716 = vpop.f32.mrf.mxu0
    %v717 = vpop.f32.mrf.mxu0
    %v718 = vadd.f32 %v142, %v717
    %v719 = vpop.f32.mrf.mxu0
    %720 = vmatprep.mubr.bf16.mxu0 %v369
    %721 = vmatmul.mubr.bf16.gmra.mxu0 %v368
    %v722 = vpop.f32.mrf.mxu0
    %v723 = vadd.f32 %v142, %v722
    %v724 = vpop.f32.mrf.mxu0
    %v725 = vpop.f32.mrf.mxu0
    %v726 = vadd.f32 %v142, %v725
    %v727 = vpop.f32.mrf.mxu0
    %728 = vmatprep.mubr.bf16.mxu0 %v371
    %729 = vmatmul.mubr.bf16.gmra.mxu0 %v370
    %v730 = vpop.f32.mrf.mxu0
    %v731 = vadd.f32 %v142, %v730
    %v732 = vpop.f32.mrf.mxu0
    %v733 = vpop.f32.mrf.mxu0
    %v734 = vadd.f32 %v142, %v733
    %v735 = vpop.f32.mrf.mxu0
    %736 = vmatprep.mubr.bf16.mxu0 %v373
    %737 = vmatmul.mubr.bf16.gmra.mxu0 %v372
    %v738 = vpop.f32.mrf.mxu0
    %v739 = vadd.f32 %v142, %v738
    %v740 = vpop.f32.mrf.mxu0
    %v741 = vpop.f32.mrf.mxu0
    %v742 = vadd.f32 %v142, %v741
    %v743 = vpop.f32.mrf.mxu0
    %744 = vmatprep.mubr.bf16.mxu0 %v375
    %745 = vmatmul.mubr.bf16.gmra.mxu0 %v374
    %v746 = vpop.f32.mrf.mxu0
    %v747 = vadd.f32 %v142, %v746
    %v748 = vpop.f32.mrf.mxu0
    %v749 = vpop.f32.mrf.mxu0
    %v750 = vadd.f32 %v142, %v749
    %v751 = vpop.f32.mrf.mxu0
    %752 = vmatprep.mubr.bf16.mxu0 %v377
    %753 = vmatmul.mubr.bf16.gmra.mxu0 %v376
    %v754 = vpop.f32.mrf.mxu0
    %v755 = vadd.f32 %v142, %v754
    %v756 = vpop.f32.mrf.mxu0
    %v757 = vpop.f32.mrf.mxu0
    %v758 = vadd.f32 %v142, %v757
    %v759 = vpop.f32.mrf.mxu0
    %760 = vmatprep.mubr.bf16.mxu0 %v379
    %761 = vmatmul.mubr.bf16.gmra.mxu0 %v378
    %v762 = vpop.f32.mrf.mxu0
    %v763 = vadd.f32 %v142, %v762
    %v764 = vpop.f32.mrf.mxu0
    %v765 = vpop.f32.mrf.mxu0
    %v766 = vadd.f32 %v142, %v765
    %v767 = vpop.f32.mrf.mxu0
    %768 = vmatprep.mubr.bf16.mxu0 %v381
    %769 = vmatmul.mubr.bf16.gmra.mxu0 %v380
    %v770 = vpop.f32.mrf.mxu0
    %v771 = vadd.f32 %v142, %v770
    %v772 = vpop.f32.mrf.mxu0
    %v773 = vpop.f32.mrf.mxu0
    %v774 = vadd.f32 %v142, %v773
    %v775 = vpop.f32.mrf.mxu0
    %776 = vmatprep.mubr.bf16.mxu0 %v383
    %777 = vmatmul.mubr.bf16.gmra.mxu0 %v382
    %v778 = vpop.f32.mrf.mxu0
    %v779 = vadd.f32 %v142, %v778
    %v780 = vpop.f32.mrf.mxu0
    %v781 = vpop.f32.mrf.mxu0
    %v782 = vadd.f32 %v142, %v781
    %v783 = vpop.f32.mrf.mxu0
    %784 = vmatprep.mubr.bf16.mxu0 %v385
    %785 = vmatmul.mubr.bf16.gmra.mxu0 %v384
    %v786 = vpop.f32.mrf.mxu0
    %v787 = vadd.f32 %v142, %v786
    %v788 = vpop.f32.mrf.mxu0
    %v789 = vpop.f32.mrf.mxu0
    %v790 = vadd.f32 %v142, %v789
    %v791 = vpop.f32.mrf.mxu0
    %792 = vmatprep.mubr.bf16.mxu0 %v387
    %793 = vmatmul.mubr.bf16.gmra.mxu0 %v386
    %v794 = vpop.f32.mrf.mxu0
    %v795 = vadd.f32 %v142, %v794
    %v796 = vpop.f32.mrf.mxu0
    %v797 = vpop.f32.mrf.mxu0
    %v798 = vadd.f32 %v142, %v797
    %v799 = vpop.f32.mrf.mxu0
    %800 = vmatprep.mubr.bf16.mxu0 %v389
    %801 = vmatmul.mubr.bf16.gmra.mxu0 %v388
    %v802 = vpop.f32.mrf.mxu0
    %v803 = vadd.f32 %v142, %v802
    %v804 = vpop.f32.mrf.mxu0
    %v805 = vpop.f32.mrf.mxu0
    %v806 = vadd.f32 %v142, %v805
    %v807 = vpop.f32.mrf.mxu0
    %808 = vmatprep.mubr.bf16.mxu0 %v391
    %809 = vmatmul.mubr.bf16.gmra.mxu0 %v390
    %v810 = vpop.f32.mrf.mxu0
    %v811 = vadd.f32 %v142, %v810
    %v812 = vpop.f32.mrf.mxu0
    %v813 = vpop.f32.mrf.mxu0
    %v814 = vadd.f32 %v142, %v813
    %v815 = vpop.f32.mrf.mxu0
    %816 = vmatprep.mubr.bf16.mxu0 %v393
    %817 = vmatmul.mubr.bf16.gmra.mxu0 %v392
    %v818 = vpop.f32.mrf.mxu0
    %v819 = vadd.f32 %v142, %v818
    %v820 = vpop.f32.mrf.mxu0
    %v821 = vpop.f32.mrf.mxu0
    %v822 = vadd.f32 %v142, %v821
    %v823 = vpop.f32.mrf.mxu0
    %824 = vmatprep.mubr.bf16.mxu0 %v395
    %825 = vmatmul.mubr.bf16.gmra.mxu0 %v394
    %v826 = vpop.f32.mrf.mxu0
    %v827 = vadd.f32 %v142, %v826
    %v828 = vpop.f32.mrf.mxu0
    %v829 = vpop.f32.mrf.mxu0
    %v830 = vadd.f32 %v142, %v829
    %v831 = vpop.f32.mrf.mxu0
    %832 = vmatprep.mubr.bf16.mxu0 %v397
    %833 = vmatmul.mubr.bf16.gmra.mxu0 %v396
    %v834 = vpop.f32.mrf.mxu0
    %v835 = vadd.f32 %v142, %v834
    %v836 = vpop.f32.mrf.mxu0
    %v837 = vpop.f32.mrf.mxu0
    %v838 = vadd.f32 %v142, %v837
    %v839 = vpop.f32.mrf.mxu0
    %840 = vmatprep.mubr.bf16.mxu0 %v399
    %841 = vmatmul.mubr.bf16.gmra.mxu0 %v398
    %v842 = vpop.f32.mrf.mxu0
    %v843 = vadd.f32 %v142, %v842
    %v844 = vpop.f32.mrf.mxu0
    %v845 = vpop.f32.mrf.mxu0
    %v846 = vadd.f32 %v142, %v845
    %v847 = vpop.f32.mrf.mxu0
    %848 = vdwg.mxu0
    %v849 = vmax.f32 %v595, 0.0
    %v850 = vmax.f32 %v598, 0.0
    %v851 = vmax.f32 %v603, 0.0
    %v852 = vmax.f32 %v606, 0.0
    %v853 = vmax.f32 %v611, 0.0
    %v854 = vmax.f32 %v614, 0.0
    %v855 = vmax.f32 %v619, 0.0
    %v856 = vmax.f32 %v622, 0.0
    %v857 = vmax.f32 %v627, 0.0
    %v858 = vmax.f32 %v630, 0.0
    %v859 = vmax.f32 %v635, 0.0
    %v860 = vmax.f32 %v638, 0.0
    %v861 = vmax.f32 %v643, 0.0
    %v862 = vmax.f32 %v646, 0.0
    %v863 = vmax.f32 %v651, 0.0
    %v864 = vmax.f32 %v654, 0.0
    %v865 = vmax.f32 %v659, 0.0
    %v866 = vmax.f32 %v662, 0.0
    %v867 = vmax.f32 %v667, 0.0
    %v868 = vmax.f32 %v670, 0.0
    %v869 = vmax.f32 %v675, 0.0
    %v870 = vmax.f32 %v678, 0.0
    %v871 = vmax.f32 %v683, 0.0
    %v872 = vmax.f32 %v686, 0.0
    %v873 = vmax.f32 %v691, 0.0
    %v874 = vmax.f32 %v694, 0.0
    %v875 = vmax.f32 %v699, 0.0
    %v876 = vmax.f32 %v702, 0.0
    %v877 = vmax.f32 %v707, 0.0
    %v878 = vmax.f32 %v710, 0.0
    %v879 = vmax.f32 %v715, 0.0
    %v880 = vmax.f32 %v718, 0.0
    %v881 = vmax.f32 %v723, 0.0
    %v882 = vmax.f32 %v726, 0.0
    %v883 = vmax.f32 %v731, 0.0
    %v884 = vmax.f32 %v734, 0.0
    %v885 = vmax.f32 %v739, 0.0
    %v886 = vmax.f32 %v742, 0.0
    %v887 = vmax.f32 %v747, 0.0
    %v888 = vmax.f32 %v750, 0.0
    %v889 = vmax.f32 %v755, 0.0
    %v890 = vmax.f32 %v758, 0.0
    %v891 = vmax.f32 %v763, 0.0
    %v892 = vmax.f32 %v766, 0.0
    %v893 = vmax.f32 %v771, 0.0
    %v894 = vmax.f32 %v774, 0.0
    %v895 = vmax.f32 %v779, 0.0
    %v896 = vmax.f32 %v782, 0.0
    %v897 = vmax.f32 %v787, 0.0
    %v898 = vmax.f32 %v790, 0.0
    %v899 = vmax.f32 %v795, 0.0
    %v900 = vmax.f32 %v798, 0.0
    %v901 = vmax.f32 %v803, 0.0
    %v902 = vmax.f32 %v806, 0.0
    %v903 = vmax.f32 %v811, 0.0
    %v904 = vmax.f32 %v814, 0.0
    %v905 = vmax.f32 %v819, 0.0
    %v906 = vmax.f32 %v822, 0.0
    %v907 = vmax.f32 %v827, 0.0
    %v908 = vmax.f32 %v830, 0.0
    %v909 = vmax.f32 %v835, 0.0
    %v910 = vmax.f32 %v838, 0.0
    %v911 = vmax.f32 %v843, 0.0
    %v912 = vmax.f32 %v846, 0.0
    %v913 = vpack.c.bf16 %v850, %v849
    %v914 = vpack.c.bf16 %v852, %v851
    %v915 = vpack.c.bf16 %v854, %v853
    %v916 = vpack.c.bf16 %v856, %v855
    %v917 = vpack.c.bf16 %v858, %v857
    %v918 = vpack.c.bf16 %v860, %v859
    %v919 = vpack.c.bf16 %v862, %v861
    %v920 = vpack.c.bf16 %v864, %v863
    %v921 = vpack.c.bf16 %v866, %v865
    %v922 = vpack.c.bf16 %v868, %v867
    %v923 = vpack.c.bf16 %v870, %v869
    %v924 = vpack.c.bf16 %v872, %v871
    %v925 = vpack.c.bf16 %v874, %v873
    %v926 = vpack.c.bf16 %v876, %v875
    %v927 = vpack.c.bf16 %v878, %v877
    %v928 = vpack.c.bf16 %v880, %v879
    %v929 = vpack.c.bf16 %v882, %v881
    %v930 = vpack.c.bf16 %v884, %v883
    %v931 = vpack.c.bf16 %v886, %v885
    %v932 = vpack.c.bf16 %v888, %v887
    %v933 = vpack.c.bf16 %v890, %v889
    %v934 = vpack.c.bf16 %v892, %v891
    %v935 = vpack.c.bf16 %v894, %v893
    %v936 = vpack.c.bf16 %v896, %v895
    %v937 = vpack.c.bf16 %v898, %v897
    %v938 = vpack.c.bf16 %v900, %v899
    %v939 = vpack.c.bf16 %v902, %v901
    %v940 = vpack.c.bf16 %v904, %v903
    %v941 = vpack.c.bf16 %v906, %v905
    %v942 = vpack.c.bf16 %v908, %v907
    %v943 = vpack.c.bf16 %v910, %v909
    %v944 = vpack.c.bf16 %v912, %v911
    %v977 = vunpack.c.l.b16 %v913
    %v978 = vunpack.c.h.b16 %v913
    %v979 = vunpack.c.l.b16 %v914
    %v980 = vunpack.c.h.b16 %v914
    %v981 = vunpack.c.l.b16 %v915
    %v982 = vunpack.c.h.b16 %v915
    %v983 = vunpack.c.l.b16 %v916
    %v984 = vunpack.c.h.b16 %v916
    %v985 = vunpack.c.l.b16 %v917
    %v986 = vunpack.c.h.b16 %v917
    %v987 = vunpack.c.l.b16 %v918
    %v988 = vunpack.c.h.b16 %v918
    %v989 = vunpack.c.l.b16 %v919
    %v990 = vunpack.c.h.b16 %v919
    %v991 = vunpack.c.l.b16 %v920
    %v992 = vunpack.c.h.b16 %v920
    %v993 = vunpack.c.l.b16 %v921
    %v994 = vunpack.c.h.b16 %v921
    %v995 = vunpack.c.l.b16 %v922
    %v996 = vunpack.c.h.b16 %v922
    %v997 = vunpack.c.l.b16 %v923
    %v998 = vunpack.c.h.b16 %v923
    %v999 = vunpack.c.l.b16 %v924
    %v1000 = vunpack.c.h.b16 %v924
    %v1001 = vunpack.c.l.b16 %v925
    %v1002 = vunpack.c.h.b16 %v925
    %v1003 = vunpack.c.l.b16 %v926
    %v1004 = vunpack.c.h.b16 %v926
    %v1005 = vunpack.c.l.b16 %v927
    %v1006 = vunpack.c.h.b16 %v927
    %v1007 = vunpack.c.l.b16 %v928
    %v1008 = vunpack.c.h.b16 %v928
    %v1009 = vunpack.c.l.b16 %v929
    %v1010 = vunpack.c.h.b16 %v929
    %v1011 = vunpack.c.l.b16 %v930
    %v1012 = vunpack.c.h.b16 %v930
    %v1013 = vunpack.c.l.b16 %v931
    %v1014 = vunpack.c.h.b16 %v931
    %v1015 = vunpack.c.l.b16 %v932
    %v1016 = vunpack.c.h.b16 %v932
    %v1017 = vunpack.c.l.b16 %v933
    %v1018 = vunpack.c.h.b16 %v933
    %v1019 = vunpack.c.l.b16 %v934
    %v1020 = vunpack.c.h.b16 %v934
    %v1021 = vunpack.c.l.b16 %v935
    %v1022 = vunpack.c.h.b16 %v935
    %v1023 = vunpack.c.l.b16 %v936
    %v1024 = vunpack.c.h.b16 %v936
    %v1025 = vunpack.c.l.b16 %v937
    %v1026 = vunpack.c.h.b16 %v937
    %v1027 = vunpack.c.l.b16 %v938
    %v1028 = vunpack.c.h.b16 %v938
    %v1029 = vunpack.c.l.b16 %v939
    %v1030 = vunpack.c.h.b16 %v939
    %v1031 = vunpack.c.l.b16 %v940
    %v1032 = vunpack.c.h.b16 %v940
    %v1033 = vunpack.c.l.b16 %v941
    %v1034 = vunpack.c.h.b16 %v941
    %v1035 = vunpack.c.l.b16 %v942
    %v1036 = vunpack.c.h.b16 %v942
    %v1037 = vunpack.c.l.b16 %v943
    %v1038 = vunpack.c.h.b16 %v943
    %v1039 = vunpack.c.l.b16 %v944
    %v1040 = vunpack.c.h.b16 %v944
    %v1041 = vpack.c.b16 %v977, %v977
    %v1042 = vpack.c.b16 %v978, %v978
    %v1043 = vpack.c.b16 %v979, %v979
    %v1044 = vpack.c.b16 %v980, %v980
    %v1045 = vpack.c.b16 %v981, %v981
    %v1046 = vpack.c.b16 %v982, %v982
    %v1047 = vpack.c.b16 %v983, %v983
    %v1048 = vpack.c.b16 %v984, %v984
    %v1049 = vpack.c.b16 %v985, %v985
    %v1050 = vpack.c.b16 %v986, %v986
    %v1051 = vpack.c.b16 %v987, %v987
    %v1052 = vpack.c.b16 %v988, %v988
    %v1053 = vpack.c.b16 %v989, %v989
    %v1054 = vpack.c.b16 %v990, %v990
    %v1055 = vpack.c.b16 %v991, %v991
    %v1056 = vpack.c.b16 %v992, %v992
    %v1057 = vpack.c.b16 %v993, %v993
    %v1058 = vpack.c.b16 %v994, %v994
    %v1059 = vpack.c.b16 %v995, %v995
    %v1060 = vpack.c.b16 %v996, %v996
    %v1061 = vpack.c.b16 %v997, %v997
    %v1062 = vpack.c.b16 %v998, %v998
    %v1063 = vpack.c.b16 %v999, %v999
    %v1064 = vpack.c.b16 %v1000, %v1000
    %v1065 = vpack.c.b16 %v1001, %v1001
    %v1066 = vpack.c.b16 %v1002, %v1002
    %v1067 = vpack.c.b16 %v1003, %v1003
    %v1068 = vpack.c.b16 %v1004, %v1004
    %v1069 = vpack.c.b16 %v1005, %v1005
    %v1070 = vpack.c.b16 %v1006, %v1006
    %v1071 = vpack.c.b16 %v1007, %v1007
    %v1072 = vpack.c.b16 %v1008, %v1008
    %v1073 = vpack.c.b16 %v1009, %v1009
    %v1074 = vpack.c.b16 %v1010, %v1010
    %v1075 = vpack.c.b16 %v1011, %v1011
    %v1076 = vpack.c.b16 %v1012, %v1012
    %v1077 = vpack.c.b16 %v1013, %v1013
    %v1078 = vpack.c.b16 %v1014, %v1014
    %v1079 = vpack.c.b16 %v1015, %v1015
    %v1080 = vpack.c.b16 %v1016, %v1016
    %v1081 = vpack.c.b16 %v1017, %v1017
    %v1082 = vpack.c.b16 %v1018, %v1018
    %v1083 = vpack.c.b16 %v1019, %v1019
    %v1084 = vpack.c.b16 %v1020, %v1020
    %v1085 = vpack.c.b16 %v1021, %v1021
    %v1086 = vpack.c.b16 %v1022, %v1022
    %v1087 = vpack.c.b16 %v1023, %v1023
    %v1088 = vpack.c.b16 %v1024, %v1024
    %v1089 = vpack.c.b16 %v1025, %v1025
    %v1090 = vpack.c.b16 %v1026, %v1026
    %v1091 = vpack.c.b16 %v1027, %v1027
    %v1092 = vpack.c.b16 %v1028, %v1028
    %v1093 = vpack.c.b16 %v1029, %v1029
    %v1094 = vpack.c.b16 %v1030, %v1030
    %v1095 = vpack.c.b16 %v1031, %v1031
    %v1096 = vpack.c.b16 %v1032, %v1032
    %v1097 = vpack.c.b16 %v1033, %v1033
    %v1098 = vpack.c.b16 %v1034, %v1034
    %v1099 = vpack.c.b16 %v1035, %v1035
    %v1100 = vpack.c.b16 %v1036, %v1036
    %v1101 = vpack.c.b16 %v1037, %v1037
    %v1102 = vpack.c.b16 %v1038, %v1038
    %v1103 = vpack.c.b16 %v1039, %v1039
    %v1104 = vpack.c.b16 %v1040, %v1040
    %1169 = vst [vmem:[%s3] sm:$0xf] %v1041
    %1170 = vst [vmem:[%s3 + $0x4] sm:$0xf] %v1042
    %1171 = vst [vmem:[%s3 + $0x8] sm:$0xf] %v1043
    %1172 = vst [vmem:[%s3 + $0xc] sm:$0xf] %v1044
    %1173 = vst [vmem:[%s3 + $0x10] sm:$0xf] %v1045
    %1174 = vst [vmem:[%s3 + $0x14] sm:$0xf] %v1046
    %1175 = vst [vmem:[%s3 + $0x18] sm:$0xf] %v1047
    %1176 = vst [vmem:[%s3 + $0x1c] sm:$0xf] %v1048
    %1177 = vst [vmem:[%s3 + $0x20] sm:$0xf] %v1049
    %1178 = vst [vmem:[%s3 + $0x24] sm:$0xf] %v1050
    %1179 = vst [vmem:[%s3 + $0x28] sm:$0xf] %v1051
    %1180 = vst [vmem:[%s3 + $0x2c] sm:$0xf] %v1052
    %1181 = vst [vmem:[%s3 + $0x30] sm:$0xf] %v1053
    %1182 = vst [vmem:[%s3 + $0x34] sm:$0xf] %v1054
    %1183 = vst [vmem:[%s3 + $0x38] sm:$0xf] %v1055
    %1184 = vst [vmem:[%s3 + $0x3c] sm:$0xf] %v1056
    %1185 = vst [vmem:[%s3 + $0x40] sm:$0xf] %v1057
    %1186 = vst [vmem:[%s3 + $0x44] sm:$0xf] %v1058
    %1187 = vst [vmem:[%s3 + $0x48] sm:$0xf] %v1059
    %1188 = vst [vmem:[%s3 + $0x4c] sm:$0xf] %v1060
    %1189 = vst [vmem:[%s3 + $0x50] sm:$0xf] %v1061
    %1190 = vst [vmem:[%s3 + $0x54] sm:$0xf] %v1062
    %1191 = vst [vmem:[%s3 + $0x58] sm:$0xf] %v1063
    %1192 = vst [vmem:[%s3 + $0x5c] sm:$0xf] %v1064
    %1193 = vst [vmem:[%s3 + $0x60] sm:$0xf] %v1065
    %1194 = vst [vmem:[%s3 + $0x64] sm:$0xf] %v1066
    %1195 = vst [vmem:[%s3 + $0x68] sm:$0xf] %v1067
    %1196 = vst [vmem:[%s3 + $0x6c] sm:$0xf] %v1068
    %1197 = vst [vmem:[%s3 + $0x70] sm:$0xf] %v1069
    %1198 = vst [vmem:[%s3 + $0x74] sm:$0xf] %v1070
    %1199 = vst [vmem:[%s3 + $0x78] sm:$0xf] %v1071
    %1200 = vst [vmem:[%s3 + $0x7c] sm:$0xf] %v1072
    %1201 = vst [vmem:[%s3 + $0x80] sm:$0xf] %v1073
    %1202 = vst [vmem:[%s3 + $0x84] sm:$0xf] %v1074
    %1203 = vst [vmem:[%s3 + $0x88] sm:$0xf] %v1075
    %1204 = vst [vmem:[%s3 + $0x8c] sm:$0xf] %v1076
    %1205 = vst [vmem:[%s3 + $0x90] sm:$0xf] %v1077
    %1206 = vst [vmem:[%s3 + $0x94] sm:$0xf] %v1078
    %1207 = vst [vmem:[%s3 + $0x98] sm:$0xf] %v1079
    %1208 = vst [vmem:[%s3 + $0x9c] sm:$0xf] %v1080
    %1209 = vst [vmem:[%s3 + $0xa0] sm:$0xf] %v1081
    %1210 = vst [vmem:[%s3 + $0xa4] sm:$0xf] %v1082
    %1211 = vst [vmem:[%s3 + $0xa8] sm:$0xf] %v1083
    %1212 = vst [vmem:[%s3 + $0xac] sm:$0xf] %v1084
    %1213 = vst [vmem:[%s3 + $0xb0] sm:$0xf] %v1085
    %1214 = vst [vmem:[%s3 + $0xb4] sm:$0xf] %v1086
    %1215 = vst [vmem:[%s3 + $0xb8] sm:$0xf] %v1087
    %1216 = vst [vmem:[%s3 + $0xbc] sm:$0xf] %v1088
    %1217 = vst [vmem:[%s3 + $0xc0] sm:$0xf] %v1089
    %1218 = vst [vmem:[%s3 + $0xc4] sm:$0xf] %v1090
    %1219 = vst [vmem:[%s3 + $0xc8] sm:$0xf] %v1091
    %1220 = vst [vmem:[%s3 + $0xcc] sm:$0xf] %v1092
    %1221 = vst [vmem:[%s3 + $0xd0] sm:$0xf] %v1093
    %1222 = vst [vmem:[%s3 + $0xd4] sm:$0xf] %v1094
    %1223 = vst [vmem:[%s3 + $0xd8] sm:$0xf] %v1095
    %1224 = vst [vmem:[%s3 + $0xdc] sm:$0xf] %v1096
    %1225 = vst [vmem:[%s3 + $0xe0] sm:$0xf] %v1097
    %1226 = vst [vmem:[%s3 + $0xe4] sm:$0xf] %v1098
    %1227 = vst [vmem:[%s3 + $0xe8] sm:$0xf] %v1099
    %1228 = vst [vmem:[%s3 + $0xec] sm:$0xf] %v1100
    %1229 = vst [vmem:[%s3 + $0xf0] sm:$0xf] %v1101
    %1230 = vst [vmem:[%s3 + $0xf4] sm:$0xf] %v1102
    %1231 = vst [vmem:[%s3 + $0xf8] sm:$0xf] %v1103
    %1232 = vst [vmem:[%s3 + $0xfc] sm:$0xf] %v1104
    // Predicated region
    $region22: #{forward.3} parent=1 // pred_check
      _
    $region23: #{forward.3} parent=1 // pred_check_branch
      %1234 = sbr.rel (0) target = $region25
    $region24: #{forward.3} parent=1 // pred_region
      _
    $region25: #{forward.3} parent=1 // pred_fallthru
      _
    // Predicated region
    $region26: #{forward.3} parent=1 // pred_check
      _
    $region27: #{forward.3} parent=1 // pred_check_branch
      %1236 = sbr.rel (0) target = $region29
    $region28: #{forward.3} parent=1 // pred_region
      _
    $region29: #{forward.3} parent=1 // pred_fallthru
      _
    %1237 = vsyncpa [#allocation3], 1
    %1238 = vsyncpa [#allocation5], 1

// kernel: forward.5
$region0: #{forward.5}
  #allocation0 [shape = 'u32[]', space=smem, size = 0x4, offset = 0x4, fixed_abs, tag = 'smem constant byte address 0x4 - core index']
  #allocation1 [shape = 'u32[144,128]{1,0:T(1,128)}', space=vmem, size = 0x12000, scoped, tag = 'internal scratch']
  %s0 = inlined_call_operand.vmem [shape: bf16[16,1024], index: 0, kind: input, shape index: {}]
  %s1 = inlined_call_operand.vmem [shape: bf16[16,1024], index: 1, kind: input, shape index: {}]
  %s2 = inlined_call_operand.vmem [shape: f32[16,128], index: 2, kind: input, shape index: {}]
  %s3 = inlined_call_operand.hbm [shape: bf16[1024,128], index: 3, kind: input, shape index: {}]
  %s4 = inlined_call_operand.hbm [shape: f32[1,128], index: 4, kind: input, shape index: {}]
  %s5 = inlined_call_operand.hbm [shape: f32[128,128], index: 5, kind: input, shape index: {}]
  %s6 = inlined_call_operand.hbm [shape: f32[1,128], index: 6, kind: input, shape index: {}]
  %s7 = inlined_call_operand.hbm [shape: bf16[1024,128], index: 7, kind: input, shape index: {}]
  %s8 = inlined_call_operand.hbm [shape: f32[1,128], index: 8, kind: input, shape index: {}]
  %s9 = inlined_call_operand.hbm [shape: f32[128,128], index: 9, kind: input, shape index: {}]
  %s10 = inlined_call_operand.hbm [shape: f32[1,128], index: 10, kind: input, shape index: {}]
  %s11 = inlined_call_operand.hbm [shape: f32[128,128], index: 11, kind: input, shape index: {}]
  %s12 = inlined_call_operand.hbm [shape: f32[1,128], index: 12, kind: input, shape index: {}]
  %s13 = inlined_call_operand.hbm [shape: f32[128,128], index: 13, kind: input, shape index: {}]
  %s14 = inlined_call_operand.hbm [shape: f32[1,128], index: 14, kind: input, shape index: {}]
  %s15 = inlined_call_operand.hbm [shape: f32[256,128], index: 15, kind: input, shape index: {}]
  %s16 = inlined_call_operand.hbm [shape: f32[1,128], index: 16, kind: input, shape index: {}]
  %s17 = inlined_call_operand.hbm [shape: f32[128,128], index: 17, kind: input, shape index: {}]
  %s18 = inlined_call_operand.hbm [shape: f32[1,128], index: 18, kind: input, shape index: {}]
  %s19 = inlined_call_operand.vmem [shape: f32[16,128], index: 19, kind: output, shape index: {0}]
  %s20 = inlined_call_operand.vmem [shape: f32[32,128], index: 20, kind: output, shape index: {1}]
  %21 = xla_tuple %s19, %s20
  %s22 = sld [smem:[#allocation0]]
  $region158: #{forward.5} parent=0
    _
  %s24 = ssub.s32 1, %s22
  %s25 = scalar_select 0, %s24, %s22
  $region1: #{forward.5} parent=0
    #allocation2 [shape = 'u8[262144]{0}', space=vmem, size = 0x40000, scoped, tag = 'input window, operand 3, single buffered']
    #allocation3 [shape = 's32[1]{0}', space=sflag, size = 0x4, scoped, tag = 'scoped memory for forward.5']
    #allocation4 [shape = 'u8[512]{0}', space=vmem, size = 0x400, scoped, tag = 'input window, operand 4, single buffered']
    #allocation5 [shape = 's32[1]{0}', space=sflag, size = 0x4, scoped, tag = 'scoped memory for forward.5']
    #allocation6 [shape = 'u8[65536]{0}', space=vmem, size = 0x10000, scoped, tag = 'input window, operand 5, single buffered']
    #allocation7 [shape = 'u8[512]{0}', space=vmem, size = 0x400, scoped, tag = 'input window, operand 6, single buffered']
    #allocation8 [shape = 's32[1]{0}', space=sflag, size = 0x4, scoped, tag = 'scoped memory for forward.5']
    #allocation9 [shape = 'u8[262144]{0}', space=vmem, size = 0x40000, scoped, tag = 'input window, operand 7, single buffered']
    #allocation10 [shape = 'u8[512]{0}', space=vmem, size = 0x400, scoped, tag = 'input window, operand 8, single buffered']
    #allocation11 [shape = 's32[1]{0}', space=sflag, size = 0x4, scoped, tag = 'scoped memory for forward.5']
    #allocation12 [shape = 'u8[65536]{0}', space=vmem, size = 0x10000, scoped, tag = 'input window, operand 9, single buffered']
    #allocation13 [shape = 'u8[512]{0}', space=vmem, size = 0x400, scoped, tag = 'input window, operand 10, single buffered']
    #allocation14 [shape = 's32[1]{0}', space=sflag, size = 0x4, scoped, tag = 'scoped memory for forward.5']
    #allocation15 [shape = 'u8[65536]{0}', space=vmem, size = 0x10000, scoped, tag = 'input window, operand 11, single buffered']
    #allocation16 [shape = 'u8[512]{0}', space=vmem, size = 0x400, scoped, tag = 'input window, operand 12, single buffered']
    #allocation17 [shape = 's32[1]{0}', space=sflag, size = 0x4, scoped, tag = 'scoped memory for forward.5']
    #allocation18 [shape = 'u8[65536]{0}', space=vmem, size = 0x10000, scoped, tag = 'input window, operand 13, single buffered']
    #allocation19 [shape = 'u8[512]{0}', space=vmem, size = 0x400, scoped, tag = 'input window, operand 14, single buffered']
    #allocation20 [shape = 's32[1]{0}', space=sflag, size = 0x4, scoped, tag = 'scoped memory for forward.5']
    #allocation21 [shape = 'u8[131072]{0}', space=vmem, size = 0x20000, scoped, tag = 'input window, operand 15, single buffered']
    #allocation22 [shape = 'u8[512]{0}', space=vmem, size = 0x400, scoped, tag = 'input window, operand 16, single buffered']
    #allocation23 [shape = 's32[1]{0}', space=sflag, size = 0x4, scoped, tag = 'scoped memory for forward.5']
    #allocation24 [shape = 'u8[65536]{0}', space=vmem, size = 0x10000, scoped, tag = 'input window, operand 17, single buffered']
    #allocation25 [shape = 'u8[512]{0}', space=vmem, size = 0x400, scoped, tag = 'input window, operand 18, single buffered']
    #allocation26 [shape = 's32[1]{0}', space=sflag, size = 0x4, scoped, tag = 'scoped memory for forward.5']
    %26 = vsyncpa [#allocation3], 0
    %27 = vsyncpa [#allocation5], 0
    %28 = vsyncpa [#allocation8], 0
    %29 = vsyncpa [#allocation11], 0
    %30 = vsyncpa [#allocation14], 0
    %31 = vsyncpa [#allocation17], 0
    %32 = vsyncpa [#allocation20], 0
    %33 = vsyncpa [#allocation23], 0
    %34 = vsyncpa [#allocation26], 0
    // Predicated region
    $region2: #{forward.5} parent=1 // pred_check
      _
    $region3: #{forward.5} parent=1 // pred_check_branch
      %36 = sbr.rel (0) target = $region5
    $region4: #{forward.5} parent=1 // pred_region
      _
    $region5: #{forward.5} parent=1 // pred_fallthru
      _
    // Predicated region
    $region6: #{forward.5} parent=1 // pred_check
      _
    $region7: #{forward.5} parent=1 // pred_check_branch
      %38 = sbr.rel (0) target = $region9
    $region8: #{forward.5} parent=1 // pred_region
      _
    $region9: #{forward.5} parent=1 // pred_fallthru
      _
    // Predicated region
    $region10: #{forward.5} parent=1 // pred_check
      _
    $region11: #{forward.5} parent=1 // pred_check_branch
      %40 = sbr.rel (0) target = $region13
    $region12: #{forward.5} parent=1 // pred_region
      _
    $region13: #{forward.5} parent=1 // pred_fallthru
      _
    // Predicated region
    $region14: #{forward.5} parent=1 // pred_check
      _
    $region15: #{forward.5} parent=1 // pred_check_branch
      %42 = sbr.rel (0) target = $region17
    $region16: #{forward.5} parent=1 // pred_region
      %s44 = ssub.s32 8192, 8192
      %45 = vsyncadd [#allocation3], %s44
      %s46 = sshll.u32 [#allocation2], 4
      %s47 = int_to_ptr.vmem [resolvable:$true] %s46
      %52 = dma.hbm_to_vmem [thread:$0]  %s3, 8192, %s47, [#allocation3], 64, 64, 4
    $region17: #{forward.5} parent=1 // pred_fallthru
      _
    // Predicated region
    $region18: #{forward.5} parent=1 // pred_check
      _
    $region19: #{forward.5} parent=1 // pred_check_branch
      %54 = sbr.rel (0) target = $region21
    $region20: #{forward.5} parent=1 // pred_region
      %s56 = ssub.s32 16, 16
      %57 = vsyncadd [#allocation5], %s56
      %s59 = sshll.u32 [#allocation4], 4
      %s60 = int_to_ptr.vmem [resolvable:$true] %s59
      %62 = dma.hbm_to_vmem [thread:$0]  %s4, 16, %s60, [#allocation5]
    $region21: #{forward.5} parent=1 // pred_fallthru
      _
    // Predicated region
    $region22: #{forward.5} parent=1 // pred_check
      _
    $region23: #{forward.5} parent=1 // pred_check_branch
      %64 = sbr.rel (0) target = $region25
    $region24: #{forward.5} parent=1 // pred_region
      %s66 = ssub.s32 2048, 2048
      %67 = vsyncadd [#allocation5], %s66
      %s68 = sshll.u32 [#allocation6], 4
      %s69 = int_to_ptr.vmem [resolvable:$true] %s68
      %74 = dma.hbm_to_vmem [thread:$0]  %s5, 2048, %s69, [#allocation5], 128, 128, 8
    $region25: #{forward.5} parent=1 // pred_fallthru
      _
    // Predicated region
    $region26: #{forward.5} parent=1 // pred_check
      _
    $region27: #{forward.5} parent=1 // pred_check_branch
      %76 = sbr.rel (0) target = $region29
    $region28: #{forward.5} parent=1 // pred_region
      %s78 = ssub.s32 16, 16
      %79 = vsyncadd [#allocation8], %s78
      %s81 = sshll.u32 [#allocation7], 4
      %s82 = int_to_ptr.vmem [resolvable:$true] %s81
      %84 = dma.hbm_to_vmem [thread:$0]  %s6, 16, %s82, [#allocation8]
    $region29: #{forward.5} parent=1 // pred_fallthru
      _
    // Predicated region
    $region30: #{forward.5} parent=1 // pred_check
      _
    $region31: #{forward.5} parent=1 // pred_check_branch
      %86 = sbr.rel (0) target = $region33
    $region32: #{forward.5} parent=1 // pred_region
      %s88 = ssub.s32 8192, 8192
      %89 = vsyncadd [#allocation8], %s88
      %s90 = sshll.u32 [#allocation9], 4
      %s91 = int_to_ptr.vmem [resolvable:$true] %s90
      %96 = dma.hbm_to_vmem [thread:$0]  %s7, 8192, %s91, [#allocation8], 64, 64, 4
    $region33: #{forward.5} parent=1 // pred_fallthru
      _
    // Predicated region
    $region34: #{forward.5} parent=1 // pred_check
      _
    $region35: #{forward.5} parent=1 // pred_check_branch
      %98 = sbr.rel (0) target = $region37
    $region36: #{forward.5} parent=1 // pred_region
      %s100 = ssub.s32 16, 16
      %101 = vsyncadd [#allocation11], %s100
      %s103 = sshll.u32 [#allocation10], 4
      %s104 = int_to_ptr.vmem [resolvable:$true] %s103
      %106 = dma.hbm_to_vmem [thread:$0]  %s8, 16, %s104, [#allocation11]
    $region37: #{forward.5} parent=1 // pred_fallthru
      _
    // Predicated region
    $region38: #{forward.5} parent=1 // pred_check
      _
    $region39: #{forward.5} parent=1 // pred_check_branch
      %108 = sbr.rel (0) target = $region41
    $region40: #{forward.5} parent=1 // pred_region
      %s110 = ssub.s32 2048, 2048
      %111 = vsyncadd [#allocation11], %s110
      %s112 = sshll.u32 [#allocation12], 4
      %s113 = int_to_ptr.vmem [resolvable:$true] %s112
      %118 = dma.hbm_to_vmem [thread:$0]  %s9, 2048, %s113, [#allocation11], 128, 128, 8
    $region41: #{forward.5} parent=1 // pred_fallthru
      _
    // Predicated region
    $region42: #{forward.5} parent=1 // pred_check
      _
    $region43: #{forward.5} parent=1 // pred_check_branch
      %120 = sbr.rel (0) target = $region45
    $region44: #{forward.5} parent=1 // pred_region
      %s122 = ssub.s32 16, 16
      %123 = vsyncadd [#allocation14], %s122
      %s125 = sshll.u32 [#allocation13], 4
      %s126 = int_to_ptr.vmem [resolvable:$true] %s125
      %128 = dma.hbm_to_vmem [thread:$0]  %s10, 16, %s126, [#allocation14]
    $region45: #{forward.5} parent=1 // pred_fallthru
      _
    // Predicated region
    $region46: #{forward.5} parent=1 // pred_check
      _
    $region47: #{forward.5} parent=1 // pred_check_branch
      %130 = sbr.rel (0) target = $region49
    $region48: #{forward.5} parent=1 // pred_region
      %s132 = ssub.s32 2048, 2048
      %133 = vsyncadd [#allocation14], %s132
      %s134 = sshll.u32 [#allocation15], 4
      %s135 = int_to_ptr.vmem [resolvable:$true] %s134
      %140 = dma.hbm_to_vmem [thread:$0]  %s11, 2048, %s135, [#allocation14], 128, 128, 8
    $region49: #{forward.5} parent=1 // pred_fallthru
      _
    // Predicated region
    $region50: #{forward.5} parent=1 // pred_check
      _
    $region51: #{forward.5} parent=1 // pred_check_branch
      %142 = sbr.rel (0) target = $region53
    $region52: #{forward.5} parent=1 // pred_region
      %s144 = ssub.s32 16, 16
      %145 = vsyncadd [#allocation17], %s144
      %s147 = sshll.u32 [#allocation16], 4
      %s148 = int_to_ptr.vmem [resolvable:$true] %s147
      %150 = dma.hbm_to_vmem [thread:$0]  %s12, 16, %s148, [#allocation17]
    $region53: #{forward.5} parent=1 // pred_fallthru
      _
    // Predicated region
    $region54: #{forward.5} parent=1 // pred_check
      _
    $region55: #{forward.5} parent=1 // pred_check_branch
      %152 = sbr.rel (0) target = $region57
    $region56: #{forward.5} parent=1 // pred_region
      %s154 = ssub.s32 2048, 2048
      %155 = vsyncadd [#allocation17], %s154
      %s156 = sshll.u32 [#allocation18], 4
      %s157 = int_to_ptr.vmem [resolvable:$true] %s156
      %162 = dma.hbm_to_vmem [thread:$0]  %s13, 2048, %s157, [#allocation17], 128, 128, 8
    $region57: #{forward.5} parent=1 // pred_fallthru
      _
    // Predicated region
    $region58: #{forward.5} parent=1 // pred_check
      _
    $region59: #{forward.5} parent=1 // pred_check_branch
      %164 = sbr.rel (0) target = $region61
    $region60: #{forward.5} parent=1 // pred_region
      %s166 = ssub.s32 16, 16
      %167 = vsyncadd [#allocation20], %s166
      %s169 = sshll.u32 [#allocation19], 4
      %s170 = int_to_ptr.vmem [resolvable:$true] %s169
      %172 = dma.hbm_to_vmem [thread:$0]  %s14, 16, %s170, [#allocation20]
    $region61: #{forward.5} parent=1 // pred_fallthru
      _
    // Predicated region
    $region62: #{forward.5} parent=1 // pred_check
      _
    $region63: #{forward.5} parent=1 // pred_check_branch
      %174 = sbr.rel (0) target = $region65
    $region64: #{forward.5} parent=1 // pred_region
      %s176 = ssub.s32 4096, 4096
      %177 = vsyncadd [#allocation20], %s176
      %s178 = sshll.u32 [#allocation21], 4
      %s179 = int_to_ptr.vmem [resolvable:$true] %s178
      %184 = dma.hbm_to_vmem [thread:$0]  %s15, 4096, %s179, [#allocation20], 128, 128, 8
    $region65: #{forward.5} parent=1 // pred_fallthru
      _
    // Predicated region
    $region66: #{forward.5} parent=1 // pred_check
      _
    $region67: #{forward.5} parent=1 // pred_check_branch
      %186 = sbr.rel (0) target = $region69
    $region68: #{forward.5} parent=1 // pred_region
      %s188 = ssub.s32 16, 16
      %189 = vsyncadd [#allocation23], %s188
      %s191 = sshll.u32 [#allocation22], 4
      %s192 = int_to_ptr.vmem [resolvable:$true] %s191
      %194 = dma.hbm_to_vmem [thread:$0]  %s16, 16, %s192, [#allocation23]
    $region69: #{forward.5} parent=1 // pred_fallthru
      _
    // Predicated region
    $region70: #{forward.5} parent=1 // pred_check
      _
    $region71: #{forward.5} parent=1 // pred_check_branch
      %196 = sbr.rel (0) target = $region73
    $region72: #{forward.5} parent=1 // pred_region
      %s198 = ssub.s32 2048, 2048
      %199 = vsyncadd [#allocation23], %s198
      %s200 = sshll.u32 [#allocation24], 4
      %s201 = int_to_ptr.vmem [resolvable:$true] %s200
      %206 = dma.hbm_to_vmem [thread:$0]  %s17, 2048, %s201, [#allocation23], 128, 128, 8
    $region73: #{forward.5} parent=1 // pred_fallthru
      _
    // Predicated region
    $region74: #{forward.5} parent=1 // pred_check
      _
    $region75: #{forward.5} parent=1 // pred_check_branch
      %208 = sbr.rel (0) target = $region77
    $region76: #{forward.5} parent=1 // pred_region
      %s210 = ssub.s32 16, 16
      %211 = vsyncadd [#allocation26], %s210
      %s213 = sshll.u32 [#allocation25], 4
      %s214 = int_to_ptr.vmem [resolvable:$true] %s213
      %216 = dma.hbm_to_vmem [thread:$0]  %s18, 16, %s214, [#allocation26]
    $region77: #{forward.5} parent=1 // pred_fallthru
      _
    // Predicated region
    $region78: #{forward.5} parent=1 // pred_check
      _
    $region79: #{forward.5} parent=1 // pred_check_branch
      %218 = sbr.rel (0) target = $region81
    $region80: #{forward.5} parent=1 // pred_region
      %219 = dma.done [#allocation3], 8192
    $region81: #{forward.5} parent=1 // pred_fallthru
      _
    // Predicated region
    $region82: #{forward.5} parent=1 // pred_check
      _
    $region83: #{forward.5} parent=1 // pred_check_branch
      %221 = sbr.rel (0) target = $region85
    $region84: #{forward.5} parent=1 // pred_region
      %222 = dma.done [#allocation5], 16
    $region85: #{forward.5} parent=1 // pred_fallthru
      _
    // Predicated region
    $region86: #{forward.5} parent=1 // pred_check
      _
    $region87: #{forward.5} parent=1 // pred_check_branch
      %224 = sbr.rel (0) target = $region89
    $region88: #{forward.5} parent=1 // pred_region
      %225 = dma.done [#allocation5], 2048
    $region89: #{forward.5} parent=1 // pred_fallthru
      _
    // Predicated region
    $region90: #{forward.5} parent=1 // pred_check
      _
    $region91: #{forward.5} parent=1 // pred_check_branch
      %227 = sbr.rel (0) target = $region93
    $region92: #{forward.5} parent=1 // pred_region
      %228 = dma.done [#allocation8], 16
    $region93: #{forward.5} parent=1 // pred_fallthru
      _
    // Predicated region
    $region94: #{forward.5} parent=1 // pred_check
      _
    $region95: #{forward.5} parent=1 // pred_check_branch
      %230 = sbr.rel (0) target = $region97
    $region96: #{forward.5} parent=1 // pred_region
      %231 = dma.done [#allocation8], 8192
    $region97: #{forward.5} parent=1 // pred_fallthru
      _
    // Predicated region
    $region98: #{forward.5} parent=1 // pred_check
      _
    $region99: #{forward.5} parent=1 // pred_check_branch
      %233 = sbr.rel (0) target = $region101
    $region100: #{forward.5} parent=1 // pred_region
      %234 = dma.done [#allocation11], 16
    $region101: #{forward.5} parent=1 // pred_fallthru
      _
    // Predicated region
    $region102: #{forward.5} parent=1 // pred_check
      _
    $region103: #{forward.5} parent=1 // pred_check_branch
      %236 = sbr.rel (0) target = $region105
    $region104: #{forward.5} parent=1 // pred_region
      %237 = dma.done [#allocation11], 2048
    $region105: #{forward.5} parent=1 // pred_fallthru
      _
    // Predicated region
    $region106: #{forward.5} parent=1 // pred_check
      _
    $region107: #{forward.5} parent=1 // pred_check_branch
      %239 = sbr.rel (0) target = $region109
    $region108: #{forward.5} parent=1 // pred_region
      %240 = dma.done [#allocation14], 16
    $region109: #{forward.5} parent=1 // pred_fallthru
      _
    // Predicated region
    $region110: #{forward.5} parent=1 // pred_check
      _
    $region111: #{forward.5} parent=1 // pred_check_branch
      %242 = sbr.rel (0) target = $region113
    $region112: #{forward.5} parent=1 // pred_region
      %243 = dma.done [#allocation14], 2048
    $region113: #{forward.5} parent=1 // pred_fallthru
      _
    // Predicated region
    $region114: #{forward.5} parent=1 // pred_check
      _
    $region115: #{forward.5} parent=1 // pred_check_branch
      %245 = sbr.rel (0) target = $region117
    $region116: #{forward.5} parent=1 // pred_region
      %246 = dma.done [#allocation17], 16
    $region117: #{forward.5} parent=1 // pred_fallthru
      _
    // Predicated region
    $region118: #{forward.5} parent=1 // pred_check
      _
    $region119: #{forward.5} parent=1 // pred_check_branch
      %248 = sbr.rel (0) target = $region121
    $region120: #{forward.5} parent=1 // pred_region
      %249 = dma.done [#allocation17], 2048
    $region121: #{forward.5} parent=1 // pred_fallthru
      _
    // Predicated region
    $region122: #{forward.5} parent=1 // pred_check
      _
    $region123: #{forward.5} parent=1 // pred_check_branch
      %251 = sbr.rel (0) target = $region125
    $region124: #{forward.5} parent=1 // pred_region
      %252 = dma.done [#allocation20], 16
    $region125: #{forward.5} parent=1 // pred_fallthru
      _
    // Predicated region
    $region126: #{forward.5} parent=1 // pred_check
      _
    $region127: #{forward.5} parent=1 // pred_check_branch
      %254 = sbr.rel (0) target = $region129
    $region128: #{forward.5} parent=1 // pred_region
      %255 = dma.done [#allocation20], 4096
    $region129: #{forward.5} parent=1 // pred_fallthru
      _
    // Predicated region
    $region130: #{forward.5} parent=1 // pred_check
      _
    $region131: #{forward.5} parent=1 // pred_check_branch
      %257 = sbr.rel (0) target = $region133
    $region132: #{forward.5} parent=1 // pred_region
      %258 = dma.done [#allocation23], 16
    $region133: #{forward.5} parent=1 // pred_fallthru
      _
    // Predicated region
    $region134: #{forward.5} parent=1 // pred_check
      _
    $region135: #{forward.5} parent=1 // pred_check_branch
      %260 = sbr.rel (0) target = $region137
    $region136: #{forward.5} parent=1 // pred_region
      %261 = dma.done [#allocation23], 2048
    $region137: #{forward.5} parent=1 // pred_fallthru
      _
    // Predicated region
    $region138: #{forward.5} parent=1 // pred_check
      _
    $region139: #{forward.5} parent=1 // pred_check_branch
      %263 = sbr.rel (0) target = $region141
    $region140: #{forward.5} parent=1 // pred_region
      %264 = dma.done [#allocation26], 16
    $region141: #{forward.5} parent=1 // pred_fallthru
      _
    %v266 = vld [vmem:[%s0] sm:$0xff]
    %v267 = vld [vmem:[%s0 + $0x8] sm:$0xff]
    %v268 = vld [vmem:[%s0 + $0x10] sm:$0xff]
    %v269 = vld [vmem:[%s0 + $0x18] sm:$0xff]
    %v270 = vld [vmem:[%s0 + $0x20] sm:$0xff]
    %v271 = vld [vmem:[%s0 + $0x28] sm:$0xff]
    %v272 = vld [vmem:[%s0 + $0x30] sm:$0xff]
    %v273 = vld [vmem:[%s0 + $0x38] sm:$0xff]
    %v274 = vld [vmem:[#allocation2] sm:$0xf]
    %v275 = vld [vmem:[#allocation2 + $0x4] sm:$0xf]
    %v276 = vld [vmem:[#allocation2 + $0x8] sm:$0xf]
    %v277 = vld [vmem:[#allocation2 + $0xc] sm:$0xf]
    %v278 = vld [vmem:[#allocation2 + $0x10] sm:$0xf]
    %v279 = vld [vmem:[#allocation2 + $0x14] sm:$0xf]
    %v280 = vld [vmem:[#allocation2 + $0x18] sm:$0xf]
    %v281 = vld [vmem:[#allocation2 + $0x1c] sm:$0xf]
    %v282 = vld [vmem:[#allocation2 + $0x20] sm:$0xf]
    %v283 = vld [vmem:[#allocation2 + $0x24] sm:$0xf]
    %v284 = vld [vmem:[#allocation2 + $0x28] sm:$0xf]
    %v285 = vld [vmem:[#allocation2 + $0x2c] sm:$0xf]
    %v286 = vld [vmem:[#allocation2 + $0x30] sm:$0xf]
    %v287 = vld [vmem:[#allocation2 + $0x34] sm:$0xf]
    %v288 = vld [vmem:[#allocation2 + $0x38] sm:$0xf]
    %v289 = vld [vmem:[#allocation2 + $0x3c] sm:$0xf]
    %v290 = vld [vmem:[#allocation2 + $0x40] sm:$0xf]
    %v291 = vld [vmem:[#allocation2 + $0x44] sm:$0xf]
    %v292 = vld [vmem:[#allocation2 + $0x48] sm:$0xf]
    %v293 = vld [vmem:[#allocation2 + $0x4c] sm:$0xf]
    %v294 = vld [vmem:[#allocation2 + $0x50] sm:$0xf]
    %v295 = vld [vmem:[#allocation2 + $0x54] sm:$0xf]
    %v296 = vld [vmem:[#allocation2 + $0x58] sm:$0xf]
    %v297 = vld [vmem:[#allocation2 + $0x5c] sm:$0xf]
    %v298 = vld [vmem:[#allocation2 + $0x60] sm:$0xf]
    %v299 = vld [vmem:[#allocation2 + $0x64] sm:$0xf]
    %v300 = vld [vmem:[#allocation2 + $0x68] sm:$0xf]
    %v301 = vld [vmem:[#allocation2 + $0x6c] sm:$0xf]
    %v302 = vld [vmem:[#allocation2 + $0x70] sm:$0xf]
    %v303 = vld [vmem:[#allocation2 + $0x74] sm:$0xf]
    %v304 = vld [vmem:[#allocation2 + $0x78] sm:$0xf]
    %v305 = vld [vmem:[#allocation2 + $0x7c] sm:$0xf]
    %v306 = vld [vmem:[#allocation2 + $0x80] sm:$0xf]
    %v307 = vld [vmem:[#allocation2 + $0x84] sm:$0xf]
    %v308 = vld [vmem:[#allocation2 + $0x88] sm:$0xf]
    %v309 = vld [vmem:[#allocation2 + $0x8c] sm:$0xf]
    %v310 = vld [vmem:[#allocation2 + $0x90] sm:$0xf]
    %v311 = vld [vmem:[#allocation2 + $0x94] sm:$0xf]
    %v312 = vld [vmem:[#allocation2 + $0x98] sm:$0xf]
    %v313 = vld [vmem:[#allocation2 + $0x9c] sm:$0xf]
    %v314 = vld [vmem:[#allocation2 + $0xa0] sm:$0xf]
    %v315 = vld [vmem:[#allocation2 + $0xa4] sm:$0xf]
    %v316 = vld [vmem:[#allocation2 + $0xa8] sm:$0xf]
    %v317 = vld [vmem:[#allocation2 + $0xac] sm:$0xf]
    %v318 = vld [vmem:[#allocation2 + $0xb0] sm:$0xf]
    %v319 = vld [vmem:[#allocation2 + $0xb4] sm:$0xf]
    %v320 = vld [vmem:[#allocation2 + $0xb8] sm:$0xf]
    %v321 = vld [vmem:[#allocation2 + $0xbc] sm:$0xf]
    %v322 = vld [vmem:[#allocation2 + $0xc0] sm:$0xf]
    %v323 = vld [vmem:[#allocation2 + $0xc4] sm:$0xf]
    %v324 = vld [vmem:[#allocation2 + $0xc8] sm:$0xf]
    %v325 = vld [vmem:[#allocation2 + $0xcc] sm:$0xf]
    %v326 = vld [vmem:[#allocation2 + $0xd0] sm:$0xf]
    %v327 = vld [vmem:[#allocation2 + $0xd4] sm:$0xf]
    %v328 = vld [vmem:[#allocation2 + $0xd8] sm:$0xf]
    %v329 = vld [vmem:[#allocation2 + $0xdc] sm:$0xf]
    %v330 = vld [vmem:[#allocation2 + $0xe0] sm:$0xf]
    %v331 = vld [vmem:[#allocation2 + $0xe4] sm:$0xf]
    %v332 = vld [vmem:[#allocation2 + $0xe8] sm:$0xf]
    %v333 = vld [vmem:[#allocation2 + $0xec] sm:$0xf]
    %v334 = vld [vmem:[#allocation2 + $0xf0] sm:$0xf]
    %v335 = vld [vmem:[#allocation2 + $0xf4] sm:$0xf]
    %v336 = vld [vmem:[#allocation2 + $0xf8] sm:$0xf]
    %v337 = vld [vmem:[#allocation2 + $0xfc] sm:$0xf]
    %v338 = vld [vmem:[#allocation2 + $0x100] sm:$0xf]
    %v339 = vld [vmem:[#allocation2 + $0x104] sm:$0xf]
    %v340 = vld [vmem:[#allocation2 + $0x108] sm:$0xf]
    %v341 = vld [vmem:[#allocation2 + $0x10c] sm:$0xf]
    %v342 = vld [vmem:[#allocation2 + $0x110] sm:$0xf]
    %v343 = vld [vmem:[#allocation2 + $0x114] sm:$0xf]
    %v344 = vld [vmem:[#allocation2 + $0x118] sm:$0xf]
    %v345 = vld [vmem:[#allocation2 + $0x11c] sm:$0xf]
    %v346 = vld [vmem:[#allocation2 + $0x120] sm:$0xf]
    %v347 = vld [vmem:[#allocation2 + $0x124] sm:$0xf]
    %v348 = vld [vmem:[#allocation2 + $0x128] sm:$0xf]
    %v349 = vld [vmem:[#allocation2 + $0x12c] sm:$0xf]
    %v350 = vld [vmem:[#allocation2 + $0x130] sm:$0xf]
    %v351 = vld [vmem:[#allocation2 + $0x134] sm:$0xf]
    %v352 = vld [vmem:[#allocation2 + $0x138] sm:$0xf]
    %v353 = vld [vmem:[#allocation2 + $0x13c] sm:$0xf]
    %v354 = vld [vmem:[#allocation2 + $0x140] sm:$0xf]
    %v355 = vld [vmem:[#allocation2 + $0x144] sm:$0xf]
    %v356 = vld [vmem:[#allocation2 + $0x148] sm:$0xf]
    %v357 = vld [vmem:[#allocation2 + $0x14c] sm:$0xf]
    %v358 = vld [vmem:[#allocation2 + $0x150] sm:$0xf]
    %v359 = vld [vmem:[#allocation2 + $0x154] sm:$0xf]
    %v360 = vld [vmem:[#allocation2 + $0x158] sm:$0xf]
    %v361 = vld [vmem:[#allocation2 + $0x15c] sm:$0xf]
    %v362 = vld [vmem:[#allocation2 + $0x160] sm:$0xf]
    %v363 = vld [vmem:[#allocation2 + $0x164] sm:$0xf]
    %v364 = vld [vmem:[#allocation2 + $0x168] sm:$0xf]
    %v365 = vld [vmem:[#allocation2 + $0x16c] sm:$0xf]
    %v366 = vld [vmem:[#allocation2 + $0x170] sm:$0xf]
    %v367 = vld [vmem:[#allocation2 + $0x174] sm:$0xf]
    %v368 = vld [vmem:[#allocation2 + $0x178] sm:$0xf]
    %v369 = vld [vmem:[#allocation2 + $0x17c] sm:$0xf]
    %v370 = vld [vmem:[#allocation2 + $0x180] sm:$0xf]
    %v371 = vld [vmem:[#allocation2 + $0x184] sm:$0xf]
    %v372 = vld [vmem:[#allocation2 + $0x188] sm:$0xf]
    %v373 = vld [vmem:[#allocation2 + $0x18c] sm:$0xf]
    %v374 = vld [vmem:[#allocation2 + $0x190] sm:$0xf]
    %v375 = vld [vmem:[#allocation2 + $0x194] sm:$0xf]
    %v376 = vld [vmem:[#allocation2 + $0x198] sm:$0xf]
    %v377 = vld [vmem:[#allocation2 + $0x19c] sm:$0xf]
    %v378 = vld [vmem:[#allocation2 + $0x1a0] sm:$0xf]
    %v379 = vld [vmem:[#allocation2 + $0x1a4] sm:$0xf]
    %v380 = vld [vmem:[#allocation2 + $0x1a8] sm:$0xf]
    %v381 = vld [vmem:[#allocation2 + $0x1ac] sm:$0xf]
    %v382 = vld [vmem:[#allocation2 + $0x1b0] sm:$0xf]
    %v383 = vld [vmem:[#allocation2 + $0x1b4] sm:$0xf]
    %v384 = vld [vmem:[#allocation2 + $0x1b8] sm:$0xf]
    %v385 = vld [vmem:[#allocation2 + $0x1bc] sm:$0xf]
    %v386 = vld [vmem:[#allocation2 + $0x1c0] sm:$0xf]
    %v387 = vld [vmem:[#allocation2 + $0x1c4] sm:$0xf]
    %v388 = vld [vmem:[#allocation2 + $0x1c8] sm:$0xf]
    %v389 = vld [vmem:[#allocation2 + $0x1cc] sm:$0xf]
    %v390 = vld [vmem:[#allocation2 + $0x1d0] sm:$0xf]
    %v391 = vld [vmem:[#allocation2 + $0x1d4] sm:$0xf]
    %v392 = vld [vmem:[#allocation2 + $0x1d8] sm:$0xf]
    %v393 = vld [vmem:[#allocation2 + $0x1dc] sm:$0xf]
    %v394 = vld [vmem:[#allocation2 + $0x1e0] sm:$0xf]
    %v395 = vld [vmem:[#allocation2 + $0x1e4] sm:$0xf]
    %v396 = vld [vmem:[#allocation2 + $0x1e8] sm:$0xf]
    %v397 = vld [vmem:[#allocation2 + $0x1ec] sm:$0xf]
    %v398 = vld [vmem:[#allocation2 + $0x1f0] sm:$0xf]
    %v399 = vld [vmem:[#allocation2 + $0x1f4] sm:$0xf]
    %v400 = vld [vmem:[#allocation2 + $0x1f8] sm:$0xf]
    %v401 = vld [vmem:[#allocation2 + $0x1fc] sm:$0xf]
    %v402 = vld [vmem:[#allocation4] sm:$0x1]
    %v404 = vlaneseq
    %v405 = vshrl.u32 %v404, 7
    %v406 = vsub.s32 0, %v405
    %v407 = vrot.slane %v402, %v406
    %v417 = vunpack.c.l.b16 %v266
    %v418 = vunpack.c.h.b16 %v266
    %v419 = vunpack.c.l.b16 %v267
    %v420 = vunpack.c.h.b16 %v267
    %v421 = vunpack.c.l.b16 %v268
    %v422 = vunpack.c.h.b16 %v268
    %v423 = vunpack.c.l.b16 %v269
    %v424 = vunpack.c.h.b16 %v269
    %v425 = vunpack.c.l.b16 %v270
    %v426 = vunpack.c.h.b16 %v270
    %v427 = vunpack.c.l.b16 %v271
    %v428 = vunpack.c.h.b16 %v271
    %v429 = vunpack.c.l.b16 %v272
    %v430 = vunpack.c.h.b16 %v272
    %v431 = vunpack.c.l.b16 %v273
    %v432 = vunpack.c.h.b16 %v273
    %v433 = vpack.c.b16 %v425, %v417
    %v434 = vpack.c.b16 %v426, %v418
    %v435 = vpack.c.b16 %v427, %v419
    %v436 = vpack.c.b16 %v428, %v420
    %v437 = vpack.c.b16 %v429, %v421
    %v438 = vpack.c.b16 %v430, %v422
    %v439 = vpack.c.b16 %v431, %v423
    %v440 = vpack.c.b16 %v432, %v424
    %v577 = vunpack.c.l.b16 %v274
    %v578 = vunpack.c.l.b16 %v275
    %v579 = vunpack.c.l.b16 %v276
    %v580 = vunpack.c.l.b16 %v277
    %v581 = vunpack.c.l.b16 %v278
    %v582 = vunpack.c.l.b16 %v279
    %v583 = vunpack.c.l.b16 %v280
    %v584 = vunpack.c.l.b16 %v281
    %v585 = vunpack.c.l.b16 %v282
    %v586 = vunpack.c.l.b16 %v283
    %v587 = vunpack.c.l.b16 %v284
    %v588 = vunpack.c.l.b16 %v285
    %v589 = vunpack.c.l.b16 %v286
    %v590 = vunpack.c.l.b16 %v287
    %v591 = vunpack.c.l.b16 %v288
    %v592 = vunpack.c.l.b16 %v289
    %v593 = vunpack.c.l.b16 %v290
    %v594 = vunpack.c.l.b16 %v291
    %v595 = vunpack.c.l.b16 %v292
    %v596 = vunpack.c.l.b16 %v293
    %v597 = vunpack.c.l.b16 %v294
    %v598 = vunpack.c.l.b16 %v295
    %v599 = vunpack.c.l.b16 %v296
    %v600 = vunpack.c.l.b16 %v297
    %v601 = vunpack.c.l.b16 %v298
    %v602 = vunpack.c.l.b16 %v299
    %v603 = vunpack.c.l.b16 %v300
    %v604 = vunpack.c.l.b16 %v301
    %v605 = vunpack.c.l.b16 %v302
    %v606 = vunpack.c.l.b16 %v303
    %v607 = vunpack.c.l.b16 %v304
    %v608 = vunpack.c.l.b16 %v305
    %v609 = vunpack.c.l.b16 %v306
    %v610 = vunpack.c.l.b16 %v307
    %v611 = vunpack.c.l.b16 %v308
    %v612 = vunpack.c.l.b16 %v309
    %v613 = vunpack.c.l.b16 %v310
    %v614 = vunpack.c.l.b16 %v311
    %v615 = vunpack.c.l.b16 %v312
    %v616 = vunpack.c.l.b16 %v313
    %v617 = vunpack.c.l.b16 %v314
    %v618 = vunpack.c.l.b16 %v315
    %v619 = vunpack.c.l.b16 %v316
    %v620 = vunpack.c.l.b16 %v317
    %v621 = vunpack.c.l.b16 %v318
    %v622 = vunpack.c.l.b16 %v319
    %v623 = vunpack.c.l.b16 %v320
    %v624 = vunpack.c.l.b16 %v321
    %v625 = vunpack.c.l.b16 %v322
    %v626 = vunpack.c.l.b16 %v323
    %v627 = vunpack.c.l.b16 %v324
    %v628 = vunpack.c.l.b16 %v325
    %v629 = vunpack.c.l.b16 %v326
    %v630 = vunpack.c.l.b16 %v327
    %v631 = vunpack.c.l.b16 %v328
    %v632 = vunpack.c.l.b16 %v329
    %v633 = vunpack.c.l.b16 %v330
    %v634 = vunpack.c.l.b16 %v331
    %v635 = vunpack.c.l.b16 %v332
    %v636 = vunpack.c.l.b16 %v333
    %v637 = vunpack.c.l.b16 %v334
    %v638 = vunpack.c.l.b16 %v335
    %v639 = vunpack.c.l.b16 %v336
    %v640 = vunpack.c.l.b16 %v337
    %v641 = vunpack.c.l.b16 %v338
    %v642 = vunpack.c.l.b16 %v339
    %v643 = vunpack.c.l.b16 %v340
    %v644 = vunpack.c.l.b16 %v341
    %v645 = vunpack.c.l.b16 %v342
    %v646 = vunpack.c.l.b16 %v343
    %v647 = vunpack.c.l.b16 %v344
    %v648 = vunpack.c.l.b16 %v345
    %v649 = vunpack.c.l.b16 %v346
    %v650 = vunpack.c.l.b16 %v347
    %v651 = vunpack.c.l.b16 %v348
    %v652 = vunpack.c.l.b16 %v349
    %v653 = vunpack.c.l.b16 %v350
    %v654 = vunpack.c.l.b16 %v351
    %v655 = vunpack.c.l.b16 %v352
    %v656 = vunpack.c.l.b16 %v353
    %v657 = vunpack.c.l.b16 %v354
    %v658 = vunpack.c.l.b16 %v355
    %v659 = vunpack.c.l.b16 %v356
    %v660 = vunpack.c.l.b16 %v357
    %v661 = vunpack.c.l.b16 %v358
    %v662 = vunpack.c.l.b16 %v359
    %v663 = vunpack.c.l.b16 %v360
    %v664 = vunpack.c.l.b16 %v361
    %v665 = vunpack.c.l.b16 %v362
    %v666 = vunpack.c.l.b16 %v363
    %v667 = vunpack.c.l.b16 %v364
    %v668 = vunpack.c.l.b16 %v365
    %v669 = vunpack.c.l.b16 %v366
    %v670 = vunpack.c.l.b16 %v367
    %v671 = vunpack.c.l.b16 %v368
    %v672 = vunpack.c.l.b16 %v369
    %v673 = vunpack.c.l.b16 %v370
    %v674 = vunpack.c.l.b16 %v371
    %v675 = vunpack.c.l.b16 %v372
    %v676 = vunpack.c.l.b16 %v373
    %v677 = vunpack.c.l.b16 %v374
    %v678 = vunpack.c.l.b16 %v375
    %v679 = vunpack.c.l.b16 %v376
    %v680 = vunpack.c.l.b16 %v377
    %v681 = vunpack.c.l.b16 %v378
    %v682 = vunpack.c.l.b16 %v379
    %v683 = vunpack.c.l.b16 %v380
    %v684 = vunpack.c.l.b16 %v381
    %v685 = vunpack.c.l.b16 %v382
    %v686 = vunpack.c.l.b16 %v383
    %v687 = vunpack.c.l.b16 %v384
    %v688 = vunpack.c.l.b16 %v385
    %v689 = vunpack.c.l.b16 %v386
    %v690 = vunpack.c.l.b16 %v387
    %v691 = vunpack.c.l.b16 %v388
    %v692 = vunpack.c.l.b16 %v389
    %v693 = vunpack.c.l.b16 %v390
    %v694 = vunpack.c.l.b16 %v391
    %v695 = vunpack.c.l.b16 %v392
    %v696 = vunpack.c.l.b16 %v393
    %v697 = vunpack.c.l.b16 %v394
    %v698 = vunpack.c.l.b16 %v395
    %v699 = vunpack.c.l.b16 %v396
    %v700 = vunpack.c.l.b16 %v397
    %v701 = vunpack.c.l.b16 %v398
    %v702 = vunpack.c.l.b16 %v399
    %v703 = vunpack.c.l.b16 %v400
    %v704 = vunpack.c.l.b16 %v401
    %v705 = vpack.c.b16 %v578, %v577
    %v706 = vpack.c.b16 %v580, %v579
    %v707 = vpack.c.b16 %v582, %v581
    %v708 = vpack.c.b16 %v584, %v583
    %v709 = vpack.c.b16 %v586, %v585
    %v710 = vpack.c.b16 %v588, %v587
    %v711 = vpack.c.b16 %v590, %v589
    %v712 = vpack.c.b16 %v592, %v591
    %v713 = vpack.c.b16 %v594, %v593
    %v714 = vpack.c.b16 %v596, %v595
    %v715 = vpack.c.b16 %v598, %v597
    %v716 = vpack.c.b16 %v600, %v599
    %v717 = vpack.c.b16 %v602, %v601
    %v718 = vpack.c.b16 %v604, %v603
    %v719 = vpack.c.b16 %v606, %v605
    %v720 = vpack.c.b16 %v608, %v607
    %v721 = vpack.c.b16 %v610, %v609
    %v722 = vpack.c.b16 %v612, %v611
    %v723 = vpack.c.b16 %v614, %v613
    %v724 = vpack.c.b16 %v616, %v615
    %v725 = vpack.c.b16 %v618, %v617
    %v726 = vpack.c.b16 %v620, %v619
    %v727 = vpack.c.b16 %v622, %v621
    %v728 = vpack.c.b16 %v624, %v623
    %v729 = vpack.c.b16 %v626, %v625
    %v730 = vpack.c.b16 %v628, %v627
    %v731 = vpack.c.b16 %v630, %v629
    %v732 = vpack.c.b16 %v632, %v631
    %v733 = vpack.c.b16 %v634, %v633
    %v734 = vpack.c.b16 %v636, %v635
    %v735 = vpack.c.b16 %v638, %v637
    %v736 = vpack.c.b16 %v640, %v639
    %v737 = vpack.c.b16 %v642, %v641
    %v738 = vpack.c.b16 %v644, %v643
    %v739 = vpack.c.b16 %v646, %v645
    %v740 = vpack.c.b16 %v648, %v647
    %v741 = vpack.c.b16 %v650, %v649
    %v742 = vpack.c.b16 %v652, %v651
    %v743 = vpack.c.b16 %v654, %v653
    %v744 = vpack.c.b16 %v656, %v655
    %v745 = vpack.c.b16 %v658, %v657
    %v746 = vpack.c.b16 %v660, %v659
    %v747 = vpack.c.b16 %v662, %v661
    %v748 = vpack.c.b16 %v664, %v663
    %v749 = vpack.c.b16 %v666, %v665
    %v750 = vpack.c.b16 %v668, %v667
    %v751 = vpack.c.b16 %v670, %v669
    %v752 = vpack.c.b16 %v672, %v671
    %v753 = vpack.c.b16 %v674, %v673
    %v754 = vpack.c.b16 %v676, %v675
    %v755 = vpack.c.b16 %v678, %v677
    %v756 = vpack.c.b16 %v680, %v679
    %v757 = vpack.c.b16 %v682, %v681
    %v758 = vpack.c.b16 %v684, %v683
    %v759 = vpack.c.b16 %v686, %v685
    %v760 = vpack.c.b16 %v688, %v687
    %v761 = vpack.c.b16 %v690, %v689
    %v762 = vpack.c.b16 %v692, %v691
    %v763 = vpack.c.b16 %v694, %v693
    %v764 = vpack.c.b16 %v696, %v695
    %v765 = vpack.c.b16 %v698, %v697
    %v766 = vpack.c.b16 %v700, %v699
    %v767 = vpack.c.b16 %v702, %v701
    %v768 = vpack.c.b16 %v704, %v703
    %833 = vmatprep.subr.bf16.mxu0 0
    %834 = vmatpush1.bf16.msra.mxu0 %v712
    %835 = vmatprep.subr.bf16.mxu0 0
    %836 = vmatpush1.bf16.msra.mxu0 %v711
    %837 = vmatprep.subr.bf16.mxu0 0
    %838 = vmatpush1.bf16.msra.mxu0 %v710
    %839 = vmatprep.subr.bf16.mxu0 0
    %840 = vmatpush1.bf16.msra.mxu0 %v709
    %841 = vmatprep.subr.bf16.mxu0 0
    %842 = vmatpush1.bf16.msra.mxu0 %v708
    %843 = vmatprep.subr.bf16.mxu0 0
    %844 = vmatpush1.bf16.msra.mxu0 %v707
    %845 = vmatprep.subr.bf16.mxu0 0
    %846 = vmatpush1.bf16.msra.mxu0 %v706
    %847 = vmatprep.subr.bf16.mxu0 0
    %848 = vmatpush1.bf16.msra.mxu0 %v705
    %849 = vmatprep.subr.bf16.mxu0 0
    %850 = vmatpush2.bf16.msra.mxu0 %v720
    %851 = vmatprep.subr.bf16.mxu0 0
    %852 = vmatpush2.bf16.msra.mxu0 %v719
    %853 = vmatprep.subr.bf16.mxu0 0
    %854 = vmatpush2.bf16.msra.mxu0 %v718
    %855 = vmatprep.subr.bf16.mxu0 0
    %856 = vmatpush2.bf16.msra.mxu0 %v717
    %857 = vmatprep.subr.bf16.mxu0 0
    %858 = vmatpush2.bf16.msra.mxu0 %v716
    %859 = vmatprep.subr.bf16.mxu0 0
    %860 = vmatpush2.bf16.msra.mxu0 %v715
    %861 = vmatprep.subr.bf16.mxu0 0
    %862 = vmatpush2.bf16.msra.mxu0 %v714
    %863 = vmatprep.subr.bf16.mxu0 0
    %864 = vmatpush2.bf16.msra.mxu0 %v713
    %865 = vmatprep.mubr.bf16.mxu0 %v434
    %866 = vmatmul.mubr.bf16.gmra.mxu0 %v433
    %v867 = vpop.f32.mrf.mxu0
    %v868 = vadd.f32 %v407, %v867
    %v869 = vpop.f32.mrf.mxu0
    %v870 = vpop.f32.mrf.mxu0
    %v871 = vadd.f32 %v407, %v870
    %v872 = vpop.f32.mrf.mxu0
    %873 = vdwg.mxu0
    %874 = vmatprep.subr.bf16.mxu0 0
    %875 = vmatpush1.bf16.msra.mxu0 %v728
    %876 = vmatprep.subr.bf16.mxu0 0
    %877 = vmatpush1.bf16.msra.mxu0 %v727
    %878 = vmatprep.subr.bf16.mxu0 0
    %879 = vmatpush1.bf16.msra.mxu0 %v726
    %880 = vmatprep.subr.bf16.mxu0 0
    %881 = vmatpush1.bf16.msra.mxu0 %v725
    %882 = vmatprep.subr.bf16.mxu0 0
    %883 = vmatpush1.bf16.msra.mxu0 %v724
    %884 = vmatprep.subr.bf16.mxu0 0
    %885 = vmatpush1.bf16.msra.mxu0 %v723
    %886 = vmatprep.subr.bf16.mxu0 0
    %887 = vmatpush1.bf16.msra.mxu0 %v722
    %888 = vmatprep.subr.bf16.mxu0 0
    %889 = vmatpush1.bf16.msra.mxu0 %v721
    %890 = vmatprep.subr.bf16.mxu0 0
    %891 = vmatpush2.bf16.msra.mxu0 %v736
    %892 = vmatprep.subr.bf16.mxu0 0
    %893 = vmatpush2.bf16.msra.mxu0 %v735
    %894 = vmatprep.subr.bf16.mxu0 0
    %895 = vmatpush2.bf16.msra.mxu0 %v734
    %896 = vmatprep.subr.bf16.mxu0 0
    %897 = vmatpush2.bf16.msra.mxu0 %v733
    %898 = vmatprep.subr.bf16.mxu0 0
    %899 = vmatpush2.bf16.msra.mxu0 %v732
    %900 = vmatprep.subr.bf16.mxu0 0
    %901 = vmatpush2.bf16.msra.mxu0 %v731
    %902 = vmatprep.subr.bf16.mxu0 0
    %903 = vmatpush2.bf16.msra.mxu0 %v730
    %904 = vmatprep.subr.bf16.mxu0 0
    %905 = vmatpush2.bf16.msra.mxu0 %v729
    %906 = vmatprep.mubr.bf16.mxu0 %v436
    %907 = vmatmul.mubr.bf16.gmra.mxu0 %v435
    %v908 = vpop.f32.mrf.mxu0
    %v909 = vadd.f32 %v868, %v908
    %v910 = vpop.f32.mrf.mxu0
    %v911 = vpop.f32.mrf.mxu0
    %v912 = vadd.f32 %v871, %v911
    %v913 = vpop.f32.mrf.mxu0
    %914 = vdwg.mxu0
    %915 = vmatprep.subr.bf16.mxu0 0
    %916 = vmatpush1.bf16.msra.mxu0 %v744
    %917 = vmatprep.subr.bf16.mxu0 0
    %918 = vmatpush1.bf16.msra.mxu0 %v743
    %919 = vmatprep.subr.bf16.mxu0 0
    %920 = vmatpush1.bf16.msra.mxu0 %v742
    %921 = vmatprep.subr.bf16.mxu0 0
    %922 = vmatpush1.bf16.msra.mxu0 %v741
    %923 = vmatprep.subr.bf16.mxu0 0
    %924 = vmatpush1.bf16.msra.mxu0 %v740
    %925 = vmatprep.subr.bf16.mxu0 0
    %926 = vmatpush1.bf16.msra.mxu0 %v739
    %927 = vmatprep.subr.bf16.mxu0 0
    %928 = vmatpush1.bf16.msra.mxu0 %v738
    %929 = vmatprep.subr.bf16.mxu0 0
    %930 = vmatpush1.bf16.msra.mxu0 %v737
    %931 = vmatprep.subr.bf16.mxu0 0
    %932 = vmatpush2.bf16.msra.mxu0 %v752
    %933 = vmatprep.subr.bf16.mxu0 0
    %934 = vmatpush2.bf16.msra.mxu0 %v751
    %935 = vmatprep.subr.bf16.mxu0 0
    %936 = vmatpush2.bf16.msra.mxu0 %v750
    %937 = vmatprep.subr.bf16.mxu0 0
    %938 = vmatpush2.bf16.msra.mxu0 %v749
    %939 = vmatprep.subr.bf16.mxu0 0
    %940 = vmatpush2.bf16.msra.mxu0 %v748
    %941 = vmatprep.subr.bf16.mxu0 0
    %942 = vmatpush2.bf16.msra.mxu0 %v747
    %943 = vmatprep.subr.bf16.mxu0 0
    %944 = vmatpush2.bf16.msra.mxu0 %v746
    %945 = vmatprep.subr.bf16.mxu0 0
    %946 = vmatpush2.bf16.msra.mxu0 %v745
    %947 = vmatprep.mubr.bf16.mxu0 %v438
    %948 = vmatmul.mubr.bf16.gmra.mxu0 %v437
    %v949 = vpop.f32.mrf.mxu0
    %v950 = vadd.f32 %v909, %v949
    %v951 = vpop.f32.mrf.mxu0
    %v952 = vpop.f32.mrf.mxu0
    %v953 = vadd.f32 %v912, %v952
    %v954 = vpop.f32.mrf.mxu0
    %955 = vdwg.mxu0
    %956 = vmatprep.subr.bf16.mxu0 0
    %957 = vmatpush1.bf16.msra.mxu0 %v760
    %958 = vmatprep.subr.bf16.mxu0 0
    %959 = vmatpush1.bf16.msra.mxu0 %v759
    %960 = vmatprep.subr.bf16.mxu0 0
    %961 = vmatpush1.bf16.msra.mxu0 %v758
    %962 = vmatprep.subr.bf16.mxu0 0
    %963 = vmatpush1.bf16.msra.mxu0 %v757
    %964 = vmatprep.subr.bf16.mxu0 0
    %965 = vmatpush1.bf16.msra.mxu0 %v756
    %966 = vmatprep.subr.bf16.mxu0 0
    %967 = vmatpush1.bf16.msra.mxu0 %v755
    %968 = vmatprep.subr.bf16.mxu0 0
    %969 = vmatpush1.bf16.msra.mxu0 %v754
    %970 = vmatprep.subr.bf16.mxu0 0
    %971 = vmatpush1.bf16.msra.mxu0 %v753
    %972 = vmatprep.subr.bf16.mxu0 0
    %973 = vmatpush2.bf16.msra.mxu0 %v768
    %974 = vmatprep.subr.bf16.mxu0 0
    %975 = vmatpush2.bf16.msra.mxu0 %v767
    %976 = vmatprep.subr.bf16.mxu0 0
    %977 = vmatpush2.bf16.msra.mxu0 %v766
    %978 = vmatprep.subr.bf16.mxu0 0
    %979 = vmatpush2.bf16.msra.mxu0 %v765
    %980 = vmatprep.subr.bf16.mxu0 0
    %981 = vmatpush2.bf16.msra.mxu0 %v764
    %982 = vmatprep.subr.bf16.mxu0 0
    %983 = vmatpush2.bf16.msra.mxu0 %v763
    %984 = vmatprep.subr.bf16.mxu0 0
    %985 = vmatpush2.bf16.msra.mxu0 %v762
    %986 = vmatprep.subr.bf16.mxu0 0
    %987 = vmatpush2.bf16.msra.mxu0 %v761
    %988 = vmatprep.mubr.bf16.mxu0 %v440
    %989 = vmatmul.mubr.bf16.gmra.mxu0 %v439
    %v990 = vpop.f32.mrf.mxu0
    %v991 = vadd.f32 %v950, %v990
    %v992 = vpop.f32.mrf.mxu0
    %v993 = vpop.f32.mrf.mxu0
    %v994 = vadd.f32 %v953, %v993
    %v995 = vpop.f32.mrf.mxu0
    %996 = vdwg.mxu0
    %v997 = vmax.f32 %v991, 0.0
    %v998 = vmax.f32 %v994, 0.0
    %v999 = vld [vmem:[#allocation6] sm:$0xff]
    %v1000 = vld [vmem:[#allocation6 + $0x8] sm:$0xff]
    %v1001 = vld [vmem:[#allocation6 + $0x10] sm:$0xff]
    %v1002 = vld [vmem:[#allocation6 + $0x18] sm:$0xff]
    %v1003 = vld [vmem:[#allocation6 + $0x20] sm:$0xff]
    %v1004 = vld [vmem:[#allocation6 + $0x28] sm:$0xff]
    %v1005 = vld [vmem:[#allocation6 + $0x30] sm:$0xff]
    %v1006 = vld [vmem:[#allocation6 + $0x38] sm:$0xff]
    %v1007 = vld [vmem:[#allocation6 + $0x40] sm:$0xff]
    %v1008 = vld [vmem:[#allocation6 + $0x48] sm:$0xff]
    %v1009 = vld [vmem:[#allocation6 + $0x50] sm:$0xff]
    %v1010 = vld [vmem:[#allocation6 + $0x58] sm:$0xff]
    %v1011 = vld [vmem:[#allocation6 + $0x60] sm:$0xff]
    %v1012 = vld [vmem:[#allocation6 + $0x68] sm:$0xff]
    %v1013 = vld [vmem:[#allocation6 + $0x70] sm:$0xff]
    %v1014 = vld [vmem:[#allocation6 + $0x78] sm:$0xff]
    %v1015 = vld [vmem:[#allocation7] sm:$0x1]
    %v1017 = vlaneseq
    %v1018 = vshrl.u32 %v1017, 7
    %v1019 = vsub.s32 0, %v1018
    %v1020 = vrot.slane %v1015, %v1019
    %1022 = vmatprep.subr.mxu0 0.0
    %1023 = vmatpush1.msra.mxu0 %v1014
    %1024 = vmatprep.subr.mxu0 0.0
    %1025 = vmatpush1.msra.mxu0 %v1013
    %1026 = vmatprep.subr.mxu0 0.0
    %1027 = vmatpush1.msra.mxu0 %v1012
    %1028 = vmatprep.subr.mxu0 0.0
    %1029 = vmatpush1.msra.mxu0 %v1011
    %1030 = vmatprep.subr.mxu0 0.0
    %1031 = vmatpush1.msra.mxu0 %v1010
    %1032 = vmatprep.subr.mxu0 0.0
    %1033 = vmatpush1.msra.mxu0 %v1009
    %1034 = vmatprep.subr.mxu0 0.0
    %1035 = vmatpush1.msra.mxu0 %v1008
    %1036 = vmatprep.subr.mxu0 0.0
    %1037 = vmatpush1.msra.mxu0 %v1007
    %1038 = vmatprep.subr.mxu0 0.0
    %1039 = vmatpush1.msra.mxu0 %v1006
    %1040 = vmatprep.subr.mxu0 0.0
    %1041 = vmatpush1.msra.mxu0 %v1005
    %1042 = vmatprep.subr.mxu0 0.0
    %1043 = vmatpush1.msra.mxu0 %v1004
    %1044 = vmatprep.subr.mxu0 0.0
    %1045 = vmatpush1.msra.mxu0 %v1003
    %1046 = vmatprep.subr.mxu0 0.0
    %1047 = vmatpush1.msra.mxu0 %v1002
    %1048 = vmatprep.subr.mxu0 0.0
    %1049 = vmatpush1.msra.mxu0 %v1001
    %1050 = vmatprep.subr.mxu0 0.0
    %1051 = vmatpush1.msra.mxu0 %v1000
    %1052 = vmatprep.subr.mxu0 0.0
    %1053 = vmatpush1.msra.mxu0 %v999
    %1054 = vmatprep.subr.mxu0 0.0
    %1055 = vmatpush2.msra.mxu0 0.0
    %1056 = vmatprep.subr.mxu0 0.0
    %1057 = vmatpush2.msra.mxu0 0.0
    %1058 = vmatprep.subr.mxu0 0.0
    %1059 = vmatpush2.msra.mxu0 0.0
    %1060 = vmatprep.subr.mxu0 0.0
    %1061 = vmatpush2.msra.mxu0 0.0
    %1062 = vmatprep.subr.mxu0 0.0
    %1063 = vmatpush2.msra.mxu0 0.0
    %1064 = vmatprep.subr.mxu0 0.0
    %1065 = vmatpush2.msra.mxu0 0.0
    %1066 = vmatprep.subr.mxu0 0.0
    %1067 = vmatpush2.msra.mxu0 0.0
    %1068 = vmatprep.subr.mxu0 0.0
    %1069 = vmatpush2.msra.mxu0 0.0
    %1070 = vmatprep.subr.mxu0 0.0
    %1071 = vmatpush2.msra.mxu0 0.0
    %1072 = vmatprep.subr.mxu0 0.0
    %1073 = vmatpush2.msra.mxu0 0.0
    %1074 = vmatprep.subr.mxu0 0.0
    %1075 = vmatpush2.msra.mxu0 0.0
    %1076 = vmatprep.subr.mxu0 0.0
    %1077 = vmatpush2.msra.mxu0 0.0
    %1078 = vmatprep.subr.mxu0 0.0
    %1079 = vmatpush2.msra.mxu0 0.0
    %1080 = vmatprep.subr.mxu0 0.0
    %1081 = vmatpush2.msra.mxu0 0.0
    %1082 = vmatprep.subr.mxu0 0.0
    %1083 = vmatpush2.msra.mxu0 0.0
    %1084 = vmatprep.subr.mxu0 0.0
    %1085 = vmatpush2.msra.mxu0 0.0
    %1086 = vmatprep.mubr.f32.mxu0 0.0
    %1087 = vmatmul.mubr.f32.gmra.mxu0 %v997
    %v1088 = vpop.f32.mrf.mxu0
    %v1089 = vadd.f32 %v1020, %v1088
    %v1090 = vpop.f32.mrf.mxu0
    %1091 = vmatprep.mubr.f32.mxu0 0.0
    %1092 = vmatmul.mubr.f32.gmra.mxu0 %v998
    %v1093 = vpop.f32.mrf.mxu0
    %v1094 = vadd.f32 %v1020, %v1093
    %v1095 = vpop.f32.mrf.mxu0
    %1096 = vdwg.mxu0
    %v1097 = vld [vmem:[%s1] sm:$0xff]
    %v1098 = vld [vmem:[%s1 + $0x8] sm:$0xff]
    %v1099 = vld [vmem:[%s1 + $0x10] sm:$0xff]
    %v1100 = vld [vmem:[%s1 + $0x18] sm:$0xff]
    %v1101 = vld [vmem:[%s1 + $0x20] sm:$0xff]
    %v1102 = vld [vmem:[%s1 + $0x28] sm:$0xff]
    %v1103 = vld [vmem:[%s1 + $0x30] sm:$0xff]
    %v1104 = vld [vmem:[%s1 + $0x38] sm:$0xff]
    %v1105 = vld [vmem:[#allocation9] sm:$0xf]
    %v1106 = vld [vmem:[#allocation9 + $0x4] sm:$0xf]
    %v1107 = vld [vmem:[#allocation9 + $0x8] sm:$0xf]
    %v1108 = vld [vmem:[#allocation9 + $0xc] sm:$0xf]
    %v1109 = vld [vmem:[#allocation9 + $0x10] sm:$0xf]
    %v1110 = vld [vmem:[#allocation9 + $0x14] sm:$0xf]
    %v1111 = vld [vmem:[#allocation9 + $0x18] sm:$0xf]
    %v1112 = vld [vmem:[#allocation9 + $0x1c] sm:$0xf]
    %v1113 = vld [vmem:[#allocation9 + $0x20] sm:$0xf]
    %v1114 = vld [vmem:[#allocation9 + $0x24] sm:$0xf]
    %v1115 = vld [vmem:[#allocation9 + $0x28] sm:$0xf]
    %v1116 = vld [vmem:[#allocation9 + $0x2c] sm:$0xf]
    %v1117 = vld [vmem:[#allocation9 + $0x30] sm:$0xf]
    %v1118 = vld [vmem:[#allocation9 + $0x34] sm:$0xf]
    %v1119 = vld [vmem:[#allocation9 + $0x38] sm:$0xf]
    %v1120 = vld [vmem:[#allocation9 + $0x3c] sm:$0xf]
    %v1121 = vld [vmem:[#allocation9 + $0x40] sm:$0xf]
    %v1122 = vld [vmem:[#allocation9 + $0x44] sm:$0xf]
    %v1123 = vld [vmem:[#allocation9 + $0x48] sm:$0xf]
    %v1124 = vld [vmem:[#allocation9 + $0x4c] sm:$0xf]
    %v1125 = vld [vmem:[#allocation9 + $0x50] sm:$0xf]
    %v1126 = vld [vmem:[#allocation9 + $0x54] sm:$0xf]
    %v1127 = vld [vmem:[#allocation9 + $0x58] sm:$0xf]
    %v1128 = vld [vmem:[#allocation9 + $0x5c] sm:$0xf]
    %v1129 = vld [vmem:[#allocation9 + $0x60] sm:$0xf]
    %v1130 = vld [vmem:[#allocation9 + $0x64] sm:$0xf]
    %v1131 = vld [vmem:[#allocation9 + $0x68] sm:$0xf]
    %v1132 = vld [vmem:[#allocation9 + $0x6c] sm:$0xf]
    %v1133 = vld [vmem:[#allocation9 + $0x70] sm:$0xf]
    %v1134 = vld [vmem:[#allocation9 + $0x74] sm:$0xf]
    %v1135 = vld [vmem:[#allocation9 + $0x78] sm:$0xf]
    %v1136 = vld [vmem:[#allocation9 + $0x7c] sm:$0xf]
    %v1137 = vld [vmem:[#allocation9 + $0x80] sm:$0xf]
    %v1138 = vld [vmem:[#allocation9 + $0x84] sm:$0xf]
    %v1139 = vld [vmem:[#allocation9 + $0x88] sm:$0xf]
    %v1140 = vld [vmem:[#allocation9 + $0x8c] sm:$0xf]
    %v1141 = vld [vmem:[#allocation9 + $0x90] sm:$0xf]
    %v1142 = vld [vmem:[#allocation9 + $0x94] sm:$0xf]
    %v1143 = vld [vmem:[#allocation9 + $0x98] sm:$0xf]
    %v1144 = vld [vmem:[#allocation9 + $0x9c] sm:$0xf]
    %v1145 = vld [vmem:[#allocation9 + $0xa0] sm:$0xf]
    %v1146 = vld [vmem:[#allocation9 + $0xa4] sm:$0xf]
    %v1147 = vld [vmem:[#allocation9 + $0xa8] sm:$0xf]
    %v1148 = vld [vmem:[#allocation9 + $0xac] sm:$0xf]
    %v1149 = vld [vmem:[#allocation9 + $0xb0] sm:$0xf]
    %v1150 = vld [vmem:[#allocation9 + $0xb4] sm:$0xf]
    %v1151 = vld [vmem:[#allocation9 + $0xb8] sm:$0xf]
    %v1152 = vld [vmem:[#allocation9 + $0xbc] sm:$0xf]
    %v1153 = vld [vmem:[#allocation9 + $0xc0] sm:$0xf]
    %v1154 = vld [vmem:[#allocation9 + $0xc4] sm:$0xf]
    %v1155 = vld [vmem:[#allocation9 + $0xc8] sm:$0xf]
    %v1156 = vld [vmem:[#allocation9 + $0xcc] sm:$0xf]
    %v1157 = vld [vmem:[#allocation9 + $0xd0] sm:$0xf]
    %v1158 = vld [vmem:[#allocation9 + $0xd4] sm:$0xf]
    %v1159 = vld [vmem:[#allocation9 + $0xd8] sm:$0xf]
    %v1160 = vld [vmem:[#allocation9 + $0xdc] sm:$0xf]
    %v1161 = vld [vmem:[#allocation9 + $0xe0] sm:$0xf]
    %v1162 = vld [vmem:[#allocation9 + $0xe4] sm:$0xf]
    %v1163 = vld [vmem:[#allocation9 + $0xe8] sm:$0xf]
    %v1164 = vld [vmem:[#allocation9 + $0xec] sm:$0xf]
    %v1165 = vld [vmem:[#allocation9 + $0xf0] sm:$0xf]
    %v1166 = vld [vmem:[#allocation9 + $0xf4] sm:$0xf]
    %v1167 = vld [vmem:[#allocation9 + $0xf8] sm:$0xf]
    %v1168 = vld [vmem:[#allocation9 + $0xfc] sm:$0xf]
    %v1169 = vld [vmem:[#allocation9 + $0x100] sm:$0xf]
    %v1170 = vld [vmem:[#allocation9 + $0x104] sm:$0xf]
    %v1171 = vld [vmem:[#allocation9 + $0x108] sm:$0xf]
    %v1172 = vld [vmem:[#allocation9 + $0x10c] sm:$0xf]
    %v1173 = vld [vmem:[#allocation9 + $0x110] sm:$0xf]
    %v1174 = vld [vmem:[#allocation9 + $0x114] sm:$0xf]
    %v1175 = vld [vmem:[#allocation9 + $0x118] sm:$0xf]
    %v1176 = vld [vmem:[#allocation9 + $0x11c] sm:$0xf]
    %v1177 = vld [vmem:[#allocation9 + $0x120] sm:$0xf]
    %v1178 = vld [vmem:[#allocation9 + $0x124] sm:$0xf]
    %v1179 = vld [vmem:[#allocation9 + $0x128] sm:$0xf]
    %v1180 = vld [vmem:[#allocation9 + $0x12c] sm:$0xf]
    %v1181 = vld [vmem:[#allocation9 + $0x130] sm:$0xf]
    %v1182 = vld [vmem:[#allocation9 + $0x134] sm:$0xf]
    %v1183 = vld [vmem:[#allocation9 + $0x138] sm:$0xf]
    %v1184 = vld [vmem:[#allocation9 + $0x13c] sm:$0xf]
    %v1185 = vld [vmem:[#allocation9 + $0x140] sm:$0xf]
    %v1186 = vld [vmem:[#allocation9 + $0x144] sm:$0xf]
    %v1187 = vld [vmem:[#allocation9 + $0x148] sm:$0xf]
    %v1188 = vld [vmem:[#allocation9 + $0x14c] sm:$0xf]
    %v1189 = vld [vmem:[#allocation9 + $0x150] sm:$0xf]
    %v1190 = vld [vmem:[#allocation9 + $0x154] sm:$0xf]
    %v1191 = vld [vmem:[#allocation9 + $0x158] sm:$0xf]
    %v1192 = vld [vmem:[#allocation9 + $0x15c] sm:$0xf]
    %v1193 = vld [vmem:[#allocation9 + $0x160] sm:$0xf]
    %v1194 = vld [vmem:[#allocation9 + $0x164] sm:$0xf]
    %v1195 = vld [vmem:[#allocation9 + $0x168] sm:$0xf]
    %v1196 = vld [vmem:[#allocation9 + $0x16c] sm:$0xf]
    %v1197 = vld [vmem:[#allocation9 + $0x170] sm:$0xf]
    %v1198 = vld [vmem:[#allocation9 + $0x174] sm:$0xf]
    %v1199 = vld [vmem:[#allocation9 + $0x178] sm:$0xf]
    %v1200 = vld [vmem:[#allocation9 + $0x17c] sm:$0xf]
    %v1201 = vld [vmem:[#allocation9 + $0x180] sm:$0xf]
    %v1202 = vld [vmem:[#allocation9 + $0x184] sm:$0xf]
    %v1203 = vld [vmem:[#allocation9 + $0x188] sm:$0xf]
    %v1204 = vld [vmem:[#allocation9 + $0x18c] sm:$0xf]
    %v1205 = vld [vmem:[#allocation9 + $0x190] sm:$0xf]
    %v1206 = vld [vmem:[#allocation9 + $0x194] sm:$0xf]
    %v1207 = vld [vmem:[#allocation9 + $0x198] sm:$0xf]
    %v1208 = vld [vmem:[#allocation9 + $0x19c] sm:$0xf]
    %v1209 = vld [vmem:[#allocation9 + $0x1a0] sm:$0xf]
    %v1210 = vld [vmem:[#allocation9 + $0x1a4] sm:$0xf]
    %v1211 = vld [vmem:[#allocation9 + $0x1a8] sm:$0xf]
    %v1212 = vld [vmem:[#allocation9 + $0x1ac] sm:$0xf]
    %v1213 = vld [vmem:[#allocation9 + $0x1b0] sm:$0xf]
    %v1214 = vld [vmem:[#allocation9 + $0x1b4] sm:$0xf]
    %v1215 = vld [vmem:[#allocation9 + $0x1b8] sm:$0xf]
    %v1216 = vld [vmem:[#allocation9 + $0x1bc] sm:$0xf]
    %v1217 = vld [vmem:[#allocation9 + $0x1c0] sm:$0xf]
    %v1218 = vld [vmem:[#allocation9 + $0x1c4] sm:$0xf]
    %v1219 = vld [vmem:[#allocation9 + $0x1c8] sm:$0xf]
    %v1220 = vld [vmem:[#allocation9 + $0x1cc] sm:$0xf]
    %v1221 = vld [vmem:[#allocation9 + $0x1d0] sm:$0xf]
    %v1222 = vld [vmem:[#allocation9 + $0x1d4] sm:$0xf]
    %v1223 = vld [vmem:[#allocation9 + $0x1d8] sm:$0xf]
    %v1224 = vld [vmem:[#allocation9 + $0x1dc] sm:$0xf]
    %v1225 = vld [vmem:[#allocation9 + $0x1e0] sm:$0xf]
    %v1226 = vld [vmem:[#allocation9 + $0x1e4] sm:$0xf]
    %v1227 = vld [vmem:[#allocation9 + $0x1e8] sm:$0xf]
    %v1228 = vld [vmem:[#allocation9 + $0x1ec] sm:$0xf]
    %v1229 = vld [vmem:[#allocation9 + $0x1f0] sm:$0xf]
    %v1230 = vld [vmem:[#allocation9 + $0x1f4] sm:$0xf]
    %v1231 = vld [vmem:[#allocation9 + $0x1f8] sm:$0xf]
    %v1232 = vld [vmem:[#allocation9 + $0x1fc] sm:$0xf]
    %v1233 = vld [vmem:[#allocation10] sm:$0x1]
    %v1235 = vlaneseq
    %v1236 = vshrl.u32 %v1235, 7
    %v1237 = vsub.s32 0, %v1236
    %v1238 = vrot.slane %v1233, %v1237
    %v1248 = vunpack.c.l.b16 %v1097
    %v1249 = vunpack.c.h.b16 %v1097
    %v1250 = vunpack.c.l.b16 %v1098
    %v1251 = vunpack.c.h.b16 %v1098
    %v1252 = vunpack.c.l.b16 %v1099
    %v1253 = vunpack.c.h.b16 %v1099
    %v1254 = vunpack.c.l.b16 %v1100
    %v1255 = vunpack.c.h.b16 %v1100
    %v1256 = vunpack.c.l.b16 %v1101
    %v1257 = vunpack.c.h.b16 %v1101
    %v1258 = vunpack.c.l.b16 %v1102
    %v1259 = vunpack.c.h.b16 %v1102
    %v1260 = vunpack.c.l.b16 %v1103
    %v1261 = vunpack.c.h.b16 %v1103
    %v1262 = vunpack.c.l.b16 %v1104
    %v1263 = vunpack.c.h.b16 %v1104
    %v1264 = vpack.c.b16 %v1256, %v1248
    %v1265 = vpack.c.b16 %v1257, %v1249
    %v1266 = vpack.c.b16 %v1258, %v1250
    %v1267 = vpack.c.b16 %v1259, %v1251
    %v1268 = vpack.c.b16 %v1260, %v1252
    %v1269 = vpack.c.b16 %v1261, %v1253
    %v1270 = vpack.c.b16 %v1262, %v1254
    %v1271 = vpack.c.b16 %v1263, %v1255
    %v1408 = vunpack.c.l.b16 %v1105
    %v1409 = vunpack.c.l.b16 %v1106
    %v1410 = vunpack.c.l.b16 %v1107
    %v1411 = vunpack.c.l.b16 %v1108
    %v1412 = vunpack.c.l.b16 %v1109
    %v1413 = vunpack.c.l.b16 %v1110
    %v1414 = vunpack.c.l.b16 %v1111
    %v1415 = vunpack.c.l.b16 %v1112
    %v1416 = vunpack.c.l.b16 %v1113
    %v1417 = vunpack.c.l.b16 %v1114
    %v1418 = vunpack.c.l.b16 %v1115
    %v1419 = vunpack.c.l.b16 %v1116
    %v1420 = vunpack.c.l.b16 %v1117
    %v1421 = vunpack.c.l.b16 %v1118
    %v1422 = vunpack.c.l.b16 %v1119
    %v1423 = vunpack.c.l.b16 %v1120
    %v1424 = vunpack.c.l.b16 %v1121
    %v1425 = vunpack.c.l.b16 %v1122
    %v1426 = vunpack.c.l.b16 %v1123
    %v1427 = vunpack.c.l.b16 %v1124
    %v1428 = vunpack.c.l.b16 %v1125
    %v1429 = vunpack.c.l.b16 %v1126
    %v1430 = vunpack.c.l.b16 %v1127
    %v1431 = vunpack.c.l.b16 %v1128
    %v1432 = vunpack.c.l.b16 %v1129
    %v1433 = vunpack.c.l.b16 %v1130
    %v1434 = vunpack.c.l.b16 %v1131
    %v1435 = vunpack.c.l.b16 %v1132
    %v1436 = vunpack.c.l.b16 %v1133
    %v1437 = vunpack.c.l.b16 %v1134
    %v1438 = vunpack.c.l.b16 %v1135
    %v1439 = vunpack.c.l.b16 %v1136
    %v1440 = vunpack.c.l.b16 %v1137
    %v1441 = vunpack.c.l.b16 %v1138
    %v1442 = vunpack.c.l.b16 %v1139
    %v1443 = vunpack.c.l.b16 %v1140
    %v1444 = vunpack.c.l.b16 %v1141
    %v1445 = vunpack.c.l.b16 %v1142
    %v1446 = vunpack.c.l.b16 %v1143
    %v1447 = vunpack.c.l.b16 %v1144
    %v1448 = vunpack.c.l.b16 %v1145
    %v1449 = vunpack.c.l.b16 %v1146
    %v1450 = vunpack.c.l.b16 %v1147
    %v1451 = vunpack.c.l.b16 %v1148
    %v1452 = vunpack.c.l.b16 %v1149
    %v1453 = vunpack.c.l.b16 %v1150
    %v1454 = vunpack.c.l.b16 %v1151
    %v1455 = vunpack.c.l.b16 %v1152
    %v1456 = vunpack.c.l.b16 %v1153
    %v1457 = vunpack.c.l.b16 %v1154
    %v1458 = vunpack.c.l.b16 %v1155
    %v1459 = vunpack.c.l.b16 %v1156
    %v1460 = vunpack.c.l.b16 %v1157
    %v1461 = vunpack.c.l.b16 %v1158
    %v1462 = vunpack.c.l.b16 %v1159
    %v1463 = vunpack.c.l.b16 %v1160
    %v1464 = vunpack.c.l.b16 %v1161
    %v1465 = vunpack.c.l.b16 %v1162
    %v1466 = vunpack.c.l.b16 %v1163
    %v1467 = vunpack.c.l.b16 %v1164
    %v1468 = vunpack.c.l.b16 %v1165
    %v1469 = vunpack.c.l.b16 %v1166
    %v1470 = vunpack.c.l.b16 %v1167
    %v1471 = vunpack.c.l.b16 %v1168
    %v1472 = vunpack.c.l.b16 %v1169
    %v1473 = vunpack.c.l.b16 %v1170
    %v1474 = vunpack.c.l.b16 %v1171
    %v1475 = vunpack.c.l.b16 %v1172
    %v1476 = vunpack.c.l.b16 %v1173
    %v1477 = vunpack.c.l.b16 %v1174
    %v1478 = vunpack.c.l.b16 %v1175
    %v1479 = vunpack.c.l.b16 %v1176
    %v1480 = vunpack.c.l.b16 %v1177
    %v1481 = vunpack.c.l.b16 %v1178
    %v1482 = vunpack.c.l.b16 %v1179
    %v1483 = vunpack.c.l.b16 %v1180
    %v1484 = vunpack.c.l.b16 %v1181
    %v1485 = vunpack.c.l.b16 %v1182
    %v1486 = vunpack.c.l.b16 %v1183
    %v1487 = vunpack.c.l.b16 %v1184
    %v1488 = vunpack.c.l.b16 %v1185
    %v1489 = vunpack.c.l.b16 %v1186
    %v1490 = vunpack.c.l.b16 %v1187
    %v1491 = vunpack.c.l.b16 %v1188
    %v1492 = vunpack.c.l.b16 %v1189
    %v1493 = vunpack.c.l.b16 %v1190
    %v1494 = vunpack.c.l.b16 %v1191
    %v1495 = vunpack.c.l.b16 %v1192
    %v1496 = vunpack.c.l.b16 %v1193
    %v1497 = vunpack.c.l.b16 %v1194
    %v1498 = vunpack.c.l.b16 %v1195
    %v1499 = vunpack.c.l.b16 %v1196
    %v1500 = vunpack.c.l.b16 %v1197
    %v1501 = vunpack.c.l.b16 %v1198
    %v1502 = vunpack.c.l.b16 %v1199
    %v1503 = vunpack.c.l.b16 %v1200
    %v1504 = vunpack.c.l.b16 %v1201
    %v1505 = vunpack.c.l.b16 %v1202
    %v1506 = vunpack.c.l.b16 %v1203
    %v1507 = vunpack.c.l.b16 %v1204
    %v1508 = vunpack.c.l.b16 %v1205
    %v1509 = vunpack.c.l.b16 %v1206
    %v1510 = vunpack.c.l.b16 %v1207
    %v1511 = vunpack.c.l.b16 %v1208
    %v1512 = vunpack.c.l.b16 %v1209
    %v1513 = vunpack.c.l.b16 %v1210
    %v1514 = vunpack.c.l.b16 %v1211
    %v1515 = vunpack.c.l.b16 %v1212
    %v1516 = vunpack.c.l.b16 %v1213
    %v1517 = vunpack.c.l.b16 %v1214
    %v1518 = vunpack.c.l.b16 %v1215
    %v1519 = vunpack.c.l.b16 %v1216
    %v1520 = vunpack.c.l.b16 %v1217
    %v1521 = vunpack.c.l.b16 %v1218
    %v1522 = vunpack.c.l.b16 %v1219
    %v1523 = vunpack.c.l.b16 %v1220
    %v1524 = vunpack.c.l.b16 %v1221
    %v1525 = vunpack.c.l.b16 %v1222
    %v1526 = vunpack.c.l.b16 %v1223
    %v1527 = vunpack.c.l.b16 %v1224
    %v1528 = vunpack.c.l.b16 %v1225
    %v1529 = vunpack.c.l.b16 %v1226
    %v1530 = vunpack.c.l.b16 %v1227
    %v1531 = vunpack.c.l.b16 %v1228
    %v1532 = vunpack.c.l.b16 %v1229
    %v1533 = vunpack.c.l.b16 %v1230
    %v1534 = vunpack.c.l.b16 %v1231
    %v1535 = vunpack.c.l.b16 %v1232
    %v1536 = vpack.c.b16 %v1409, %v1408
    %v1537 = vpack.c.b16 %v1411, %v1410
    %v1538 = vpack.c.b16 %v1413, %v1412
    %v1539 = vpack.c.b16 %v1415, %v1414
    %v1540 = vpack.c.b16 %v1417, %v1416
    %v1541 = vpack.c.b16 %v1419, %v1418
    %v1542 = vpack.c.b16 %v1421, %v1420
    %v1543 = vpack.c.b16 %v1423, %v1422
    %v1544 = vpack.c.b16 %v1425, %v1424
    %v1545 = vpack.c.b16 %v1427, %v1426
    %v1546 = vpack.c.b16 %v1429, %v1428
    %v1547 = vpack.c.b16 %v1431, %v1430
    %v1548 = vpack.c.b16 %v1433, %v1432
    %v1549 = vpack.c.b16 %v1435, %v1434
    %v1550 = vpack.c.b16 %v1437, %v1436
    %v1551 = vpack.c.b16 %v1439, %v1438
    %v1552 = vpack.c.b16 %v1441, %v1440
    %v1553 = vpack.c.b16 %v1443, %v1442
    %v1554 = vpack.c.b16 %v1445, %v1444
    %v1555 = vpack.c.b16 %v1447, %v1446
    %v1556 = vpack.c.b16 %v1449, %v1448
    %v1557 = vpack.c.b16 %v1451, %v1450
    %v1558 = vpack.c.b16 %v1453, %v1452
    %v1559 = vpack.c.b16 %v1455, %v1454
    %v1560 = vpack.c.b16 %v1457, %v1456
    %v1561 = vpack.c.b16 %v1459, %v1458
    %v1562 = vpack.c.b16 %v1461, %v1460
    %v1563 = vpack.c.b16 %v1463, %v1462
    %v1564 = vpack.c.b16 %v1465, %v1464
    %v1565 = vpack.c.b16 %v1467, %v1466
    %v1566 = vpack.c.b16 %v1469, %v1468
    %v1567 = vpack.c.b16 %v1471, %v1470
    %v1568 = vpack.c.b16 %v1473, %v1472
    %v1569 = vpack.c.b16 %v1475, %v1474
    %v1570 = vpack.c.b16 %v1477, %v1476
    %v1571 = vpack.c.b16 %v1479, %v1478
    %v1572 = vpack.c.b16 %v1481, %v1480
    %v1573 = vpack.c.b16 %v1483, %v1482
    %v1574 = vpack.c.b16 %v1485, %v1484
    %v1575 = vpack.c.b16 %v1487, %v1486
    %v1576 = vpack.c.b16 %v1489, %v1488
    %v1577 = vpack.c.b16 %v1491, %v1490
    %v1578 = vpack.c.b16 %v1493, %v1492
    %v1579 = vpack.c.b16 %v1495, %v1494
    %v1580 = vpack.c.b16 %v1497, %v1496
    %v1581 = vpack.c.b16 %v1499, %v1498
    %v1582 = vpack.c.b16 %v1501, %v1500
    %v1583 = vpack.c.b16 %v1503, %v1502
    %v1584 = vpack.c.b16 %v1505, %v1504
    %v1585 = vpack.c.b16 %v1507, %v1506
    %v1586 = vpack.c.b16 %v1509, %v1508
    %v1587 = vpack.c.b16 %v1511, %v1510
    %v1588 = vpack.c.b16 %v1513, %v1512
    %v1589 = vpack.c.b16 %v1515, %v1514
    %v1590 = vpack.c.b16 %v1517, %v1516
    %v1591 = vpack.c.b16 %v1519, %v1518
    %v1592 = vpack.c.b16 %v1521, %v1520
    %v1593 = vpack.c.b16 %v1523, %v1522
    %v1594 = vpack.c.b16 %v1525, %v1524
    %v1595 = vpack.c.b16 %v1527, %v1526
    %v1596 = vpack.c.b16 %v1529, %v1528
    %v1597 = vpack.c.b16 %v1531, %v1530
    %v1598 = vpack.c.b16 %v1533, %v1532
    %v1599 = vpack.c.b16 %v1535, %v1534
    %1664 = vmatprep.subr.bf16.mxu0 0
    %1665 = vmatpush1.bf16.msra.mxu0 %v1543
    %1666 = vmatprep.subr.bf16.mxu0 0
    %1667 = vmatpush1.bf16.msra.mxu0 %v1542
    %1668 = vmatprep.subr.bf16.mxu0 0
    %1669 = vmatpush1.bf16.msra.mxu0 %v1541
    %1670 = vmatprep.subr.bf16.mxu0 0
    %1671 = vmatpush1.bf16.msra.mxu0 %v1540
    %1672 = vmatprep.subr.bf16.mxu0 0
    %1673 = vmatpush1.bf16.msra.mxu0 %v1539
    %1674 = vmatprep.subr.bf16.mxu0 0
    %1675 = vmatpush1.bf16.msra.mxu0 %v1538
    %1676 = vmatprep.subr.bf16.mxu0 0
    %1677 = vmatpush1.bf16.msra.mxu0 %v1537
    %1678 = vmatprep.subr.bf16.mxu0 0
    %1679 = vmatpush1.bf16.msra.mxu0 %v1536
    %1680 = vmatprep.subr.bf16.mxu0 0
    %1681 = vmatpush2.bf16.msra.mxu0 %v1551
    %1682 = vmatprep.subr.bf16.mxu0 0
    %1683 = vmatpush2.bf16.msra.mxu0 %v1550
    %1684 = vmatprep.subr.bf16.mxu0 0
    %1685 = vmatpush2.bf16.msra.mxu0 %v1549
    %1686 = vmatprep.subr.bf16.mxu0 0
    %1687 = vmatpush2.bf16.msra.mxu0 %v1548
    %1688 = vmatprep.subr.bf16.mxu0 0
    %1689 = vmatpush2.bf16.msra.mxu0 %v1547
    %1690 = vmatprep.subr.bf16.mxu0 0
    %1691 = vmatpush2.bf16.msra.mxu0 %v1546
    %1692 = vmatprep.subr.bf16.mxu0 0
    %1693 = vmatpush2.bf16.msra.mxu0 %v1545
    %1694 = vmatprep.subr.bf16.mxu0 0
    %1695 = vmatpush2.bf16.msra.mxu0 %v1544
    %1696 = vmatprep.mubr.bf16.mxu0 %v1265
    %1697 = vmatmul.mubr.bf16.gmra.mxu0 %v1264
    %v1698 = vpop.f32.mrf.mxu0
    %v1699 = vadd.f32 %v1238, %v1698
    %v1700 = vpop.f32.mrf.mxu0
    %v1701 = vpop.f32.mrf.mxu0
    %v1702 = vadd.f32 %v1238, %v1701
    %v1703 = vpop.f32.mrf.mxu0
    %1704 = vdwg.mxu0
    %1705 = vmatprep.subr.bf16.mxu0 0
    %1706 = vmatpush1.bf16.msra.mxu0 %v1559
    %1707 = vmatprep.subr.bf16.mxu0 0
    %1708 = vmatpush1.bf16.msra.mxu0 %v1558
    %1709 = vmatprep.subr.bf16.mxu0 0
    %1710 = vmatpush1.bf16.msra.mxu0 %v1557
    %1711 = vmatprep.subr.bf16.mxu0 0
    %1712 = vmatpush1.bf16.msra.mxu0 %v1556
    %1713 = vmatprep.subr.bf16.mxu0 0
    %1714 = vmatpush1.bf16.msra.mxu0 %v1555
    %1715 = vmatprep.subr.bf16.mxu0 0
    %1716 = vmatpush1.bf16.msra.mxu0 %v1554
    %1717 = vmatprep.subr.bf16.mxu0 0
    %1718 = vmatpush1.bf16.msra.mxu0 %v1553
    %1719 = vmatprep.subr.bf16.mxu0 0
    %1720 = vmatpush1.bf16.msra.mxu0 %v1552
    %1721 = vmatprep.subr.bf16.mxu0 0
    %1722 = vmatpush2.bf16.msra.mxu0 %v1567
    %1723 = vmatprep.subr.bf16.mxu0 0
    %1724 = vmatpush2.bf16.msra.mxu0 %v1566
    %1725 = vmatprep.subr.bf16.mxu0 0
    %1726 = vmatpush2.bf16.msra.mxu0 %v1565
    %1727 = vmatprep.subr.bf16.mxu0 0
    %1728 = vmatpush2.bf16.msra.mxu0 %v1564
    %1729 = vmatprep.subr.bf16.mxu0 0
    %1730 = vmatpush2.bf16.msra.mxu0 %v1563
    %1731 = vmatprep.subr.bf16.mxu0 0
    %1732 = vmatpush2.bf16.msra.mxu0 %v1562
    %1733 = vmatprep.subr.bf16.mxu0 0
    %1734 = vmatpush2.bf16.msra.mxu0 %v1561
    %1735 = vmatprep.subr.bf16.mxu0 0
    %1736 = vmatpush2.bf16.msra.mxu0 %v1560
    %1737 = vmatprep.mubr.bf16.mxu0 %v1267
    %1738 = vmatmul.mubr.bf16.gmra.mxu0 %v1266
    %v1739 = vpop.f32.mrf.mxu0
    %v1740 = vadd.f32 %v1699, %v1739
    %v1741 = vpop.f32.mrf.mxu0
    %v1742 = vpop.f32.mrf.mxu0
    %v1743 = vadd.f32 %v1702, %v1742
    %v1744 = vpop.f32.mrf.mxu0
    %1745 = vdwg.mxu0
    %1746 = vmatprep.subr.bf16.mxu0 0
    %1747 = vmatpush1.bf16.msra.mxu0 %v1575
    %1748 = vmatprep.subr.bf16.mxu0 0
    %1749 = vmatpush1.bf16.msra.mxu0 %v1574
    %1750 = vmatprep.subr.bf16.mxu0 0
    %1751 = vmatpush1.bf16.msra.mxu0 %v1573
    %1752 = vmatprep.subr.bf16.mxu0 0
    %1753 = vmatpush1.bf16.msra.mxu0 %v1572
    %1754 = vmatprep.subr.bf16.mxu0 0
    %1755 = vmatpush1.bf16.msra.mxu0 %v1571
    %1756 = vmatprep.subr.bf16.mxu0 0
    %1757 = vmatpush1.bf16.msra.mxu0 %v1570
    %1758 = vmatprep.subr.bf16.mxu0 0
    %1759 = vmatpush1.bf16.msra.mxu0 %v1569
    %1760 = vmatprep.subr.bf16.mxu0 0
    %1761 = vmatpush1.bf16.msra.mxu0 %v1568
    %1762 = vmatprep.subr.bf16.mxu0 0
    %1763 = vmatpush2.bf16.msra.mxu0 %v1583
    %1764 = vmatprep.subr.bf16.mxu0 0
    %1765 = vmatpush2.bf16.msra.mxu0 %v1582
    %1766 = vmatprep.subr.bf16.mxu0 0
    %1767 = vmatpush2.bf16.msra.mxu0 %v1581
    %1768 = vmatprep.subr.bf16.mxu0 0
    %1769 = vmatpush2.bf16.msra.mxu0 %v1580
    %1770 = vmatprep.subr.bf16.mxu0 0
    %1771 = vmatpush2.bf16.msra.mxu0 %v1579
    %1772 = vmatprep.subr.bf16.mxu0 0
    %1773 = vmatpush2.bf16.msra.mxu0 %v1578
    %1774 = vmatprep.subr.bf16.mxu0 0
    %1775 = vmatpush2.bf16.msra.mxu0 %v1577
    %1776 = vmatprep.subr.bf16.mxu0 0
    %1777 = vmatpush2.bf16.msra.mxu0 %v1576
    %1778 = vmatprep.mubr.bf16.mxu0 %v1269
    %1779 = vmatmul.mubr.bf16.gmra.mxu0 %v1268
    %v1780 = vpop.f32.mrf.mxu0
    %v1781 = vadd.f32 %v1740, %v1780
    %v1782 = vpop.f32.mrf.mxu0
    %v1783 = vpop.f32.mrf.mxu0
    %v1784 = vadd.f32 %v1743, %v1783
    %v1785 = vpop.f32.mrf.mxu0
    %1786 = vdwg.mxu0
    %1787 = vmatprep.subr.bf16.mxu0 0
    %1788 = vmatpush1.bf16.msra.mxu0 %v1591
    %1789 = vmatprep.subr.bf16.mxu0 0
    %1790 = vmatpush1.bf16.msra.mxu0 %v1590
    %1791 = vmatprep.subr.bf16.mxu0 0
    %1792 = vmatpush1.bf16.msra.mxu0 %v1589
    %1793 = vmatprep.subr.bf16.mxu0 0
    %1794 = vmatpush1.bf16.msra.mxu0 %v1588
    %1795 = vmatprep.subr.bf16.mxu0 0
    %1796 = vmatpush1.bf16.msra.mxu0 %v1587
    %1797 = vmatprep.subr.bf16.mxu0 0
    %1798 = vmatpush1.bf16.msra.mxu0 %v1586
    %1799 = vmatprep.subr.bf16.mxu0 0
    %1800 = vmatpush1.bf16.msra.mxu0 %v1585
    %1801 = vmatprep.subr.bf16.mxu0 0
    %1802 = vmatpush1.bf16.msra.mxu0 %v1584
    %1803 = vmatprep.subr.bf16.mxu0 0
    %1804 = vmatpush2.bf16.msra.mxu0 %v1599
    %1805 = vmatprep.subr.bf16.mxu0 0
    %1806 = vmatpush2.bf16.msra.mxu0 %v1598
    %1807 = vmatprep.subr.bf16.mxu0 0
    %1808 = vmatpush2.bf16.msra.mxu0 %v1597
    %1809 = vmatprep.subr.bf16.mxu0 0
    %1810 = vmatpush2.bf16.msra.mxu0 %v1596
    %1811 = vmatprep.subr.bf16.mxu0 0
    %1812 = vmatpush2.bf16.msra.mxu0 %v1595
    %1813 = vmatprep.subr.bf16.mxu0 0
    %1814 = vmatpush2.bf16.msra.mxu0 %v1594
    %1815 = vmatprep.subr.bf16.mxu0 0
    %1816 = vmatpush2.bf16.msra.mxu0 %v1593
    %1817 = vmatprep.subr.bf16.mxu0 0
    %1818 = vmatpush2.bf16.msra.mxu0 %v1592
    %1819 = vmatprep.mubr.bf16.mxu0 %v1271
    %1820 = vmatmul.mubr.bf16.gmra.mxu0 %v1270
    %v1821 = vpop.f32.mrf.mxu0
    %v1822 = vadd.f32 %v1781, %v1821
    %v1823 = vpop.f32.mrf.mxu0
    %v1824 = vpop.f32.mrf.mxu0
    %v1825 = vadd.f32 %v1784, %v1824
    %v1826 = vpop.f32.mrf.mxu0
    %1827 = vdwg.mxu0
    %v1828 = vmax.f32 %v1822, 0.0
    %v1829 = vmax.f32 %v1825, 0.0
    %v1830 = vld [vmem:[#allocation12] sm:$0xff]
    %v1831 = vld [vmem:[#allocation12 + $0x8] sm:$0xff]
    %v1832 = vld [vmem:[#allocation12 + $0x10] sm:$0xff]
    %v1833 = vld [vmem:[#allocation12 + $0x18] sm:$0xff]
    %v1834 = vld [vmem:[#allocation12 + $0x20] sm:$0xff]
    %v1835 = vld [vmem:[#allocation12 + $0x28] sm:$0xff]
    %v1836 = vld [vmem:[#allocation12 + $0x30] sm:$0xff]
    %v1837 = vld [vmem:[#allocation12 + $0x38] sm:$0xff]
    %v1838 = vld [vmem:[#allocation12 + $0x40] sm:$0xff]
    %v1839 = vld [vmem:[#allocation12 + $0x48] sm:$0xff]
    %v1840 = vld [vmem:[#allocation12 + $0x50] sm:$0xff]
    %v1841 = vld [vmem:[#allocation12 + $0x58] sm:$0xff]
    %v1842 = vld [vmem:[#allocation12 + $0x60] sm:$0xff]
    %v1843 = vld [vmem:[#allocation12 + $0x68] sm:$0xff]
    %v1844 = vld [vmem:[#allocation12 + $0x70] sm:$0xff]
    %v1845 = vld [vmem:[#allocation12 + $0x78] sm:$0xff]
    %v1846 = vld [vmem:[#allocation13] sm:$0x1]
    %v1848 = vlaneseq
    %v1849 = vshrl.u32 %v1848, 7
    %v1850 = vsub.s32 0, %v1849
    %v1851 = vrot.slane %v1846, %v1850
    %1853 = vmatprep.subr.mxu0 0.0
    %1854 = vmatpush1.msra.mxu0 %v1845
    %1855 = vmatprep.subr.mxu0 0.0
    %1856 = vmatpush1.msra.mxu0 %v1844
    %1857 = vmatprep.subr.mxu0 0.0
    %1858 = vmatpush1.msra.mxu0 %v1843
    %1859 = vmatprep.subr.mxu0 0.0
    %1860 = vmatpush1.msra.mxu0 %v1842
    %1861 = vmatprep.subr.mxu0 0.0
    %1862 = vmatpush1.msra.mxu0 %v1841
    %1863 = vmatprep.subr.mxu0 0.0
    %1864 = vmatpush1.msra.mxu0 %v1840
    %1865 = vmatprep.subr.mxu0 0.0
    %1866 = vmatpush1.msra.mxu0 %v1839
    %1867 = vmatprep.subr.mxu0 0.0
    %1868 = vmatpush1.msra.mxu0 %v1838
    %1869 = vmatprep.subr.mxu0 0.0
    %1870 = vmatpush1.msra.mxu0 %v1837
    %1871 = vmatprep.subr.mxu0 0.0
    %1872 = vmatpush1.msra.mxu0 %v1836
    %1873 = vmatprep.subr.mxu0 0.0
    %1874 = vmatpush1.msra.mxu0 %v1835
    %1875 = vmatprep.subr.mxu0 0.0
    %1876 = vmatpush1.msra.mxu0 %v1834
    %1877 = vmatprep.subr.mxu0 0.0
    %1878 = vmatpush1.msra.mxu0 %v1833
    %1879 = vmatprep.subr.mxu0 0.0
    %1880 = vmatpush1.msra.mxu0 %v1832
    %1881 = vmatprep.subr.mxu0 0.0
    %1882 = vmatpush1.msra.mxu0 %v1831
    %1883 = vmatprep.subr.mxu0 0.0
    %1884 = vmatpush1.msra.mxu0 %v1830
    %1885 = vmatprep.subr.mxu0 0.0
    %1886 = vmatpush2.msra.mxu0 0.0
    %1887 = vmatprep.subr.mxu0 0.0
    %1888 = vmatpush2.msra.mxu0 0.0
    %1889 = vmatprep.subr.mxu0 0.0
    %1890 = vmatpush2.msra.mxu0 0.0
    %1891 = vmatprep.subr.mxu0 0.0
    %1892 = vmatpush2.msra.mxu0 0.0
    %1893 = vmatprep.subr.mxu0 0.0
    %1894 = vmatpush2.msra.mxu0 0.0
    %1895 = vmatprep.subr.mxu0 0.0
    %1896 = vmatpush2.msra.mxu0 0.0
    %1897 = vmatprep.subr.mxu0 0.0
    %1898 = vmatpush2.msra.mxu0 0.0
    %1899 = vmatprep.subr.mxu0 0.0
    %1900 = vmatpush2.msra.mxu0 0.0
    %1901 = vmatprep.subr.mxu0 0.0
    %1902 = vmatpush2.msra.mxu0 0.0
    %1903 = vmatprep.subr.mxu0 0.0
    %1904 = vmatpush2.msra.mxu0 0.0
    %1905 = vmatprep.subr.mxu0 0.0
    %1906 = vmatpush2.msra.mxu0 0.0
    %1907 = vmatprep.subr.mxu0 0.0
    %1908 = vmatpush2.msra.mxu0 0.0
    %1909 = vmatprep.subr.mxu0 0.0
    %1910 = vmatpush2.msra.mxu0 0.0
    %1911 = vmatprep.subr.mxu0 0.0
    %1912 = vmatpush2.msra.mxu0 0.0
    %1913 = vmatprep.subr.mxu0 0.0
    %1914 = vmatpush2.msra.mxu0 0.0
    %1915 = vmatprep.subr.mxu0 0.0
    %1916 = vmatpush2.msra.mxu0 0.0
    %1917 = vmatprep.mubr.f32.mxu0 0.0
    %1918 = vmatmul.mubr.f32.gmra.mxu0 %v1828
    %v1919 = vpop.f32.mrf.mxu0
    %v1920 = vadd.f32 %v1851, %v1919
    %v1921 = vpop.f32.mrf.mxu0
    %1922 = vmatprep.mubr.f32.mxu0 0.0
    %1923 = vmatmul.mubr.f32.gmra.mxu0 %v1829
    %v1924 = vpop.f32.mrf.mxu0
    %v1925 = vadd.f32 %v1851, %v1924
    %v1926 = vpop.f32.mrf.mxu0
    %1927 = vdwg.mxu0
    %v1928 = vld [vmem:[#allocation15] sm:$0xff]
    %v1929 = vld [vmem:[#allocation15 + $0x8] sm:$0xff]
    %v1930 = vld [vmem:[#allocation15 + $0x10] sm:$0xff]
    %v1931 = vld [vmem:[#allocation15 + $0x18] sm:$0xff]
    %v1932 = vld [vmem:[#allocation15 + $0x20] sm:$0xff]
    %v1933 = vld [vmem:[#allocation15 + $0x28] sm:$0xff]
    %v1934 = vld [vmem:[#allocation15 + $0x30] sm:$0xff]
    %v1935 = vld [vmem:[#allocation15 + $0x38] sm:$0xff]
    %v1936 = vld [vmem:[#allocation15 + $0x40] sm:$0xff]
    %v1937 = vld [vmem:[#allocation15 + $0x48] sm:$0xff]
    %v1938 = vld [vmem:[#allocation15 + $0x50] sm:$0xff]
    %v1939 = vld [vmem:[#allocation15 + $0x58] sm:$0xff]
    %v1940 = vld [vmem:[#allocation15 + $0x60] sm:$0xff]
    %v1941 = vld [vmem:[#allocation15 + $0x68] sm:$0xff]
    %v1942 = vld [vmem:[#allocation15 + $0x70] sm:$0xff]
    %v1943 = vld [vmem:[#allocation15 + $0x78] sm:$0xff]
    %v1944 = vld [vmem:[#allocation16] sm:$0x1]
    %v1946 = vlaneseq
    %v1947 = vshrl.u32 %v1946, 7
    %v1948 = vsub.s32 0, %v1947
    %v1949 = vrot.slane %v1944, %v1948
    %1951 = vmatprep.subr.mxu0 0.0
    %1952 = vmatpush1.msra.mxu0 %v1943
    %1953 = vmatprep.subr.mxu0 0.0
    %1954 = vmatpush1.msra.mxu0 %v1942
    %1955 = vmatprep.subr.mxu0 0.0
    %1956 = vmatpush1.msra.mxu0 %v1941
    %1957 = vmatprep.subr.mxu0 0.0
    %1958 = vmatpush1.msra.mxu0 %v1940
    %1959 = vmatprep.subr.mxu0 0.0
    %1960 = vmatpush1.msra.mxu0 %v1939
    %1961 = vmatprep.subr.mxu0 0.0
    %1962 = vmatpush1.msra.mxu0 %v1938
    %1963 = vmatprep.subr.mxu0 0.0
    %1964 = vmatpush1.msra.mxu0 %v1937
    %1965 = vmatprep.subr.mxu0 0.0
    %1966 = vmatpush1.msra.mxu0 %v1936
    %1967 = vmatprep.subr.mxu0 0.0
    %1968 = vmatpush1.msra.mxu0 %v1935
    %1969 = vmatprep.subr.mxu0 0.0
    %1970 = vmatpush1.msra.mxu0 %v1934
    %1971 = vmatprep.subr.mxu0 0.0
    %1972 = vmatpush1.msra.mxu0 %v1933
    %1973 = vmatprep.subr.mxu0 0.0
    %1974 = vmatpush1.msra.mxu0 %v1932
    %1975 = vmatprep.subr.mxu0 0.0
    %1976 = vmatpush1.msra.mxu0 %v1931
    %1977 = vmatprep.subr.mxu0 0.0
    %1978 = vmatpush1.msra.mxu0 %v1930
    %1979 = vmatprep.subr.mxu0 0.0
    %1980 = vmatpush1.msra.mxu0 %v1929
    %1981 = vmatprep.subr.mxu0 0.0
    %1982 = vmatpush1.msra.mxu0 %v1928
    %1983 = vmatprep.subr.mxu0 0.0
    %1984 = vmatpush2.msra.mxu0 0.0
    %1985 = vmatprep.subr.mxu0 0.0
    %1986 = vmatpush2.msra.mxu0 0.0
    %1987 = vmatprep.subr.mxu0 0.0
    %1988 = vmatpush2.msra.mxu0 0.0
    %1989 = vmatprep.subr.mxu0 0.0
    %1990 = vmatpush2.msra.mxu0 0.0
    %1991 = vmatprep.subr.mxu0 0.0
    %1992 = vmatpush2.msra.mxu0 0.0
    %1993 = vmatprep.subr.mxu0 0.0
    %1994 = vmatpush2.msra.mxu0 0.0
    %1995 = vmatprep.subr.mxu0 0.0
    %1996 = vmatpush2.msra.mxu0 0.0
    %1997 = vmatprep.subr.mxu0 0.0
    %1998 = vmatpush2.msra.mxu0 0.0
    %1999 = vmatprep.subr.mxu0 0.0
    %2000 = vmatpush2.msra.mxu0 0.0
    %2001 = vmatprep.subr.mxu0 0.0
    %2002 = vmatpush2.msra.mxu0 0.0
    %2003 = vmatprep.subr.mxu0 0.0
    %2004 = vmatpush2.msra.mxu0 0.0
    %2005 = vmatprep.subr.mxu0 0.0
    %2006 = vmatpush2.msra.mxu0 0.0
    %2007 = vmatprep.subr.mxu0 0.0
    %2008 = vmatpush2.msra.mxu0 0.0
    %2009 = vmatprep.subr.mxu0 0.0
    %2010 = vmatpush2.msra.mxu0 0.0
    %2011 = vmatprep.subr.mxu0 0.0
    %2012 = vmatpush2.msra.mxu0 0.0
    %2013 = vmatprep.subr.mxu0 0.0
    %2014 = vmatpush2.msra.mxu0 0.0
    %2015 = vmatprep.mubr.f32.mxu0 0.0
    %2016 = vmatmul.mubr.f32.gmra.mxu0 %v1089
    %v2017 = vpop.f32.mrf.mxu0
    %v2018 = vadd.f32 %v1949, %v2017
    %v2019 = vpop.f32.mrf.mxu0
    %2020 = vmatprep.mubr.f32.mxu0 0.0
    %2021 = vmatmul.mubr.f32.gmra.mxu0 %v1094
    %v2022 = vpop.f32.mrf.mxu0
    %v2023 = vadd.f32 %v1949, %v2022
    %v2024 = vpop.f32.mrf.mxu0
    %2025 = vdwg.mxu0
    %v2026 = vld [vmem:[#allocation18] sm:$0xff]
    %v2027 = vld [vmem:[#allocation18 + $0x8] sm:$0xff]
    %v2028 = vld [vmem:[#allocation18 + $0x10] sm:$0xff]
    %v2029 = vld [vmem:[#allocation18 + $0x18] sm:$0xff]
    %v2030 = vld [vmem:[#allocation18 + $0x20] sm:$0xff]
    %v2031 = vld [vmem:[#allocation18 + $0x28] sm:$0xff]
    %v2032 = vld [vmem:[#allocation18 + $0x30] sm:$0xff]
    %v2033 = vld [vmem:[#allocation18 + $0x38] sm:$0xff]
    %v2034 = vld [vmem:[#allocation18 + $0x40] sm:$0xff]
    %v2035 = vld [vmem:[#allocation18 + $0x48] sm:$0xff]
    %v2036 = vld [vmem:[#allocation18 + $0x50] sm:$0xff]
    %v2037 = vld [vmem:[#allocation18 + $0x58] sm:$0xff]
    %v2038 = vld [vmem:[#allocation18 + $0x60] sm:$0xff]
    %v2039 = vld [vmem:[#allocation18 + $0x68] sm:$0xff]
    %v2040 = vld [vmem:[#allocation18 + $0x70] sm:$0xff]
    %v2041 = vld [vmem:[#allocation18 + $0x78] sm:$0xff]
    %v2042 = vld [vmem:[#allocation19] sm:$0x1]
    %v2044 = vlaneseq
    %v2045 = vshrl.u32 %v2044, 7
    %v2046 = vsub.s32 0, %v2045
    %v2047 = vrot.slane %v2042, %v2046
    %2049 = vmatprep.subr.mxu0 0.0
    %2050 = vmatpush1.msra.mxu0 %v2041
    %2051 = vmatprep.subr.mxu0 0.0
    %2052 = vmatpush1.msra.mxu0 %v2040
    %2053 = vmatprep.subr.mxu0 0.0
    %2054 = vmatpush1.msra.mxu0 %v2039
    %2055 = vmatprep.subr.mxu0 0.0
    %2056 = vmatpush1.msra.mxu0 %v2038
    %2057 = vmatprep.subr.mxu0 0.0
    %2058 = vmatpush1.msra.mxu0 %v2037
    %2059 = vmatprep.subr.mxu0 0.0
    %2060 = vmatpush1.msra.mxu0 %v2036
    %2061 = vmatprep.subr.mxu0 0.0
    %2062 = vmatpush1.msra.mxu0 %v2035
    %2063 = vmatprep.subr.mxu0 0.0
    %2064 = vmatpush1.msra.mxu0 %v2034
    %2065 = vmatprep.subr.mxu0 0.0
    %2066 = vmatpush1.msra.mxu0 %v2033
    %2067 = vmatprep.subr.mxu0 0.0
    %2068 = vmatpush1.msra.mxu0 %v2032
    %2069 = vmatprep.subr.mxu0 0.0
    %2070 = vmatpush1.msra.mxu0 %v2031
    %2071 = vmatprep.subr.mxu0 0.0
    %2072 = vmatpush1.msra.mxu0 %v2030
    %2073 = vmatprep.subr.mxu0 0.0
    %2074 = vmatpush1.msra.mxu0 %v2029
    %2075 = vmatprep.subr.mxu0 0.0
    %2076 = vmatpush1.msra.mxu0 %v2028
    %2077 = vmatprep.subr.mxu0 0.0
    %2078 = vmatpush1.msra.mxu0 %v2027
    %2079 = vmatprep.subr.mxu0 0.0
    %2080 = vmatpush1.msra.mxu0 %v2026
    %2081 = vmatprep.subr.mxu0 0.0
    %2082 = vmatpush2.msra.mxu0 0.0
    %2083 = vmatprep.subr.mxu0 0.0
    %2084 = vmatpush2.msra.mxu0 0.0
    %2085 = vmatprep.subr.mxu0 0.0
    %2086 = vmatpush2.msra.mxu0 0.0
    %2087 = vmatprep.subr.mxu0 0.0
    %2088 = vmatpush2.msra.mxu0 0.0
    %2089 = vmatprep.subr.mxu0 0.0
    %2090 = vmatpush2.msra.mxu0 0.0
    %2091 = vmatprep.subr.mxu0 0.0
    %2092 = vmatpush2.msra.mxu0 0.0
    %2093 = vmatprep.subr.mxu0 0.0
    %2094 = vmatpush2.msra.mxu0 0.0
    %2095 = vmatprep.subr.mxu0 0.0
    %2096 = vmatpush2.msra.mxu0 0.0
    %2097 = vmatprep.subr.mxu0 0.0
    %2098 = vmatpush2.msra.mxu0 0.0
    %2099 = vmatprep.subr.mxu0 0.0
    %2100 = vmatpush2.msra.mxu0 0.0
    %2101 = vmatprep.subr.mxu0 0.0
    %2102 = vmatpush2.msra.mxu0 0.0
    %2103 = vmatprep.subr.mxu0 0.0
    %2104 = vmatpush2.msra.mxu0 0.0
    %2105 = vmatprep.subr.mxu0 0.0
    %2106 = vmatpush2.msra.mxu0 0.0
    %2107 = vmatprep.subr.mxu0 0.0
    %2108 = vmatpush2.msra.mxu0 0.0
    %2109 = vmatprep.subr.mxu0 0.0
    %2110 = vmatpush2.msra.mxu0 0.0
    %2111 = vmatprep.subr.mxu0 0.0
    %2112 = vmatpush2.msra.mxu0 0.0
    %2113 = vmatprep.mubr.f32.mxu0 0.0
    %2114 = vmatmul.mubr.f32.gmra.mxu0 %v1920
    %v2115 = vpop.f32.mrf.mxu0
    %v2116 = vadd.f32 %v2047, %v2115
    %v2117 = vpop.f32.mrf.mxu0
    %2118 = vmatprep.mubr.f32.mxu0 0.0
    %2119 = vmatmul.mubr.f32.gmra.mxu0 %v1925
    %v2120 = vpop.f32.mrf.mxu0
    %v2121 = vadd.f32 %v2047, %v2120
    %v2122 = vpop.f32.mrf.mxu0
    %2123 = vdwg.mxu0
    %v2124 = vmul.f32 %v2018, %v2018
    %v2125 = vmul.f32 %v2023, %v2023
    %2126 = vadd.xlane.f32.xlu0 %v2124
    %v2127 = vpop.xlane.xlu0 %2126
    %2128 = vadd.xlane.f32.xlu0 %v2125
    %v2129 = vpop.xlane.xlu0 %2128
    %v2130 = vmax.f32 %v2127, 1e-24
    %v2131 = vmax.f32 %v2129, 1e-24
    %v2132 = vrsqrt.pop %v2130
    %v2133 = vrsqrt.pop %v2131
    %v2134 = vmul.f32 %v2018, %v2132
    %v2135 = vmul.f32 %v2023, %v2133
    %v2136 = vmul.f32 %v2116, %v2116
    %v2137 = vmul.f32 %v2121, %v2121
    %2138 = vadd.xlane.f32.xlu0 %v2136
    %v2139 = vpop.xlane.xlu0 %2138
    %2140 = vadd.xlane.f32.xlu0 %v2137
    %v2141 = vpop.xlane.xlu0 %2140
    %v2142 = vmax.f32 %v2139, 1e-24
    %v2143 = vmax.f32 %v2141, 1e-24
    %v2144 = vrsqrt.pop %v2142
    %v2145 = vrsqrt.pop %v2143
    %v2146 = vmul.f32 %v2116, %v2144
    %v2147 = vmul.f32 %v2121, %v2145
    %2148 = vmatprep.subr.mxu0 0.0
    %2149 = vmatpush1.xpose.msra.mxu0 0.0
    %2150 = vmatprep.subr.mxu0 0.0
    %2151 = vmatpush1.xpose.msra.mxu0 0.0
    %2152 = vmatprep.subr.mxu0 0.0
    %2153 = vmatpush1.xpose.msra.mxu0 0.0
    %2154 = vmatprep.subr.mxu0 0.0
    %2155 = vmatpush1.xpose.msra.mxu0 0.0
    %2156 = vmatprep.subr.mxu0 0.0
    %2157 = vmatpush1.xpose.msra.mxu0 0.0
    %2158 = vmatprep.subr.mxu0 0.0
    %2159 = vmatpush1.xpose.msra.mxu0 0.0
    %2160 = vmatprep.subr.mxu0 0.0
    %2161 = vmatpush1.xpose.msra.mxu0 0.0
    %2162 = vmatprep.subr.mxu0 0.0
    %2163 = vmatpush1.xpose.msra.mxu0 0.0
    %2164 = vmatprep.subr.mxu0 0.0
    %2165 = vmatpush1.xpose.msra.mxu0 0.0
    %2166 = vmatprep.subr.mxu0 0.0
    %2167 = vmatpush1.xpose.msra.mxu0 0.0
    %2168 = vmatprep.subr.mxu0 0.0
    %2169 = vmatpush1.xpose.msra.mxu0 0.0
    %2170 = vmatprep.subr.mxu0 0.0
    %2171 = vmatpush1.xpose.msra.mxu0 0.0
    %2172 = vmatprep.subr.mxu0 0.0
    %2173 = vmatpush1.xpose.msra.mxu0 0.0
    %2174 = vmatprep.subr.mxu0 0.0
    %2175 = vmatpush1.xpose.msra.mxu0 0.0
    %2176 = vmatprep.subr.mxu0 0.0
    %2177 = vmatpush1.xpose.msra.mxu0 %v2147
    %2178 = vmatprep.subr.mxu0 0.0
    %2179 = vmatpush1.xpose.msra.mxu0 %v2146
    %2180 = vmatprep.subr.mxu0 0.0
    %2181 = vmatpush2.xpose.msra.mxu0 0.0
    %2182 = vmatprep.subr.mxu0 0.0
    %2183 = vmatpush2.xpose.msra.mxu0 0.0
    %2184 = vmatprep.subr.mxu0 0.0
    %2185 = vmatpush2.xpose.msra.mxu0 0.0
    %2186 = vmatprep.subr.mxu0 0.0
    %2187 = vmatpush2.xpose.msra.mxu0 0.0
    %2188 = vmatprep.subr.mxu0 0.0
    %2189 = vmatpush2.xpose.msra.mxu0 0.0
    %2190 = vmatprep.subr.mxu0 0.0
    %2191 = vmatpush2.xpose.msra.mxu0 0.0
    %2192 = vmatprep.subr.mxu0 0.0
    %2193 = vmatpush2.xpose.msra.mxu0 0.0
    %2194 = vmatprep.subr.mxu0 0.0
    %2195 = vmatpush2.xpose.msra.mxu0 0.0
    %2196 = vmatprep.subr.mxu0 0.0
    %2197 = vmatpush2.xpose.msra.mxu0 0.0
    %2198 = vmatprep.subr.mxu0 0.0
    %2199 = vmatpush2.xpose.msra.mxu0 0.0
    %2200 = vmatprep.subr.mxu0 0.0
    %2201 = vmatpush2.xpose.msra.mxu0 0.0
    %2202 = vmatprep.subr.mxu0 0.0
    %2203 = vmatpush2.xpose.msra.mxu0 0.0
    %2204 = vmatprep.subr.mxu0 0.0
    %2205 = vmatpush2.xpose.msra.mxu0 0.0
    %2206 = vmatprep.subr.mxu0 0.0
    %2207 = vmatpush2.xpose.msra.mxu0 0.0
    %2208 = vmatprep.subr.mxu0 0.0
    %2209 = vmatpush2.xpose.msra.mxu0 0.0
    %2210 = vmatprep.subr.mxu0 0.0
    %2211 = vmatpush2.xpose.msra.mxu0 0.0
    %2212 = vmatprep.mubr.f32.mxu0 0.0
    %2213 = vmatmul.mubr.f32.gmra.mxu0 %v2134
    %v2214 = vpop.f32.mrf.mxu0
    %v2215 = vadd.f32 0.0, %v2214
    %v2216 = vpop.f32.mrf.mxu0
    %2217 = vmatprep.mubr.f32.mxu0 0.0
    %2218 = vmatmul.mubr.f32.gmra.mxu0 %v2135
    %v2219 = vpop.f32.mrf.mxu0
    %v2220 = vadd.f32 0.0, %v2219
    %v2221 = vpop.f32.mrf.mxu0
    %2222 = vdwg.mxu0
    %2223 = vst [vmem:[%s19] sm:$0xff] %v2215
    %2224 = vst [vmem:[%s19 + $0x8] sm:$0xff] %v2220
    %v2225 = vld [vmem:[%s2] sm:$0xff]
    %v2226 = vld [vmem:[%s2 + $0x8] sm:$0xff]
    %2227 = vmatprep.subr.mxu0 0.0
    %2228 = vmatpush1.msra.mxu0 0.0
    %2229 = vmatprep.subr.mxu0 0.0
    %2230 = vmatpush1.msra.mxu0 0.0
    %2231 = vmatprep.subr.mxu0 0.0
    %2232 = vmatpush1.msra.mxu0 0.0
    %2233 = vmatprep.subr.mxu0 0.0
    %2234 = vmatpush1.msra.mxu0 0.0
    %2235 = vmatprep.subr.mxu0 0.0
    %2236 = vmatpush1.msra.mxu0 0.0
    %2237 = vmatprep.subr.mxu0 0.0
    %2238 = vmatpush1.msra.mxu0 0.0
    %2239 = vmatprep.subr.mxu0 0.0
    %2240 = vmatpush1.msra.mxu0 0.0
    %2241 = vmatprep.subr.mxu0 0.0
    %2242 = vmatpush1.msra.mxu0 0.0
    %2243 = vmatprep.subr.mxu0 0.0
    %2244 = vmatpush1.msra.mxu0 0.0
    %2245 = vmatprep.subr.mxu0 0.0
    %2246 = vmatpush1.msra.mxu0 0.0
    %2247 = vmatprep.subr.mxu0 0.0
    %2248 = vmatpush1.msra.mxu0 0.0
    %2249 = vmatprep.subr.mxu0 0.0
    %2250 = vmatpush1.msra.mxu0 0.0
    %2251 = vmatprep.subr.mxu0 0.0
    %2252 = vmatpush1.msra.mxu0 0.0
    %2253 = vmatprep.subr.mxu0 0.0
    %2254 = vmatpush1.msra.mxu0 0.0
    %2255 = vmatprep.subr.mxu0 0.0
    %2256 = vmatpush1.msra.mxu0 %v1094
    %2257 = vmatprep.subr.mxu0 0.0
    %2258 = vmatpush1.msra.mxu0 %v1089
    %2259 = vmatprep.subr.mxu0 0.0
    %2260 = vmatpush2.msra.mxu0 0.0
    %2261 = vmatprep.subr.mxu0 0.0
    %2262 = vmatpush2.msra.mxu0 0.0
    %2263 = vmatprep.subr.mxu0 0.0
    %2264 = vmatpush2.msra.mxu0 0.0
    %2265 = vmatprep.subr.mxu0 0.0
    %2266 = vmatpush2.msra.mxu0 0.0
    %2267 = vmatprep.subr.mxu0 0.0
    %2268 = vmatpush2.msra.mxu0 0.0
    %2269 = vmatprep.subr.mxu0 0.0
    %2270 = vmatpush2.msra.mxu0 0.0
    %2271 = vmatprep.subr.mxu0 0.0
    %2272 = vmatpush2.msra.mxu0 0.0
    %2273 = vmatprep.subr.mxu0 0.0
    %2274 = vmatpush2.msra.mxu0 0.0
    %2275 = vmatprep.subr.mxu0 0.0
    %2276 = vmatpush2.msra.mxu0 0.0
    %2277 = vmatprep.subr.mxu0 0.0
    %2278 = vmatpush2.msra.mxu0 0.0
    %2279 = vmatprep.subr.mxu0 0.0
    %2280 = vmatpush2.msra.mxu0 0.0
    %2281 = vmatprep.subr.mxu0 0.0
    %2282 = vmatpush2.msra.mxu0 0.0
    %2283 = vmatprep.subr.mxu0 0.0
    %2284 = vmatpush2.msra.mxu0 0.0
    %2285 = vmatprep.subr.mxu0 0.0
    %2286 = vmatpush2.msra.mxu0 0.0
    %2287 = vmatprep.subr.mxu0 0.0
    %2288 = vmatpush2.msra.mxu0 0.0
    %2289 = vmatprep.subr.mxu0 0.0
    %2290 = vmatpush2.msra.mxu0 0.0
    %2291 = vmatprep.mubr.f32.mxu0 0.0
    %2292 = vmatmul.mubr.f32.gmra.mxu0 %v2225
    %v2293 = vpop.f32.mrf.mxu0
    %v2294 = vadd.f32 0.0, %v2293
    %v2295 = vpop.f32.mrf.mxu0
    %2296 = vmatprep.mubr.f32.mxu0 0.0
    %2297 = vmatmul.mubr.f32.gmra.mxu0 %v2226
    %v2298 = vpop.f32.mrf.mxu0
    %v2299 = vadd.f32 0.0, %v2298
    %v2300 = vpop.f32.mrf.mxu0
    %2301 = vdwg.mxu0
    %v2302 = vld [vmem:[#allocation21] sm:$0xff]
    %v2303 = vld [vmem:[#allocation21 + $0x8] sm:$0xff]
    %v2304 = vld [vmem:[#allocation21 + $0x10] sm:$0xff]
    %v2305 = vld [vmem:[#allocation21 + $0x18] sm:$0xff]
    %v2306 = vld [vmem:[#allocation21 + $0x20] sm:$0xff]
    %v2307 = vld [vmem:[#allocation21 + $0x28] sm:$0xff]
    %v2308 = vld [vmem:[#allocation21 + $0x30] sm:$0xff]
    %v2309 = vld [vmem:[#allocation21 + $0x38] sm:$0xff]
    %v2310 = vld [vmem:[#allocation21 + $0x40] sm:$0xff]
    %v2311 = vld [vmem:[#allocation21 + $0x48] sm:$0xff]
    %v2312 = vld [vmem:[#allocation21 + $0x50] sm:$0xff]
    %v2313 = vld [vmem:[#allocation21 + $0x58] sm:$0xff]
    %v2314 = vld [vmem:[#allocation21 + $0x60] sm:$0xff]
    %v2315 = vld [vmem:[#allocation21 + $0x68] sm:$0xff]
    %v2316 = vld [vmem:[#allocation21 + $0x70] sm:$0xff]
    %v2317 = vld [vmem:[#allocation21 + $0x78] sm:$0xff]
    %v2318 = vld [vmem:[#allocation21 + $0x80] sm:$0xff]
    %v2319 = vld [vmem:[#allocation21 + $0x88] sm:$0xff]
    %v2320 = vld [vmem:[#allocation21 + $0x90] sm:$0xff]
    %v2321 = vld [vmem:[#allocation21 + $0x98] sm:$0xff]
    %v2322 = vld [vmem:[#allocation21 + $0xa0] sm:$0xff]
    %v2323 = vld [vmem:[#allocation21 + $0xa8] sm:$0xff]
    %v2324 = vld [vmem:[#allocation21 + $0xb0] sm:$0xff]
    %v2325 = vld [vmem:[#allocation21 + $0xb8] sm:$0xff]
    %v2326 = vld [vmem:[#allocation21 + $0xc0] sm:$0xff]
    %v2327 = vld [vmem:[#allocation21 + $0xc8] sm:$0xff]
    %v2328 = vld [vmem:[#allocation21 + $0xd0] sm:$0xff]
    %v2329 = vld [vmem:[#allocation21 + $0xd8] sm:$0xff]
    %v2330 = vld [vmem:[#allocation21 + $0xe0] sm:$0xff]
    %v2331 = vld [vmem:[#allocation21 + $0xe8] sm:$0xff]
    %v2332 = vld [vmem:[#allocation21 + $0xf0] sm:$0xff]
    %v2333 = vld [vmem:[#allocation21 + $0xf8] sm:$0xff]
    %v2334 = vld [vmem:[#allocation22] sm:$0x1]
    %v2336 = vlaneseq
    %v2337 = vshrl.u32 %v2336, 7
    %v2338 = vsub.s32 0, %v2337
    %v2339 = vrot.slane %v2334, %v2338
    %2341 = vmatprep.subr.mxu0 0.0
    %2342 = vmatpush1.msra.mxu0 %v2317
    %2343 = vmatprep.subr.mxu0 0.0
    %2344 = vmatpush1.msra.mxu0 %v2316
    %2345 = vmatprep.subr.mxu0 0.0
    %2346 = vmatpush1.msra.mxu0 %v2315
    %2347 = vmatprep.subr.mxu0 0.0
    %2348 = vmatpush1.msra.mxu0 %v2314
    %2349 = vmatprep.subr.mxu0 0.0
    %2350 = vmatpush1.msra.mxu0 %v2313
    %2351 = vmatprep.subr.mxu0 0.0
    %2352 = vmatpush1.msra.mxu0 %v2312
    %2353 = vmatprep.subr.mxu0 0.0
    %2354 = vmatpush1.msra.mxu0 %v2311
    %2355 = vmatprep.subr.mxu0 0.0
    %2356 = vmatpush1.msra.mxu0 %v2310
    %2357 = vmatprep.subr.mxu0 0.0
    %2358 = vmatpush1.msra.mxu0 %v2309
    %2359 = vmatprep.subr.mxu0 0.0
    %2360 = vmatpush1.msra.mxu0 %v2308
    %2361 = vmatprep.subr.mxu0 0.0
    %2362 = vmatpush1.msra.mxu0 %v2307
    %2363 = vmatprep.subr.mxu0 0.0
    %2364 = vmatpush1.msra.mxu0 %v2306
    %2365 = vmatprep.subr.mxu0 0.0
    %2366 = vmatpush1.msra.mxu0 %v2305
    %2367 = vmatprep.subr.mxu0 0.0
    %2368 = vmatpush1.msra.mxu0 %v2304
    %2369 = vmatprep.subr.mxu0 0.0
    %2370 = vmatpush1.msra.mxu0 %v2303
    %2371 = vmatprep.subr.mxu0 0.0
    %2372 = vmatpush1.msra.mxu0 %v2302
    %2373 = vmatprep.subr.mxu0 0.0
    %2374 = vmatpush2.msra.mxu0 %v2333
    %2375 = vmatprep.subr.mxu0 0.0
    %2376 = vmatpush2.msra.mxu0 %v2332
    %2377 = vmatprep.subr.mxu0 0.0
    %2378 = vmatpush2.msra.mxu0 %v2331
    %2379 = vmatprep.subr.mxu0 0.0
    %2380 = vmatpush2.msra.mxu0 %v2330
    %2381 = vmatprep.subr.mxu0 0.0
    %2382 = vmatpush2.msra.mxu0 %v2329
    %2383 = vmatprep.subr.mxu0 0.0
    %2384 = vmatpush2.msra.mxu0 %v2328
    %2385 = vmatprep.subr.mxu0 0.0
    %2386 = vmatpush2.msra.mxu0 %v2327
    %2387 = vmatprep.subr.mxu0 0.0
    %2388 = vmatpush2.msra.mxu0 %v2326
    %2389 = vmatprep.subr.mxu0 0.0
    %2390 = vmatpush2.msra.mxu0 %v2325
    %2391 = vmatprep.subr.mxu0 0.0
    %2392 = vmatpush2.msra.mxu0 %v2324
    %2393 = vmatprep.subr.mxu0 0.0
    %2394 = vmatpush2.msra.mxu0 %v2323
    %2395 = vmatprep.subr.mxu0 0.0
    %2396 = vmatpush2.msra.mxu0 %v2322
    %2397 = vmatprep.subr.mxu0 0.0
    %2398 = vmatpush2.msra.mxu0 %v2321
    %2399 = vmatprep.subr.mxu0 0.0
    %2400 = vmatpush2.msra.mxu0 %v2320
    %2401 = vmatprep.subr.mxu0 0.0
    %2402 = vmatpush2.msra.mxu0 %v2319
    %2403 = vmatprep.subr.mxu0 0.0
    %2404 = vmatpush2.msra.mxu0 %v2318
    %2405 = vmatprep.mubr.f32.mxu0 %v1920
    %2406 = vmatmul.mubr.f32.gmra.mxu0 %v1089
    %v2407 = vpop.f32.mrf.mxu0
    %v2408 = vadd.f32 %v2339, %v2407
    %v2409 = vpop.f32.mrf.mxu0
    %2410 = vmatprep.mubr.f32.mxu0 %v1925
    %2411 = vmatmul.mubr.f32.gmra.mxu0 %v1094
    %v2412 = vpop.f32.mrf.mxu0
    %v2413 = vadd.f32 %v2339, %v2412
    %v2414 = vpop.f32.mrf.mxu0
    %2415 = vmatprep.mubr.f32.mxu0 %v1920
    %2416 = vmatmul.mubr.f32.gmra.mxu0 %v2294
    %v2417 = vpop.f32.mrf.mxu0
    %v2418 = vadd.f32 %v2339, %v2417
    %v2419 = vpop.f32.mrf.mxu0
    %2420 = vmatprep.mubr.f32.mxu0 %v1925
    %2421 = vmatmul.mubr.f32.gmra.mxu0 %v2299
    %v2422 = vpop.f32.mrf.mxu0
    %v2423 = vadd.f32 %v2339, %v2422
    %v2424 = vpop.f32.mrf.mxu0
    %2425 = vdwg.mxu0
    %v2426 = vmax.f32 %v2408, 0.0
    %v2427 = vmax.f32 %v2413, 0.0
    %v2428 = vmax.f32 %v2418, 0.0
    %v2429 = vmax.f32 %v2423, 0.0
    %v2430 = vld [vmem:[#allocation24] sm:$0xff]
    %v2431 = vld [vmem:[#allocation24 + $0x8] sm:$0xff]
    %v2432 = vld [vmem:[#allocation24 + $0x10] sm:$0xff]
    %v2433 = vld [vmem:[#allocation24 + $0x18] sm:$0xff]
    %v2434 = vld [vmem:[#allocation24 + $0x20] sm:$0xff]
    %v2435 = vld [vmem:[#allocation24 + $0x28] sm:$0xff]
    %v2436 = vld [vmem:[#allocation24 + $0x30] sm:$0xff]
    %v2437 = vld [vmem:[#allocation24 + $0x38] sm:$0xff]
    %v2438 = vld [vmem:[#allocation24 + $0x40] sm:$0xff]
    %v2439 = vld [vmem:[#allocation24 + $0x48] sm:$0xff]
    %v2440 = vld [vmem:[#allocation24 + $0x50] sm:$0xff]
    %v2441 = vld [vmem:[#allocation24 + $0x58] sm:$0xff]
    %v2442 = vld [vmem:[#allocation24 + $0x60] sm:$0xff]
    %v2443 = vld [vmem:[#allocation24 + $0x68] sm:$0xff]
    %v2444 = vld [vmem:[#allocation24 + $0x70] sm:$0xff]
    %v2445 = vld [vmem:[#allocation24 + $0x78] sm:$0xff]
    %v2446 = vld [vmem:[#allocation25] sm:$0x1]
    %v2448 = vlaneseq
    %v2449 = vshrl.u32 %v2448, 7
    %v2450 = vsub.s32 0, %v2449
    %v2451 = vrot.slane %v2446, %v2450
    %2453 = vmatprep.subr.mxu0 0.0
    %2454 = vmatpush1.msra.mxu0 %v2445
    %2455 = vmatprep.subr.mxu0 0.0
    %2456 = vmatpush1.msra.mxu0 %v2444
    %2457 = vmatprep.subr.mxu0 0.0
    %2458 = vmatpush1.msra.mxu0 %v2443
    %2459 = vmatprep.subr.mxu0 0.0
    %2460 = vmatpush1.msra.mxu0 %v2442
    %2461 = vmatprep.subr.mxu0 0.0
    %2462 = vmatpush1.msra.mxu0 %v2441
    %2463 = vmatprep.subr.mxu0 0.0
    %2464 = vmatpush1.msra.mxu0 %v2440
    %2465 = vmatprep.subr.mxu0 0.0
    %2466 = vmatpush1.msra.mxu0 %v2439
    %2467 = vmatprep.subr.mxu0 0.0
    %2468 = vmatpush1.msra.mxu0 %v2438
    %2469 = vmatprep.subr.mxu0 0.0
    %2470 = vmatpush1.msra.mxu0 %v2437
    %2471 = vmatprep.subr.mxu0 0.0
    %2472 = vmatpush1.msra.mxu0 %v2436
    %2473 = vmatprep.subr.mxu0 0.0
    %2474 = vmatpush1.msra.mxu0 %v2435
    %2475 = vmatprep.subr.mxu0 0.0
    %2476 = vmatpush1.msra.mxu0 %v2434
    %2477 = vmatprep.subr.mxu0 0.0
    %2478 = vmatpush1.msra.mxu0 %v2433
    %2479 = vmatprep.subr.mxu0 0.0
    %2480 = vmatpush1.msra.mxu0 %v2432
    %2481 = vmatprep.subr.mxu0 0.0
    %2482 = vmatpush1.msra.mxu0 %v2431
    %2483 = vmatprep.subr.mxu0 0.0
    %2484 = vmatpush1.msra.mxu0 %v2430
    %2485 = vmatprep.subr.mxu0 0.0
    %2486 = vmatpush2.msra.mxu0 0.0
    %2487 = vmatprep.subr.mxu0 0.0
    %2488 = vmatpush2.msra.mxu0 0.0
    %2489 = vmatprep.subr.mxu0 0.0
    %2490 = vmatpush2.msra.mxu0 0.0
    %2491 = vmatprep.subr.mxu0 0.0
    %2492 = vmatpush2.msra.mxu0 0.0
    %2493 = vmatprep.subr.mxu0 0.0
    %2494 = vmatpush2.msra.mxu0 0.0
    %2495 = vmatprep.subr.mxu0 0.0
    %2496 = vmatpush2.msra.mxu0 0.0
    %2497 = vmatprep.subr.mxu0 0.0
    %2498 = vmatpush2.msra.mxu0 0.0
    %2499 = vmatprep.subr.mxu0 0.0
    %2500 = vmatpush2.msra.mxu0 0.0
    %2501 = vmatprep.subr.mxu0 0.0
    %2502 = vmatpush2.msra.mxu0 0.0
    %2503 = vmatprep.subr.mxu0 0.0
    %2504 = vmatpush2.msra.mxu0 0.0
    %2505 = vmatprep.subr.mxu0 0.0
    %2506 = vmatpush2.msra.mxu0 0.0
    %2507 = vmatprep.subr.mxu0 0.0
    %2508 = vmatpush2.msra.mxu0 0.0
    %2509 = vmatprep.subr.mxu0 0.0
    %2510 = vmatpush2.msra.mxu0 0.0
    %2511 = vmatprep.subr.mxu0 0.0
    %2512 = vmatpush2.msra.mxu0 0.0
    %2513 = vmatprep.subr.mxu0 0.0
    %2514 = vmatpush2.msra.mxu0 0.0
    %2515 = vmatprep.subr.mxu0 0.0
    %2516 = vmatpush2.msra.mxu0 0.0
    %2517 = vmatprep.mubr.f32.mxu0 0.0
    %2518 = vmatmul.mubr.f32.gmra.mxu0 %v2426
    %v2519 = vpop.f32.mrf.mxu0
    %v2520 = vadd.f32 %v2451, %v2519
    %v2521 = vpop.f32.mrf.mxu0
    %2522 = vmatprep.mubr.f32.mxu0 0.0
    %2523 = vmatmul.mubr.f32.gmra.mxu0 %v2427
    %v2524 = vpop.f32.mrf.mxu0
    %v2525 = vadd.f32 %v2451, %v2524
    %v2526 = vpop.f32.mrf.mxu0
    %2527 = vmatprep.mubr.f32.mxu0 0.0
    %2528 = vmatmul.mubr.f32.gmra.mxu0 %v2428
    %v2529 = vpop.f32.mrf.mxu0
    %v2530 = vadd.f32 %v2451, %v2529
    %v2531 = vpop.f32.mrf.mxu0
    %2532 = vmatprep.mubr.f32.mxu0 0.0
    %2533 = vmatmul.mubr.f32.gmra.mxu0 %v2429
    %v2534 = vpop.f32.mrf.mxu0
    %v2535 = vadd.f32 %v2451, %v2534
    %v2536 = vpop.f32.mrf.mxu0
    %2537 = vdwg.mxu0
    %2538 = vst [vmem:[%s20] sm:$0xff] %v2520
    %2539 = vst [vmem:[%s20 + $0x8] sm:$0xff] %v2525
    %2540 = vst [vmem:[%s20 + $0x10] sm:$0xff] %v2530
    %2541 = vst [vmem:[%s20 + $0x18] sm:$0xff] %v2535
    // Predicated region
    $region142: #{forward.5} parent=1 // pred_check
      _
    $region143: #{forward.5} parent=1 // pred_check_branch
      %2543 = sbr.rel (0) target = $region145
    $region144: #{forward.5} parent=1 // pred_region
      _
    $region145: #{forward.5} parent=1 // pred_fallthru
      _
    // Predicated region
    $region146: #{forward.5} parent=1 // pred_check
      _
    $region147: #{forward.5} parent=1 // pred_check_branch
      %2545 = sbr.rel (0) target = $region149
    $region148: #{forward.5} parent=1 // pred_region
      _
    $region149: #{forward.5} parent=1 // pred_fallthru
      _
    // Predicated region
    $region150: #{forward.5} parent=1 // pred_check
      _
    $region151: #{forward.5} parent=1 // pred_check_branch
      %2547 = sbr.rel (0) target = $region153
    $region152: #{forward.5} parent=1 // pred_region
      _
    $region153: #{forward.5} parent=1 // pred_fallthru
      _
    // Predicated region
    $region154: #{forward.5} parent=1 // pred_check
      _
    $region155: #{forward.5} parent=1 // pred_check_branch
      %2549 = sbr.rel (0) target = $region157
    $region156: #{forward.5} parent=1 // pred_region
      _
    $region157: #{forward.5} parent=1 // pred_fallthru
      _
    %2550 = vsyncpa [#allocation3], 1
    %2551 = vsyncpa [#allocation5], 1
    %2552 = vsyncpa [#allocation8], 1
    %2553 = vsyncpa [#allocation11], 1
    %2554 = vsyncpa [#allocation14], 1
    %2555 = vsyncpa [#allocation17], 1
    %2556 = vsyncpa [#allocation20], 1
    %2557 = vsyncpa [#allocation23], 1
    %2558 = vsyncpa [#allocation26], 1

// kernel: forward.4
$region0: #{forward.4}
  #allocation0 [shape = 'u32[]', space=smem, size = 0x4, offset = 0x4, fixed_abs, tag = 'smem constant byte address 0x4 - core index']
  #allocation1 [shape = 'u32[144,128]{1,0:T(1,128)}', space=vmem, size = 0x12000, scoped, tag = 'internal scratch']
  #allocation2 [shape = 'f32[16,512]{1,0:T(8,128)}', space=vmem, size = 0x8000, scoped, tag = 'scratch operand']
  %s0 = inlined_call_operand.vmem [shape: bf16[16,16384], index: 0, kind: input, shape index: {}]
  %s1 = inlined_call_operand.hbm [shape: bf16[16384,1024], index: 1, kind: input, shape index: {}]
  %s2 = inlined_call_operand.hbm [shape: f32[1,1024], index: 2, kind: input, shape index: {}]
  %s3 = inlined_call_operand.vmem [shape: bf16[16,1024], index: 3, kind: output, shape index: {}]
  %s4 = sld [smem:[#allocation0]]
  $region103: #{forward.4} parent=0
    _
  %s6 = ssub.s32 1, %s4
  %s7 = scalar_select 0, %s6, %s4
  $region1: #{forward.4} parent=0
    #allocation3 [shape = 'u8[262144]{0}', space=vmem, size = 0x40000, scoped, tag = 'input window, operand 0']
    #allocation4 [shape = 'u8[8388608]{0}', space=vmem, size = 0x800000, scoped, tag = 'input window, operand 1']
    #allocation5 [shape = 's32[2]{0}', space=sflag, size = 0x8, scoped, tag = 'scoped memory for forward.4']
    #allocation6 [shape = 'u8[4096]{0}', space=vmem, size = 0x1000, scoped, tag = 'input window, operand 2']
    #allocation7 [shape = 's32[2]{0}', space=sflag, size = 0x8, scoped, tag = 'scoped memory for forward.4']
    #allocation8 [shape = 'u8[32768]{0}', space=vmem, size = 0x8000, scoped, tag = 'output window, operand 0']
    %8 = vsyncpa [#allocation5], 0
    %s9 = scalar_lea.sflag [#allocation5], 1
    %10 = vsyncpa %s9, 0
    %11 = vsyncpa [#allocation7], 0
    %s12 = scalar_lea.sflag [#allocation7], 1
    %13 = vsyncpa %s12, 0
    loop: start=0, step=1, limit=10
    $region2: #{forward.4} parent=1 // loop_pre_header
      _
    $region3: #{forward.4} parent=1 // loop_header
      %s15 = sphi 0, %s19
      %p16 = scmp.ge.s32.totalorder %s15, 10
      %s22 = sphi 0, %s41
      %s23 = sphi 0, %s37
      %s24 = sphi 0, %s33
      %s25 = sphi 0, %s22
      %s26 = sphi 0, %s23
      %s27 = sphi 0, %s24
      %s28 = sphi 0, %s25
      %s29 = sphi 0, %s26
      %s30 = sphi 0, %s27
      %s46 = sphi 0, %s48
      %s49 = sphi 0, %s46
      %s50 = sphi 0, %s49
      %s66 = sphi 0, %s50
      %s74 = sphi 0, %s76
      %s77 = sphi 0, %s74
      %s78 = sphi 0, %s77
      %s94 = sphi 0, %s78
      %s100 = sphi 0, %s102
      %s103 = sphi 0, %s100
      %s104 = sphi 0, %s103
      %s120 = sphi 0, %s104
      %s128 = sphi 0, %s130
      %s131 = sphi 0, %s128
      %s132 = sphi 0, %s131
      %s148 = sphi 0, %s132
    $region4: #{forward.4} parent=1 // loop_header_branch
      %18 = sbr.rel (%p16) target = $region8
    $region5: #{forward.4} parent=1 // loop_body
      %s20 = ssub.s32 %s15, 1
      %s21 = ssub.s32 %s15, 2
      %s31 = sadd.s32 1, %s24
      %p32 = scmp.ge.s32.totalorder %s31, 4
      %s33 = scalar_select %p32, 0, %s31
      %s34 = sadd.s32 1, %s23
      %s35 = scalar_select %p32, %s34, %s23
      %p36 = scmp.ge.s32.totalorder %s35, 2
      %s37 = scalar_select %p36, 0, %s35
      %s38 = sadd.s32 1, %s22
      %s39 = scalar_select %p36, %s38, %s22
      %p40 = scmp.ge.s32.totalorder %s39, 1
      %s41 = scalar_select %p40, 0, %s39
      %s42 = ssub.s32 %s22, %s41
      %s43 = ssub.s32 %s24, %s33
      %s44 = sor.u32 %s42, %s43
      %p45 = scmp.eq.s32.totalorder %s44, 0
      %s47 = sadd.s32 %s46, 1
      %s48 = scalar_select %p45, %s46, %s47
      %p51 = pneg %p45
      %p52 = scmp.eq.s32.totalorder %s15, 7
      %p53 = por %p51, %p52
      %p54 = scmp.ne.s32.totalorder %s46, %s49
      %p55 = scmp.eq.s32.totalorder %s15, 0
      %p56 = por %p54, %p55
      %p57 = scmp.ne.s32.totalorder %s46, %s49
      %p58 = scmp.eq.s32.totalorder %s20, 7
      %p59 = por %p57, %p58
      %p60 = scmp.ne.s32.totalorder %s49, %s50
      %p61 = scmp.eq.s32.totalorder %s20, 0
      %p62 = por %p60, %p61
      %p63 = scmp.ne.s32.totalorder %s49, %s50
      %p64 = scmp.eq.s32.totalorder %s21, 7
      %p65 = por %p63, %p64
      %p67 = scmp.ne.s32.totalorder %s50, %s66
      %p68 = scmp.eq.s32.totalorder %s21, 0
      %p69 = por %p67, %p68
      %s70 = ssub.s32 %s24, %s33
      %s71 = ssub.s32 %s23, %s37
      %s72 = sor.u32 %s70, %s71
      %p73 = scmp.eq.s32.totalorder %s72, 0
      %s75 = sadd.s32 %s74, 1
      %s76 = scalar_select %p73, %s74, %s75
      %p79 = pneg %p73
      %p80 = scmp.eq.s32.totalorder %s15, 7
      %p81 = por %p79, %p80
      %p82 = scmp.ne.s32.totalorder %s74, %s77
      %p83 = scmp.eq.s32.totalorder %s15, 0
      %p84 = por %p82, %p83
      %p85 = scmp.ne.s32.totalorder %s74, %s77
      %p86 = scmp.eq.s32.totalorder %s20, 7
      %p87 = por %p85, %p86
      %p88 = scmp.ne.s32.totalorder %s77, %s78
      %p89 = scmp.eq.s32.totalorder %s20, 0
      %p90 = por %p88, %p89
      %p91 = scmp.ne.s32.totalorder %s77, %s78
      %p92 = scmp.eq.s32.totalorder %s21, 7
      %p93 = por %p91, %p92
      %p95 = scmp.ne.s32.totalorder %s78, %s94
      %p96 = scmp.eq.s32.totalorder %s21, 0
      %p97 = por %p95, %p96
      %s98 = ssub.s32 %s23, %s37
      %p99 = scmp.eq.s32.totalorder %s98, 0
      %s101 = sadd.s32 %s100, 1
      %s102 = scalar_select %p99, %s100, %s101
      %p105 = pneg %p99
      %p106 = scmp.eq.s32.totalorder %s15, 7
      %p107 = por %p105, %p106
      %p108 = scmp.ne.s32.totalorder %s100, %s103
      %p109 = scmp.eq.s32.totalorder %s15, 0
      %p110 = por %p108, %p109
      %p111 = scmp.ne.s32.totalorder %s100, %s103
      %p112 = scmp.eq.s32.totalorder %s20, 7
      %p113 = por %p111, %p112
      %p114 = scmp.ne.s32.totalorder %s103, %s104
      %p115 = scmp.eq.s32.totalorder %s20, 0
      %p116 = por %p114, %p115
      %p117 = scmp.ne.s32.totalorder %s103, %s104
      %p118 = scmp.eq.s32.totalorder %s21, 7
      %p119 = por %p117, %p118
      %p121 = scmp.ne.s32.totalorder %s104, %s120
      %p122 = scmp.eq.s32.totalorder %s21, 0
      %p123 = por %p121, %p122
      %s124 = ssub.s32 %s22, %s41
      %s125 = ssub.s32 %s23, %s37
      %s126 = sor.u32 %s124, %s125
      %p127 = scmp.eq.s32.totalorder %s126, 0
      %s129 = sadd.s32 %s128, 1
      %s130 = scalar_select %p127, %s128, %s129
      %p133 = pneg %p127
      %p134 = scmp.eq.s32.totalorder %s15, 7
      %p135 = por %p133, %p134
      %p136 = scmp.ne.s32.totalorder %s128, %s131
      %p137 = scmp.eq.s32.totalorder %s15, 0
      %p138 = por %p136, %p137
      %p139 = scmp.ne.s32.totalorder %s128, %s131
      %p140 = scmp.eq.s32.totalorder %s20, 7
      %p141 = por %p139, %p140
      %p142 = scmp.ne.s32.totalorder %s131, %s132
      %p143 = scmp.eq.s32.totalorder %s20, 0
      %p144 = por %p142, %p143
      %p145 = scmp.ne.s32.totalorder %s131, %s132
      %p146 = scmp.eq.s32.totalorder %s21, 7
      %p147 = por %p145, %p146
      %p149 = scmp.ne.s32.totalorder %s132, %s148
      %p150 = scmp.eq.s32.totalorder %s21, 0
      %p151 = por %p149, %p150
      %p152 = scmp.le.s32.totalorder 1, %s15
      %p153 = scmp.lt.s32.totalorder %s15, 9
      %p154 = pnand %p152, %p153
      %p155 = pneg %p154
      // Predicated region
      $region9: #{forward.4} parent=5 // pred_check
        _
      $region10: #{forward.4} parent=5 // pred_check_branch
        %157 = sbr.rel (%p154) target = $region12
      $region11: #{forward.4} parent=5 // pred_region
        %s158 = ssub.s32 %s15, 1
      $region12: #{forward.4} parent=5 // pred_fallthru
        _
      %p159 = scmp.lt.s32.totalorder %s15, 8
      // Predicated region
      $region13: #{forward.4} parent=5 // pred_check
        %p160 = pneg %p159
      $region14: #{forward.4} parent=5 // pred_check_branch
        %162 = sbr.rel (%p160) target = $region16
      $region15: #{forward.4} parent=5 // pred_region
        // Predicated region
        $region17: #{forward.4} parent=15 // pred_check
          %p163 = pneg %p56
        $region18: #{forward.4} parent=15 // pred_check_branch
          %165 = sbr.rel (%p163) target = $region20
        $region19: #{forward.4} parent=15 // pred_region
          %s166 = sand.u32 %s46, 1
          %s167 = sand.u32 %s46, 1
          %s168 = smul.addr %s167, 256
          %s169 = scalar_lea.vmem [#allocation3], %s168
          %s170 = smul.u32 2, %s22
          %s171 = smul.u32 32, %s24
          %s172 = smul.addr %s170, 128
          %s173 = sadd.s32 %s171, %s172
          %s174 = smul.addr %s173, 4
          %s175 = scalar_lea.vmem %s0, %s174
          // Predicated region
          $region21: #{forward.4} parent=19 // pred_check
            _
          $region22: #{forward.4} parent=19 // pred_check_branch
            %177 = sbr.rel (0) target = $region24
          $region23: #{forward.4} parent=19 // pred_region
            // Predicated region
            $region25: #{forward.4} parent=23 // pred_check
              _
            $region26: #{forward.4} parent=23 // pred_check_branch
              %179 = sbr.rel (0) target = $region28
            $region27: #{forward.4} parent=23 // pred_region
              loop: start=0, step=1, limit=1
              $region29: #{forward.4} parent=27 // loop_pre_header
                _
              $region30: #{forward.4} parent=27 // loop_header
                %s181 = sphi 0, %s185
                %p182 = scmp.ge.s32.totalorder %s181, 1
                %s186 = sphi %s175, %s175
                %s187 = sphi %s169, %s169
              $region31: #{forward.4} parent=27 // loop_header_branch
                %184 = sbr.rel (%p182) target = $region35
              $region32: #{forward.4} parent=27 // loop_body
                %v188 = vld [vmem:[%s186] sm:$0xff]
                %189 = vst [vmem:[%s187] sm:$0xff] %v188
                %v190 = vld [vmem:[%s186 + $0x8] sm:$0xff]
                %191 = vst [vmem:[%s187 + $0x8] sm:$0xff] %v190
                %v192 = vld [vmem:[%s186 + $0x10] sm:$0xff]
                %193 = vst [vmem:[%s187 + $0x10] sm:$0xff] %v192
                %v194 = vld [vmem:[%s186 + $0x18] sm:$0xff]
                %195 = vst [vmem:[%s187 + $0x18] sm:$0xff] %v194
                %v196 = vld [vmem:[%s186 + $0x20] sm:$0xff]
                %197 = vst [vmem:[%s187 + $0x20] sm:$0xff] %v196
                %v198 = vld [vmem:[%s186 + $0x28] sm:$0xff]
                %199 = vst [vmem:[%s187 + $0x28] sm:$0xff] %v198
                %v200 = vld [vmem:[%s186 + $0x30] sm:$0xff]
                %201 = vst [vmem:[%s187 + $0x30] sm:$0xff] %v200
                %v202 = vld [vmem:[%s186 + $0x38] sm:$0xff]
                %203 = vst [vmem:[%s187 + $0x38] sm:$0xff] %v202
                %v204 = vld [vmem:[%s186 + $0x40] sm:$0xff]
                %205 = vst [vmem:[%s187 + $0x40] sm:$0xff] %v204
                %v206 = vld [vmem:[%s186 + $0x48] sm:$0xff]
                %207 = vst [vmem:[%s187 + $0x48] sm:$0xff] %v206
                %v208 = vld [vmem:[%s186 + $0x50] sm:$0xff]
                %209 = vst [vmem:[%s187 + $0x50] sm:$0xff] %v208
                %v210 = vld [vmem:[%s186 + $0x58] sm:$0xff]
                %211 = vst [vmem:[%s187 + $0x58] sm:$0xff] %v210
                %v212 = vld [vmem:[%s186 + $0x60] sm:$0xff]
                %213 = vst [vmem:[%s187 + $0x60] sm:$0xff] %v212
                %v214 = vld [vmem:[%s186 + $0x68] sm:$0xff]
                %215 = vst [vmem:[%s187 + $0x68] sm:$0xff] %v214
                %v216 = vld [vmem:[%s186 + $0x70] sm:$0xff]
                %217 = vst [vmem:[%s187 + $0x70] sm:$0xff] %v216
                %v218 = vld [vmem:[%s186 + $0x78] sm:$0xff]
                %219 = vst [vmem:[%s187 + $0x78] sm:$0xff] %v218
                %v220 = vld [vmem:[%s186 + $0x200] sm:$0xff]
                %221 = vst [vmem:[%s187 + $0x80] sm:$0xff] %v220
                %v222 = vld [vmem:[%s186 + $0x208] sm:$0xff]
                %223 = vst [vmem:[%s187 + $0x88] sm:$0xff] %v222
                %v224 = vld [vmem:[%s186 + $0x210] sm:$0xff]
                %225 = vst [vmem:[%s187 + $0x90] sm:$0xff] %v224
                %v226 = vld [vmem:[%s186 + $0x218] sm:$0xff]
                %227 = vst [vmem:[%s187 + $0x98] sm:$0xff] %v226
                %v228 = vld [vmem:[%s186 + $0x220] sm:$0xff]
                %229 = vst [vmem:[%s187 + $0xa0] sm:$0xff] %v228
                %v230 = vld [vmem:[%s186 + $0x228] sm:$0xff]
                %231 = vst [vmem:[%s187 + $0xa8] sm:$0xff] %v230
                %v232 = vld [vmem:[%s186 + $0x230] sm:$0xff]
                %233 = vst [vmem:[%s187 + $0xb0] sm:$0xff] %v232
                %v234 = vld [vmem:[%s186 + $0x238] sm:$0xff]
                %235 = vst [vmem:[%s187 + $0xb8] sm:$0xff] %v234
                %v236 = vld [vmem:[%s186 + $0x240] sm:$0xff]
                %237 = vst [vmem:[%s187 + $0xc0] sm:$0xff] %v236
                %v238 = vld [vmem:[%s186 + $0x248] sm:$0xff]
                %239 = vst [vmem:[%s187 + $0xc8] sm:$0xff] %v238
                %v240 = vld [vmem:[%s186 + $0x250] sm:$0xff]
                %241 = vst [vmem:[%s187 + $0xd0] sm:$0xff] %v240
                %v242 = vld [vmem:[%s186 + $0x258] sm:$0xff]
                %243 = vst [vmem:[%s187 + $0xd8] sm:$0xff] %v242
                %v244 = vld [vmem:[%s186 + $0x260] sm:$0xff]
                %245 = vst [vmem:[%s187 + $0xe0] sm:$0xff] %v244
                %v246 = vld [vmem:[%s186 + $0x268] sm:$0xff]
                %247 = vst [vmem:[%s187 + $0xe8] sm:$0xff] %v246
                %v248 = vld [vmem:[%s186 + $0x270] sm:$0xff]
                %249 = vst [vmem:[%s187 + $0xf0] sm:$0xff] %v248
                %v250 = vld [vmem:[%s186 + $0x278] sm:$0xff]
                %251 = vst [vmem:[%s187 + $0xf8] sm:$0xff] %v250
              $region33: #{forward.4} parent=27 // loop_footer
                %s185 = sadd.s32 1, %s181
              $region34: #{forward.4} parent=27 // loop_footer_branch
                %180 = sbr.rel target = $region30
              $region35: #{forward.4} parent=27 // loop_exit
                _
            $region28: #{forward.4} parent=23 // pred_fallthru
              _
            // Predicated region
            $region36: #{forward.4} parent=23 // pred_check
              _
            $region37: #{forward.4} parent=23 // pred_check_branch
              %253 = sbr.rel target = $region39
            $region38: #{forward.4} parent=23 // pred_region
              _
            $region39: #{forward.4} parent=23 // pred_fallthru
              _
          $region24: #{forward.4} parent=19 // pred_fallthru
            _
          %254 = vnop
        $region20: #{forward.4} parent=15 // pred_fallthru
          _
        // Predicated region
        $region40: #{forward.4} parent=15 // pred_check
          %p255 = pneg %p84
        $region41: #{forward.4} parent=15 // pred_check_branch
          %257 = sbr.rel (%p255) target = $region43
        $region42: #{forward.4} parent=15 // pred_region
          %s258 = sand.u32 %s74, 1
          %s259 = scalar_lea.sflag [#allocation5], %s258
          %s260 = sand.u32 %s74, 1
          %s261 = smul.addr %s260, 8192
          %s262 = scalar_lea.vmem [#allocation4], %s261
          %s263 = smul.u32 512, %s24
          %s264 = smul.u32 4, %s23
          %s266 = ssub.s32 131072, 131072
          %267 = vsyncadd %s259, %s266
          %s268 = smul.addr %s263, 8
          %s269 = sadd.s32 %s264, %s268
          %s270 = smul.addr %s269, 64
          %s271 = scalar_lea.hbm %s1, %s270
          %s272 = sshll.u32 %s262, 4
          %s273 = int_to_ptr.vmem [resolvable:$true] %s272
          %278 = dma.hbm_to_vmem [thread:$0]  %s271, 131072, %s273, %s259, 512, 256, 16
        $region43: #{forward.4} parent=15 // pred_fallthru
          _
        // Predicated region
        $region44: #{forward.4} parent=15 // pred_check
          %p279 = pneg %p110
        $region45: #{forward.4} parent=15 // pred_check_branch
          %281 = sbr.rel (%p279) target = $region47
        $region46: #{forward.4} parent=15 // pred_region
          %s282 = sand.u32 %s100, 1
          %s283 = scalar_lea.sflag [#allocation7], %s282
          %s284 = sand.u32 %s100, 1
          %s285 = smul.addr %s284, 4
          %s286 = scalar_lea.vmem [#allocation6], %s285
          %s287 = smul.u32 4, %s23
          %s289 = ssub.s32 64, 64
          %290 = vsyncadd %s283, %s289
          %s291 = smul.addr %s287, 16
          %s292 = scalar_lea.hbm %s2, %s291
          %s294 = sshll.u32 %s286, 4
          %s295 = int_to_ptr.vmem [resolvable:$true] %s294
          %297 = dma.hbm_to_vmem [thread:$0]  %s292, 64, %s295, %s283
        $region47: #{forward.4} parent=15 // pred_fallthru
          _
      $region16: #{forward.4} parent=5 // pred_fallthru
        _
      %p298 = scmp.le.s32.totalorder 1, %s15
      %p299 = scmp.lt.s32.totalorder %s15, 9
      %p300 = pnand %p298, %p299
      %p301 = pneg %p300
      // Predicated region
      $region48: #{forward.4} parent=5 // pred_check
        _
      $region49: #{forward.4} parent=5 // pred_check_branch
        %303 = sbr.rel (%p300) target = $region51
      $region50: #{forward.4} parent=5 // pred_region
        %s304 = ssub.s32 %s15, 1
        %s305 = sand.u32 %s49, 1
        %s306 = sand.u32 %s49, 1
        %s307 = smul.addr %s306, 256
        %s308 = scalar_lea.vmem [#allocation3], %s307
        // Predicated region
        $region52: #{forward.4} parent=50 // pred_check
          %p309 = pneg %p62
        $region53: #{forward.4} parent=50 // pred_check_branch
          %311 = sbr.rel (%p309) target = $region55
        $region54: #{forward.4} parent=50 // pred_region
          _
        $region55: #{forward.4} parent=50 // pred_fallthru
          _
        %s312 = sand.u32 %s77, 1
        %s313 = scalar_lea.sflag [#allocation5], %s312
        %s314 = sand.u32 %s77, 1
        %s315 = smul.addr %s314, 8192
        %s316 = scalar_lea.vmem [#allocation4], %s315
        // Predicated region
        $region56: #{forward.4} parent=50 // pred_check
          %p317 = pneg %p90
        $region57: #{forward.4} parent=50 // pred_check_branch
          %319 = sbr.rel (%p317) target = $region59
        $region58: #{forward.4} parent=50 // pred_region
          %320 = dma.done %s313, 131072
        $region59: #{forward.4} parent=50 // pred_fallthru
          _
        %s321 = sand.u32 %s103, 1
        %s322 = scalar_lea.sflag [#allocation7], %s321
        %s323 = sand.u32 %s103, 1
        %s324 = smul.addr %s323, 4
        %s325 = scalar_lea.vmem [#allocation6], %s324
        // Predicated region
        $region60: #{forward.4} parent=50 // pred_check
          %p326 = pneg %p116
        $region61: #{forward.4} parent=50 // pred_check_branch
          %328 = sbr.rel (%p326) target = $region63
        $region62: #{forward.4} parent=50 // pred_region
          %329 = dma.done %s322, 64
        $region63: #{forward.4} parent=50 // pred_fallthru
          _
        %s330 = sand.u32 %s49, 1
        %s331 = sand.u32 %s49, 1
        %s332 = smul.addr %s331, 256
        %s333 = scalar_lea.vmem [#allocation3], %s332
        %p334 = pneg %p62
        %p335 = pneg %p59
        %s336 = sand.u32 %s77, 1
        %s337 = scalar_lea.sflag [#allocation5], %s336
        %s338 = sand.u32 %s77, 1
        %s339 = smul.addr %s338, 8192
        %s340 = scalar_lea.vmem [#allocation4], %s339
        %p341 = pneg %p90
        %p342 = pneg %p87
        %s343 = sand.u32 %s103, 1
        %s344 = scalar_lea.sflag [#allocation7], %s343
        %s345 = sand.u32 %s103, 1
        %s346 = smul.addr %s345, 4
        %s347 = scalar_lea.vmem [#allocation6], %s346
        %p348 = pneg %p116
        %p349 = pneg %p113
        %p350 = pneg %p144
        %p351 = pneg %p141
        %s352 = sand.u32 %s131, 1
        %s353 = sand.u32 %s131, 1
        %s354 = smul.addr %s353, 32
        %s355 = scalar_lea.vmem [#allocation8], %s354
        %s356 = smul.u32 2, %s25
        %s357 = smul.u32 32, %s27
        %s358 = smul.u32 512, %s27
        %s359 = smul.u32 4, %s26
        %s360 = smul.u32 4, %s26
        %s361 = smul.u32 2, %s25
        %s362 = smul.u32 4, %s26
        %p363 = scmp.eq.s32.totalorder %s27, 0
        // Predicated region
        $region64: #{forward.4} parent=50 // pred_check
          %p364 = pneg %p363
        $region65: #{forward.4} parent=50 // pred_check_branch
          %366 = sbr.rel (%p364) target = $region67
        $region66: #{forward.4} parent=50 // pred_region
          %367 = vst [vmem:[#allocation2] sm:$0xff] 0.0
          %368 = vst [vmem:[#allocation2 + $0x8] sm:$0xff] 0.0
          %369 = vst [vmem:[#allocation2 + $0x10] sm:$0xff] 0.0
          %370 = vst [vmem:[#allocation2 + $0x18] sm:$0xff] 0.0
          %371 = vst [vmem:[#allocation2 + $0x20] sm:$0xff] 0.0
          %372 = vst [vmem:[#allocation2 + $0x28] sm:$0xff] 0.0
          %373 = vst [vmem:[#allocation2 + $0x30] sm:$0xff] 0.0
          %374 = vst [vmem:[#allocation2 + $0x38] sm:$0xff] 0.0
        $region67: #{forward.4} parent=50 // pred_fallthru
          _
        %v375 = vld [vmem:[#allocation2] sm:$0xff]
        %v376 = vld [vmem:[#allocation2 + $0x8] sm:$0xff]
        %v377 = vld [vmem:[#allocation2 + $0x10] sm:$0xff]
        %v378 = vld [vmem:[#allocation2 + $0x18] sm:$0xff]
        %v379 = vld [vmem:[#allocation2 + $0x20] sm:$0xff]
        %v380 = vld [vmem:[#allocation2 + $0x28] sm:$0xff]
        %v381 = vld [vmem:[#allocation2 + $0x30] sm:$0xff]
        %v382 = vld [vmem:[#allocation2 + $0x38] sm:$0xff]
        %v383 = vld [vmem:[%s308] sm:$0xff]
        %v384 = vld [vmem:[%s308 + $0x8] sm:$0xff]
        %v385 = vld [vmem:[%s308 + $0x10] sm:$0xff]
        %v386 = vld [vmem:[%s308 + $0x18] sm:$0xff]
        %v387 = vld [vmem:[%s308 + $0x20] sm:$0xff]
        %v388 = vld [vmem:[%s308 + $0x28] sm:$0xff]
        %v389 = vld [vmem:[%s308 + $0x30] sm:$0xff]
        %v390 = vld [vmem:[%s308 + $0x38] sm:$0xff]
        %v391 = vld [vmem:[%s308 + $0x40] sm:$0xff]
        %v392 = vld [vmem:[%s308 + $0x48] sm:$0xff]
        %v393 = vld [vmem:[%s308 + $0x50] sm:$0xff]
        %v394 = vld [vmem:[%s308 + $0x58] sm:$0xff]
        %v395 = vld [vmem:[%s308 + $0x60] sm:$0xff]
        %v396 = vld [vmem:[%s308 + $0x68] sm:$0xff]
        %v397 = vld [vmem:[%s308 + $0x70] sm:$0xff]
        %v398 = vld [vmem:[%s308 + $0x78] sm:$0xff]
        %v399 = vld [vmem:[%s308 + $0x80] sm:$0xff]
        %v400 = vld [vmem:[%s308 + $0x88] sm:$0xff]
        %v401 = vld [vmem:[%s308 + $0x90] sm:$0xff]
        %v402 = vld [vmem:[%s308 + $0x98] sm:$0xff]
        %v403 = vld [vmem:[%s308 + $0xa0] sm:$0xff]
        %v404 = vld [vmem:[%s308 + $0xa8] sm:$0xff]
        %v405 = vld [vmem:[%s308 + $0xb0] sm:$0xff]
        %v406 = vld [vmem:[%s308 + $0xb8] sm:$0xff]
        %v407 = vld [vmem:[%s308 + $0xc0] sm:$0xff]
        %v408 = vld [vmem:[%s308 + $0xc8] sm:$0xff]
        %v409 = vld [vmem:[%s308 + $0xd0] sm:$0xff]
        %v410 = vld [vmem:[%s308 + $0xd8] sm:$0xff]
        %v411 = vld [vmem:[%s308 + $0xe0] sm:$0xff]
        %v412 = vld [vmem:[%s308 + $0xe8] sm:$0xff]
        %v413 = vld [vmem:[%s308 + $0xf0] sm:$0xff]
        %v414 = vld [vmem:[%s308 + $0xf8] sm:$0xff]
        %v415 = vld [vmem:[%s316] sm:$0xff]
        %v416 = vld [vmem:[%s316 + $0x8] sm:$0xff]
        %v417 = vld [vmem:[%s316 + $0x10] sm:$0xff]
        %v418 = vld [vmem:[%s316 + $0x18] sm:$0xff]
        %v419 = vld [vmem:[%s316 + $0x20] sm:$0xff]
        %v420 = vld [vmem:[%s316 + $0x28] sm:$0xff]
        %v421 = vld [vmem:[%s316 + $0x30] sm:$0xff]
        %v422 = vld [vmem:[%s316 + $0x38] sm:$0xff]
        %v423 = vld [vmem:[%s316 + $0x40] sm:$0xff]
        %v424 = vld [vmem:[%s316 + $0x48] sm:$0xff]
        %v425 = vld [vmem:[%s316 + $0x50] sm:$0xff]
        %v426 = vld [vmem:[%s316 + $0x58] sm:$0xff]
        %v427 = vld [vmem:[%s316 + $0x60] sm:$0xff]
        %v428 = vld [vmem:[%s316 + $0x68] sm:$0xff]
        %v429 = vld [vmem:[%s316 + $0x70] sm:$0xff]
        %v430 = vld [vmem:[%s316 + $0x78] sm:$0xff]
        %v431 = vld [vmem:[%s316 + $0x80] sm:$0xff]
        %v432 = vld [vmem:[%s316 + $0x88] sm:$0xff]
        %v433 = vld [vmem:[%s316 + $0x90] sm:$0xff]
        %v434 = vld [vmem:[%s316 + $0x98] sm:$0xff]
        %v435 = vld [vmem:[%s316 + $0xa0] sm:$0xff]
        %v436 = vld [vmem:[%s316 + $0xa8] sm:$0xff]
        %v437 = vld [vmem:[%s316 + $0xb0] sm:$0xff]
        %v438 = vld [vmem:[%s316 + $0xb8] sm:$0xff]
        %v439 = vld [vmem:[%s316 + $0xc0] sm:$0xff]
        %v440 = vld [vmem:[%s316 + $0xc8] sm:$0xff]
        %v441 = vld [vmem:[%s316 + $0xd0] sm:$0xff]
        %v442 = vld [vmem:[%s316 + $0xd8] sm:$0xff]
        %v443 = vld [vmem:[%s316 + $0xe0] sm:$0xff]
        %v444 = vld [vmem:[%s316 + $0xe8] sm:$0xff]
        %v445 = vld [vmem:[%s316 + $0xf0] sm:$0xff]
        %v446 = vld [vmem:[%s316 + $0xf8] sm:$0xff]
        %v447 = vld [vmem:[%s316 + $0x100] sm:$0xff]
        %v448 = vld [vmem:[%s316 + $0x108] sm:$0xff]
        %v449 = vld [vmem:[%s316 + $0x110] sm:$0xff]
        %v450 = vld [vmem:[%s316 + $0x118] sm:$0xff]
        %v451 = vld [vmem:[%s316 + $0x120] sm:$0xff]
        %v452 = vld [vmem:[%s316 + $0x128] sm:$0xff]
        %v453 = vld [vmem:[%s316 + $0x130] sm:$0xff]
        %v454 = vld [vmem:[%s316 + $0x138] sm:$0xff]
        %v455 = vld [vmem:[%s316 + $0x140] sm:$0xff]
        %v456 = vld [vmem:[%s316 + $0x148] sm:$0xff]
        %v457 = vld [vmem:[%s316 + $0x150] sm:$0xff]
        %v458 = vld [vmem:[%s316 + $0x158] sm:$0xff]
        %v459 = vld [vmem:[%s316 + $0x160] sm:$0xff]
        %v460 = vld [vmem:[%s316 + $0x168] sm:$0xff]
        %v461 = vld [vmem:[%s316 + $0x170] sm:$0xff]
        %v462 = vld [vmem:[%s316 + $0x178] sm:$0xff]
        %v463 = vld [vmem:[%s316 + $0x180] sm:$0xff]
        %v464 = vld [vmem:[%s316 + $0x188] sm:$0xff]
        %v465 = vld [vmem:[%s316 + $0x190] sm:$0xff]
        %v466 = vld [vmem:[%s316 + $0x198] sm:$0xff]
        %v467 = vld [vmem:[%s316 + $0x1a0] sm:$0xff]
        %v468 = vld [vmem:[%s316 + $0x1a8] sm:$0xff]
        %v469 = vld [vmem:[%s316 + $0x1b0] sm:$0xff]
        %v470 = vld [vmem:[%s316 + $0x1b8] sm:$0xff]
        %v471 = vld [vmem:[%s316 + $0x1c0] sm:$0xff]
        %v472 = vld [vmem:[%s316 + $0x1c8] sm:$0xff]
        %v473 = vld [vmem:[%s316 + $0x1d0] sm:$0xff]
        %v474 = vld [vmem:[%s316 + $0x1d8] sm:$0xff]
        %v475 = vld [vmem:[%s316 + $0x1e0] sm:$0xff]
        %v476 = vld [vmem:[%s316 + $0x1e8] sm:$0xff]
        %v477 = vld [vmem:[%s316 + $0x1f0] sm:$0xff]
        %v478 = vld [vmem:[%s316 + $0x1f8] sm:$0xff]
        %v479 = vld [vmem:[%s316 + $0x200] sm:$0xff]
        %v480 = vld [vmem:[%s316 + $0x208] sm:$0xff]
        %v481 = vld [vmem:[%s316 + $0x210] sm:$0xff]
        %v482 = vld [vmem:[%s316 + $0x218] sm:$0xff]
        %v483 = vld [vmem:[%s316 + $0x220] sm:$0xff]
        %v484 = vld [vmem:[%s316 + $0x228] sm:$0xff]
        %v485 = vld [vmem:[%s316 + $0x230] sm:$0xff]
        %v486 = vld [vmem:[%s316 + $0x238] sm:$0xff]
        %v487 = vld [vmem:[%s316 + $0x240] sm:$0xff]
        %v488 = vld [vmem:[%s316 + $0x248] sm:$0xff]
        %v489 = vld [vmem:[%s316 + $0x250] sm:$0xff]
        %v490 = vld [vmem:[%s316 + $0x258] sm:$0xff]
        %v491 = vld [vmem:[%s316 + $0x260] sm:$0xff]
        %v492 = vld [vmem:[%s316 + $0x268] sm:$0xff]
        %v493 = vld [vmem:[%s316 + $0x270] sm:$0xff]
        %v494 = vld [vmem:[%s316 + $0x278] sm:$0xff]
        %v495 = vld [vmem:[%s316 + $0x280] sm:$0xff]
        %v496 = vld [vmem:[%s316 + $0x288] sm:$0xff]
        %v497 = vld [vmem:[%s316 + $0x290] sm:$0xff]
        %v498 = vld [vmem:[%s316 + $0x298] sm:$0xff]
        %v499 = vld [vmem:[%s316 + $0x2a0] sm:$0xff]
        %v500 = vld [vmem:[%s316 + $0x2a8] sm:$0xff]
        %v501 = vld [vmem:[%s316 + $0x2b0] sm:$0xff]
        %v502 = vld [vmem:[%s316 + $0x2b8] sm:$0xff]
        %v503 = vld [vmem:[%s316 + $0x2c0] sm:$0xff]
        %v504 = vld [vmem:[%s316 + $0x2c8] sm:$0xff]
        %v505 = vld [vmem:[%s316 + $0x2d0] sm:$0xff]
        %v506 = vld [vmem:[%s316 + $0x2d8] sm:$0xff]
        %v507 = vld [vmem:[%s316 + $0x2e0] sm:$0xff]
        %v508 = vld [vmem:[%s316 + $0x2e8] sm:$0xff]
        %v509 = vld [vmem:[%s316 + $0x2f0] sm:$0xff]
        %v510 = vld [vmem:[%s316 + $0x2f8] sm:$0xff]
        %v511 = vld [vmem:[%s316 + $0x300] sm:$0xff]
        %v512 = vld [vmem:[%s316 + $0x308] sm:$0xff]
        %v513 = vld [vmem:[%s316 + $0x310] sm:$0xff]
        %v514 = vld [vmem:[%s316 + $0x318] sm:$0xff]
        %v515 = vld [vmem:[%s316 + $0x320] sm:$0xff]
        %v516 = vld [vmem:[%s316 + $0x328] sm:$0xff]
        %v517 = vld [vmem:[%s316 + $0x330] sm:$0xff]
        %v518 = vld [vmem:[%s316 + $0x338] sm:$0xff]
        %v519 = vld [vmem:[%s316 + $0x340] sm:$0xff]
        %v520 = vld [vmem:[%s316 + $0x348] sm:$0xff]
        %v521 = vld [vmem:[%s316 + $0x350] sm:$0xff]
        %v522 = vld [vmem:[%s316 + $0x358] sm:$0xff]
        %v523 = vld [vmem:[%s316 + $0x360] sm:$0xff]
        %v524 = vld [vmem:[%s316 + $0x368] sm:$0xff]
        %v525 = vld [vmem:[%s316 + $0x370] sm:$0xff]
        %v526 = vld [vmem:[%s316 + $0x378] sm:$0xff]
        %v527 = vld [vmem:[%s316 + $0x380] sm:$0xff]
        %v528 = vld [vmem:[%s316 + $0x388] sm:$0xff]
        %v529 = vld [vmem:[%s316 + $0x390] sm:$0xff]
        %v530 = vld [vmem:[%s316 + $0x398] sm:$0xff]
        %v531 = vld [vmem:[%s316 + $0x3a0] sm:$0xff]
        %v532 = vld [vmem:[%s316 + $0x3a8] sm:$0xff]
        %v533 = vld [vmem:[%s316 + $0x3b0] sm:$0xff]
        %v534 = vld [vmem:[%s316 + $0x3b8] sm:$0xff]
        %v535 = vld [vmem:[%s316 + $0x3c0] sm:$0xff]
        %v536 = vld [vmem:[%s316 + $0x3c8] sm:$0xff]
        %v537 = vld [vmem:[%s316 + $0x3d0] sm:$0xff]
        %v538 = vld [vmem:[%s316 + $0x3d8] sm:$0xff]
        %v539 = vld [vmem:[%s316 + $0x3e0] sm:$0xff]
        %v540 = vld [vmem:[%s316 + $0x3e8] sm:$0xff]
        %v541 = vld [vmem:[%s316 + $0x3f0] sm:$0xff]
        %v542 = vld [vmem:[%s316 + $0x3f8] sm:$0xff]
        %v543 = vld [vmem:[%s316 + $0x400] sm:$0xff]
        %v544 = vld [vmem:[%s316 + $0x408] sm:$0xff]
        %v545 = vld [vmem:[%s316 + $0x410] sm:$0xff]
        %v546 = vld [vmem:[%s316 + $0x418] sm:$0xff]
        %v547 = vld [vmem:[%s316 + $0x420] sm:$0xff]
        %v548 = vld [vmem:[%s316 + $0x428] sm:$0xff]
        %v549 = vld [vmem:[%s316 + $0x430] sm:$0xff]
        %v550 = vld [vmem:[%s316 + $0x438] sm:$0xff]
        %v551 = vld [vmem:[%s316 + $0x440] sm:$0xff]
        %v552 = vld [vmem:[%s316 + $0x448] sm:$0xff]
        %v553 = vld [vmem:[%s316 + $0x450] sm:$0xff]
        %v554 = vld [vmem:[%s316 + $0x458] sm:$0xff]
        %v555 = vld [vmem:[%s316 + $0x460] sm:$0xff]
        %v556 = vld [vmem:[%s316 + $0x468] sm:$0xff]
        %v557 = vld [vmem:[%s316 + $0x470] sm:$0xff]
        %v558 = vld [vmem:[%s316 + $0x478] sm:$0xff]
        %v559 = vld [vmem:[%s316 + $0x480] sm:$0xff]
        %v560 = vld [vmem:[%s316 + $0x488] sm:$0xff]
        %v561 = vld [vmem:[%s316 + $0x490] sm:$0xff]
        %v562 = vld [vmem:[%s316 + $0x498] sm:$0xff]
        %v563 = vld [vmem:[%s316 + $0x4a0] sm:$0xff]
        %v564 = vld [vmem:[%s316 + $0x4a8] sm:$0xff]
        %v565 = vld [vmem:[%s316 + $0x4b0] sm:$0xff]
        %v566 = vld [vmem:[%s316 + $0x4b8] sm:$0xff]
        %v567 = vld [vmem:[%s316 + $0x4c0] sm:$0xff]
        %v568 = vld [vmem:[%s316 + $0x4c8] sm:$0xff]
        %v569 = vld [vmem:[%s316 + $0x4d0] sm:$0xff]
        %v570 = vld [vmem:[%s316 + $0x4d8] sm:$0xff]
        %v571 = vld [vmem:[%s316 + $0x4e0] sm:$0xff]
        %v572 = vld [vmem:[%s316 + $0x4e8] sm:$0xff]
        %v573 = vld [vmem:[%s316 + $0x4f0] sm:$0xff]
        %v574 = vld [vmem:[%s316 + $0x4f8] sm:$0xff]
        %v575 = vld [vmem:[%s316 + $0x500] sm:$0xff]
        %v576 = vld [vmem:[%s316 + $0x508] sm:$0xff]
        %v577 = vld [vmem:[%s316 + $0x510] sm:$0xff]
        %v578 = vld [vmem:[%s316 + $0x518] sm:$0xff]
        %v579 = vld [vmem:[%s316 + $0x520] sm:$0xff]
        %v580 = vld [vmem:[%s316 + $0x528] sm:$0xff]
        %v581 = vld [vmem:[%s316 + $0x530] sm:$0xff]
        %v582 = vld [vmem:[%s316 + $0x538] sm:$0xff]
        %v583 = vld [vmem:[%s316 + $0x540] sm:$0xff]
        %v584 = vld [vmem:[%s316 + $0x548] sm:$0xff]
        %v585 = vld [vmem:[%s316 + $0x550] sm:$0xff]
        %v586 = vld [vmem:[%s316 + $0x558] sm:$0xff]
        %v587 = vld [vmem:[%s316 + $0x560] sm:$0xff]
        %v588 = vld [vmem:[%s316 + $0x568] sm:$0xff]
        %v589 = vld [vmem:[%s316 + $0x570] sm:$0xff]
        %v590 = vld [vmem:[%s316 + $0x578] sm:$0xff]
        %v591 = vld [vmem:[%s316 + $0x580] sm:$0xff]
        %v592 = vld [vmem:[%s316 + $0x588] sm:$0xff]
        %v593 = vld [vmem:[%s316 + $0x590] sm:$0xff]
        %v594 = vld [vmem:[%s316 + $0x598] sm:$0xff]
        %v595 = vld [vmem:[%s316 + $0x5a0] sm:$0xff]
        %v596 = vld [vmem:[%s316 + $0x5a8] sm:$0xff]
        %v597 = vld [vmem:[%s316 + $0x5b0] sm:$0xff]
        %v598 = vld [vmem:[%s316 + $0x5b8] sm:$0xff]
        %v599 = vld [vmem:[%s316 + $0x5c0] sm:$0xff]
        %v600 = vld [vmem:[%s316 + $0x5c8] sm:$0xff]
        %v601 = vld [vmem:[%s316 + $0x5d0] sm:$0xff]
        %v602 = vld [vmem:[%s316 + $0x5d8] sm:$0xff]
        %v603 = vld [vmem:[%s316 + $0x5e0] sm:$0xff]
        %v604 = vld [vmem:[%s316 + $0x5e8] sm:$0xff]
        %v605 = vld [vmem:[%s316 + $0x5f0] sm:$0xff]
        %v606 = vld [vmem:[%s316 + $0x5f8] sm:$0xff]
        %v607 = vld [vmem:[%s316 + $0x600] sm:$0xff]
        %v608 = vld [vmem:[%s316 + $0x608] sm:$0xff]
        %v609 = vld [vmem:[%s316 + $0x610] sm:$0xff]
        %v610 = vld [vmem:[%s316 + $0x618] sm:$0xff]
        %v611 = vld [vmem:[%s316 + $0x620] sm:$0xff]
        %v612 = vld [vmem:[%s316 + $0x628] sm:$0xff]
        %v613 = vld [vmem:[%s316 + $0x630] sm:$0xff]
        %v614 = vld [vmem:[%s316 + $0x638] sm:$0xff]
        %v615 = vld [vmem:[%s316 + $0x640] sm:$0xff]
        %v616 = vld [vmem:[%s316 + $0x648] sm:$0xff]
        %v617 = vld [vmem:[%s316 + $0x650] sm:$0xff]
        %v618 = vld [vmem:[%s316 + $0x658] sm:$0xff]
        %v619 = vld [vmem:[%s316 + $0x660] sm:$0xff]
        %v620 = vld [vmem:[%s316 + $0x668] sm:$0xff]
        %v621 = vld [vmem:[%s316 + $0x670] sm:$0xff]
        %v622 = vld [vmem:[%s316 + $0x678] sm:$0xff]
        %v623 = vld [vmem:[%s316 + $0x680] sm:$0xff]
        %v624 = vld [vmem:[%s316 + $0x688] sm:$0xff]
        %v625 = vld [vmem:[%s316 + $0x690] sm:$0xff]
        %v626 = vld [vmem:[%s316 + $0x698] sm:$0xff]
        %v627 = vld [vmem:[%s316 + $0x6a0] sm:$0xff]
        %v628 = vld [vmem:[%s316 + $0x6a8] sm:$0xff]
        %v629 = vld [vmem:[%s316 + $0x6b0] sm:$0xff]
        %v630 = vld [vmem:[%s316 + $0x6b8] sm:$0xff]
        %v631 = vld [vmem:[%s316 + $0x6c0] sm:$0xff]
        %v632 = vld [vmem:[%s316 + $0x6c8] sm:$0xff]
        %v633 = vld [vmem:[%s316 + $0x6d0] sm:$0xff]
        %v634 = vld [vmem:[%s316 + $0x6d8] sm:$0xff]
        %v635 = vld [vmem:[%s316 + $0x6e0] sm:$0xff]
        %v636 = vld [vmem:[%s316 + $0x6e8] sm:$0xff]
        %v637 = vld [vmem:[%s316 + $0x6f0] sm:$0xff]
        %v638 = vld [vmem:[%s316 + $0x6f8] sm:$0xff]
        %v639 = vld [vmem:[%s316 + $0x700] sm:$0xff]
        %v640 = vld [vmem:[%s316 + $0x708] sm:$0xff]
        %v641 = vld [vmem:[%s316 + $0x710] sm:$0xff]
        %v642 = vld [vmem:[%s316 + $0x718] sm:$0xff]
        %v643 = vld [vmem:[%s316 + $0x720] sm:$0xff]
        %v644 = vld [vmem:[%s316 + $0x728] sm:$0xff]
        %v645 = vld [vmem:[%s316 + $0x730] sm:$0xff]
        %v646 = vld [vmem:[%s316 + $0x738] sm:$0xff]
        %v647 = vld [vmem:[%s316 + $0x740] sm:$0xff]
        %v648 = vld [vmem:[%s316 + $0x748] sm:$0xff]
        %v649 = vld [vmem:[%s316 + $0x750] sm:$0xff]
        %v650 = vld [vmem:[%s316 + $0x758] sm:$0xff]
        %v651 = vld [vmem:[%s316 + $0x760] sm:$0xff]
        %v652 = vld [vmem:[%s316 + $0x768] sm:$0xff]
        %v653 = vld [vmem:[%s316 + $0x770] sm:$0xff]
        %v654 = vld [vmem:[%s316 + $0x778] sm:$0xff]
        %v655 = vld [vmem:[%s316 + $0x780] sm:$0xff]
        %v656 = vld [vmem:[%s316 + $0x788] sm:$0xff]
        %v657 = vld [vmem:[%s316 + $0x790] sm:$0xff]
        %v658 = vld [vmem:[%s316 + $0x798] sm:$0xff]
        %v659 = vld [vmem:[%s316 + $0x7a0] sm:$0xff]
        %v660 = vld [vmem:[%s316 + $0x7a8] sm:$0xff]
        %v661 = vld [vmem:[%s316 + $0x7b0] sm:$0xff]
        %v662 = vld [vmem:[%s316 + $0x7b8] sm:$0xff]
        %v663 = vld [vmem:[%s316 + $0x7c0] sm:$0xff]
        %v664 = vld [vmem:[%s316 + $0x7c8] sm:$0xff]
        %v665 = vld [vmem:[%s316 + $0x7d0] sm:$0xff]
        %v666 = vld [vmem:[%s316 + $0x7d8] sm:$0xff]
        %v667 = vld [vmem:[%s316 + $0x7e0] sm:$0xff]
        %v668 = vld [vmem:[%s316 + $0x7e8] sm:$0xff]
        %v669 = vld [vmem:[%s316 + $0x7f0] sm:$0xff]
        %v670 = vld [vmem:[%s316 + $0x7f8] sm:$0xff]
        %v671 = vld [vmem:[%s316 + $0x800] sm:$0xff]
        %v672 = vld [vmem:[%s316 + $0x808] sm:$0xff]
        %v673 = vld [vmem:[%s316 + $0x810] sm:$0xff]
        %v674 = vld [vmem:[%s316 + $0x818] sm:$0xff]
        %v675 = vld [vmem:[%s316 + $0x820] sm:$0xff]
        %v676 = vld [vmem:[%s316 + $0x828] sm:$0xff]
        %v677 = vld [vmem:[%s316 + $0x830] sm:$0xff]
        %v678 = vld [vmem:[%s316 + $0x838] sm:$0xff]
        %v679 = vld [vmem:[%s316 + $0x840] sm:$0xff]
        %v680 = vld [vmem:[%s316 + $0x848] sm:$0xff]
        %v681 = vld [vmem:[%s316 + $0x850] sm:$0xff]
        %v682 = vld [vmem:[%s316 + $0x858] sm:$0xff]
        %v683 = vld [vmem:[%s316 + $0x860] sm:$0xff]
        %v684 = vld [vmem:[%s316 + $0x868] sm:$0xff]
        %v685 = vld [vmem:[%s316 + $0x870] sm:$0xff]
        %v686 = vld [vmem:[%s316 + $0x878] sm:$0xff]
        %v687 = vld [vmem:[%s316 + $0x880] sm:$0xff]
        %v688 = vld [vmem:[%s316 + $0x888] sm:$0xff]
        %v689 = vld [vmem:[%s316 + $0x890] sm:$0xff]
        %v690 = vld [vmem:[%s316 + $0x898] sm:$0xff]
        %v691 = vld [vmem:[%s316 + $0x8a0] sm:$0xff]
        %v692 = vld [vmem:[%s316 + $0x8a8] sm:$0xff]
        %v693 = vld [vmem:[%s316 + $0x8b0] sm:$0xff]
        %v694 = vld [vmem:[%s316 + $0x8b8] sm:$0xff]
        %v695 = vld [vmem:[%s316 + $0x8c0] sm:$0xff]
        %v696 = vld [vmem:[%s316 + $0x8c8] sm:$0xff]
        %v697 = vld [vmem:[%s316 + $0x8d0] sm:$0xff]
        %v698 = vld [vmem:[%s316 + $0x8d8] sm:$0xff]
        %v699 = vld [vmem:[%s316 + $0x8e0] sm:$0xff]
        %v700 = vld [vmem:[%s316 + $0x8e8] sm:$0xff]
        %v701 = vld [vmem:[%s316 + $0x8f0] sm:$0xff]
        %v702 = vld [vmem:[%s316 + $0x8f8] sm:$0xff]
        %v703 = vld [vmem:[%s316 + $0x900] sm:$0xff]
        %v704 = vld [vmem:[%s316 + $0x908] sm:$0xff]
        %v705 = vld [vmem:[%s316 + $0x910] sm:$0xff]
        %v706 = vld [vmem:[%s316 + $0x918] sm:$0xff]
        %v707 = vld [vmem:[%s316 + $0x920] sm:$0xff]
        %v708 = vld [vmem:[%s316 + $0x928] sm:$0xff]
        %v709 = vld [vmem:[%s316 + $0x930] sm:$0xff]
        %v710 = vld [vmem:[%s316 + $0x938] sm:$0xff]
        %v711 = vld [vmem:[%s316 + $0x940] sm:$0xff]
        %v712 = vld [vmem:[%s316 + $0x948] sm:$0xff]
        %v713 = vld [vmem:[%s316 + $0x950] sm:$0xff]
        %v714 = vld [vmem:[%s316 + $0x958] sm:$0xff]
        %v715 = vld [vmem:[%s316 + $0x960] sm:$0xff]
        %v716 = vld [vmem:[%s316 + $0x968] sm:$0xff]
        %v717 = vld [vmem:[%s316 + $0x970] sm:$0xff]
        %v718 = vld [vmem:[%s316 + $0x978] sm:$0xff]
        %v719 = vld [vmem:[%s316 + $0x980] sm:$0xff]
        %v720 = vld [vmem:[%s316 + $0x988] sm:$0xff]
        %v721 = vld [vmem:[%s316 + $0x990] sm:$0xff]
        %v722 = vld [vmem:[%s316 + $0x998] sm:$0xff]
        %v723 = vld [vmem:[%s316 + $0x9a0] sm:$0xff]
        %v724 = vld [vmem:[%s316 + $0x9a8] sm:$0xff]
        %v725 = vld [vmem:[%s316 + $0x9b0] sm:$0xff]
        %v726 = vld [vmem:[%s316 + $0x9b8] sm:$0xff]
        %v727 = vld [vmem:[%s316 + $0x9c0] sm:$0xff]
        %v728 = vld [vmem:[%s316 + $0x9c8] sm:$0xff]
        %v729 = vld [vmem:[%s316 + $0x9d0] sm:$0xff]
        %v730 = vld [vmem:[%s316 + $0x9d8] sm:$0xff]
        %v731 = vld [vmem:[%s316 + $0x9e0] sm:$0xff]
        %v732 = vld [vmem:[%s316 + $0x9e8] sm:$0xff]
        %v733 = vld [vmem:[%s316 + $0x9f0] sm:$0xff]
        %v734 = vld [vmem:[%s316 + $0x9f8] sm:$0xff]
        %v735 = vld [vmem:[%s316 + $0xa00] sm:$0xff]
        %v736 = vld [vmem:[%s316 + $0xa08] sm:$0xff]
        %v737 = vld [vmem:[%s316 + $0xa10] sm:$0xff]
        %v738 = vld [vmem:[%s316 + $0xa18] sm:$0xff]
        %v739 = vld [vmem:[%s316 + $0xa20] sm:$0xff]
        %v740 = vld [vmem:[%s316 + $0xa28] sm:$0xff]
        %v741 = vld [vmem:[%s316 + $0xa30] sm:$0xff]
        %v742 = vld [vmem:[%s316 + $0xa38] sm:$0xff]
        %v743 = vld [vmem:[%s316 + $0xa40] sm:$0xff]
        %v744 = vld [vmem:[%s316 + $0xa48] sm:$0xff]
        %v745 = vld [vmem:[%s316 + $0xa50] sm:$0xff]
        %v746 = vld [vmem:[%s316 + $0xa58] sm:$0xff]
        %v747 = vld [vmem:[%s316 + $0xa60] sm:$0xff]
        %v748 = vld [vmem:[%s316 + $0xa68] sm:$0xff]
        %v749 = vld [vmem:[%s316 + $0xa70] sm:$0xff]
        %v750 = vld [vmem:[%s316 + $0xa78] sm:$0xff]
        %v751 = vld [vmem:[%s316 + $0xa80] sm:$0xff]
        %v752 = vld [vmem:[%s316 + $0xa88] sm:$0xff]
        %v753 = vld [vmem:[%s316 + $0xa90] sm:$0xff]
        %v754 = vld [vmem:[%s316 + $0xa98] sm:$0xff]
        %v755 = vld [vmem:[%s316 + $0xaa0] sm:$0xff]
        %v756 = vld [vmem:[%s316 + $0xaa8] sm:$0xff]
        %v757 = vld [vmem:[%s316 + $0xab0] sm:$0xff]
        %v758 = vld [vmem:[%s316 + $0xab8] sm:$0xff]
        %v759 = vld [vmem:[%s316 + $0xac0] sm:$0xff]
        %v760 = vld [vmem:[%s316 + $0xac8] sm:$0xff]
        %v761 = vld [vmem:[%s316 + $0xad0] sm:$0xff]
        %v762 = vld [vmem:[%s316 + $0xad8] sm:$0xff]
        %v763 = vld [vmem:[%s316 + $0xae0] sm:$0xff]
        %v764 = vld [vmem:[%s316 + $0xae8] sm:$0xff]
        %v765 = vld [vmem:[%s316 + $0xaf0] sm:$0xff]
        %v766 = vld [vmem:[%s316 + $0xaf8] sm:$0xff]
        %v767 = vld [vmem:[%s316 + $0xb00] sm:$0xff]
        %v768 = vld [vmem:[%s316 + $0xb08] sm:$0xff]
        %v769 = vld [vmem:[%s316 + $0xb10] sm:$0xff]
        %v770 = vld [vmem:[%s316 + $0xb18] sm:$0xff]
        %v771 = vld [vmem:[%s316 + $0xb20] sm:$0xff]
        %v772 = vld [vmem:[%s316 + $0xb28] sm:$0xff]
        %v773 = vld [vmem:[%s316 + $0xb30] sm:$0xff]
        %v774 = vld [vmem:[%s316 + $0xb38] sm:$0xff]
        %v775 = vld [vmem:[%s316 + $0xb40] sm:$0xff]
        %v776 = vld [vmem:[%s316 + $0xb48] sm:$0xff]
        %v777 = vld [vmem:[%s316 + $0xb50] sm:$0xff]
        %v778 = vld [vmem:[%s316 + $0xb58] sm:$0xff]
        %v779 = vld [vmem:[%s316 + $0xb60] sm:$0xff]
        %v780 = vld [vmem:[%s316 + $0xb68] sm:$0xff]
        %v781 = vld [vmem:[%s316 + $0xb70] sm:$0xff]
        %v782 = vld [vmem:[%s316 + $0xb78] sm:$0xff]
        %v783 = vld [vmem:[%s316 + $0xb80] sm:$0xff]
        %v784 = vld [vmem:[%s316 + $0xb88] sm:$0xff]
        %v785 = vld [vmem:[%s316 + $0xb90] sm:$0xff]
        %v786 = vld [vmem:[%s316 + $0xb98] sm:$0xff]
        %v787 = vld [vmem:[%s316 + $0xba0] sm:$0xff]
        %v788 = vld [vmem:[%s316 + $0xba8] sm:$0xff]
        %v789 = vld [vmem:[%s316 + $0xbb0] sm:$0xff]
        %v790 = vld [vmem:[%s316 + $0xbb8] sm:$0xff]
        %v791 = vld [vmem:[%s316 + $0xbc0] sm:$0xff]
        %v792 = vld [vmem:[%s316 + $0xbc8] sm:$0xff]
        %v793 = vld [vmem:[%s316 + $0xbd0] sm:$0xff]
        %v794 = vld [vmem:[%s316 + $0xbd8] sm:$0xff]
        %v795 = vld [vmem:[%s316 + $0xbe0] sm:$0xff]
        %v796 = vld [vmem:[%s316 + $0xbe8] sm:$0xff]
        %v797 = vld [vmem:[%s316 + $0xbf0] sm:$0xff]
        %v798 = vld [vmem:[%s316 + $0xbf8] sm:$0xff]
        %v799 = vld [vmem:[%s316 + $0xc00] sm:$0xff]
        %v800 = vld [vmem:[%s316 + $0xc08] sm:$0xff]
        %v801 = vld [vmem:[%s316 + $0xc10] sm:$0xff]
        %v802 = vld [vmem:[%s316 + $0xc18] sm:$0xff]
        %v803 = vld [vmem:[%s316 + $0xc20] sm:$0xff]
        %v804 = vld [vmem:[%s316 + $0xc28] sm:$0xff]
        %v805 = vld [vmem:[%s316 + $0xc30] sm:$0xff]
        %v806 = vld [vmem:[%s316 + $0xc38] sm:$0xff]
        %v807 = vld [vmem:[%s316 + $0xc40] sm:$0xff]
        %v808 = vld [vmem:[%s316 + $0xc48] sm:$0xff]
        %v809 = vld [vmem:[%s316 + $0xc50] sm:$0xff]
        %v810 = vld [vmem:[%s316 + $0xc58] sm:$0xff]
        %v811 = vld [vmem:[%s316 + $0xc60] sm:$0xff]
        %v812 = vld [vmem:[%s316 + $0xc68] sm:$0xff]
        %v813 = vld [vmem:[%s316 + $0xc70] sm:$0xff]
        %v814 = vld [vmem:[%s316 + $0xc78] sm:$0xff]
        %v815 = vld [vmem:[%s316 + $0xc80] sm:$0xff]
        %v816 = vld [vmem:[%s316 + $0xc88] sm:$0xff]
        %v817 = vld [vmem:[%s316 + $0xc90] sm:$0xff]
        %v818 = vld [vmem:[%s316 + $0xc98] sm:$0xff]
        %v819 = vld [vmem:[%s316 + $0xca0] sm:$0xff]
        %v820 = vld [vmem:[%s316 + $0xca8] sm:$0xff]
        %v821 = vld [vmem:[%s316 + $0xcb0] sm:$0xff]
        %v822 = vld [vmem:[%s316 + $0xcb8] sm:$0xff]
        %v823 = vld [vmem:[%s316 + $0xcc0] sm:$0xff]
        %v824 = vld [vmem:[%s316 + $0xcc8] sm:$0xff]
        %v825 = vld [vmem:[%s316 + $0xcd0] sm:$0xff]
        %v826 = vld [vmem:[%s316 + $0xcd8] sm:$0xff]
        %v827 = vld [vmem:[%s316 + $0xce0] sm:$0xff]
        %v828 = vld [vmem:[%s316 + $0xce8] sm:$0xff]
        %v829 = vld [vmem:[%s316 + $0xcf0] sm:$0xff]
        %v830 = vld [vmem:[%s316 + $0xcf8] sm:$0xff]
        %v831 = vld [vmem:[%s316 + $0xd00] sm:$0xff]
        %v832 = vld [vmem:[%s316 + $0xd08] sm:$0xff]
        %v833 = vld [vmem:[%s316 + $0xd10] sm:$0xff]
        %v834 = vld [vmem:[%s316 + $0xd18] sm:$0xff]
        %v835 = vld [vmem:[%s316 + $0xd20] sm:$0xff]
        %v836 = vld [vmem:[%s316 + $0xd28] sm:$0xff]
        %v837 = vld [vmem:[%s316 + $0xd30] sm:$0xff]
        %v838 = vld [vmem:[%s316 + $0xd38] sm:$0xff]
        %v839 = vld [vmem:[%s316 + $0xd40] sm:$0xff]
        %v840 = vld [vmem:[%s316 + $0xd48] sm:$0xff]
        %v841 = vld [vmem:[%s316 + $0xd50] sm:$0xff]
        %v842 = vld [vmem:[%s316 + $0xd58] sm:$0xff]
        %v843 = vld [vmem:[%s316 + $0xd60] sm:$0xff]
        %v844 = vld [vmem:[%s316 + $0xd68] sm:$0xff]
        %v845 = vld [vmem:[%s316 + $0xd70] sm:$0xff]
        %v846 = vld [vmem:[%s316 + $0xd78] sm:$0xff]
        %v847 = vld [vmem:[%s316 + $0xd80] sm:$0xff]
        %v848 = vld [vmem:[%s316 + $0xd88] sm:$0xff]
        %v849 = vld [vmem:[%s316 + $0xd90] sm:$0xff]
        %v850 = vld [vmem:[%s316 + $0xd98] sm:$0xff]
        %v851 = vld [vmem:[%s316 + $0xda0] sm:$0xff]
        %v852 = vld [vmem:[%s316 + $0xda8] sm:$0xff]
        %v853 = vld [vmem:[%s316 + $0xdb0] sm:$0xff]
        %v854 = vld [vmem:[%s316 + $0xdb8] sm:$0xff]
        %v855 = vld [vmem:[%s316 + $0xdc0] sm:$0xff]
        %v856 = vld [vmem:[%s316 + $0xdc8] sm:$0xff]
        %v857 = vld [vmem:[%s316 + $0xdd0] sm:$0xff]
        %v858 = vld [vmem:[%s316 + $0xdd8] sm:$0xff]
        %v859 = vld [vmem:[%s316 + $0xde0] sm:$0xff]
        %v860 = vld [vmem:[%s316 + $0xde8] sm:$0xff]
        %v861 = vld [vmem:[%s316 + $0xdf0] sm:$0xff]
        %v862 = vld [vmem:[%s316 + $0xdf8] sm:$0xff]
        %v863 = vld [vmem:[%s316 + $0xe00] sm:$0xff]
        %v864 = vld [vmem:[%s316 + $0xe08] sm:$0xff]
        %v865 = vld [vmem:[%s316 + $0xe10] sm:$0xff]
        %v866 = vld [vmem:[%s316 + $0xe18] sm:$0xff]
        %v867 = vld [vmem:[%s316 + $0xe20] sm:$0xff]
        %v868 = vld [vmem:[%s316 + $0xe28] sm:$0xff]
        %v869 = vld [vmem:[%s316 + $0xe30] sm:$0xff]
        %v870 = vld [vmem:[%s316 + $0xe38] sm:$0xff]
        %v871 = vld [vmem:[%s316 + $0xe40] sm:$0xff]
        %v872 = vld [vmem:[%s316 + $0xe48] sm:$0xff]
        %v873 = vld [vmem:[%s316 + $0xe50] sm:$0xff]
        %v874 = vld [vmem:[%s316 + $0xe58] sm:$0xff]
        %v875 = vld [vmem:[%s316 + $0xe60] sm:$0xff]
        %v876 = vld [vmem:[%s316 + $0xe68] sm:$0xff]
        %v877 = vld [vmem:[%s316 + $0xe70] sm:$0xff]
        %v878 = vld [vmem:[%s316 + $0xe78] sm:$0xff]
        %v879 = vld [vmem:[%s316 + $0xe80] sm:$0xff]
        %v880 = vld [vmem:[%s316 + $0xe88] sm:$0xff]
        %v881 = vld [vmem:[%s316 + $0xe90] sm:$0xff]
        %v882 = vld [vmem:[%s316 + $0xe98] sm:$0xff]
        %v883 = vld [vmem:[%s316 + $0xea0] sm:$0xff]
        %v884 = vld [vmem:[%s316 + $0xea8] sm:$0xff]
        %v885 = vld [vmem:[%s316 + $0xeb0] sm:$0xff]
        %v886 = vld [vmem:[%s316 + $0xeb8] sm:$0xff]
        %v887 = vld [vmem:[%s316 + $0xec0] sm:$0xff]
        %v888 = vld [vmem:[%s316 + $0xec8] sm:$0xff]
        %v889 = vld [vmem:[%s316 + $0xed0] sm:$0xff]
        %v890 = vld [vmem:[%s316 + $0xed8] sm:$0xff]
        %v891 = vld [vmem:[%s316 + $0xee0] sm:$0xff]
        %v892 = vld [vmem:[%s316 + $0xee8] sm:$0xff]
        %v893 = vld [vmem:[%s316 + $0xef0] sm:$0xff]
        %v894 = vld [vmem:[%s316 + $0xef8] sm:$0xff]
        %v895 = vld [vmem:[%s316 + $0xf00] sm:$0xff]
        %v896 = vld [vmem:[%s316 + $0xf08] sm:$0xff]
        %v897 = vld [vmem:[%s316 + $0xf10] sm:$0xff]
        %v898 = vld [vmem:[%s316 + $0xf18] sm:$0xff]
        %v899 = vld [vmem:[%s316 + $0xf20] sm:$0xff]
        %v900 = vld [vmem:[%s316 + $0xf28] sm:$0xff]
        %v901 = vld [vmem:[%s316 + $0xf30] sm:$0xff]
        %v902 = vld [vmem:[%s316 + $0xf38] sm:$0xff]
        %v903 = vld [vmem:[%s316 + $0xf40] sm:$0xff]
        %v904 = vld [vmem:[%s316 + $0xf48] sm:$0xff]
        %v905 = vld [vmem:[%s316 + $0xf50] sm:$0xff]
        %v906 = vld [vmem:[%s316 + $0xf58] sm:$0xff]
        %v907 = vld [vmem:[%s316 + $0xf60] sm:$0xff]
        %v908 = vld [vmem:[%s316 + $0xf68] sm:$0xff]
        %v909 = vld [vmem:[%s316 + $0xf70] sm:$0xff]
        %v910 = vld [vmem:[%s316 + $0xf78] sm:$0xff]
        %v911 = vld [vmem:[%s316 + $0xf80] sm:$0xff]
        %v912 = vld [vmem:[%s316 + $0xf88] sm:$0xff]
        %v913 = vld [vmem:[%s316 + $0xf90] sm:$0xff]
        %v914 = vld [vmem:[%s316 + $0xf98] sm:$0xff]
        %v915 = vld [vmem:[%s316 + $0xfa0] sm:$0xff]
        %v916 = vld [vmem:[%s316 + $0xfa8] sm:$0xff]
        %v917 = vld [vmem:[%s316 + $0xfb0] sm:$0xff]
        %v918 = vld [vmem:[%s316 + $0xfb8] sm:$0xff]
        %v919 = vld [vmem:[%s316 + $0xfc0] sm:$0xff]
        %v920 = vld [vmem:[%s316 + $0xfc8] sm:$0xff]
        %v921 = vld [vmem:[%s316 + $0xfd0] sm:$0xff]
        %v922 = vld [vmem:[%s316 + $0xfd8] sm:$0xff]
        %v923 = vld [vmem:[%s316 + $0xfe0] sm:$0xff]
        %v924 = vld [vmem:[%s316 + $0xfe8] sm:$0xff]
        %v925 = vld [vmem:[%s316 + $0xff0] sm:$0xff]
        %v926 = vld [vmem:[%s316 + $0xff8] sm:$0xff]
        %v927 = vld [vmem:[%s316 + $0x1000] sm:$0xff]
        %v928 = vld [vmem:[%s316 + $0x1008] sm:$0xff]
        %v929 = vld [vmem:[%s316 + $0x1010] sm:$0xff]
        %v930 = vld [vmem:[%s316 + $0x1018] sm:$0xff]
        %v931 = vld [vmem:[%s316 + $0x1020] sm:$0xff]
        %v932 = vld [vmem:[%s316 + $0x1028] sm:$0xff]
        %v933 = vld [vmem:[%s316 + $0x1030] sm:$0xff]
        %v934 = vld [vmem:[%s316 + $0x1038] sm:$0xff]
        %v935 = vld [vmem:[%s316 + $0x1040] sm:$0xff]
        %v936 = vld [vmem:[%s316 + $0x1048] sm:$0xff]
        %v937 = vld [vmem:[%s316 + $0x1050] sm:$0xff]
        %v938 = vld [vmem:[%s316 + $0x1058] sm:$0xff]
        %v939 = vld [vmem:[%s316 + $0x1060] sm:$0xff]
        %v940 = vld [vmem:[%s316 + $0x1068] sm:$0xff]
        %v941 = vld [vmem:[%s316 + $0x1070] sm:$0xff]
        %v942 = vld [vmem:[%s316 + $0x1078] sm:$0xff]
        %v943 = vld [vmem:[%s316 + $0x1080] sm:$0xff]
        %v944 = vld [vmem:[%s316 + $0x1088] sm:$0xff]
        %v945 = vld [vmem:[%s316 + $0x1090] sm:$0xff]
        %v946 = vld [vmem:[%s316 + $0x1098] sm:$0xff]
        %v947 = vld [vmem:[%s316 + $0x10a0] sm:$0xff]
        %v948 = vld [vmem:[%s316 + $0x10a8] sm:$0xff]
        %v949 = vld [vmem:[%s316 + $0x10b0] sm:$0xff]
        %v950 = vld [vmem:[%s316 + $0x10b8] sm:$0xff]
        %v951 = vld [vmem:[%s316 + $0x10c0] sm:$0xff]
        %v952 = vld [vmem:[%s316 + $0x10c8] sm:$0xff]
        %v953 = vld [vmem:[%s316 + $0x10d0] sm:$0xff]
        %v954 = vld [vmem:[%s316 + $0x10d8] sm:$0xff]
        %v955 = vld [vmem:[%s316 + $0x10e0] sm:$0xff]
        %v956 = vld [vmem:[%s316 + $0x10e8] sm:$0xff]
        %v957 = vld [vmem:[%s316 + $0x10f0] sm:$0xff]
        %v958 = vld [vmem:[%s316 + $0x10f8] sm:$0xff]
        %v959 = vld [vmem:[%s316 + $0x1100] sm:$0xff]
        %v960 = vld [vmem:[%s316 + $0x1108] sm:$0xff]
        %v961 = vld [vmem:[%s316 + $0x1110] sm:$0xff]
        %v962 = vld [vmem:[%s316 + $0x1118] sm:$0xff]
        %v963 = vld [vmem:[%s316 + $0x1120] sm:$0xff]
        %v964 = vld [vmem:[%s316 + $0x1128] sm:$0xff]
        %v965 = vld [vmem:[%s316 + $0x1130] sm:$0xff]
        %v966 = vld [vmem:[%s316 + $0x1138] sm:$0xff]
        %v967 = vld [vmem:[%s316 + $0x1140] sm:$0xff]
        %v968 = vld [vmem:[%s316 + $0x1148] sm:$0xff]
        %v969 = vld [vmem:[%s316 + $0x1150] sm:$0xff]
        %v970 = vld [vmem:[%s316 + $0x1158] sm:$0xff]
        %v971 = vld [vmem:[%s316 + $0x1160] sm:$0xff]
        %v972 = vld [vmem:[%s316 + $0x1168] sm:$0xff]
        %v973 = vld [vmem:[%s316 + $0x1170] sm:$0xff]
        %v974 = vld [vmem:[%s316 + $0x1178] sm:$0xff]
        %v975 = vld [vmem:[%s316 + $0x1180] sm:$0xff]
        %v976 = vld [vmem:[%s316 + $0x1188] sm:$0xff]
        %v977 = vld [vmem:[%s316 + $0x1190] sm:$0xff]
        %v978 = vld [vmem:[%s316 + $0x1198] sm:$0xff]
        %v979 = vld [vmem:[%s316 + $0x11a0] sm:$0xff]
        %v980 = vld [vmem:[%s316 + $0x11a8] sm:$0xff]
        %v981 = vld [vmem:[%s316 + $0x11b0] sm:$0xff]
        %v982 = vld [vmem:[%s316 + $0x11b8] sm:$0xff]
        %v983 = vld [vmem:[%s316 + $0x11c0] sm:$0xff]
        %v984 = vld [vmem:[%s316 + $0x11c8] sm:$0xff]
        %v985 = vld [vmem:[%s316 + $0x11d0] sm:$0xff]
        %v986 = vld [vmem:[%s316 + $0x11d8] sm:$0xff]
        %v987 = vld [vmem:[%s316 + $0x11e0] sm:$0xff]
        %v988 = vld [vmem:[%s316 + $0x11e8] sm:$0xff]
        %v989 = vld [vmem:[%s316 + $0x11f0] sm:$0xff]
        %v990 = vld [vmem:[%s316 + $0x11f8] sm:$0xff]
        %v991 = vld [vmem:[%s316 + $0x1200] sm:$0xff]
        %v992 = vld [vmem:[%s316 + $0x1208] sm:$0xff]
        %v993 = vld [vmem:[%s316 + $0x1210] sm:$0xff]
        %v994 = vld [vmem:[%s316 + $0x1218] sm:$0xff]
        %v995 = vld [vmem:[%s316 + $0x1220] sm:$0xff]
        %v996 = vld [vmem:[%s316 + $0x1228] sm:$0xff]
        %v997 = vld [vmem:[%s316 + $0x1230] sm:$0xff]
        %v998 = vld [vmem:[%s316 + $0x1238] sm:$0xff]
        %v999 = vld [vmem:[%s316 + $0x1240] sm:$0xff]
        %v1000 = vld [vmem:[%s316 + $0x1248] sm:$0xff]
        %v1001 = vld [vmem:[%s316 + $0x1250] sm:$0xff]
        %v1002 = vld [vmem:[%s316 + $0x1258] sm:$0xff]
        %v1003 = vld [vmem:[%s316 + $0x1260] sm:$0xff]
        %v1004 = vld [vmem:[%s316 + $0x1268] sm:$0xff]
        %v1005 = vld [vmem:[%s316 + $0x1270] sm:$0xff]
        %v1006 = vld [vmem:[%s316 + $0x1278] sm:$0xff]
        %v1007 = vld [vmem:[%s316 + $0x1280] sm:$0xff]
        %v1008 = vld [vmem:[%s316 + $0x1288] sm:$0xff]
        %v1009 = vld [vmem:[%s316 + $0x1290] sm:$0xff]
        %v1010 = vld [vmem:[%s316 + $0x1298] sm:$0xff]
        %v1011 = vld [vmem:[%s316 + $0x12a0] sm:$0xff]
        %v1012 = vld [vmem:[%s316 + $0x12a8] sm:$0xff]
        %v1013 = vld [vmem:[%s316 + $0x12b0] sm:$0xff]
        %v1014 = vld [vmem:[%s316 + $0x12b8] sm:$0xff]
        %v1015 = vld [vmem:[%s316 + $0x12c0] sm:$0xff]
        %v1016 = vld [vmem:[%s316 + $0x12c8] sm:$0xff]
        %v1017 = vld [vmem:[%s316 + $0x12d0] sm:$0xff]
        %v1018 = vld [vmem:[%s316 + $0x12d8] sm:$0xff]
        %v1019 = vld [vmem:[%s316 + $0x12e0] sm:$0xff]
        %v1020 = vld [vmem:[%s316 + $0x12e8] sm:$0xff]
        %v1021 = vld [vmem:[%s316 + $0x12f0] sm:$0xff]
        %v1022 = vld [vmem:[%s316 + $0x12f8] sm:$0xff]
        %v1023 = vld [vmem:[%s316 + $0x1300] sm:$0xff]
        %v1024 = vld [vmem:[%s316 + $0x1308] sm:$0xff]
        %v1025 = vld [vmem:[%s316 + $0x1310] sm:$0xff]
        %v1026 = vld [vmem:[%s316 + $0x1318] sm:$0xff]
        %v1027 = vld [vmem:[%s316 + $0x1320] sm:$0xff]
        %v1028 = vld [vmem:[%s316 + $0x1328] sm:$0xff]
        %v1029 = vld [vmem:[%s316 + $0x1330] sm:$0xff]
        %v1030 = vld [vmem:[%s316 + $0x1338] sm:$0xff]
        %v1031 = vld [vmem:[%s316 + $0x1340] sm:$0xff]
        %v1032 = vld [vmem:[%s316 + $0x1348] sm:$0xff]
        %v1033 = vld [vmem:[%s316 + $0x1350] sm:$0xff]
        %v1034 = vld [vmem:[%s316 + $0x1358] sm:$0xff]
        %v1035 = vld [vmem:[%s316 + $0x1360] sm:$0xff]
        %v1036 = vld [vmem:[%s316 + $0x1368] sm:$0xff]
        %v1037 = vld [vmem:[%s316 + $0x1370] sm:$0xff]
        %v1038 = vld [vmem:[%s316 + $0x1378] sm:$0xff]
        %v1039 = vld [vmem:[%s316 + $0x1380] sm:$0xff]
        %v1040 = vld [vmem:[%s316 + $0x1388] sm:$0xff]
        %v1041 = vld [vmem:[%s316 + $0x1390] sm:$0xff]
        %v1042 = vld [vmem:[%s316 + $0x1398] sm:$0xff]
        %v1043 = vld [vmem:[%s316 + $0x13a0] sm:$0xff]
        %v1044 = vld [vmem:[%s316 + $0x13a8] sm:$0xff]
        %v1045 = vld [vmem:[%s316 + $0x13b0] sm:$0xff]
        %v1046 = vld [vmem:[%s316 + $0x13b8] sm:$0xff]
        %v1047 = vld [vmem:[%s316 + $0x13c0] sm:$0xff]
        %v1048 = vld [vmem:[%s316 + $0x13c8] sm:$0xff]
        %v1049 = vld [vmem:[%s316 + $0x13d0] sm:$0xff]
        %v1050 = vld [vmem:[%s316 + $0x13d8] sm:$0xff]
        %v1051 = vld [vmem:[%s316 + $0x13e0] sm:$0xff]
        %v1052 = vld [vmem:[%s316 + $0x13e8] sm:$0xff]
        %v1053 = vld [vmem:[%s316 + $0x13f0] sm:$0xff]
        %v1054 = vld [vmem:[%s316 + $0x13f8] sm:$0xff]
        %v1055 = vld [vmem:[%s316 + $0x1400] sm:$0xff]
        %v1056 = vld [vmem:[%s316 + $0x1408] sm:$0xff]
        %v1057 = vld [vmem:[%s316 + $0x1410] sm:$0xff]
        %v1058 = vld [vmem:[%s316 + $0x1418] sm:$0xff]
        %v1059 = vld [vmem:[%s316 + $0x1420] sm:$0xff]
        %v1060 = vld [vmem:[%s316 + $0x1428] sm:$0xff]
        %v1061 = vld [vmem:[%s316 + $0x1430] sm:$0xff]
        %v1062 = vld [vmem:[%s316 + $0x1438] sm:$0xff]
        %v1063 = vld [vmem:[%s316 + $0x1440] sm:$0xff]
        %v1064 = vld [vmem:[%s316 + $0x1448] sm:$0xff]
        %v1065 = vld [vmem:[%s316 + $0x1450] sm:$0xff]
        %v1066 = vld [vmem:[%s316 + $0x1458] sm:$0xff]
        %v1067 = vld [vmem:[%s316 + $0x1460] sm:$0xff]
        %v1068 = vld [vmem:[%s316 + $0x1468] sm:$0xff]
        %v1069 = vld [vmem:[%s316 + $0x1470] sm:$0xff]
        %v1070 = vld [vmem:[%s316 + $0x1478] sm:$0xff]
        %v1071 = vld [vmem:[%s316 + $0x1480] sm:$0xff]
        %v1072 = vld [vmem:[%s316 + $0x1488] sm:$0xff]
        %v1073 = vld [vmem:[%s316 + $0x1490] sm:$0xff]
        %v1074 = vld [vmem:[%s316 + $0x1498] sm:$0xff]
        %v1075 = vld [vmem:[%s316 + $0x14a0] sm:$0xff]
        %v1076 = vld [vmem:[%s316 + $0x14a8] sm:$0xff]
        %v1077 = vld [vmem:[%s316 + $0x14b0] sm:$0xff]
        %v1078 = vld [vmem:[%s316 + $0x14b8] sm:$0xff]
        %v1079 = vld [vmem:[%s316 + $0x14c0] sm:$0xff]
        %v1080 = vld [vmem:[%s316 + $0x14c8] sm:$0xff]
        %v1081 = vld [vmem:[%s316 + $0x14d0] sm:$0xff]
        %v1082 = vld [vmem:[%s316 + $0x14d8] sm:$0xff]
        %v1083 = vld [vmem:[%s316 + $0x14e0] sm:$0xff]
        %v1084 = vld [vmem:[%s316 + $0x14e8] sm:$0xff]
        %v1085 = vld [vmem:[%s316 + $0x14f0] sm:$0xff]
        %v1086 = vld [vmem:[%s316 + $0x14f8] sm:$0xff]
        %v1087 = vld [vmem:[%s316 + $0x1500] sm:$0xff]
        %v1088 = vld [vmem:[%s316 + $0x1508] sm:$0xff]
        %v1089 = vld [vmem:[%s316 + $0x1510] sm:$0xff]
        %v1090 = vld [vmem:[%s316 + $0x1518] sm:$0xff]
        %v1091 = vld [vmem:[%s316 + $0x1520] sm:$0xff]
        %v1092 = vld [vmem:[%s316 + $0x1528] sm:$0xff]
        %v1093 = vld [vmem:[%s316 + $0x1530] sm:$0xff]
        %v1094 = vld [vmem:[%s316 + $0x1538] sm:$0xff]
        %v1095 = vld [vmem:[%s316 + $0x1540] sm:$0xff]
        %v1096 = vld [vmem:[%s316 + $0x1548] sm:$0xff]
        %v1097 = vld [vmem:[%s316 + $0x1550] sm:$0xff]
        %v1098 = vld [vmem:[%s316 + $0x1558] sm:$0xff]
        %v1099 = vld [vmem:[%s316 + $0x1560] sm:$0xff]
        %v1100 = vld [vmem:[%s316 + $0x1568] sm:$0xff]
        %v1101 = vld [vmem:[%s316 + $0x1570] sm:$0xff]
        %v1102 = vld [vmem:[%s316 + $0x1578] sm:$0xff]
        %v1103 = vld [vmem:[%s316 + $0x1580] sm:$0xff]
        %v1104 = vld [vmem:[%s316 + $0x1588] sm:$0xff]
        %v1105 = vld [vmem:[%s316 + $0x1590] sm:$0xff]
        %v1106 = vld [vmem:[%s316 + $0x1598] sm:$0xff]
        %v1107 = vld [vmem:[%s316 + $0x15a0] sm:$0xff]
        %v1108 = vld [vmem:[%s316 + $0x15a8] sm:$0xff]
        %v1109 = vld [vmem:[%s316 + $0x15b0] sm:$0xff]
        %v1110 = vld [vmem:[%s316 + $0x15b8] sm:$0xff]
        %v1111 = vld [vmem:[%s316 + $0x15c0] sm:$0xff]
        %v1112 = vld [vmem:[%s316 + $0x15c8] sm:$0xff]
        %v1113 = vld [vmem:[%s316 + $0x15d0] sm:$0xff]
        %v1114 = vld [vmem:[%s316 + $0x15d8] sm:$0xff]
        %v1115 = vld [vmem:[%s316 + $0x15e0] sm:$0xff]
        %v1116 = vld [vmem:[%s316 + $0x15e8] sm:$0xff]
        %v1117 = vld [vmem:[%s316 + $0x15f0] sm:$0xff]
        %v1118 = vld [vmem:[%s316 + $0x15f8] sm:$0xff]
        %v1119 = vld [vmem:[%s316 + $0x1600] sm:$0xff]
        %v1120 = vld [vmem:[%s316 + $0x1608] sm:$0xff]
        %v1121 = vld [vmem:[%s316 + $0x1610] sm:$0xff]
        %v1122 = vld [vmem:[%s316 + $0x1618] sm:$0xff]
        %v1123 = vld [vmem:[%s316 + $0x1620] sm:$0xff]
        %v1124 = vld [vmem:[%s316 + $0x1628] sm:$0xff]
        %v1125 = vld [vmem:[%s316 + $0x1630] sm:$0xff]
        %v1126 = vld [vmem:[%s316 + $0x1638] sm:$0xff]
        %v1127 = vld [vmem:[%s316 + $0x1640] sm:$0xff]
        %v1128 = vld [vmem:[%s316 + $0x1648] sm:$0xff]
        %v1129 = vld [vmem:[%s316 + $0x1650] sm:$0xff]
        %v1130 = vld [vmem:[%s316 + $0x1658] sm:$0xff]
        %v1131 = vld [vmem:[%s316 + $0x1660] sm:$0xff]
        %v1132 = vld [vmem:[%s316 + $0x1668] sm:$0xff]
        %v1133 = vld [vmem:[%s316 + $0x1670] sm:$0xff]
        %v1134 = vld [vmem:[%s316 + $0x1678] sm:$0xff]
        %v1135 = vld [vmem:[%s316 + $0x1680] sm:$0xff]
        %v1136 = vld [vmem:[%s316 + $0x1688] sm:$0xff]
        %v1137 = vld [vmem:[%s316 + $0x1690] sm:$0xff]
        %v1138 = vld [vmem:[%s316 + $0x1698] sm:$0xff]
        %v1139 = vld [vmem:[%s316 + $0x16a0] sm:$0xff]
        %v1140 = vld [vmem:[%s316 + $0x16a8] sm:$0xff]
        %v1141 = vld [vmem:[%s316 + $0x16b0] sm:$0xff]
        %v1142 = vld [vmem:[%s316 + $0x16b8] sm:$0xff]
        %v1143 = vld [vmem:[%s316 + $0x16c0] sm:$0xff]
        %v1144 = vld [vmem:[%s316 + $0x16c8] sm:$0xff]
        %v1145 = vld [vmem:[%s316 + $0x16d0] sm:$0xff]
        %v1146 = vld [vmem:[%s316 + $0x16d8] sm:$0xff]
        %v1147 = vld [vmem:[%s316 + $0x16e0] sm:$0xff]
        %v1148 = vld [vmem:[%s316 + $0x16e8] sm:$0xff]
        %v1149 = vld [vmem:[%s316 + $0x16f0] sm:$0xff]
        %v1150 = vld [vmem:[%s316 + $0x16f8] sm:$0xff]
        %v1151 = vld [vmem:[%s316 + $0x1700] sm:$0xff]
        %v1152 = vld [vmem:[%s316 + $0x1708] sm:$0xff]
        %v1153 = vld [vmem:[%s316 + $0x1710] sm:$0xff]
        %v1154 = vld [vmem:[%s316 + $0x1718] sm:$0xff]
        %v1155 = vld [vmem:[%s316 + $0x1720] sm:$0xff]
        %v1156 = vld [vmem:[%s316 + $0x1728] sm:$0xff]
        %v1157 = vld [vmem:[%s316 + $0x1730] sm:$0xff]
        %v1158 = vld [vmem:[%s316 + $0x1738] sm:$0xff]
        %v1159 = vld [vmem:[%s316 + $0x1740] sm:$0xff]
        %v1160 = vld [vmem:[%s316 + $0x1748] sm:$0xff]
        %v1161 = vld [vmem:[%s316 + $0x1750] sm:$0xff]
        %v1162 = vld [vmem:[%s316 + $0x1758] sm:$0xff]
        %v1163 = vld [vmem:[%s316 + $0x1760] sm:$0xff]
        %v1164 = vld [vmem:[%s316 + $0x1768] sm:$0xff]
        %v1165 = vld [vmem:[%s316 + $0x1770] sm:$0xff]
        %v1166 = vld [vmem:[%s316 + $0x1778] sm:$0xff]
        %v1167 = vld [vmem:[%s316 + $0x1780] sm:$0xff]
        %v1168 = vld [vmem:[%s316 + $0x1788] sm:$0xff]
        %v1169 = vld [vmem:[%s316 + $0x1790] sm:$0xff]
        %v1170 = vld [vmem:[%s316 + $0x1798] sm:$0xff]
        %v1171 = vld [vmem:[%s316 + $0x17a0] sm:$0xff]
        %v1172 = vld [vmem:[%s316 + $0x17a8] sm:$0xff]
        %v1173 = vld [vmem:[%s316 + $0x17b0] sm:$0xff]
        %v1174 = vld [vmem:[%s316 + $0x17b8] sm:$0xff]
        %v1175 = vld [vmem:[%s316 + $0x17c0] sm:$0xff]
        %v1176 = vld [vmem:[%s316 + $0x17c8] sm:$0xff]
        %v1177 = vld [vmem:[%s316 + $0x17d0] sm:$0xff]
        %v1178 = vld [vmem:[%s316 + $0x17d8] sm:$0xff]
        %v1179 = vld [vmem:[%s316 + $0x17e0] sm:$0xff]
        %v1180 = vld [vmem:[%s316 + $0x17e8] sm:$0xff]
        %v1181 = vld [vmem:[%s316 + $0x17f0] sm:$0xff]
        %v1182 = vld [vmem:[%s316 + $0x17f8] sm:$0xff]
        %v1183 = vld [vmem:[%s316 + $0x1800] sm:$0xff]
        %v1184 = vld [vmem:[%s316 + $0x1808] sm:$0xff]
        %v1185 = vld [vmem:[%s316 + $0x1810] sm:$0xff]
        %v1186 = vld [vmem:[%s316 + $0x1818] sm:$0xff]
        %v1187 = vld [vmem:[%s316 + $0x1820] sm:$0xff]
        %v1188 = vld [vmem:[%s316 + $0x1828] sm:$0xff]
        %v1189 = vld [vmem:[%s316 + $0x1830] sm:$0xff]
        %v1190 = vld [vmem:[%s316 + $0x1838] sm:$0xff]
        %v1191 = vld [vmem:[%s316 + $0x1840] sm:$0xff]
        %v1192 = vld [vmem:[%s316 + $0x1848] sm:$0xff]
        %v1193 = vld [vmem:[%s316 + $0x1850] sm:$0xff]
        %v1194 = vld [vmem:[%s316 + $0x1858] sm:$0xff]
        %v1195 = vld [vmem:[%s316 + $0x1860] sm:$0xff]
        %v1196 = vld [vmem:[%s316 + $0x1868] sm:$0xff]
        %v1197 = vld [vmem:[%s316 + $0x1870] sm:$0xff]
        %v1198 = vld [vmem:[%s316 + $0x1878] sm:$0xff]
        %v1199 = vld [vmem:[%s316 + $0x1880] sm:$0xff]
        %v1200 = vld [vmem:[%s316 + $0x1888] sm:$0xff]
        %v1201 = vld [vmem:[%s316 + $0x1890] sm:$0xff]
        %v1202 = vld [vmem:[%s316 + $0x1898] sm:$0xff]
        %v1203 = vld [vmem:[%s316 + $0x18a0] sm:$0xff]
        %v1204 = vld [vmem:[%s316 + $0x18a8] sm:$0xff]
        %v1205 = vld [vmem:[%s316 + $0x18b0] sm:$0xff]
        %v1206 = vld [vmem:[%s316 + $0x18b8] sm:$0xff]
        %v1207 = vld [vmem:[%s316 + $0x18c0] sm:$0xff]
        %v1208 = vld [vmem:[%s316 + $0x18c8] sm:$0xff]
        %v1209 = vld [vmem:[%s316 + $0x18d0] sm:$0xff]
        %v1210 = vld [vmem:[%s316 + $0x18d8] sm:$0xff]
        %v1211 = vld [vmem:[%s316 + $0x18e0] sm:$0xff]
        %v1212 = vld [vmem:[%s316 + $0x18e8] sm:$0xff]
        %v1213 = vld [vmem:[%s316 + $0x18f0] sm:$0xff]
        %v1214 = vld [vmem:[%s316 + $0x18f8] sm:$0xff]
        %v1215 = vld [vmem:[%s316 + $0x1900] sm:$0xff]
        %v1216 = vld [vmem:[%s316 + $0x1908] sm:$0xff]
        %v1217 = vld [vmem:[%s316 + $0x1910] sm:$0xff]
        %v1218 = vld [vmem:[%s316 + $0x1918] sm:$0xff]
        %v1219 = vld [vmem:[%s316 + $0x1920] sm:$0xff]
        %v1220 = vld [vmem:[%s316 + $0x1928] sm:$0xff]
        %v1221 = vld [vmem:[%s316 + $0x1930] sm:$0xff]
        %v1222 = vld [vmem:[%s316 + $0x1938] sm:$0xff]
        %v1223 = vld [vmem:[%s316 + $0x1940] sm:$0xff]
        %v1224 = vld [vmem:[%s316 + $0x1948] sm:$0xff]
        %v1225 = vld [vmem:[%s316 + $0x1950] sm:$0xff]
        %v1226 = vld [vmem:[%s316 + $0x1958] sm:$0xff]
        %v1227 = vld [vmem:[%s316 + $0x1960] sm:$0xff]
        %v1228 = vld [vmem:[%s316 + $0x1968] sm:$0xff]
        %v1229 = vld [vmem:[%s316 + $0x1970] sm:$0xff]
        %v1230 = vld [vmem:[%s316 + $0x1978] sm:$0xff]
        %v1231 = vld [vmem:[%s316 + $0x1980] sm:$0xff]
        %v1232 = vld [vmem:[%s316 + $0x1988] sm:$0xff]
        %v1233 = vld [vmem:[%s316 + $0x1990] sm:$0xff]
        %v1234 = vld [vmem:[%s316 + $0x1998] sm:$0xff]
        %v1235 = vld [vmem:[%s316 + $0x19a0] sm:$0xff]
        %v1236 = vld [vmem:[%s316 + $0x19a8] sm:$0xff]
        %v1237 = vld [vmem:[%s316 + $0x19b0] sm:$0xff]
        %v1238 = vld [vmem:[%s316 + $0x19b8] sm:$0xff]
        %v1239 = vld [vmem:[%s316 + $0x19c0] sm:$0xff]
        %v1240 = vld [vmem:[%s316 + $0x19c8] sm:$0xff]
        %v1241 = vld [vmem:[%s316 + $0x19d0] sm:$0xff]
        %v1242 = vld [vmem:[%s316 + $0x19d8] sm:$0xff]
        %v1243 = vld [vmem:[%s316 + $0x19e0] sm:$0xff]
        %v1244 = vld [vmem:[%s316 + $0x19e8] sm:$0xff]
        %v1245 = vld [vmem:[%s316 + $0x19f0] sm:$0xff]
        %v1246 = vld [vmem:[%s316 + $0x19f8] sm:$0xff]
        %v1247 = vld [vmem:[%s316 + $0x1a00] sm:$0xff]
        %v1248 = vld [vmem:[%s316 + $0x1a08] sm:$0xff]
        %v1249 = vld [vmem:[%s316 + $0x1a10] sm:$0xff]
        %v1250 = vld [vmem:[%s316 + $0x1a18] sm:$0xff]
        %v1251 = vld [vmem:[%s316 + $0x1a20] sm:$0xff]
        %v1252 = vld [vmem:[%s316 + $0x1a28] sm:$0xff]
        %v1253 = vld [vmem:[%s316 + $0x1a30] sm:$0xff]
        %v1254 = vld [vmem:[%s316 + $0x1a38] sm:$0xff]
        %v1255 = vld [vmem:[%s316 + $0x1a40] sm:$0xff]
        %v1256 = vld [vmem:[%s316 + $0x1a48] sm:$0xff]
        %v1257 = vld [vmem:[%s316 + $0x1a50] sm:$0xff]
        %v1258 = vld [vmem:[%s316 + $0x1a58] sm:$0xff]
        %v1259 = vld [vmem:[%s316 + $0x1a60] sm:$0xff]
        %v1260 = vld [vmem:[%s316 + $0x1a68] sm:$0xff]
        %v1261 = vld [vmem:[%s316 + $0x1a70] sm:$0xff]
        %v1262 = vld [vmem:[%s316 + $0x1a78] sm:$0xff]
        %v1263 = vld [vmem:[%s316 + $0x1a80] sm:$0xff]
        %v1264 = vld [vmem:[%s316 + $0x1a88] sm:$0xff]
        %v1265 = vld [vmem:[%s316 + $0x1a90] sm:$0xff]
        %v1266 = vld [vmem:[%s316 + $0x1a98] sm:$0xff]
        %v1267 = vld [vmem:[%s316 + $0x1aa0] sm:$0xff]
        %v1268 = vld [vmem:[%s316 + $0x1aa8] sm:$0xff]
        %v1269 = vld [vmem:[%s316 + $0x1ab0] sm:$0xff]
        %v1270 = vld [vmem:[%s316 + $0x1ab8] sm:$0xff]
        %v1271 = vld [vmem:[%s316 + $0x1ac0] sm:$0xff]
        %v1272 = vld [vmem:[%s316 + $0x1ac8] sm:$0xff]
        %v1273 = vld [vmem:[%s316 + $0x1ad0] sm:$0xff]
        %v1274 = vld [vmem:[%s316 + $0x1ad8] sm:$0xff]
        %v1275 = vld [vmem:[%s316 + $0x1ae0] sm:$0xff]
        %v1276 = vld [vmem:[%s316 + $0x1ae8] sm:$0xff]
        %v1277 = vld [vmem:[%s316 + $0x1af0] sm:$0xff]
        %v1278 = vld [vmem:[%s316 + $0x1af8] sm:$0xff]
        %v1279 = vld [vmem:[%s316 + $0x1b00] sm:$0xff]
        %v1280 = vld [vmem:[%s316 + $0x1b08] sm:$0xff]
        %v1281 = vld [vmem:[%s316 + $0x1b10] sm:$0xff]
        %v1282 = vld [vmem:[%s316 + $0x1b18] sm:$0xff]
        %v1283 = vld [vmem:[%s316 + $0x1b20] sm:$0xff]
        %v1284 = vld [vmem:[%s316 + $0x1b28] sm:$0xff]
        %v1285 = vld [vmem:[%s316 + $0x1b30] sm:$0xff]
        %v1286 = vld [vmem:[%s316 + $0x1b38] sm:$0xff]
        %v1287 = vld [vmem:[%s316 + $0x1b40] sm:$0xff]
        %v1288 = vld [vmem:[%s316 + $0x1b48] sm:$0xff]
        %v1289 = vld [vmem:[%s316 + $0x1b50] sm:$0xff]
        %v1290 = vld [vmem:[%s316 + $0x1b58] sm:$0xff]
        %v1291 = vld [vmem:[%s316 + $0x1b60] sm:$0xff]
        %v1292 = vld [vmem:[%s316 + $0x1b68] sm:$0xff]
        %v1293 = vld [vmem:[%s316 + $0x1b70] sm:$0xff]
        %v1294 = vld [vmem:[%s316 + $0x1b78] sm:$0xff]
        %v1295 = vld [vmem:[%s316 + $0x1b80] sm:$0xff]
        %v1296 = vld [vmem:[%s316 + $0x1b88] sm:$0xff]
        %v1297 = vld [vmem:[%s316 + $0x1b90] sm:$0xff]
        %v1298 = vld [vmem:[%s316 + $0x1b98] sm:$0xff]
        %v1299 = vld [vmem:[%s316 + $0x1ba0] sm:$0xff]
        %v1300 = vld [vmem:[%s316 + $0x1ba8] sm:$0xff]
        %v1301 = vld [vmem:[%s316 + $0x1bb0] sm:$0xff]
        %v1302 = vld [vmem:[%s316 + $0x1bb8] sm:$0xff]
        %v1303 = vld [vmem:[%s316 + $0x1bc0] sm:$0xff]
        %v1304 = vld [vmem:[%s316 + $0x1bc8] sm:$0xff]
        %v1305 = vld [vmem:[%s316 + $0x1bd0] sm:$0xff]
        %v1306 = vld [vmem:[%s316 + $0x1bd8] sm:$0xff]
        %v1307 = vld [vmem:[%s316 + $0x1be0] sm:$0xff]
        %v1308 = vld [vmem:[%s316 + $0x1be8] sm:$0xff]
        %v1309 = vld [vmem:[%s316 + $0x1bf0] sm:$0xff]
        %v1310 = vld [vmem:[%s316 + $0x1bf8] sm:$0xff]
        %v1311 = vld [vmem:[%s316 + $0x1c00] sm:$0xff]
        %v1312 = vld [vmem:[%s316 + $0x1c08] sm:$0xff]
        %v1313 = vld [vmem:[%s316 + $0x1c10] sm:$0xff]
        %v1314 = vld [vmem:[%s316 + $0x1c18] sm:$0xff]
        %v1315 = vld [vmem:[%s316 + $0x1c20] sm:$0xff]
        %v1316 = vld [vmem:[%s316 + $0x1c28] sm:$0xff]
        %v1317 = vld [vmem:[%s316 + $0x1c30] sm:$0xff]
        %v1318 = vld [vmem:[%s316 + $0x1c38] sm:$0xff]
        %v1319 = vld [vmem:[%s316 + $0x1c40] sm:$0xff]
        %v1320 = vld [vmem:[%s316 + $0x1c48] sm:$0xff]
        %v1321 = vld [vmem:[%s316 + $0x1c50] sm:$0xff]
        %v1322 = vld [vmem:[%s316 + $0x1c58] sm:$0xff]
        %v1323 = vld [vmem:[%s316 + $0x1c60] sm:$0xff]
        %v1324 = vld [vmem:[%s316 + $0x1c68] sm:$0xff]
        %v1325 = vld [vmem:[%s316 + $0x1c70] sm:$0xff]
        %v1326 = vld [vmem:[%s316 + $0x1c78] sm:$0xff]
        %v1327 = vld [vmem:[%s316 + $0x1c80] sm:$0xff]
        %v1328 = vld [vmem:[%s316 + $0x1c88] sm:$0xff]
        %v1329 = vld [vmem:[%s316 + $0x1c90] sm:$0xff]
        %v1330 = vld [vmem:[%s316 + $0x1c98] sm:$0xff]
        %v1331 = vld [vmem:[%s316 + $0x1ca0] sm:$0xff]
        %v1332 = vld [vmem:[%s316 + $0x1ca8] sm:$0xff]
        %v1333 = vld [vmem:[%s316 + $0x1cb0] sm:$0xff]
        %v1334 = vld [vmem:[%s316 + $0x1cb8] sm:$0xff]
        %v1335 = vld [vmem:[%s316 + $0x1cc0] sm:$0xff]
        %v1336 = vld [vmem:[%s316 + $0x1cc8] sm:$0xff]
        %v1337 = vld [vmem:[%s316 + $0x1cd0] sm:$0xff]
        %v1338 = vld [vmem:[%s316 + $0x1cd8] sm:$0xff]
        %v1339 = vld [vmem:[%s316 + $0x1ce0] sm:$0xff]
        %v1340 = vld [vmem:[%s316 + $0x1ce8] sm:$0xff]
        %v1341 = vld [vmem:[%s316 + $0x1cf0] sm:$0xff]
        %v1342 = vld [vmem:[%s316 + $0x1cf8] sm:$0xff]
        %v1343 = vld [vmem:[%s316 + $0x1d00] sm:$0xff]
        %v1344 = vld [vmem:[%s316 + $0x1d08] sm:$0xff]
        %v1345 = vld [vmem:[%s316 + $0x1d10] sm:$0xff]
        %v1346 = vld [vmem:[%s316 + $0x1d18] sm:$0xff]
        %v1347 = vld [vmem:[%s316 + $0x1d20] sm:$0xff]
        %v1348 = vld [vmem:[%s316 + $0x1d28] sm:$0xff]
        %v1349 = vld [vmem:[%s316 + $0x1d30] sm:$0xff]
        %v1350 = vld [vmem:[%s316 + $0x1d38] sm:$0xff]
        %v1351 = vld [vmem:[%s316 + $0x1d40] sm:$0xff]
        %v1352 = vld [vmem:[%s316 + $0x1d48] sm:$0xff]
        %v1353 = vld [vmem:[%s316 + $0x1d50] sm:$0xff]
        %v1354 = vld [vmem:[%s316 + $0x1d58] sm:$0xff]
        %v1355 = vld [vmem:[%s316 + $0x1d60] sm:$0xff]
        %v1356 = vld [vmem:[%s316 + $0x1d68] sm:$0xff]
        %v1357 = vld [vmem:[%s316 + $0x1d70] sm:$0xff]
        %v1358 = vld [vmem:[%s316 + $0x1d78] sm:$0xff]
        %v1359 = vld [vmem:[%s316 + $0x1d80] sm:$0xff]
        %v1360 = vld [vmem:[%s316 + $0x1d88] sm:$0xff]
        %v1361 = vld [vmem:[%s316 + $0x1d90] sm:$0xff]
        %v1362 = vld [vmem:[%s316 + $0x1d98] sm:$0xff]
        %v1363 = vld [vmem:[%s316 + $0x1da0] sm:$0xff]
        %v1364 = vld [vmem:[%s316 + $0x1da8] sm:$0xff]
        %v1365 = vld [vmem:[%s316 + $0x1db0] sm:$0xff]
        %v1366 = vld [vmem:[%s316 + $0x1db8] sm:$0xff]
        %v1367 = vld [vmem:[%s316 + $0x1dc0] sm:$0xff]
        %v1368 = vld [vmem:[%s316 + $0x1dc8] sm:$0xff]
        %v1369 = vld [vmem:[%s316 + $0x1dd0] sm:$0xff]
        %v1370 = vld [vmem:[%s316 + $0x1dd8] sm:$0xff]
        %v1371 = vld [vmem:[%s316 + $0x1de0] sm:$0xff]
        %v1372 = vld [vmem:[%s316 + $0x1de8] sm:$0xff]
        %v1373 = vld [vmem:[%s316 + $0x1df0] sm:$0xff]
        %v1374 = vld [vmem:[%s316 + $0x1df8] sm:$0xff]
        %v1375 = vld [vmem:[%s316 + $0x1e00] sm:$0xff]
        %v1376 = vld [vmem:[%s316 + $0x1e08] sm:$0xff]
        %v1377 = vld [vmem:[%s316 + $0x1e10] sm:$0xff]
        %v1378 = vld [vmem:[%s316 + $0x1e18] sm:$0xff]
        %v1379 = vld [vmem:[%s316 + $0x1e20] sm:$0xff]
        %v1380 = vld [vmem:[%s316 + $0x1e28] sm:$0xff]
        %v1381 = vld [vmem:[%s316 + $0x1e30] sm:$0xff]
        %v1382 = vld [vmem:[%s316 + $0x1e38] sm:$0xff]
        %v1383 = vld [vmem:[%s316 + $0x1e40] sm:$0xff]
        %v1384 = vld [vmem:[%s316 + $0x1e48] sm:$0xff]
        %v1385 = vld [vmem:[%s316 + $0x1e50] sm:$0xff]
        %v1386 = vld [vmem:[%s316 + $0x1e58] sm:$0xff]
        %v1387 = vld [vmem:[%s316 + $0x1e60] sm:$0xff]
        %v1388 = vld [vmem:[%s316 + $0x1e68] sm:$0xff]
        %v1389 = vld [vmem:[%s316 + $0x1e70] sm:$0xff]
        %v1390 = vld [vmem:[%s316 + $0x1e78] sm:$0xff]
        %v1391 = vld [vmem:[%s316 + $0x1e80] sm:$0xff]
        %v1392 = vld [vmem:[%s316 + $0x1e88] sm:$0xff]
        %v1393 = vld [vmem:[%s316 + $0x1e90] sm:$0xff]
        %v1394 = vld [vmem:[%s316 + $0x1e98] sm:$0xff]
        %v1395 = vld [vmem:[%s316 + $0x1ea0] sm:$0xff]
        %v1396 = vld [vmem:[%s316 + $0x1ea8] sm:$0xff]
        %v1397 = vld [vmem:[%s316 + $0x1eb0] sm:$0xff]
        %v1398 = vld [vmem:[%s316 + $0x1eb8] sm:$0xff]
        %v1399 = vld [vmem:[%s316 + $0x1ec0] sm:$0xff]
        %v1400 = vld [vmem:[%s316 + $0x1ec8] sm:$0xff]
        %v1401 = vld [vmem:[%s316 + $0x1ed0] sm:$0xff]
        %v1402 = vld [vmem:[%s316 + $0x1ed8] sm:$0xff]
        %v1403 = vld [vmem:[%s316 + $0x1ee0] sm:$0xff]
        %v1404 = vld [vmem:[%s316 + $0x1ee8] sm:$0xff]
        %v1405 = vld [vmem:[%s316 + $0x1ef0] sm:$0xff]
        %v1406 = vld [vmem:[%s316 + $0x1ef8] sm:$0xff]
        %v1407 = vld [vmem:[%s316 + $0x1f00] sm:$0xff]
        %v1408 = vld [vmem:[%s316 + $0x1f08] sm:$0xff]
        %v1409 = vld [vmem:[%s316 + $0x1f10] sm:$0xff]
        %v1410 = vld [vmem:[%s316 + $0x1f18] sm:$0xff]
        %v1411 = vld [vmem:[%s316 + $0x1f20] sm:$0xff]
        %v1412 = vld [vmem:[%s316 + $0x1f28] sm:$0xff]
        %v1413 = vld [vmem:[%s316 + $0x1f30] sm:$0xff]
        %v1414 = vld [vmem:[%s316 + $0x1f38] sm:$0xff]
        %v1415 = vld [vmem:[%s316 + $0x1f40] sm:$0xff]
        %v1416 = vld [vmem:[%s316 + $0x1f48] sm:$0xff]
        %v1417 = vld [vmem:[%s316 + $0x1f50] sm:$0xff]
        %v1418 = vld [vmem:[%s316 + $0x1f58] sm:$0xff]
        %v1419 = vld [vmem:[%s316 + $0x1f60] sm:$0xff]
        %v1420 = vld [vmem:[%s316 + $0x1f68] sm:$0xff]
        %v1421 = vld [vmem:[%s316 + $0x1f70] sm:$0xff]
        %v1422 = vld [vmem:[%s316 + $0x1f78] sm:$0xff]
        %v1423 = vld [vmem:[%s316 + $0x1f80] sm:$0xff]
        %v1424 = vld [vmem:[%s316 + $0x1f88] sm:$0xff]
        %v1425 = vld [vmem:[%s316 + $0x1f90] sm:$0xff]
        %v1426 = vld [vmem:[%s316 + $0x1f98] sm:$0xff]
        %v1427 = vld [vmem:[%s316 + $0x1fa0] sm:$0xff]
        %v1428 = vld [vmem:[%s316 + $0x1fa8] sm:$0xff]
        %v1429 = vld [vmem:[%s316 + $0x1fb0] sm:$0xff]
        %v1430 = vld [vmem:[%s316 + $0x1fb8] sm:$0xff]
        %v1431 = vld [vmem:[%s316 + $0x1fc0] sm:$0xff]
        %v1432 = vld [vmem:[%s316 + $0x1fc8] sm:$0xff]
        %v1433 = vld [vmem:[%s316 + $0x1fd0] sm:$0xff]
        %v1434 = vld [vmem:[%s316 + $0x1fd8] sm:$0xff]
        %v1435 = vld [vmem:[%s316 + $0x1fe0] sm:$0xff]
        %v1436 = vld [vmem:[%s316 + $0x1fe8] sm:$0xff]
        %v1437 = vld [vmem:[%s316 + $0x1ff0] sm:$0xff]
        %v1438 = vld [vmem:[%s316 + $0x1ff8] sm:$0xff]
        %v1471 = vunpack.c.l.b16 %v383
        %v1472 = vunpack.c.h.b16 %v383
        %v1473 = vunpack.c.l.b16 %v384
        %v1474 = vunpack.c.h.b16 %v384
        %v1475 = vunpack.c.l.b16 %v385
        %v1476 = vunpack.c.h.b16 %v385
        %v1477 = vunpack.c.l.b16 %v386
        %v1478 = vunpack.c.h.b16 %v386
        %v1479 = vunpack.c.l.b16 %v387
        %v1480 = vunpack.c.h.b16 %v387
        %v1481 = vunpack.c.l.b16 %v388
        %v1482 = vunpack.c.h.b16 %v388
        %v1483 = vunpack.c.l.b16 %v389
        %v1484 = vunpack.c.h.b16 %v389
        %v1485 = vunpack.c.l.b16 %v390
        %v1486 = vunpack.c.h.b16 %v390
        %v1487 = vunpack.c.l.b16 %v391
        %v1488 = vunpack.c.h.b16 %v391
        %v1489 = vunpack.c.l.b16 %v392
        %v1490 = vunpack.c.h.b16 %v392
        %v1491 = vunpack.c.l.b16 %v393
        %v1492 = vunpack.c.h.b16 %v393
        %v1493 = vunpack.c.l.b16 %v394
        %v1494 = vunpack.c.h.b16 %v394
        %v1495 = vunpack.c.l.b16 %v395
        %v1496 = vunpack.c.h.b16 %v395
        %v1497 = vunpack.c.l.b16 %v396
        %v1498 = vunpack.c.h.b16 %v396
        %v1499 = vunpack.c.l.b16 %v397
        %v1500 = vunpack.c.h.b16 %v397
        %v1501 = vunpack.c.l.b16 %v398
        %v1502 = vunpack.c.h.b16 %v398
        %v1503 = vunpack.c.l.b16 %v399
        %v1504 = vunpack.c.h.b16 %v399
        %v1505 = vunpack.c.l.b16 %v400
        %v1506 = vunpack.c.h.b16 %v400
        %v1507 = vunpack.c.l.b16 %v401
        %v1508 = vunpack.c.h.b16 %v401
        %v1509 = vunpack.c.l.b16 %v402
        %v1510 = vunpack.c.h.b16 %v402
        %v1511 = vunpack.c.l.b16 %v403
        %v1512 = vunpack.c.h.b16 %v403
        %v1513 = vunpack.c.l.b16 %v404
        %v1514 = vunpack.c.h.b16 %v404
        %v1515 = vunpack.c.l.b16 %v405
        %v1516 = vunpack.c.h.b16 %v405
        %v1517 = vunpack.c.l.b16 %v406
        %v1518 = vunpack.c.h.b16 %v406
        %v1519 = vunpack.c.l.b16 %v407
        %v1520 = vunpack.c.h.b16 %v407
        %v1521 = vunpack.c.l.b16 %v408
        %v1522 = vunpack.c.h.b16 %v408
        %v1523 = vunpack.c.l.b16 %v409
        %v1524 = vunpack.c.h.b16 %v409
        %v1525 = vunpack.c.l.b16 %v410
        %v1526 = vunpack.c.h.b16 %v410
        %v1527 = vunpack.c.l.b16 %v411
        %v1528 = vunpack.c.h.b16 %v411
        %v1529 = vunpack.c.l.b16 %v412
        %v1530 = vunpack.c.h.b16 %v412
        %v1531 = vunpack.c.l.b16 %v413
        %v1532 = vunpack.c.h.b16 %v413
        %v1533 = vunpack.c.l.b16 %v414
        %v1534 = vunpack.c.h.b16 %v414
        %v1535 = vpack.c.b16 %v1503, %v1471
        %v1536 = vpack.c.b16 %v1504, %v1472
        %v1537 = vpack.c.b16 %v1505, %v1473
        %v1538 = vpack.c.b16 %v1506, %v1474
        %v1539 = vpack.c.b16 %v1507, %v1475
        %v1540 = vpack.c.b16 %v1508, %v1476
        %v1541 = vpack.c.b16 %v1509, %v1477
        %v1542 = vpack.c.b16 %v1510, %v1478
        %v1543 = vpack.c.b16 %v1511, %v1479
        %v1544 = vpack.c.b16 %v1512, %v1480
        %v1545 = vpack.c.b16 %v1513, %v1481
        %v1546 = vpack.c.b16 %v1514, %v1482
        %v1547 = vpack.c.b16 %v1515, %v1483
        %v1548 = vpack.c.b16 %v1516, %v1484
        %v1549 = vpack.c.b16 %v1517, %v1485
        %v1550 = vpack.c.b16 %v1518, %v1486
        %v1551 = vpack.c.b16 %v1519, %v1487
        %v1552 = vpack.c.b16 %v1520, %v1488
        %v1553 = vpack.c.b16 %v1521, %v1489
        %v1554 = vpack.c.b16 %v1522, %v1490
        %v1555 = vpack.c.b16 %v1523, %v1491
        %v1556 = vpack.c.b16 %v1524, %v1492
        %v1557 = vpack.c.b16 %v1525, %v1493
        %v1558 = vpack.c.b16 %v1526, %v1494
        %v1559 = vpack.c.b16 %v1527, %v1495
        %v1560 = vpack.c.b16 %v1528, %v1496
        %v1561 = vpack.c.b16 %v1529, %v1497
        %v1562 = vpack.c.b16 %v1530, %v1498
        %v1563 = vpack.c.b16 %v1531, %v1499
        %v1564 = vpack.c.b16 %v1532, %v1500
        %v1565 = vpack.c.b16 %v1533, %v1501
        %v1566 = vpack.c.b16 %v1534, %v1502
        %v2623 = vunpack.c.l.b16 %v415
        %v2624 = vunpack.c.h.b16 %v415
        %v2625 = vunpack.c.l.b16 %v416
        %v2626 = vunpack.c.h.b16 %v416
        %v2627 = vunpack.c.l.b16 %v417
        %v2628 = vunpack.c.h.b16 %v417
        %v2629 = vunpack.c.l.b16 %v418
        %v2630 = vunpack.c.h.b16 %v418
        %v2631 = vunpack.c.l.b16 %v419
        %v2632 = vunpack.c.h.b16 %v419
        %v2633 = vunpack.c.l.b16 %v420
        %v2634 = vunpack.c.h.b16 %v420
        %v2635 = vunpack.c.l.b16 %v421
        %v2636 = vunpack.c.h.b16 %v421
        %v2637 = vunpack.c.l.b16 %v422
        %v2638 = vunpack.c.h.b16 %v422
        %v2639 = vunpack.c.l.b16 %v423
        %v2640 = vunpack.c.h.b16 %v423
        %v2641 = vunpack.c.l.b16 %v424
        %v2642 = vunpack.c.h.b16 %v424
        %v2643 = vunpack.c.l.b16 %v425
        %v2644 = vunpack.c.h.b16 %v425
        %v2645 = vunpack.c.l.b16 %v426
        %v2646 = vunpack.c.h.b16 %v426
        %v2647 = vunpack.c.l.b16 %v427
        %v2648 = vunpack.c.h.b16 %v427
        %v2649 = vunpack.c.l.b16 %v428
        %v2650 = vunpack.c.h.b16 %v428
        %v2651 = vunpack.c.l.b16 %v429
        %v2652 = vunpack.c.h.b16 %v429
        %v2653 = vunpack.c.l.b16 %v430
        %v2654 = vunpack.c.h.b16 %v430
        %v2655 = vunpack.c.l.b16 %v431
        %v2656 = vunpack.c.h.b16 %v431
        %v2657 = vunpack.c.l.b16 %v432
        %v2658 = vunpack.c.h.b16 %v432
        %v2659 = vunpack.c.l.b16 %v433
        %v2660 = vunpack.c.h.b16 %v433
        %v2661 = vunpack.c.l.b16 %v434
        %v2662 = vunpack.c.h.b16 %v434
        %v2663 = vunpack.c.l.b16 %v435
        %v2664 = vunpack.c.h.b16 %v435
        %v2665 = vunpack.c.l.b16 %v436
        %v2666 = vunpack.c.h.b16 %v436
        %v2667 = vunpack.c.l.b16 %v437
        %v2668 = vunpack.c.h.b16 %v437
        %v2669 = vunpack.c.l.b16 %v438
        %v2670 = vunpack.c.h.b16 %v438
        %v2671 = vunpack.c.l.b16 %v439
        %v2672 = vunpack.c.h.b16 %v439
        %v2673 = vunpack.c.l.b16 %v440
        %v2674 = vunpack.c.h.b16 %v440
        %v2675 = vunpack.c.l.b16 %v441
        %v2676 = vunpack.c.h.b16 %v441
        %v2677 = vunpack.c.l.b16 %v442
        %v2678 = vunpack.c.h.b16 %v442
        %v2679 = vunpack.c.l.b16 %v443
        %v2680 = vunpack.c.h.b16 %v443
        %v2681 = vunpack.c.l.b16 %v444
        %v2682 = vunpack.c.h.b16 %v444
        %v2683 = vunpack.c.l.b16 %v445
        %v2684 = vunpack.c.h.b16 %v445
        %v2685 = vunpack.c.l.b16 %v446
        %v2686 = vunpack.c.h.b16 %v446
        %v2687 = vunpack.c.l.b16 %v447
        %v2688 = vunpack.c.h.b16 %v447
        %v2689 = vunpack.c.l.b16 %v448
        %v2690 = vunpack.c.h.b16 %v448
        %v2691 = vunpack.c.l.b16 %v449
        %v2692 = vunpack.c.h.b16 %v449
        %v2693 = vunpack.c.l.b16 %v450
        %v2694 = vunpack.c.h.b16 %v450
        %v2695 = vunpack.c.l.b16 %v451
        %v2696 = vunpack.c.h.b16 %v451
        %v2697 = vunpack.c.l.b16 %v452
        %v2698 = vunpack.c.h.b16 %v452
        %v2699 = vunpack.c.l.b16 %v453
        %v2700 = vunpack.c.h.b16 %v453
        %v2701 = vunpack.c.l.b16 %v454
        %v2702 = vunpack.c.h.b16 %v454
        %v2703 = vunpack.c.l.b16 %v455
        %v2704 = vunpack.c.h.b16 %v455
        %v2705 = vunpack.c.l.b16 %v456
        %v2706 = vunpack.c.h.b16 %v456
        %v2707 = vunpack.c.l.b16 %v457
        %v2708 = vunpack.c.h.b16 %v457
        %v2709 = vunpack.c.l.b16 %v458
        %v2710 = vunpack.c.h.b16 %v458
        %v2711 = vunpack.c.l.b16 %v459
        %v2712 = vunpack.c.h.b16 %v459
        %v2713 = vunpack.c.l.b16 %v460
        %v2714 = vunpack.c.h.b16 %v460
        %v2715 = vunpack.c.l.b16 %v461
        %v2716 = vunpack.c.h.b16 %v461
        %v2717 = vunpack.c.l.b16 %v462
        %v2718 = vunpack.c.h.b16 %v462
        %v2719 = vunpack.c.l.b16 %v463
        %v2720 = vunpack.c.h.b16 %v463
        %v2721 = vunpack.c.l.b16 %v464
        %v2722 = vunpack.c.h.b16 %v464
        %v2723 = vunpack.c.l.b16 %v465
        %v2724 = vunpack.c.h.b16 %v465
        %v2725 = vunpack.c.l.b16 %v466
        %v2726 = vunpack.c.h.b16 %v466
        %v2727 = vunpack.c.l.b16 %v467
        %v2728 = vunpack.c.h.b16 %v467
        %v2729 = vunpack.c.l.b16 %v468
        %v2730 = vunpack.c.h.b16 %v468
        %v2731 = vunpack.c.l.b16 %v469
        %v2732 = vunpack.c.h.b16 %v469
        %v2733 = vunpack.c.l.b16 %v470
        %v2734 = vunpack.c.h.b16 %v470
        %v2735 = vunpack.c.l.b16 %v471
        %v2736 = vunpack.c.h.b16 %v471
        %v2737 = vunpack.c.l.b16 %v472
        %v2738 = vunpack.c.h.b16 %v472
        %v2739 = vunpack.c.l.b16 %v473
        %v2740 = vunpack.c.h.b16 %v473
        %v2741 = vunpack.c.l.b16 %v474
        %v2742 = vunpack.c.h.b16 %v474
        %v2743 = vunpack.c.l.b16 %v475
        %v2744 = vunpack.c.h.b16 %v475
        %v2745 = vunpack.c.l.b16 %v476
        %v2746 = vunpack.c.h.b16 %v476
        %v2747 = vunpack.c.l.b16 %v477
        %v2748 = vunpack.c.h.b16 %v477
        %v2749 = vunpack.c.l.b16 %v478
        %v2750 = vunpack.c.h.b16 %v478
        %v2751 = vunpack.c.l.b16 %v479
        %v2752 = vunpack.c.h.b16 %v479
        %v2753 = vunpack.c.l.b16 %v480
        %v2754 = vunpack.c.h.b16 %v480
        %v2755 = vunpack.c.l.b16 %v481
        %v2756 = vunpack.c.h.b16 %v481
        %v2757 = vunpack.c.l.b16 %v482
        %v2758 = vunpack.c.h.b16 %v482
        %v2759 = vunpack.c.l.b16 %v483
        %v2760 = vunpack.c.h.b16 %v483
        %v2761 = vunpack.c.l.b16 %v484
        %v2762 = vunpack.c.h.b16 %v484
        %v2763 = vunpack.c.l.b16 %v485
        %v2764 = vunpack.c.h.b16 %v485
        %v2765 = vunpack.c.l.b16 %v486
        %v2766 = vunpack.c.h.b16 %v486
        %v2767 = vunpack.c.l.b16 %v487
        %v2768 = vunpack.c.h.b16 %v487
        %v2769 = vunpack.c.l.b16 %v488
        %v2770 = vunpack.c.h.b16 %v488
        %v2771 = vunpack.c.l.b16 %v489
        %v2772 = vunpack.c.h.b16 %v489
        %v2773 = vunpack.c.l.b16 %v490
        %v2774 = vunpack.c.h.b16 %v490
        %v2775 = vunpack.c.l.b16 %v491
        %v2776 = vunpack.c.h.b16 %v491
        %v2777 = vunpack.c.l.b16 %v492
        %v2778 = vunpack.c.h.b16 %v492
        %v2779 = vunpack.c.l.b16 %v493
        %v2780 = vunpack.c.h.b16 %v493
        %v2781 = vunpack.c.l.b16 %v494
        %v2782 = vunpack.c.h.b16 %v494
        %v2783 = vunpack.c.l.b16 %v495
        %v2784 = vunpack.c.h.b16 %v495
        %v2785 = vunpack.c.l.b16 %v496
        %v2786 = vunpack.c.h.b16 %v496
        %v2787 = vunpack.c.l.b16 %v497
        %v2788 = vunpack.c.h.b16 %v497
        %v2789 = vunpack.c.l.b16 %v498
        %v2790 = vunpack.c.h.b16 %v498
        %v2791 = vunpack.c.l.b16 %v499
        %v2792 = vunpack.c.h.b16 %v499
        %v2793 = vunpack.c.l.b16 %v500
        %v2794 = vunpack.c.h.b16 %v500
        %v2795 = vunpack.c.l.b16 %v501
        %v2796 = vunpack.c.h.b16 %v501
        %v2797 = vunpack.c.l.b16 %v502
        %v2798 = vunpack.c.h.b16 %v502
        %v2799 = vunpack.c.l.b16 %v503
        %v2800 = vunpack.c.h.b16 %v503
        %v2801 = vunpack.c.l.b16 %v504
        %v2802 = vunpack.c.h.b16 %v504
        %v2803 = vunpack.c.l.b16 %v505
        %v2804 = vunpack.c.h.b16 %v505
        %v2805 = vunpack.c.l.b16 %v506
        %v2806 = vunpack.c.h.b16 %v506
        %v2807 = vunpack.c.l.b16 %v507
        %v2808 = vunpack.c.h.b16 %v507
        %v2809 = vunpack.c.l.b16 %v508
        %v2810 = vunpack.c.h.b16 %v508
        %v2811 = vunpack.c.l.b16 %v509
        %v2812 = vunpack.c.h.b16 %v509
        %v2813 = vunpack.c.l.b16 %v510
        %v2814 = vunpack.c.h.b16 %v510
        %v2815 = vunpack.c.l.b16 %v511
        %v2816 = vunpack.c.h.b16 %v511
        %v2817 = vunpack.c.l.b16 %v512
        %v2818 = vunpack.c.h.b16 %v512
        %v2819 = vunpack.c.l.b16 %v513
        %v2820 = vunpack.c.h.b16 %v513
        %v2821 = vunpack.c.l.b16 %v514
        %v2822 = vunpack.c.h.b16 %v514
        %v2823 = vunpack.c.l.b16 %v515
        %v2824 = vunpack.c.h.b16 %v515
        %v2825 = vunpack.c.l.b16 %v516
        %v2826 = vunpack.c.h.b16 %v516
        %v2827 = vunpack.c.l.b16 %v517
        %v2828 = vunpack.c.h.b16 %v517
        %v2829 = vunpack.c.l.b16 %v518
        %v2830 = vunpack.c.h.b16 %v518
        %v2831 = vunpack.c.l.b16 %v519
        %v2832 = vunpack.c.h.b16 %v519
        %v2833 = vunpack.c.l.b16 %v520
        %v2834 = vunpack.c.h.b16 %v520
        %v2835 = vunpack.c.l.b16 %v521
        %v2836 = vunpack.c.h.b16 %v521
        %v2837 = vunpack.c.l.b16 %v522
        %v2838 = vunpack.c.h.b16 %v522
        %v2839 = vunpack.c.l.b16 %v523
        %v2840 = vunpack.c.h.b16 %v523
        %v2841 = vunpack.c.l.b16 %v524
        %v2842 = vunpack.c.h.b16 %v524
        %v2843 = vunpack.c.l.b16 %v525
        %v2844 = vunpack.c.h.b16 %v525
        %v2845 = vunpack.c.l.b16 %v526
        %v2846 = vunpack.c.h.b16 %v526
        %v2847 = vunpack.c.l.b16 %v527
        %v2848 = vunpack.c.h.b16 %v527
        %v2849 = vunpack.c.l.b16 %v528
        %v2850 = vunpack.c.h.b16 %v528
        %v2851 = vunpack.c.l.b16 %v529
        %v2852 = vunpack.c.h.b16 %v529
        %v2853 = vunpack.c.l.b16 %v530
        %v2854 = vunpack.c.h.b16 %v530
        %v2855 = vunpack.c.l.b16 %v531
        %v2856 = vunpack.c.h.b16 %v531
        %v2857 = vunpack.c.l.b16 %v532
        %v2858 = vunpack.c.h.b16 %v532
        %v2859 = vunpack.c.l.b16 %v533
        %v2860 = vunpack.c.h.b16 %v533
        %v2861 = vunpack.c.l.b16 %v534
        %v2862 = vunpack.c.h.b16 %v534
        %v2863 = vunpack.c.l.b16 %v535
        %v2864 = vunpack.c.h.b16 %v535
        %v2865 = vunpack.c.l.b16 %v536
        %v2866 = vunpack.c.h.b16 %v536
        %v2867 = vunpack.c.l.b16 %v537
        %v2868 = vunpack.c.h.b16 %v537
        %v2869 = vunpack.c.l.b16 %v538
        %v2870 = vunpack.c.h.b16 %v538
        %v2871 = vunpack.c.l.b16 %v539
        %v2872 = vunpack.c.h.b16 %v539
        %v2873 = vunpack.c.l.b16 %v540
        %v2874 = vunpack.c.h.b16 %v540
        %v2875 = vunpack.c.l.b16 %v541
        %v2876 = vunpack.c.h.b16 %v541
        %v2877 = vunpack.c.l.b16 %v542
        %v2878 = vunpack.c.h.b16 %v542
        %v2879 = vunpack.c.l.b16 %v543
        %v2880 = vunpack.c.h.b16 %v543
        %v2881 = vunpack.c.l.b16 %v544
        %v2882 = vunpack.c.h.b16 %v544
        %v2883 = vunpack.c.l.b16 %v545
        %v2884 = vunpack.c.h.b16 %v545
        %v2885 = vunpack.c.l.b16 %v546
        %v2886 = vunpack.c.h.b16 %v546
        %v2887 = vunpack.c.l.b16 %v547
        %v2888 = vunpack.c.h.b16 %v547
        %v2889 = vunpack.c.l.b16 %v548
        %v2890 = vunpack.c.h.b16 %v548
        %v2891 = vunpack.c.l.b16 %v549
        %v2892 = vunpack.c.h.b16 %v549
        %v2893 = vunpack.c.l.b16 %v550
        %v2894 = vunpack.c.h.b16 %v550
        %v2895 = vunpack.c.l.b16 %v551
        %v2896 = vunpack.c.h.b16 %v551
        %v2897 = vunpack.c.l.b16 %v552
        %v2898 = vunpack.c.h.b16 %v552
        %v2899 = vunpack.c.l.b16 %v553
        %v2900 = vunpack.c.h.b16 %v553
        %v2901 = vunpack.c.l.b16 %v554
        %v2902 = vunpack.c.h.b16 %v554
        %v2903 = vunpack.c.l.b16 %v555
        %v2904 = vunpack.c.h.b16 %v555
        %v2905 = vunpack.c.l.b16 %v556
        %v2906 = vunpack.c.h.b16 %v556
        %v2907 = vunpack.c.l.b16 %v557
        %v2908 = vunpack.c.h.b16 %v557
        %v2909 = vunpack.c.l.b16 %v558
        %v2910 = vunpack.c.h.b16 %v558
        %v2911 = vunpack.c.l.b16 %v559
        %v2912 = vunpack.c.h.b16 %v559
        %v2913 = vunpack.c.l.b16 %v560
        %v2914 = vunpack.c.h.b16 %v560
        %v2915 = vunpack.c.l.b16 %v561
        %v2916 = vunpack.c.h.b16 %v561
        %v2917 = vunpack.c.l.b16 %v562
        %v2918 = vunpack.c.h.b16 %v562
        %v2919 = vunpack.c.l.b16 %v563
        %v2920 = vunpack.c.h.b16 %v563
        %v2921 = vunpack.c.l.b16 %v564
        %v2922 = vunpack.c.h.b16 %v564
        %v2923 = vunpack.c.l.b16 %v565
        %v2924 = vunpack.c.h.b16 %v565
        %v2925 = vunpack.c.l.b16 %v566
        %v2926 = vunpack.c.h.b16 %v566
        %v2927 = vunpack.c.l.b16 %v567
        %v2928 = vunpack.c.h.b16 %v567
        %v2929 = vunpack.c.l.b16 %v568
        %v2930 = vunpack.c.h.b16 %v568
        %v2931 = vunpack.c.l.b16 %v569
        %v2932 = vunpack.c.h.b16 %v569
        %v2933 = vunpack.c.l.b16 %v570
        %v2934 = vunpack.c.h.b16 %v570
        %v2935 = vunpack.c.l.b16 %v571
        %v2936 = vunpack.c.h.b16 %v571
        %v2937 = vunpack.c.l.b16 %v572
        %v2938 = vunpack.c.h.b16 %v572
        %v2939 = vunpack.c.l.b16 %v573
        %v2940 = vunpack.c.h.b16 %v573
        %v2941 = vunpack.c.l.b16 %v574
        %v2942 = vunpack.c.h.b16 %v574
        %v2943 = vunpack.c.l.b16 %v575
        %v2944 = vunpack.c.h.b16 %v575
        %v2945 = vunpack.c.l.b16 %v576
        %v2946 = vunpack.c.h.b16 %v576
        %v2947 = vunpack.c.l.b16 %v577
        %v2948 = vunpack.c.h.b16 %v577
        %v2949 = vunpack.c.l.b16 %v578
        %v2950 = vunpack.c.h.b16 %v578
        %v2951 = vunpack.c.l.b16 %v579
        %v2952 = vunpack.c.h.b16 %v579
        %v2953 = vunpack.c.l.b16 %v580
        %v2954 = vunpack.c.h.b16 %v580
        %v2955 = vunpack.c.l.b16 %v581
        %v2956 = vunpack.c.h.b16 %v581
        %v2957 = vunpack.c.l.b16 %v582
        %v2958 = vunpack.c.h.b16 %v582
        %v2959 = vunpack.c.l.b16 %v583
        %v2960 = vunpack.c.h.b16 %v583
        %v2961 = vunpack.c.l.b16 %v584
        %v2962 = vunpack.c.h.b16 %v584
        %v2963 = vunpack.c.l.b16 %v585
        %v2964 = vunpack.c.h.b16 %v585
        %v2965 = vunpack.c.l.b16 %v586
        %v2966 = vunpack.c.h.b16 %v586
        %v2967 = vunpack.c.l.b16 %v587
        %v2968 = vunpack.c.h.b16 %v587
        %v2969 = vunpack.c.l.b16 %v588
        %v2970 = vunpack.c.h.b16 %v588
        %v2971 = vunpack.c.l.b16 %v589
        %v2972 = vunpack.c.h.b16 %v589
        %v2973 = vunpack.c.l.b16 %v590
        %v2974 = vunpack.c.h.b16 %v590
        %v2975 = vunpack.c.l.b16 %v591
        %v2976 = vunpack.c.h.b16 %v591
        %v2977 = vunpack.c.l.b16 %v592
        %v2978 = vunpack.c.h.b16 %v592
        %v2979 = vunpack.c.l.b16 %v593
        %v2980 = vunpack.c.h.b16 %v593
        %v2981 = vunpack.c.l.b16 %v594
        %v2982 = vunpack.c.h.b16 %v594
        %v2983 = vunpack.c.l.b16 %v595
        %v2984 = vunpack.c.h.b16 %v595
        %v2985 = vunpack.c.l.b16 %v596
        %v2986 = vunpack.c.h.b16 %v596
        %v2987 = vunpack.c.l.b16 %v597
        %v2988 = vunpack.c.h.b16 %v597
        %v2989 = vunpack.c.l.b16 %v598
        %v2990 = vunpack.c.h.b16 %v598
        %v2991 = vunpack.c.l.b16 %v599
        %v2992 = vunpack.c.h.b16 %v599
        %v2993 = vunpack.c.l.b16 %v600
        %v2994 = vunpack.c.h.b16 %v600
        %v2995 = vunpack.c.l.b16 %v601
        %v2996 = vunpack.c.h.b16 %v601
        %v2997 = vunpack.c.l.b16 %v602
        %v2998 = vunpack.c.h.b16 %v602
        %v2999 = vunpack.c.l.b16 %v603
        %v3000 = vunpack.c.h.b16 %v603
        %v3001 = vunpack.c.l.b16 %v604
        %v3002 = vunpack.c.h.b16 %v604
        %v3003 = vunpack.c.l.b16 %v605
        %v3004 = vunpack.c.h.b16 %v605
        %v3005 = vunpack.c.l.b16 %v606
        %v3006 = vunpack.c.h.b16 %v606
        %v3007 = vunpack.c.l.b16 %v607
        %v3008 = vunpack.c.h.b16 %v607
        %v3009 = vunpack.c.l.b16 %v608
        %v3010 = vunpack.c.h.b16 %v608
        %v3011 = vunpack.c.l.b16 %v609
        %v3012 = vunpack.c.h.b16 %v609
        %v3013 = vunpack.c.l.b16 %v610
        %v3014 = vunpack.c.h.b16 %v610
        %v3015 = vunpack.c.l.b16 %v611
        %v3016 = vunpack.c.h.b16 %v611
        %v3017 = vunpack.c.l.b16 %v612
        %v3018 = vunpack.c.h.b16 %v612
        %v3019 = vunpack.c.l.b16 %v613
        %v3020 = vunpack.c.h.b16 %v613
        %v3021 = vunpack.c.l.b16 %v614
        %v3022 = vunpack.c.h.b16 %v614
        %v3023 = vunpack.c.l.b16 %v615
        %v3024 = vunpack.c.h.b16 %v615
        %v3025 = vunpack.c.l.b16 %v616
        %v3026 = vunpack.c.h.b16 %v616
        %v3027 = vunpack.c.l.b16 %v617
        %v3028 = vunpack.c.h.b16 %v617
        %v3029 = vunpack.c.l.b16 %v618
        %v3030 = vunpack.c.h.b16 %v618
        %v3031 = vunpack.c.l.b16 %v619
        %v3032 = vunpack.c.h.b16 %v619
        %v3033 = vunpack.c.l.b16 %v620
        %v3034 = vunpack.c.h.b16 %v620
        %v3035 = vunpack.c.l.b16 %v621
        %v3036 = vunpack.c.h.b16 %v621
        %v3037 = vunpack.c.l.b16 %v622
        %v3038 = vunpack.c.h.b16 %v622
        %v3039 = vunpack.c.l.b16 %v623
        %v3040 = vunpack.c.h.b16 %v623
        %v3041 = vunpack.c.l.b16 %v624
        %v3042 = vunpack.c.h.b16 %v624
        %v3043 = vunpack.c.l.b16 %v625
        %v3044 = vunpack.c.h.b16 %v625
        %v3045 = vunpack.c.l.b16 %v626
        %v3046 = vunpack.c.h.b16 %v626
        %v3047 = vunpack.c.l.b16 %v627
        %v3048 = vunpack.c.h.b16 %v627
        %v3049 = vunpack.c.l.b16 %v628
        %v3050 = vunpack.c.h.b16 %v628
        %v3051 = vunpack.c.l.b16 %v629
        %v3052 = vunpack.c.h.b16 %v629
        %v3053 = vunpack.c.l.b16 %v630
        %v3054 = vunpack.c.h.b16 %v630
        %v3055 = vunpack.c.l.b16 %v631
        %v3056 = vunpack.c.h.b16 %v631
        %v3057 = vunpack.c.l.b16 %v632
        %v3058 = vunpack.c.h.b16 %v632
        %v3059 = vunpack.c.l.b16 %v633
        %v3060 = vunpack.c.h.b16 %v633
        %v3061 = vunpack.c.l.b16 %v634
        %v3062 = vunpack.c.h.b16 %v634
        %v3063 = vunpack.c.l.b16 %v635
        %v3064 = vunpack.c.h.b16 %v635
        %v3065 = vunpack.c.l.b16 %v636
        %v3066 = vunpack.c.h.b16 %v636
        %v3067 = vunpack.c.l.b16 %v637
        %v3068 = vunpack.c.h.b16 %v637
        %v3069 = vunpack.c.l.b16 %v638
        %v3070 = vunpack.c.h.b16 %v638
        %v3071 = vunpack.c.l.b16 %v639
        %v3072 = vunpack.c.h.b16 %v639
        %v3073 = vunpack.c.l.b16 %v640
        %v3074 = vunpack.c.h.b16 %v640
        %v3075 = vunpack.c.l.b16 %v641
        %v3076 = vunpack.c.h.b16 %v641
        %v3077 = vunpack.c.l.b16 %v642
        %v3078 = vunpack.c.h.b16 %v642
        %v3079 = vunpack.c.l.b16 %v643
        %v3080 = vunpack.c.h.b16 %v643
        %v3081 = vunpack.c.l.b16 %v644
        %v3082 = vunpack.c.h.b16 %v644
        %v3083 = vunpack.c.l.b16 %v645
        %v3084 = vunpack.c.h.b16 %v645
        %v3085 = vunpack.c.l.b16 %v646
        %v3086 = vunpack.c.h.b16 %v646
        %v3087 = vunpack.c.l.b16 %v647
        %v3088 = vunpack.c.h.b16 %v647
        %v3089 = vunpack.c.l.b16 %v648
        %v3090 = vunpack.c.h.b16 %v648
        %v3091 = vunpack.c.l.b16 %v649
        %v3092 = vunpack.c.h.b16 %v649
        %v3093 = vunpack.c.l.b16 %v650
        %v3094 = vunpack.c.h.b16 %v650
        %v3095 = vunpack.c.l.b16 %v651
        %v3096 = vunpack.c.h.b16 %v651
        %v3097 = vunpack.c.l.b16 %v652
        %v3098 = vunpack.c.h.b16 %v652
        %v3099 = vunpack.c.l.b16 %v653
        %v3100 = vunpack.c.h.b16 %v653
        %v3101 = vunpack.c.l.b16 %v654
        %v3102 = vunpack.c.h.b16 %v654
        %v3103 = vunpack.c.l.b16 %v655
        %v3104 = vunpack.c.h.b16 %v655
        %v3105 = vunpack.c.l.b16 %v656
        %v3106 = vunpack.c.h.b16 %v656
        %v3107 = vunpack.c.l.b16 %v657
        %v3108 = vunpack.c.h.b16 %v657
        %v3109 = vunpack.c.l.b16 %v658
        %v3110 = vunpack.c.h.b16 %v658
        %v3111 = vunpack.c.l.b16 %v659
        %v3112 = vunpack.c.h.b16 %v659
        %v3113 = vunpack.c.l.b16 %v660
        %v3114 = vunpack.c.h.b16 %v660
        %v3115 = vunpack.c.l.b16 %v661
        %v3116 = vunpack.c.h.b16 %v661
        %v3117 = vunpack.c.l.b16 %v662
        %v3118 = vunpack.c.h.b16 %v662
        %v3119 = vunpack.c.l.b16 %v663
        %v3120 = vunpack.c.h.b16 %v663
        %v3121 = vunpack.c.l.b16 %v664
        %v3122 = vunpack.c.h.b16 %v664
        %v3123 = vunpack.c.l.b16 %v665
        %v3124 = vunpack.c.h.b16 %v665
        %v3125 = vunpack.c.l.b16 %v666
        %v3126 = vunpack.c.h.b16 %v666
        %v3127 = vunpack.c.l.b16 %v667
        %v3128 = vunpack.c.h.b16 %v667
        %v3129 = vunpack.c.l.b16 %v668
        %v3130 = vunpack.c.h.b16 %v668
        %v3131 = vunpack.c.l.b16 %v669
        %v3132 = vunpack.c.h.b16 %v669
        %v3133 = vunpack.c.l.b16 %v670
        %v3134 = vunpack.c.h.b16 %v670
        %v3135 = vunpack.c.l.b16 %v671
        %v3136 = vunpack.c.h.b16 %v671
        %v3137 = vunpack.c.l.b16 %v672
        %v3138 = vunpack.c.h.b16 %v672
        %v3139 = vunpack.c.l.b16 %v673
        %v3140 = vunpack.c.h.b16 %v673
        %v3141 = vunpack.c.l.b16 %v674
        %v3142 = vunpack.c.h.b16 %v674
        %v3143 = vunpack.c.l.b16 %v675
        %v3144 = vunpack.c.h.b16 %v675
        %v3145 = vunpack.c.l.b16 %v676
        %v3146 = vunpack.c.h.b16 %v676
        %v3147 = vunpack.c.l.b16 %v677
        %v3148 = vunpack.c.h.b16 %v677
        %v3149 = vunpack.c.l.b16 %v678
        %v3150 = vunpack.c.h.b16 %v678
        %v3151 = vunpack.c.l.b16 %v679
        %v3152 = vunpack.c.h.b16 %v679
        %v3153 = vunpack.c.l.b16 %v680
        %v3154 = vunpack.c.h.b16 %v680
        %v3155 = vunpack.c.l.b16 %v681
        %v3156 = vunpack.c.h.b16 %v681
        %v3157 = vunpack.c.l.b16 %v682
        %v3158 = vunpack.c.h.b16 %v682
        %v3159 = vunpack.c.l.b16 %v683
        %v3160 = vunpack.c.h.b16 %v683
        %v3161 = vunpack.c.l.b16 %v684
        %v3162 = vunpack.c.h.b16 %v684
        %v3163 = vunpack.c.l.b16 %v685
        %v3164 = vunpack.c.h.b16 %v685
        %v3165 = vunpack.c.l.b16 %v686
        %v3166 = vunpack.c.h.b16 %v686
        %v3167 = vunpack.c.l.b16 %v687
        %v3168 = vunpack.c.h.b16 %v687
        %v3169 = vunpack.c.l.b16 %v688
        %v3170 = vunpack.c.h.b16 %v688
        %v3171 = vunpack.c.l.b16 %v689
        %v3172 = vunpack.c.h.b16 %v689
        %v3173 = vunpack.c.l.b16 %v690
        %v3174 = vunpack.c.h.b16 %v690
        %v3175 = vunpack.c.l.b16 %v691
        %v3176 = vunpack.c.h.b16 %v691
        %v3177 = vunpack.c.l.b16 %v692
        %v3178 = vunpack.c.h.b16 %v692
        %v3179 = vunpack.c.l.b16 %v693
        %v3180 = vunpack.c.h.b16 %v693
        %v3181 = vunpack.c.l.b16 %v694
        %v3182 = vunpack.c.h.b16 %v694
        %v3183 = vunpack.c.l.b16 %v695
        %v3184 = vunpack.c.h.b16 %v695
        %v3185 = vunpack.c.l.b16 %v696
        %v3186 = vunpack.c.h.b16 %v696
        %v3187 = vunpack.c.l.b16 %v697
        %v3188 = vunpack.c.h.b16 %v697
        %v3189 = vunpack.c.l.b16 %v698
        %v3190 = vunpack.c.h.b16 %v698
        %v3191 = vunpack.c.l.b16 %v699
        %v3192 = vunpack.c.h.b16 %v699
        %v3193 = vunpack.c.l.b16 %v700
        %v3194 = vunpack.c.h.b16 %v700
        %v3195 = vunpack.c.l.b16 %v701
        %v3196 = vunpack.c.h.b16 %v701
        %v3197 = vunpack.c.l.b16 %v702
        %v3198 = vunpack.c.h.b16 %v702
        %v3199 = vunpack.c.l.b16 %v703
        %v3200 = vunpack.c.h.b16 %v703
        %v3201 = vunpack.c.l.b16 %v704
        %v3202 = vunpack.c.h.b16 %v704
        %v3203 = vunpack.c.l.b16 %v705
        %v3204 = vunpack.c.h.b16 %v705
        %v3205 = vunpack.c.l.b16 %v706
        %v3206 = vunpack.c.h.b16 %v706
        %v3207 = vunpack.c.l.b16 %v707
        %v3208 = vunpack.c.h.b16 %v707
        %v3209 = vunpack.c.l.b16 %v708
        %v3210 = vunpack.c.h.b16 %v708
        %v3211 = vunpack.c.l.b16 %v709
        %v3212 = vunpack.c.h.b16 %v709
        %v3213 = vunpack.c.l.b16 %v710
        %v3214 = vunpack.c.h.b16 %v710
        %v3215 = vunpack.c.l.b16 %v711
        %v3216 = vunpack.c.h.b16 %v711
        %v3217 = vunpack.c.l.b16 %v712
        %v3218 = vunpack.c.h.b16 %v712
        %v3219 = vunpack.c.l.b16 %v713
        %v3220 = vunpack.c.h.b16 %v713
        %v3221 = vunpack.c.l.b16 %v714
        %v3222 = vunpack.c.h.b16 %v714
        %v3223 = vunpack.c.l.b16 %v715
        %v3224 = vunpack.c.h.b16 %v715
        %v3225 = vunpack.c.l.b16 %v716
        %v3226 = vunpack.c.h.b16 %v716
        %v3227 = vunpack.c.l.b16 %v717
        %v3228 = vunpack.c.h.b16 %v717
        %v3229 = vunpack.c.l.b16 %v718
        %v3230 = vunpack.c.h.b16 %v718
        %v3231 = vunpack.c.l.b16 %v719
        %v3232 = vunpack.c.h.b16 %v719
        %v3233 = vunpack.c.l.b16 %v720
        %v3234 = vunpack.c.h.b16 %v720
        %v3235 = vunpack.c.l.b16 %v721
        %v3236 = vunpack.c.h.b16 %v721
        %v3237 = vunpack.c.l.b16 %v722
        %v3238 = vunpack.c.h.b16 %v722
        %v3239 = vunpack.c.l.b16 %v723
        %v3240 = vunpack.c.h.b16 %v723
        %v3241 = vunpack.c.l.b16 %v724
        %v3242 = vunpack.c.h.b16 %v724
        %v3243 = vunpack.c.l.b16 %v725
        %v3244 = vunpack.c.h.b16 %v725
        %v3245 = vunpack.c.l.b16 %v726
        %v3246 = vunpack.c.h.b16 %v726
        %v3247 = vunpack.c.l.b16 %v727
        %v3248 = vunpack.c.h.b16 %v727
        %v3249 = vunpack.c.l.b16 %v728
        %v3250 = vunpack.c.h.b16 %v728
        %v3251 = vunpack.c.l.b16 %v729
        %v3252 = vunpack.c.h.b16 %v729
        %v3253 = vunpack.c.l.b16 %v730
        %v3254 = vunpack.c.h.b16 %v730
        %v3255 = vunpack.c.l.b16 %v731
        %v3256 = vunpack.c.h.b16 %v731
        %v3257 = vunpack.c.l.b16 %v732
        %v3258 = vunpack.c.h.b16 %v732
        %v3259 = vunpack.c.l.b16 %v733
        %v3260 = vunpack.c.h.b16 %v733
        %v3261 = vunpack.c.l.b16 %v734
        %v3262 = vunpack.c.h.b16 %v734
        %v3263 = vunpack.c.l.b16 %v735
        %v3264 = vunpack.c.h.b16 %v735
        %v3265 = vunpack.c.l.b16 %v736
        %v3266 = vunpack.c.h.b16 %v736
        %v3267 = vunpack.c.l.b16 %v737
        %v3268 = vunpack.c.h.b16 %v737
        %v3269 = vunpack.c.l.b16 %v738
        %v3270 = vunpack.c.h.b16 %v738
        %v3271 = vunpack.c.l.b16 %v739
        %v3272 = vunpack.c.h.b16 %v739
        %v3273 = vunpack.c.l.b16 %v740
        %v3274 = vunpack.c.h.b16 %v740
        %v3275 = vunpack.c.l.b16 %v741
        %v3276 = vunpack.c.h.b16 %v741
        %v3277 = vunpack.c.l.b16 %v742
        %v3278 = vunpack.c.h.b16 %v742
        %v3279 = vunpack.c.l.b16 %v743
        %v3280 = vunpack.c.h.b16 %v743
        %v3281 = vunpack.c.l.b16 %v744
        %v3282 = vunpack.c.h.b16 %v744
        %v3283 = vunpack.c.l.b16 %v745
        %v3284 = vunpack.c.h.b16 %v745
        %v3285 = vunpack.c.l.b16 %v746
        %v3286 = vunpack.c.h.b16 %v746
        %v3287 = vunpack.c.l.b16 %v747
        %v3288 = vunpack.c.h.b16 %v747
        %v3289 = vunpack.c.l.b16 %v748
        %v3290 = vunpack.c.h.b16 %v748
        %v3291 = vunpack.c.l.b16 %v749
        %v3292 = vunpack.c.h.b16 %v749
        %v3293 = vunpack.c.l.b16 %v750
        %v3294 = vunpack.c.h.b16 %v750
        %v3295 = vunpack.c.l.b16 %v751
        %v3296 = vunpack.c.h.b16 %v751
        %v3297 = vunpack.c.l.b16 %v752
        %v3298 = vunpack.c.h.b16 %v752
        %v3299 = vunpack.c.l.b16 %v753
        %v3300 = vunpack.c.h.b16 %v753
        %v3301 = vunpack.c.l.b16 %v754
        %v3302 = vunpack.c.h.b16 %v754
        %v3303 = vunpack.c.l.b16 %v755
        %v3304 = vunpack.c.h.b16 %v755
        %v3305 = vunpack.c.l.b16 %v756
        %v3306 = vunpack.c.h.b16 %v756
        %v3307 = vunpack.c.l.b16 %v757
        %v3308 = vunpack.c.h.b16 %v757
        %v3309 = vunpack.c.l.b16 %v758
        %v3310 = vunpack.c.h.b16 %v758
        %v3311 = vunpack.c.l.b16 %v759
        %v3312 = vunpack.c.h.b16 %v759
        %v3313 = vunpack.c.l.b16 %v760
        %v3314 = vunpack.c.h.b16 %v760
        %v3315 = vunpack.c.l.b16 %v761
        %v3316 = vunpack.c.h.b16 %v761
        %v3317 = vunpack.c.l.b16 %v762
        %v3318 = vunpack.c.h.b16 %v762
        %v3319 = vunpack.c.l.b16 %v763
        %v3320 = vunpack.c.h.b16 %v763
        %v3321 = vunpack.c.l.b16 %v764
        %v3322 = vunpack.c.h.b16 %v764
        %v3323 = vunpack.c.l.b16 %v765
        %v3324 = vunpack.c.h.b16 %v765
        %v3325 = vunpack.c.l.b16 %v766
        %v3326 = vunpack.c.h.b16 %v766
        %v3327 = vunpack.c.l.b16 %v767
        %v3328 = vunpack.c.h.b16 %v767
        %v3329 = vunpack.c.l.b16 %v768
        %v3330 = vunpack.c.h.b16 %v768
        %v3331 = vunpack.c.l.b16 %v769
        %v3332 = vunpack.c.h.b16 %v769
        %v3333 = vunpack.c.l.b16 %v770
        %v3334 = vunpack.c.h.b16 %v770
        %v3335 = vunpack.c.l.b16 %v771
        %v3336 = vunpack.c.h.b16 %v771
        %v3337 = vunpack.c.l.b16 %v772
        %v3338 = vunpack.c.h.b16 %v772
        %v3339 = vunpack.c.l.b16 %v773
        %v3340 = vunpack.c.h.b16 %v773
        %v3341 = vunpack.c.l.b16 %v774
        %v3342 = vunpack.c.h.b16 %v774
        %v3343 = vunpack.c.l.b16 %v775
        %v3344 = vunpack.c.h.b16 %v775
        %v3345 = vunpack.c.l.b16 %v776
        %v3346 = vunpack.c.h.b16 %v776
        %v3347 = vunpack.c.l.b16 %v777
        %v3348 = vunpack.c.h.b16 %v777
        %v3349 = vunpack.c.l.b16 %v778
        %v3350 = vunpack.c.h.b16 %v778
        %v3351 = vunpack.c.l.b16 %v779
        %v3352 = vunpack.c.h.b16 %v779
        %v3353 = vunpack.c.l.b16 %v780
        %v3354 = vunpack.c.h.b16 %v780
        %v3355 = vunpack.c.l.b16 %v781
        %v3356 = vunpack.c.h.b16 %v781
        %v3357 = vunpack.c.l.b16 %v782
        %v3358 = vunpack.c.h.b16 %v782
        %v3359 = vunpack.c.l.b16 %v783
        %v3360 = vunpack.c.h.b16 %v783
        %v3361 = vunpack.c.l.b16 %v784
        %v3362 = vunpack.c.h.b16 %v784
        %v3363 = vunpack.c.l.b16 %v785
        %v3364 = vunpack.c.h.b16 %v785
        %v3365 = vunpack.c.l.b16 %v786
        %v3366 = vunpack.c.h.b16 %v786
        %v3367 = vunpack.c.l.b16 %v787
        %v3368 = vunpack.c.h.b16 %v787
        %v3369 = vunpack.c.l.b16 %v788
        %v3370 = vunpack.c.h.b16 %v788
        %v3371 = vunpack.c.l.b16 %v789
        %v3372 = vunpack.c.h.b16 %v789
        %v3373 = vunpack.c.l.b16 %v790
        %v3374 = vunpack.c.h.b16 %v790
        %v3375 = vunpack.c.l.b16 %v791
        %v3376 = vunpack.c.h.b16 %v791
        %v3377 = vunpack.c.l.b16 %v792
        %v3378 = vunpack.c.h.b16 %v792
        %v3379 = vunpack.c.l.b16 %v793
        %v3380 = vunpack.c.h.b16 %v793
        %v3381 = vunpack.c.l.b16 %v794
        %v3382 = vunpack.c.h.b16 %v794
        %v3383 = vunpack.c.l.b16 %v795
        %v3384 = vunpack.c.h.b16 %v795
        %v3385 = vunpack.c.l.b16 %v796
        %v3386 = vunpack.c.h.b16 %v796
        %v3387 = vunpack.c.l.b16 %v797
        %v3388 = vunpack.c.h.b16 %v797
        %v3389 = vunpack.c.l.b16 %v798
        %v3390 = vunpack.c.h.b16 %v798
        %v3391 = vunpack.c.l.b16 %v799
        %v3392 = vunpack.c.h.b16 %v799
        %v3393 = vunpack.c.l.b16 %v800
        %v3394 = vunpack.c.h.b16 %v800
        %v3395 = vunpack.c.l.b16 %v801
        %v3396 = vunpack.c.h.b16 %v801
        %v3397 = vunpack.c.l.b16 %v802
        %v3398 = vunpack.c.h.b16 %v802
        %v3399 = vunpack.c.l.b16 %v803
        %v3400 = vunpack.c.h.b16 %v803
        %v3401 = vunpack.c.l.b16 %v804
        %v3402 = vunpack.c.h.b16 %v804
        %v3403 = vunpack.c.l.b16 %v805
        %v3404 = vunpack.c.h.b16 %v805
        %v3405 = vunpack.c.l.b16 %v806
        %v3406 = vunpack.c.h.b16 %v806
        %v3407 = vunpack.c.l.b16 %v807
        %v3408 = vunpack.c.h.b16 %v807
        %v3409 = vunpack.c.l.b16 %v808
        %v3410 = vunpack.c.h.b16 %v808
        %v3411 = vunpack.c.l.b16 %v809
        %v3412 = vunpack.c.h.b16 %v809
        %v3413 = vunpack.c.l.b16 %v810
        %v3414 = vunpack.c.h.b16 %v810
        %v3415 = vunpack.c.l.b16 %v811
        %v3416 = vunpack.c.h.b16 %v811
        %v3417 = vunpack.c.l.b16 %v812
        %v3418 = vunpack.c.h.b16 %v812
        %v3419 = vunpack.c.l.b16 %v813
        %v3420 = vunpack.c.h.b16 %v813
        %v3421 = vunpack.c.l.b16 %v814
        %v3422 = vunpack.c.h.b16 %v814
        %v3423 = vunpack.c.l.b16 %v815
        %v3424 = vunpack.c.h.b16 %v815
        %v3425 = vunpack.c.l.b16 %v816
        %v3426 = vunpack.c.h.b16 %v816
        %v3427 = vunpack.c.l.b16 %v817
        %v3428 = vunpack.c.h.b16 %v817
        %v3429 = vunpack.c.l.b16 %v818
        %v3430 = vunpack.c.h.b16 %v818
        %v3431 = vunpack.c.l.b16 %v819
        %v3432 = vunpack.c.h.b16 %v819
        %v3433 = vunpack.c.l.b16 %v820
        %v3434 = vunpack.c.h.b16 %v820
        %v3435 = vunpack.c.l.b16 %v821
        %v3436 = vunpack.c.h.b16 %v821
        %v3437 = vunpack.c.l.b16 %v822
        %v3438 = vunpack.c.h.b16 %v822
        %v3439 = vunpack.c.l.b16 %v823
        %v3440 = vunpack.c.h.b16 %v823
        %v3441 = vunpack.c.l.b16 %v824
        %v3442 = vunpack.c.h.b16 %v824
        %v3443 = vunpack.c.l.b16 %v825
        %v3444 = vunpack.c.h.b16 %v825
        %v3445 = vunpack.c.l.b16 %v826
        %v3446 = vunpack.c.h.b16 %v826
        %v3447 = vunpack.c.l.b16 %v827
        %v3448 = vunpack.c.h.b16 %v827
        %v3449 = vunpack.c.l.b16 %v828
        %v3450 = vunpack.c.h.b16 %v828
        %v3451 = vunpack.c.l.b16 %v829
        %v3452 = vunpack.c.h.b16 %v829
        %v3453 = vunpack.c.l.b16 %v830
        %v3454 = vunpack.c.h.b16 %v830
        %v3455 = vunpack.c.l.b16 %v831
        %v3456 = vunpack.c.h.b16 %v831
        %v3457 = vunpack.c.l.b16 %v832
        %v3458 = vunpack.c.h.b16 %v832
        %v3459 = vunpack.c.l.b16 %v833
        %v3460 = vunpack.c.h.b16 %v833
        %v3461 = vunpack.c.l.b16 %v834
        %v3462 = vunpack.c.h.b16 %v834
        %v3463 = vunpack.c.l.b16 %v835
        %v3464 = vunpack.c.h.b16 %v835
        %v3465 = vunpack.c.l.b16 %v836
        %v3466 = vunpack.c.h.b16 %v836
        %v3467 = vunpack.c.l.b16 %v837
        %v3468 = vunpack.c.h.b16 %v837
        %v3469 = vunpack.c.l.b16 %v838
        %v3470 = vunpack.c.h.b16 %v838
        %v3471 = vunpack.c.l.b16 %v839
        %v3472 = vunpack.c.h.b16 %v839
        %v3473 = vunpack.c.l.b16 %v840
        %v3474 = vunpack.c.h.b16 %v840
        %v3475 = vunpack.c.l.b16 %v841
        %v3476 = vunpack.c.h.b16 %v841
        %v3477 = vunpack.c.l.b16 %v842
        %v3478 = vunpack.c.h.b16 %v842
        %v3479 = vunpack.c.l.b16 %v843
        %v3480 = vunpack.c.h.b16 %v843
        %v3481 = vunpack.c.l.b16 %v844
        %v3482 = vunpack.c.h.b16 %v844
        %v3483 = vunpack.c.l.b16 %v845
        %v3484 = vunpack.c.h.b16 %v845
        %v3485 = vunpack.c.l.b16 %v846
        %v3486 = vunpack.c.h.b16 %v846
        %v3487 = vunpack.c.l.b16 %v847
        %v3488 = vunpack.c.h.b16 %v847
        %v3489 = vunpack.c.l.b16 %v848
        %v3490 = vunpack.c.h.b16 %v848
        %v3491 = vunpack.c.l.b16 %v849
        %v3492 = vunpack.c.h.b16 %v849
        %v3493 = vunpack.c.l.b16 %v850
        %v3494 = vunpack.c.h.b16 %v850
        %v3495 = vunpack.c.l.b16 %v851
        %v3496 = vunpack.c.h.b16 %v851
        %v3497 = vunpack.c.l.b16 %v852
        %v3498 = vunpack.c.h.b16 %v852
        %v3499 = vunpack.c.l.b16 %v853
        %v3500 = vunpack.c.h.b16 %v853
        %v3501 = vunpack.c.l.b16 %v854
        %v3502 = vunpack.c.h.b16 %v854
        %v3503 = vunpack.c.l.b16 %v855
        %v3504 = vunpack.c.h.b16 %v855
        %v3505 = vunpack.c.l.b16 %v856
        %v3506 = vunpack.c.h.b16 %v856
        %v3507 = vunpack.c.l.b16 %v857
        %v3508 = vunpack.c.h.b16 %v857
        %v3509 = vunpack.c.l.b16 %v858
        %v3510 = vunpack.c.h.b16 %v858
        %v3511 = vunpack.c.l.b16 %v859
        %v3512 = vunpack.c.h.b16 %v859
        %v3513 = vunpack.c.l.b16 %v860
        %v3514 = vunpack.c.h.b16 %v860
        %v3515 = vunpack.c.l.b16 %v861
        %v3516 = vunpack.c.h.b16 %v861
        %v3517 = vunpack.c.l.b16 %v862
        %v3518 = vunpack.c.h.b16 %v862
        %v3519 = vunpack.c.l.b16 %v863
        %v3520 = vunpack.c.h.b16 %v863
        %v3521 = vunpack.c.l.b16 %v864
        %v3522 = vunpack.c.h.b16 %v864
        %v3523 = vunpack.c.l.b16 %v865
        %v3524 = vunpack.c.h.b16 %v865
        %v3525 = vunpack.c.l.b16 %v866
        %v3526 = vunpack.c.h.b16 %v866
        %v3527 = vunpack.c.l.b16 %v867
        %v3528 = vunpack.c.h.b16 %v867
        %v3529 = vunpack.c.l.b16 %v868
        %v3530 = vunpack.c.h.b16 %v868
        %v3531 = vunpack.c.l.b16 %v869
        %v3532 = vunpack.c.h.b16 %v869
        %v3533 = vunpack.c.l.b16 %v870
        %v3534 = vunpack.c.h.b16 %v870
        %v3535 = vunpack.c.l.b16 %v871
        %v3536 = vunpack.c.h.b16 %v871
        %v3537 = vunpack.c.l.b16 %v872
        %v3538 = vunpack.c.h.b16 %v872
        %v3539 = vunpack.c.l.b16 %v873
        %v3540 = vunpack.c.h.b16 %v873
        %v3541 = vunpack.c.l.b16 %v874
        %v3542 = vunpack.c.h.b16 %v874
        %v3543 = vunpack.c.l.b16 %v875
        %v3544 = vunpack.c.h.b16 %v875
        %v3545 = vunpack.c.l.b16 %v876
        %v3546 = vunpack.c.h.b16 %v876
        %v3547 = vunpack.c.l.b16 %v877
        %v3548 = vunpack.c.h.b16 %v877
        %v3549 = vunpack.c.l.b16 %v878
        %v3550 = vunpack.c.h.b16 %v878
        %v3551 = vunpack.c.l.b16 %v879
        %v3552 = vunpack.c.h.b16 %v879
        %v3553 = vunpack.c.l.b16 %v880
        %v3554 = vunpack.c.h.b16 %v880
        %v3555 = vunpack.c.l.b16 %v881
        %v3556 = vunpack.c.h.b16 %v881
        %v3557 = vunpack.c.l.b16 %v882
        %v3558 = vunpack.c.h.b16 %v882
        %v3559 = vunpack.c.l.b16 %v883
        %v3560 = vunpack.c.h.b16 %v883
        %v3561 = vunpack.c.l.b16 %v884
        %v3562 = vunpack.c.h.b16 %v884
        %v3563 = vunpack.c.l.b16 %v885
        %v3564 = vunpack.c.h.b16 %v885
        %v3565 = vunpack.c.l.b16 %v886
        %v3566 = vunpack.c.h.b16 %v886
        %v3567 = vunpack.c.l.b16 %v887
        %v3568 = vunpack.c.h.b16 %v887
        %v3569 = vunpack.c.l.b16 %v888
        %v3570 = vunpack.c.h.b16 %v888
        %v3571 = vunpack.c.l.b16 %v889
        %v3572 = vunpack.c.h.b16 %v889
        %v3573 = vunpack.c.l.b16 %v890
        %v3574 = vunpack.c.h.b16 %v890
        %v3575 = vunpack.c.l.b16 %v891
        %v3576 = vunpack.c.h.b16 %v891
        %v3577 = vunpack.c.l.b16 %v892
        %v3578 = vunpack.c.h.b16 %v892
        %v3579 = vunpack.c.l.b16 %v893
        %v3580 = vunpack.c.h.b16 %v893
        %v3581 = vunpack.c.l.b16 %v894
        %v3582 = vunpack.c.h.b16 %v894
        %v3583 = vunpack.c.l.b16 %v895
        %v3584 = vunpack.c.h.b16 %v895
        %v3585 = vunpack.c.l.b16 %v896
        %v3586 = vunpack.c.h.b16 %v896
        %v3587 = vunpack.c.l.b16 %v897
        %v3588 = vunpack.c.h.b16 %v897
        %v3589 = vunpack.c.l.b16 %v898
        %v3590 = vunpack.c.h.b16 %v898
        %v3591 = vunpack.c.l.b16 %v899
        %v3592 = vunpack.c.h.b16 %v899
        %v3593 = vunpack.c.l.b16 %v900
        %v3594 = vunpack.c.h.b16 %v900
        %v3595 = vunpack.c.l.b16 %v901
        %v3596 = vunpack.c.h.b16 %v901
        %v3597 = vunpack.c.l.b16 %v902
        %v3598 = vunpack.c.h.b16 %v902
        %v3599 = vunpack.c.l.b16 %v903
        %v3600 = vunpack.c.h.b16 %v903
        %v3601 = vunpack.c.l.b16 %v904
        %v3602 = vunpack.c.h.b16 %v904
        %v3603 = vunpack.c.l.b16 %v905
        %v3604 = vunpack.c.h.b16 %v905
        %v3605 = vunpack.c.l.b16 %v906
        %v3606 = vunpack.c.h.b16 %v906
        %v3607 = vunpack.c.l.b16 %v907
        %v3608 = vunpack.c.h.b16 %v907
        %v3609 = vunpack.c.l.b16 %v908
        %v3610 = vunpack.c.h.b16 %v908
        %v3611 = vunpack.c.l.b16 %v909
        %v3612 = vunpack.c.h.b16 %v909
        %v3613 = vunpack.c.l.b16 %v910
        %v3614 = vunpack.c.h.b16 %v910
        %v3615 = vunpack.c.l.b16 %v911
        %v3616 = vunpack.c.h.b16 %v911
        %v3617 = vunpack.c.l.b16 %v912
        %v3618 = vunpack.c.h.b16 %v912
        %v3619 = vunpack.c.l.b16 %v913
        %v3620 = vunpack.c.h.b16 %v913
        %v3621 = vunpack.c.l.b16 %v914
        %v3622 = vunpack.c.h.b16 %v914
        %v3623 = vunpack.c.l.b16 %v915
        %v3624 = vunpack.c.h.b16 %v915
        %v3625 = vunpack.c.l.b16 %v916
        %v3626 = vunpack.c.h.b16 %v916
        %v3627 = vunpack.c.l.b16 %v917
        %v3628 = vunpack.c.h.b16 %v917
        %v3629 = vunpack.c.l.b16 %v918
        %v3630 = vunpack.c.h.b16 %v918
        %v3631 = vunpack.c.l.b16 %v919
        %v3632 = vunpack.c.h.b16 %v919
        %v3633 = vunpack.c.l.b16 %v920
        %v3634 = vunpack.c.h.b16 %v920
        %v3635 = vunpack.c.l.b16 %v921
        %v3636 = vunpack.c.h.b16 %v921
        %v3637 = vunpack.c.l.b16 %v922
        %v3638 = vunpack.c.h.b16 %v922
        %v3639 = vunpack.c.l.b16 %v923
        %v3640 = vunpack.c.h.b16 %v923
        %v3641 = vunpack.c.l.b16 %v924
        %v3642 = vunpack.c.h.b16 %v924
        %v3643 = vunpack.c.l.b16 %v925
        %v3644 = vunpack.c.h.b16 %v925
        %v3645 = vunpack.c.l.b16 %v926
        %v3646 = vunpack.c.h.b16 %v926
        %v3647 = vunpack.c.l.b16 %v927
        %v3648 = vunpack.c.h.b16 %v927
        %v3649 = vunpack.c.l.b16 %v928
        %v3650 = vunpack.c.h.b16 %v928
        %v3651 = vunpack.c.l.b16 %v929
        %v3652 = vunpack.c.h.b16 %v929
        %v3653 = vunpack.c.l.b16 %v930
        %v3654 = vunpack.c.h.b16 %v930
        %v3655 = vunpack.c.l.b16 %v931
        %v3656 = vunpack.c.h.b16 %v931
        %v3657 = vunpack.c.l.b16 %v932
        %v3658 = vunpack.c.h.b16 %v932
        %v3659 = vunpack.c.l.b16 %v933
        %v3660 = vunpack.c.h.b16 %v933
        %v3661 = vunpack.c.l.b16 %v934
        %v3662 = vunpack.c.h.b16 %v934
        %v3663 = vunpack.c.l.b16 %v935
        %v3664 = vunpack.c.h.b16 %v935
        %v3665 = vunpack.c.l.b16 %v936
        %v3666 = vunpack.c.h.b16 %v936
        %v3667 = vunpack.c.l.b16 %v937
        %v3668 = vunpack.c.h.b16 %v937
        %v3669 = vunpack.c.l.b16 %v938
        %v3670 = vunpack.c.h.b16 %v938
        %v3671 = vunpack.c.l.b16 %v939
        %v3672 = vunpack.c.h.b16 %v939
        %v3673 = vunpack.c.l.b16 %v940
        %v3674 = vunpack.c.h.b16 %v940
        %v3675 = vunpack.c.l.b16 %v941
        %v3676 = vunpack.c.h.b16 %v941
        %v3677 = vunpack.c.l.b16 %v942
        %v3678 = vunpack.c.h.b16 %v942
        %v3679 = vunpack.c.l.b16 %v943
        %v3680 = vunpack.c.h.b16 %v943
        %v3681 = vunpack.c.l.b16 %v944
        %v3682 = vunpack.c.h.b16 %v944
        %v3683 = vunpack.c.l.b16 %v945
        %v3684 = vunpack.c.h.b16 %v945
        %v3685 = vunpack.c.l.b16 %v946
        %v3686 = vunpack.c.h.b16 %v946
        %v3687 = vunpack.c.l.b16 %v947
        %v3688 = vunpack.c.h.b16 %v947
        %v3689 = vunpack.c.l.b16 %v948
        %v3690 = vunpack.c.h.b16 %v948
        %v3691 = vunpack.c.l.b16 %v949
        %v3692 = vunpack.c.h.b16 %v949
        %v3693 = vunpack.c.l.b16 %v950
        %v3694 = vunpack.c.h.b16 %v950
        %v3695 = vunpack.c.l.b16 %v951
        %v3696 = vunpack.c.h.b16 %v951
        %v3697 = vunpack.c.l.b16 %v952
        %v3698 = vunpack.c.h.b16 %v952
        %v3699 = vunpack.c.l.b16 %v953
        %v3700 = vunpack.c.h.b16 %v953
        %v3701 = vunpack.c.l.b16 %v954
        %v3702 = vunpack.c.h.b16 %v954
        %v3703 = vunpack.c.l.b16 %v955
        %v3704 = vunpack.c.h.b16 %v955
        %v3705 = vunpack.c.l.b16 %v956
        %v3706 = vunpack.c.h.b16 %v956
        %v3707 = vunpack.c.l.b16 %v957
        %v3708 = vunpack.c.h.b16 %v957
        %v3709 = vunpack.c.l.b16 %v958
        %v3710 = vunpack.c.h.b16 %v958
        %v3711 = vunpack.c.l.b16 %v959
        %v3712 = vunpack.c.h.b16 %v959
        %v3713 = vunpack.c.l.b16 %v960
        %v3714 = vunpack.c.h.b16 %v960
        %v3715 = vunpack.c.l.b16 %v961
        %v3716 = vunpack.c.h.b16 %v961
        %v3717 = vunpack.c.l.b16 %v962
        %v3718 = vunpack.c.h.b16 %v962
        %v3719 = vunpack.c.l.b16 %v963
        %v3720 = vunpack.c.h.b16 %v963
        %v3721 = vunpack.c.l.b16 %v964
        %v3722 = vunpack.c.h.b16 %v964
        %v3723 = vunpack.c.l.b16 %v965
        %v3724 = vunpack.c.h.b16 %v965
        %v3725 = vunpack.c.l.b16 %v966
        %v3726 = vunpack.c.h.b16 %v966
        %v3727 = vunpack.c.l.b16 %v967
        %v3728 = vunpack.c.h.b16 %v967
        %v3729 = vunpack.c.l.b16 %v968
        %v3730 = vunpack.c.h.b16 %v968
        %v3731 = vunpack.c.l.b16 %v969
        %v3732 = vunpack.c.h.b16 %v969
        %v3733 = vunpack.c.l.b16 %v970
        %v3734 = vunpack.c.h.b16 %v970
        %v3735 = vunpack.c.l.b16 %v971
        %v3736 = vunpack.c.h.b16 %v971
        %v3737 = vunpack.c.l.b16 %v972
        %v3738 = vunpack.c.h.b16 %v972
        %v3739 = vunpack.c.l.b16 %v973
        %v3740 = vunpack.c.h.b16 %v973
        %v3741 = vunpack.c.l.b16 %v974
        %v3742 = vunpack.c.h.b16 %v974
        %v3743 = vunpack.c.l.b16 %v975
        %v3744 = vunpack.c.h.b16 %v975
        %v3745 = vunpack.c.l.b16 %v976
        %v3746 = vunpack.c.h.b16 %v976
        %v3747 = vunpack.c.l.b16 %v977
        %v3748 = vunpack.c.h.b16 %v977
        %v3749 = vunpack.c.l.b16 %v978
        %v3750 = vunpack.c.h.b16 %v978
        %v3751 = vunpack.c.l.b16 %v979
        %v3752 = vunpack.c.h.b16 %v979
        %v3753 = vunpack.c.l.b16 %v980
        %v3754 = vunpack.c.h.b16 %v980
        %v3755 = vunpack.c.l.b16 %v981
        %v3756 = vunpack.c.h.b16 %v981
        %v3757 = vunpack.c.l.b16 %v982
        %v3758 = vunpack.c.h.b16 %v982
        %v3759 = vunpack.c.l.b16 %v983
        %v3760 = vunpack.c.h.b16 %v983
        %v3761 = vunpack.c.l.b16 %v984
        %v3762 = vunpack.c.h.b16 %v984
        %v3763 = vunpack.c.l.b16 %v985
        %v3764 = vunpack.c.h.b16 %v985
        %v3765 = vunpack.c.l.b16 %v986
        %v3766 = vunpack.c.h.b16 %v986
        %v3767 = vunpack.c.l.b16 %v987
        %v3768 = vunpack.c.h.b16 %v987
        %v3769 = vunpack.c.l.b16 %v988
        %v3770 = vunpack.c.h.b16 %v988
        %v3771 = vunpack.c.l.b16 %v989
        %v3772 = vunpack.c.h.b16 %v989
        %v3773 = vunpack.c.l.b16 %v990
        %v3774 = vunpack.c.h.b16 %v990
        %v3775 = vunpack.c.l.b16 %v991
        %v3776 = vunpack.c.h.b16 %v991
        %v3777 = vunpack.c.l.b16 %v992
        %v3778 = vunpack.c.h.b16 %v992
        %v3779 = vunpack.c.l.b16 %v993
        %v3780 = vunpack.c.h.b16 %v993
        %v3781 = vunpack.c.l.b16 %v994
        %v3782 = vunpack.c.h.b16 %v994
        %v3783 = vunpack.c.l.b16 %v995
        %v3784 = vunpack.c.h.b16 %v995
        %v3785 = vunpack.c.l.b16 %v996
        %v3786 = vunpack.c.h.b16 %v996
        %v3787 = vunpack.c.l.b16 %v997
        %v3788 = vunpack.c.h.b16 %v997
        %v3789 = vunpack.c.l.b16 %v998
        %v3790 = vunpack.c.h.b16 %v998
        %v3791 = vunpack.c.l.b16 %v999
        %v3792 = vunpack.c.h.b16 %v999
        %v3793 = vunpack.c.l.b16 %v1000
        %v3794 = vunpack.c.h.b16 %v1000
        %v3795 = vunpack.c.l.b16 %v1001
        %v3796 = vunpack.c.h.b16 %v1001
        %v3797 = vunpack.c.l.b16 %v1002
        %v3798 = vunpack.c.h.b16 %v1002
        %v3799 = vunpack.c.l.b16 %v1003
        %v3800 = vunpack.c.h.b16 %v1003
        %v3801 = vunpack.c.l.b16 %v1004
        %v3802 = vunpack.c.h.b16 %v1004
        %v3803 = vunpack.c.l.b16 %v1005
        %v3804 = vunpack.c.h.b16 %v1005
        %v3805 = vunpack.c.l.b16 %v1006
        %v3806 = vunpack.c.h.b16 %v1006
        %v3807 = vunpack.c.l.b16 %v1007
        %v3808 = vunpack.c.h.b16 %v1007
        %v3809 = vunpack.c.l.b16 %v1008
        %v3810 = vunpack.c.h.b16 %v1008
        %v3811 = vunpack.c.l.b16 %v1009
        %v3812 = vunpack.c.h.b16 %v1009
        %v3813 = vunpack.c.l.b16 %v1010
        %v3814 = vunpack.c.h.b16 %v1010
        %v3815 = vunpack.c.l.b16 %v1011
        %v3816 = vunpack.c.h.b16 %v1011
        %v3817 = vunpack.c.l.b16 %v1012
        %v3818 = vunpack.c.h.b16 %v1012
        %v3819 = vunpack.c.l.b16 %v1013
        %v3820 = vunpack.c.h.b16 %v1013
        %v3821 = vunpack.c.l.b16 %v1014
        %v3822 = vunpack.c.h.b16 %v1014
        %v3823 = vunpack.c.l.b16 %v1015
        %v3824 = vunpack.c.h.b16 %v1015
        %v3825 = vunpack.c.l.b16 %v1016
        %v3826 = vunpack.c.h.b16 %v1016
        %v3827 = vunpack.c.l.b16 %v1017
        %v3828 = vunpack.c.h.b16 %v1017
        %v3829 = vunpack.c.l.b16 %v1018
        %v3830 = vunpack.c.h.b16 %v1018
        %v3831 = vunpack.c.l.b16 %v1019
        %v3832 = vunpack.c.h.b16 %v1019
        %v3833 = vunpack.c.l.b16 %v1020
        %v3834 = vunpack.c.h.b16 %v1020
        %v3835 = vunpack.c.l.b16 %v1021
        %v3836 = vunpack.c.h.b16 %v1021
        %v3837 = vunpack.c.l.b16 %v1022
        %v3838 = vunpack.c.h.b16 %v1022
        %v3839 = vunpack.c.l.b16 %v1023
        %v3840 = vunpack.c.h.b16 %v1023
        %v3841 = vunpack.c.l.b16 %v1024
        %v3842 = vunpack.c.h.b16 %v1024
        %v3843 = vunpack.c.l.b16 %v1025
        %v3844 = vunpack.c.h.b16 %v1025
        %v3845 = vunpack.c.l.b16 %v1026
        %v3846 = vunpack.c.h.b16 %v1026
        %v3847 = vunpack.c.l.b16 %v1027
        %v3848 = vunpack.c.h.b16 %v1027
        %v3849 = vunpack.c.l.b16 %v1028
        %v3850 = vunpack.c.h.b16 %v1028
        %v3851 = vunpack.c.l.b16 %v1029
        %v3852 = vunpack.c.h.b16 %v1029
        %v3853 = vunpack.c.l.b16 %v1030
        %v3854 = vunpack.c.h.b16 %v1030
        %v3855 = vunpack.c.l.b16 %v1031
        %v3856 = vunpack.c.h.b16 %v1031
        %v3857 = vunpack.c.l.b16 %v1032
        %v3858 = vunpack.c.h.b16 %v1032
        %v3859 = vunpack.c.l.b16 %v1033
        %v3860 = vunpack.c.h.b16 %v1033
        %v3861 = vunpack.c.l.b16 %v1034
        %v3862 = vunpack.c.h.b16 %v1034
        %v3863 = vunpack.c.l.b16 %v1035
        %v3864 = vunpack.c.h.b16 %v1035
        %v3865 = vunpack.c.l.b16 %v1036
        %v3866 = vunpack.c.h.b16 %v1036
        %v3867 = vunpack.c.l.b16 %v1037
        %v3868 = vunpack.c.h.b16 %v1037
        %v3869 = vunpack.c.l.b16 %v1038
        %v3870 = vunpack.c.h.b16 %v1038
        %v3871 = vunpack.c.l.b16 %v1039
        %v3872 = vunpack.c.h.b16 %v1039
        %v3873 = vunpack.c.l.b16 %v1040
        %v3874 = vunpack.c.h.b16 %v1040
        %v3875 = vunpack.c.l.b16 %v1041
        %v3876 = vunpack.c.h.b16 %v1041
        %v3877 = vunpack.c.l.b16 %v1042
        %v3878 = vunpack.c.h.b16 %v1042
        %v3879 = vunpack.c.l.b16 %v1043
        %v3880 = vunpack.c.h.b16 %v1043
        %v3881 = vunpack.c.l.b16 %v1044
        %v3882 = vunpack.c.h.b16 %v1044
        %v3883 = vunpack.c.l.b16 %v1045
        %v3884 = vunpack.c.h.b16 %v1045
        %v3885 = vunpack.c.l.b16 %v1046
        %v3886 = vunpack.c.h.b16 %v1046
        %v3887 = vunpack.c.l.b16 %v1047
        %v3888 = vunpack.c.h.b16 %v1047
        %v3889 = vunpack.c.l.b16 %v1048
        %v3890 = vunpack.c.h.b16 %v1048
        %v3891 = vunpack.c.l.b16 %v1049
        %v3892 = vunpack.c.h.b16 %v1049
        %v3893 = vunpack.c.l.b16 %v1050
        %v3894 = vunpack.c.h.b16 %v1050
        %v3895 = vunpack.c.l.b16 %v1051
        %v3896 = vunpack.c.h.b16 %v1051
        %v3897 = vunpack.c.l.b16 %v1052
        %v3898 = vunpack.c.h.b16 %v1052
        %v3899 = vunpack.c.l.b16 %v1053
        %v3900 = vunpack.c.h.b16 %v1053
        %v3901 = vunpack.c.l.b16 %v1054
        %v3902 = vunpack.c.h.b16 %v1054
        %v3903 = vunpack.c.l.b16 %v1055
        %v3904 = vunpack.c.h.b16 %v1055
        %v3905 = vunpack.c.l.b16 %v1056
        %v3906 = vunpack.c.h.b16 %v1056
        %v3907 = vunpack.c.l.b16 %v1057
        %v3908 = vunpack.c.h.b16 %v1057
        %v3909 = vunpack.c.l.b16 %v1058
        %v3910 = vunpack.c.h.b16 %v1058
        %v3911 = vunpack.c.l.b16 %v1059
        %v3912 = vunpack.c.h.b16 %v1059
        %v3913 = vunpack.c.l.b16 %v1060
        %v3914 = vunpack.c.h.b16 %v1060
        %v3915 = vunpack.c.l.b16 %v1061
        %v3916 = vunpack.c.h.b16 %v1061
        %v3917 = vunpack.c.l.b16 %v1062
        %v3918 = vunpack.c.h.b16 %v1062
        %v3919 = vunpack.c.l.b16 %v1063
        %v3920 = vunpack.c.h.b16 %v1063
        %v3921 = vunpack.c.l.b16 %v1064
        %v3922 = vunpack.c.h.b16 %v1064
        %v3923 = vunpack.c.l.b16 %v1065
        %v3924 = vunpack.c.h.b16 %v1065
        %v3925 = vunpack.c.l.b16 %v1066
        %v3926 = vunpack.c.h.b16 %v1066
        %v3927 = vunpack.c.l.b16 %v1067
        %v3928 = vunpack.c.h.b16 %v1067
        %v3929 = vunpack.c.l.b16 %v1068
        %v3930 = vunpack.c.h.b16 %v1068
        %v3931 = vunpack.c.l.b16 %v1069
        %v3932 = vunpack.c.h.b16 %v1069
        %v3933 = vunpack.c.l.b16 %v1070
        %v3934 = vunpack.c.h.b16 %v1070
        %v3935 = vunpack.c.l.b16 %v1071
        %v3936 = vunpack.c.h.b16 %v1071
        %v3937 = vunpack.c.l.b16 %v1072
        %v3938 = vunpack.c.h.b16 %v1072
        %v3939 = vunpack.c.l.b16 %v1073
        %v3940 = vunpack.c.h.b16 %v1073
        %v3941 = vunpack.c.l.b16 %v1074
        %v3942 = vunpack.c.h.b16 %v1074
        %v3943 = vunpack.c.l.b16 %v1075
        %v3944 = vunpack.c.h.b16 %v1075
        %v3945 = vunpack.c.l.b16 %v1076
        %v3946 = vunpack.c.h.b16 %v1076
        %v3947 = vunpack.c.l.b16 %v1077
        %v3948 = vunpack.c.h.b16 %v1077
        %v3949 = vunpack.c.l.b16 %v1078
        %v3950 = vunpack.c.h.b16 %v1078
        %v3951 = vunpack.c.l.b16 %v1079
        %v3952 = vunpack.c.h.b16 %v1079
        %v3953 = vunpack.c.l.b16 %v1080
        %v3954 = vunpack.c.h.b16 %v1080
        %v3955 = vunpack.c.l.b16 %v1081
        %v3956 = vunpack.c.h.b16 %v1081
        %v3957 = vunpack.c.l.b16 %v1082
        %v3958 = vunpack.c.h.b16 %v1082
        %v3959 = vunpack.c.l.b16 %v1083
        %v3960 = vunpack.c.h.b16 %v1083
        %v3961 = vunpack.c.l.b16 %v1084
        %v3962 = vunpack.c.h.b16 %v1084
        %v3963 = vunpack.c.l.b16 %v1085
        %v3964 = vunpack.c.h.b16 %v1085
        %v3965 = vunpack.c.l.b16 %v1086
        %v3966 = vunpack.c.h.b16 %v1086
        %v3967 = vunpack.c.l.b16 %v1087
        %v3968 = vunpack.c.h.b16 %v1087
        %v3969 = vunpack.c.l.b16 %v1088
        %v3970 = vunpack.c.h.b16 %v1088
        %v3971 = vunpack.c.l.b16 %v1089
        %v3972 = vunpack.c.h.b16 %v1089
        %v3973 = vunpack.c.l.b16 %v1090
        %v3974 = vunpack.c.h.b16 %v1090
        %v3975 = vunpack.c.l.b16 %v1091
        %v3976 = vunpack.c.h.b16 %v1091
        %v3977 = vunpack.c.l.b16 %v1092
        %v3978 = vunpack.c.h.b16 %v1092
        %v3979 = vunpack.c.l.b16 %v1093
        %v3980 = vunpack.c.h.b16 %v1093
        %v3981 = vunpack.c.l.b16 %v1094
        %v3982 = vunpack.c.h.b16 %v1094
        %v3983 = vunpack.c.l.b16 %v1095
        %v3984 = vunpack.c.h.b16 %v1095
        %v3985 = vunpack.c.l.b16 %v1096
        %v3986 = vunpack.c.h.b16 %v1096
        %v3987 = vunpack.c.l.b16 %v1097
        %v3988 = vunpack.c.h.b16 %v1097
        %v3989 = vunpack.c.l.b16 %v1098
        %v3990 = vunpack.c.h.b16 %v1098
        %v3991 = vunpack.c.l.b16 %v1099
        %v3992 = vunpack.c.h.b16 %v1099
        %v3993 = vunpack.c.l.b16 %v1100
        %v3994 = vunpack.c.h.b16 %v1100
        %v3995 = vunpack.c.l.b16 %v1101
        %v3996 = vunpack.c.h.b16 %v1101
        %v3997 = vunpack.c.l.b16 %v1102
        %v3998 = vunpack.c.h.b16 %v1102
        %v3999 = vunpack.c.l.b16 %v1103
        %v4000 = vunpack.c.h.b16 %v1103
        %v4001 = vunpack.c.l.b16 %v1104
        %v4002 = vunpack.c.h.b16 %v1104
        %v4003 = vunpack.c.l.b16 %v1105
        %v4004 = vunpack.c.h.b16 %v1105
        %v4005 = vunpack.c.l.b16 %v1106
        %v4006 = vunpack.c.h.b16 %v1106
        %v4007 = vunpack.c.l.b16 %v1107
        %v4008 = vunpack.c.h.b16 %v1107
        %v4009 = vunpack.c.l.b16 %v1108
        %v4010 = vunpack.c.h.b16 %v1108
        %v4011 = vunpack.c.l.b16 %v1109
        %v4012 = vunpack.c.h.b16 %v1109
        %v4013 = vunpack.c.l.b16 %v1110
        %v4014 = vunpack.c.h.b16 %v1110
        %v4015 = vunpack.c.l.b16 %v1111
        %v4016 = vunpack.c.h.b16 %v1111
        %v4017 = vunpack.c.l.b16 %v1112
        %v4018 = vunpack.c.h.b16 %v1112
        %v4019 = vunpack.c.l.b16 %v1113
        %v4020 = vunpack.c.h.b16 %v1113
        %v4021 = vunpack.c.l.b16 %v1114
        %v4022 = vunpack.c.h.b16 %v1114
        %v4023 = vunpack.c.l.b16 %v1115
        %v4024 = vunpack.c.h.b16 %v1115
        %v4025 = vunpack.c.l.b16 %v1116
        %v4026 = vunpack.c.h.b16 %v1116
        %v4027 = vunpack.c.l.b16 %v1117
        %v4028 = vunpack.c.h.b16 %v1117
        %v4029 = vunpack.c.l.b16 %v1118
        %v4030 = vunpack.c.h.b16 %v1118
        %v4031 = vunpack.c.l.b16 %v1119
        %v4032 = vunpack.c.h.b16 %v1119
        %v4033 = vunpack.c.l.b16 %v1120
        %v4034 = vunpack.c.h.b16 %v1120
        %v4035 = vunpack.c.l.b16 %v1121
        %v4036 = vunpack.c.h.b16 %v1121
        %v4037 = vunpack.c.l.b16 %v1122
        %v4038 = vunpack.c.h.b16 %v1122
        %v4039 = vunpack.c.l.b16 %v1123
        %v4040 = vunpack.c.h.b16 %v1123
        %v4041 = vunpack.c.l.b16 %v1124
        %v4042 = vunpack.c.h.b16 %v1124
        %v4043 = vunpack.c.l.b16 %v1125
        %v4044 = vunpack.c.h.b16 %v1125
        %v4045 = vunpack.c.l.b16 %v1126
        %v4046 = vunpack.c.h.b16 %v1126
        %v4047 = vunpack.c.l.b16 %v1127
        %v4048 = vunpack.c.h.b16 %v1127
        %v4049 = vunpack.c.l.b16 %v1128
        %v4050 = vunpack.c.h.b16 %v1128
        %v4051 = vunpack.c.l.b16 %v1129
        %v4052 = vunpack.c.h.b16 %v1129
        %v4053 = vunpack.c.l.b16 %v1130
        %v4054 = vunpack.c.h.b16 %v1130
        %v4055 = vunpack.c.l.b16 %v1131
        %v4056 = vunpack.c.h.b16 %v1131
        %v4057 = vunpack.c.l.b16 %v1132
        %v4058 = vunpack.c.h.b16 %v1132
        %v4059 = vunpack.c.l.b16 %v1133
        %v4060 = vunpack.c.h.b16 %v1133
        %v4061 = vunpack.c.l.b16 %v1134
        %v4062 = vunpack.c.h.b16 %v1134
        %v4063 = vunpack.c.l.b16 %v1135
        %v4064 = vunpack.c.h.b16 %v1135
        %v4065 = vunpack.c.l.b16 %v1136
        %v4066 = vunpack.c.h.b16 %v1136
        %v4067 = vunpack.c.l.b16 %v1137
        %v4068 = vunpack.c.h.b16 %v1137
        %v4069 = vunpack.c.l.b16 %v1138
        %v4070 = vunpack.c.h.b16 %v1138
        %v4071 = vunpack.c.l.b16 %v1139
        %v4072 = vunpack.c.h.b16 %v1139
        %v4073 = vunpack.c.l.b16 %v1140
        %v4074 = vunpack.c.h.b16 %v1140
        %v4075 = vunpack.c.l.b16 %v1141
        %v4076 = vunpack.c.h.b16 %v1141
        %v4077 = vunpack.c.l.b16 %v1142
        %v4078 = vunpack.c.h.b16 %v1142
        %v4079 = vunpack.c.l.b16 %v1143
        %v4080 = vunpack.c.h.b16 %v1143
        %v4081 = vunpack.c.l.b16 %v1144
        %v4082 = vunpack.c.h.b16 %v1144
        %v4083 = vunpack.c.l.b16 %v1145
        %v4084 = vunpack.c.h.b16 %v1145
        %v4085 = vunpack.c.l.b16 %v1146
        %v4086 = vunpack.c.h.b16 %v1146
        %v4087 = vunpack.c.l.b16 %v1147
        %v4088 = vunpack.c.h.b16 %v1147
        %v4089 = vunpack.c.l.b16 %v1148
        %v4090 = vunpack.c.h.b16 %v1148
        %v4091 = vunpack.c.l.b16 %v1149
        %v4092 = vunpack.c.h.b16 %v1149
        %v4093 = vunpack.c.l.b16 %v1150
        %v4094 = vunpack.c.h.b16 %v1150
        %v4095 = vunpack.c.l.b16 %v1151
        %v4096 = vunpack.c.h.b16 %v1151
        %v4097 = vunpack.c.l.b16 %v1152
        %v4098 = vunpack.c.h.b16 %v1152
        %v4099 = vunpack.c.l.b16 %v1153
        %v4100 = vunpack.c.h.b16 %v1153
        %v4101 = vunpack.c.l.b16 %v1154
        %v4102 = vunpack.c.h.b16 %v1154
        %v4103 = vunpack.c.l.b16 %v1155
        %v4104 = vunpack.c.h.b16 %v1155
        %v4105 = vunpack.c.l.b16 %v1156
        %v4106 = vunpack.c.h.b16 %v1156
        %v4107 = vunpack.c.l.b16 %v1157
        %v4108 = vunpack.c.h.b16 %v1157
        %v4109 = vunpack.c.l.b16 %v1158
        %v4110 = vunpack.c.h.b16 %v1158
        %v4111 = vunpack.c.l.b16 %v1159
        %v4112 = vunpack.c.h.b16 %v1159
        %v4113 = vunpack.c.l.b16 %v1160
        %v4114 = vunpack.c.h.b16 %v1160
        %v4115 = vunpack.c.l.b16 %v1161
        %v4116 = vunpack.c.h.b16 %v1161
        %v4117 = vunpack.c.l.b16 %v1162
        %v4118 = vunpack.c.h.b16 %v1162
        %v4119 = vunpack.c.l.b16 %v1163
        %v4120 = vunpack.c.h.b16 %v1163
        %v4121 = vunpack.c.l.b16 %v1164
        %v4122 = vunpack.c.h.b16 %v1164
        %v4123 = vunpack.c.l.b16 %v1165
        %v4124 = vunpack.c.h.b16 %v1165
        %v4125 = vunpack.c.l.b16 %v1166
        %v4126 = vunpack.c.h.b16 %v1166
        %v4127 = vunpack.c.l.b16 %v1167
        %v4128 = vunpack.c.h.b16 %v1167
        %v4129 = vunpack.c.l.b16 %v1168
        %v4130 = vunpack.c.h.b16 %v1168
        %v4131 = vunpack.c.l.b16 %v1169
        %v4132 = vunpack.c.h.b16 %v1169
        %v4133 = vunpack.c.l.b16 %v1170
        %v4134 = vunpack.c.h.b16 %v1170
        %v4135 = vunpack.c.l.b16 %v1171
        %v4136 = vunpack.c.h.b16 %v1171
        %v4137 = vunpack.c.l.b16 %v1172
        %v4138 = vunpack.c.h.b16 %v1172
        %v4139 = vunpack.c.l.b16 %v1173
        %v4140 = vunpack.c.h.b16 %v1173
        %v4141 = vunpack.c.l.b16 %v1174
        %v4142 = vunpack.c.h.b16 %v1174
        %v4143 = vunpack.c.l.b16 %v1175
        %v4144 = vunpack.c.h.b16 %v1175
        %v4145 = vunpack.c.l.b16 %v1176
        %v4146 = vunpack.c.h.b16 %v1176
        %v4147 = vunpack.c.l.b16 %v1177
        %v4148 = vunpack.c.h.b16 %v1177
        %v4149 = vunpack.c.l.b16 %v1178
        %v4150 = vunpack.c.h.b16 %v1178
        %v4151 = vunpack.c.l.b16 %v1179
        %v4152 = vunpack.c.h.b16 %v1179
        %v4153 = vunpack.c.l.b16 %v1180
        %v4154 = vunpack.c.h.b16 %v1180
        %v4155 = vunpack.c.l.b16 %v1181
        %v4156 = vunpack.c.h.b16 %v1181
        %v4157 = vunpack.c.l.b16 %v1182
        %v4158 = vunpack.c.h.b16 %v1182
        %v4159 = vunpack.c.l.b16 %v1183
        %v4160 = vunpack.c.h.b16 %v1183
        %v4161 = vunpack.c.l.b16 %v1184
        %v4162 = vunpack.c.h.b16 %v1184
        %v4163 = vunpack.c.l.b16 %v1185
        %v4164 = vunpack.c.h.b16 %v1185
        %v4165 = vunpack.c.l.b16 %v1186
        %v4166 = vunpack.c.h.b16 %v1186
        %v4167 = vunpack.c.l.b16 %v1187
        %v4168 = vunpack.c.h.b16 %v1187
        %v4169 = vunpack.c.l.b16 %v1188
        %v4170 = vunpack.c.h.b16 %v1188
        %v4171 = vunpack.c.l.b16 %v1189
        %v4172 = vunpack.c.h.b16 %v1189
        %v4173 = vunpack.c.l.b16 %v1190
        %v4174 = vunpack.c.h.b16 %v1190
        %v4175 = vunpack.c.l.b16 %v1191
        %v4176 = vunpack.c.h.b16 %v1191
        %v4177 = vunpack.c.l.b16 %v1192
        %v4178 = vunpack.c.h.b16 %v1192
        %v4179 = vunpack.c.l.b16 %v1193
        %v4180 = vunpack.c.h.b16 %v1193
        %v4181 = vunpack.c.l.b16 %v1194
        %v4182 = vunpack.c.h.b16 %v1194
        %v4183 = vunpack.c.l.b16 %v1195
        %v4184 = vunpack.c.h.b16 %v1195
        %v4185 = vunpack.c.l.b16 %v1196
        %v4186 = vunpack.c.h.b16 %v1196
        %v4187 = vunpack.c.l.b16 %v1197
        %v4188 = vunpack.c.h.b16 %v1197
        %v4189 = vunpack.c.l.b16 %v1198
        %v4190 = vunpack.c.h.b16 %v1198
        %v4191 = vunpack.c.l.b16 %v1199
        %v4192 = vunpack.c.h.b16 %v1199
        %v4193 = vunpack.c.l.b16 %v1200
        %v4194 = vunpack.c.h.b16 %v1200
        %v4195 = vunpack.c.l.b16 %v1201
        %v4196 = vunpack.c.h.b16 %v1201
        %v4197 = vunpack.c.l.b16 %v1202
        %v4198 = vunpack.c.h.b16 %v1202
        %v4199 = vunpack.c.l.b16 %v1203
        %v4200 = vunpack.c.h.b16 %v1203
        %v4201 = vunpack.c.l.b16 %v1204
        %v4202 = vunpack.c.h.b16 %v1204
        %v4203 = vunpack.c.l.b16 %v1205
        %v4204 = vunpack.c.h.b16 %v1205
        %v4205 = vunpack.c.l.b16 %v1206
        %v4206 = vunpack.c.h.b16 %v1206
        %v4207 = vunpack.c.l.b16 %v1207
        %v4208 = vunpack.c.h.b16 %v1207
        %v4209 = vunpack.c.l.b16 %v1208
        %v4210 = vunpack.c.h.b16 %v1208
        %v4211 = vunpack.c.l.b16 %v1209
        %v4212 = vunpack.c.h.b16 %v1209
        %v4213 = vunpack.c.l.b16 %v1210
        %v4214 = vunpack.c.h.b16 %v1210
        %v4215 = vunpack.c.l.b16 %v1211
        %v4216 = vunpack.c.h.b16 %v1211
        %v4217 = vunpack.c.l.b16 %v1212
        %v4218 = vunpack.c.h.b16 %v1212
        %v4219 = vunpack.c.l.b16 %v1213
        %v4220 = vunpack.c.h.b16 %v1213
        %v4221 = vunpack.c.l.b16 %v1214
        %v4222 = vunpack.c.h.b16 %v1214
        %v4223 = vunpack.c.l.b16 %v1215
        %v4224 = vunpack.c.h.b16 %v1215
        %v4225 = vunpack.c.l.b16 %v1216
        %v4226 = vunpack.c.h.b16 %v1216
        %v4227 = vunpack.c.l.b16 %v1217
        %v4228 = vunpack.c.h.b16 %v1217
        %v4229 = vunpack.c.l.b16 %v1218
        %v4230 = vunpack.c.h.b16 %v1218
        %v4231 = vunpack.c.l.b16 %v1219
        %v4232 = vunpack.c.h.b16 %v1219
        %v4233 = vunpack.c.l.b16 %v1220
        %v4234 = vunpack.c.h.b16 %v1220
        %v4235 = vunpack.c.l.b16 %v1221
        %v4236 = vunpack.c.h.b16 %v1221
        %v4237 = vunpack.c.l.b16 %v1222
        %v4238 = vunpack.c.h.b16 %v1222
        %v4239 = vunpack.c.l.b16 %v1223
        %v4240 = vunpack.c.h.b16 %v1223
        %v4241 = vunpack.c.l.b16 %v1224
        %v4242 = vunpack.c.h.b16 %v1224
        %v4243 = vunpack.c.l.b16 %v1225
        %v4244 = vunpack.c.h.b16 %v1225
        %v4245 = vunpack.c.l.b16 %v1226
        %v4246 = vunpack.c.h.b16 %v1226
        %v4247 = vunpack.c.l.b16 %v1227
        %v4248 = vunpack.c.h.b16 %v1227
        %v4249 = vunpack.c.l.b16 %v1228
        %v4250 = vunpack.c.h.b16 %v1228
        %v4251 = vunpack.c.l.b16 %v1229
        %v4252 = vunpack.c.h.b16 %v1229
        %v4253 = vunpack.c.l.b16 %v1230
        %v4254 = vunpack.c.h.b16 %v1230
        %v4255 = vunpack.c.l.b16 %v1231
        %v4256 = vunpack.c.h.b16 %v1231
        %v4257 = vunpack.c.l.b16 %v1232
        %v4258 = vunpack.c.h.b16 %v1232
        %v4259 = vunpack.c.l.b16 %v1233
        %v4260 = vunpack.c.h.b16 %v1233
        %v4261 = vunpack.c.l.b16 %v1234
        %v4262 = vunpack.c.h.b16 %v1234
        %v4263 = vunpack.c.l.b16 %v1235
        %v4264 = vunpack.c.h.b16 %v1235
        %v4265 = vunpack.c.l.b16 %v1236
        %v4266 = vunpack.c.h.b16 %v1236
        %v4267 = vunpack.c.l.b16 %v1237
        %v4268 = vunpack.c.h.b16 %v1237
        %v4269 = vunpack.c.l.b16 %v1238
        %v4270 = vunpack.c.h.b16 %v1238
        %v4271 = vunpack.c.l.b16 %v1239
        %v4272 = vunpack.c.h.b16 %v1239
        %v4273 = vunpack.c.l.b16 %v1240
        %v4274 = vunpack.c.h.b16 %v1240
        %v4275 = vunpack.c.l.b16 %v1241
        %v4276 = vunpack.c.h.b16 %v1241
        %v4277 = vunpack.c.l.b16 %v1242
        %v4278 = vunpack.c.h.b16 %v1242
        %v4279 = vunpack.c.l.b16 %v1243
        %v4280 = vunpack.c.h.b16 %v1243
        %v4281 = vunpack.c.l.b16 %v1244
        %v4282 = vunpack.c.h.b16 %v1244
        %v4283 = vunpack.c.l.b16 %v1245
        %v4284 = vunpack.c.h.b16 %v1245
        %v4285 = vunpack.c.l.b16 %v1246
        %v4286 = vunpack.c.h.b16 %v1246
        %v4287 = vunpack.c.l.b16 %v1247
        %v4288 = vunpack.c.h.b16 %v1247
        %v4289 = vunpack.c.l.b16 %v1248
        %v4290 = vunpack.c.h.b16 %v1248
        %v4291 = vunpack.c.l.b16 %v1249
        %v4292 = vunpack.c.h.b16 %v1249
        %v4293 = vunpack.c.l.b16 %v1250
        %v4294 = vunpack.c.h.b16 %v1250
        %v4295 = vunpack.c.l.b16 %v1251
        %v4296 = vunpack.c.h.b16 %v1251
        %v4297 = vunpack.c.l.b16 %v1252
        %v4298 = vunpack.c.h.b16 %v1252
        %v4299 = vunpack.c.l.b16 %v1253
        %v4300 = vunpack.c.h.b16 %v1253
        %v4301 = vunpack.c.l.b16 %v1254
        %v4302 = vunpack.c.h.b16 %v1254
        %v4303 = vunpack.c.l.b16 %v1255
        %v4304 = vunpack.c.h.b16 %v1255
        %v4305 = vunpack.c.l.b16 %v1256
        %v4306 = vunpack.c.h.b16 %v1256
        %v4307 = vunpack.c.l.b16 %v1257
        %v4308 = vunpack.c.h.b16 %v1257
        %v4309 = vunpack.c.l.b16 %v1258
        %v4310 = vunpack.c.h.b16 %v1258
        %v4311 = vunpack.c.l.b16 %v1259
        %v4312 = vunpack.c.h.b16 %v1259
        %v4313 = vunpack.c.l.b16 %v1260
        %v4314 = vunpack.c.h.b16 %v1260
        %v4315 = vunpack.c.l.b16 %v1261
        %v4316 = vunpack.c.h.b16 %v1261
        %v4317 = vunpack.c.l.b16 %v1262
        %v4318 = vunpack.c.h.b16 %v1262
        %v4319 = vunpack.c.l.b16 %v1263
        %v4320 = vunpack.c.h.b16 %v1263
        %v4321 = vunpack.c.l.b16 %v1264
        %v4322 = vunpack.c.h.b16 %v1264
        %v4323 = vunpack.c.l.b16 %v1265
        %v4324 = vunpack.c.h.b16 %v1265
        %v4325 = vunpack.c.l.b16 %v1266
        %v4326 = vunpack.c.h.b16 %v1266
        %v4327 = vunpack.c.l.b16 %v1267
        %v4328 = vunpack.c.h.b16 %v1267
        %v4329 = vunpack.c.l.b16 %v1268
        %v4330 = vunpack.c.h.b16 %v1268
        %v4331 = vunpack.c.l.b16 %v1269
        %v4332 = vunpack.c.h.b16 %v1269
        %v4333 = vunpack.c.l.b16 %v1270
        %v4334 = vunpack.c.h.b16 %v1270
        %v4335 = vunpack.c.l.b16 %v1271
        %v4336 = vunpack.c.h.b16 %v1271
        %v4337 = vunpack.c.l.b16 %v1272
        %v4338 = vunpack.c.h.b16 %v1272
        %v4339 = vunpack.c.l.b16 %v1273
        %v4340 = vunpack.c.h.b16 %v1273
        %v4341 = vunpack.c.l.b16 %v1274
        %v4342 = vunpack.c.h.b16 %v1274
        %v4343 = vunpack.c.l.b16 %v1275
        %v4344 = vunpack.c.h.b16 %v1275
        %v4345 = vunpack.c.l.b16 %v1276
        %v4346 = vunpack.c.h.b16 %v1276
        %v4347 = vunpack.c.l.b16 %v1277
        %v4348 = vunpack.c.h.b16 %v1277
        %v4349 = vunpack.c.l.b16 %v1278
        %v4350 = vunpack.c.h.b16 %v1278
        %v4351 = vunpack.c.l.b16 %v1279
        %v4352 = vunpack.c.h.b16 %v1279
        %v4353 = vunpack.c.l.b16 %v1280
        %v4354 = vunpack.c.h.b16 %v1280
        %v4355 = vunpack.c.l.b16 %v1281
        %v4356 = vunpack.c.h.b16 %v1281
        %v4357 = vunpack.c.l.b16 %v1282
        %v4358 = vunpack.c.h.b16 %v1282
        %v4359 = vunpack.c.l.b16 %v1283
        %v4360 = vunpack.c.h.b16 %v1283
        %v4361 = vunpack.c.l.b16 %v1284
        %v4362 = vunpack.c.h.b16 %v1284
        %v4363 = vunpack.c.l.b16 %v1285
        %v4364 = vunpack.c.h.b16 %v1285
        %v4365 = vunpack.c.l.b16 %v1286
        %v4366 = vunpack.c.h.b16 %v1286
        %v4367 = vunpack.c.l.b16 %v1287
        %v4368 = vunpack.c.h.b16 %v1287
        %v4369 = vunpack.c.l.b16 %v1288
        %v4370 = vunpack.c.h.b16 %v1288
        %v4371 = vunpack.c.l.b16 %v1289
        %v4372 = vunpack.c.h.b16 %v1289
        %v4373 = vunpack.c.l.b16 %v1290
        %v4374 = vunpack.c.h.b16 %v1290
        %v4375 = vunpack.c.l.b16 %v1291
        %v4376 = vunpack.c.h.b16 %v1291
        %v4377 = vunpack.c.l.b16 %v1292
        %v4378 = vunpack.c.h.b16 %v1292
        %v4379 = vunpack.c.l.b16 %v1293
        %v4380 = vunpack.c.h.b16 %v1293
        %v4381 = vunpack.c.l.b16 %v1294
        %v4382 = vunpack.c.h.b16 %v1294
        %v4383 = vunpack.c.l.b16 %v1295
        %v4384 = vunpack.c.h.b16 %v1295
        %v4385 = vunpack.c.l.b16 %v1296
        %v4386 = vunpack.c.h.b16 %v1296
        %v4387 = vunpack.c.l.b16 %v1297
        %v4388 = vunpack.c.h.b16 %v1297
        %v4389 = vunpack.c.l.b16 %v1298
        %v4390 = vunpack.c.h.b16 %v1298
        %v4391 = vunpack.c.l.b16 %v1299
        %v4392 = vunpack.c.h.b16 %v1299
        %v4393 = vunpack.c.l.b16 %v1300
        %v4394 = vunpack.c.h.b16 %v1300
        %v4395 = vunpack.c.l.b16 %v1301
        %v4396 = vunpack.c.h.b16 %v1301
        %v4397 = vunpack.c.l.b16 %v1302
        %v4398 = vunpack.c.h.b16 %v1302
        %v4399 = vunpack.c.l.b16 %v1303
        %v4400 = vunpack.c.h.b16 %v1303
        %v4401 = vunpack.c.l.b16 %v1304
        %v4402 = vunpack.c.h.b16 %v1304
        %v4403 = vunpack.c.l.b16 %v1305
        %v4404 = vunpack.c.h.b16 %v1305
        %v4405 = vunpack.c.l.b16 %v1306
        %v4406 = vunpack.c.h.b16 %v1306
        %v4407 = vunpack.c.l.b16 %v1307
        %v4408 = vunpack.c.h.b16 %v1307
        %v4409 = vunpack.c.l.b16 %v1308
        %v4410 = vunpack.c.h.b16 %v1308
        %v4411 = vunpack.c.l.b16 %v1309
        %v4412 = vunpack.c.h.b16 %v1309
        %v4413 = vunpack.c.l.b16 %v1310
        %v4414 = vunpack.c.h.b16 %v1310
        %v4415 = vunpack.c.l.b16 %v1311
        %v4416 = vunpack.c.h.b16 %v1311
        %v4417 = vunpack.c.l.b16 %v1312
        %v4418 = vunpack.c.h.b16 %v1312
        %v4419 = vunpack.c.l.b16 %v1313
        %v4420 = vunpack.c.h.b16 %v1313
        %v4421 = vunpack.c.l.b16 %v1314
        %v4422 = vunpack.c.h.b16 %v1314
        %v4423 = vunpack.c.l.b16 %v1315
        %v4424 = vunpack.c.h.b16 %v1315
        %v4425 = vunpack.c.l.b16 %v1316
        %v4426 = vunpack.c.h.b16 %v1316
        %v4427 = vunpack.c.l.b16 %v1317
        %v4428 = vunpack.c.h.b16 %v1317
        %v4429 = vunpack.c.l.b16 %v1318
        %v4430 = vunpack.c.h.b16 %v1318
        %v4431 = vunpack.c.l.b16 %v1319
        %v4432 = vunpack.c.h.b16 %v1319
        %v4433 = vunpack.c.l.b16 %v1320
        %v4434 = vunpack.c.h.b16 %v1320
        %v4435 = vunpack.c.l.b16 %v1321
        %v4436 = vunpack.c.h.b16 %v1321
        %v4437 = vunpack.c.l.b16 %v1322
        %v4438 = vunpack.c.h.b16 %v1322
        %v4439 = vunpack.c.l.b16 %v1323
        %v4440 = vunpack.c.h.b16 %v1323
        %v4441 = vunpack.c.l.b16 %v1324
        %v4442 = vunpack.c.h.b16 %v1324
        %v4443 = vunpack.c.l.b16 %v1325
        %v4444 = vunpack.c.h.b16 %v1325
        %v4445 = vunpack.c.l.b16 %v1326
        %v4446 = vunpack.c.h.b16 %v1326
        %v4447 = vunpack.c.l.b16 %v1327
        %v4448 = vunpack.c.h.b16 %v1327
        %v4449 = vunpack.c.l.b16 %v1328
        %v4450 = vunpack.c.h.b16 %v1328
        %v4451 = vunpack.c.l.b16 %v1329
        %v4452 = vunpack.c.h.b16 %v1329
        %v4453 = vunpack.c.l.b16 %v1330
        %v4454 = vunpack.c.h.b16 %v1330
        %v4455 = vunpack.c.l.b16 %v1331
        %v4456 = vunpack.c.h.b16 %v1331
        %v4457 = vunpack.c.l.b16 %v1332
        %v4458 = vunpack.c.h.b16 %v1332
        %v4459 = vunpack.c.l.b16 %v1333
        %v4460 = vunpack.c.h.b16 %v1333
        %v4461 = vunpack.c.l.b16 %v1334
        %v4462 = vunpack.c.h.b16 %v1334
        %v4463 = vunpack.c.l.b16 %v1335
        %v4464 = vunpack.c.h.b16 %v1335
        %v4465 = vunpack.c.l.b16 %v1336
        %v4466 = vunpack.c.h.b16 %v1336
        %v4467 = vunpack.c.l.b16 %v1337
        %v4468 = vunpack.c.h.b16 %v1337
        %v4469 = vunpack.c.l.b16 %v1338
        %v4470 = vunpack.c.h.b16 %v1338
        %v4471 = vunpack.c.l.b16 %v1339
        %v4472 = vunpack.c.h.b16 %v1339
        %v4473 = vunpack.c.l.b16 %v1340
        %v4474 = vunpack.c.h.b16 %v1340
        %v4475 = vunpack.c.l.b16 %v1341
        %v4476 = vunpack.c.h.b16 %v1341
        %v4477 = vunpack.c.l.b16 %v1342
        %v4478 = vunpack.c.h.b16 %v1342
        %v4479 = vunpack.c.l.b16 %v1343
        %v4480 = vunpack.c.h.b16 %v1343
        %v4481 = vunpack.c.l.b16 %v1344
        %v4482 = vunpack.c.h.b16 %v1344
        %v4483 = vunpack.c.l.b16 %v1345
        %v4484 = vunpack.c.h.b16 %v1345
        %v4485 = vunpack.c.l.b16 %v1346
        %v4486 = vunpack.c.h.b16 %v1346
        %v4487 = vunpack.c.l.b16 %v1347
        %v4488 = vunpack.c.h.b16 %v1347
        %v4489 = vunpack.c.l.b16 %v1348
        %v4490 = vunpack.c.h.b16 %v1348
        %v4491 = vunpack.c.l.b16 %v1349
        %v4492 = vunpack.c.h.b16 %v1349
        %v4493 = vunpack.c.l.b16 %v1350
        %v4494 = vunpack.c.h.b16 %v1350
        %v4495 = vunpack.c.l.b16 %v1351
        %v4496 = vunpack.c.h.b16 %v1351
        %v4497 = vunpack.c.l.b16 %v1352
        %v4498 = vunpack.c.h.b16 %v1352
        %v4499 = vunpack.c.l.b16 %v1353
        %v4500 = vunpack.c.h.b16 %v1353
        %v4501 = vunpack.c.l.b16 %v1354
        %v4502 = vunpack.c.h.b16 %v1354
        %v4503 = vunpack.c.l.b16 %v1355
        %v4504 = vunpack.c.h.b16 %v1355
        %v4505 = vunpack.c.l.b16 %v1356
        %v4506 = vunpack.c.h.b16 %v1356
        %v4507 = vunpack.c.l.b16 %v1357
        %v4508 = vunpack.c.h.b16 %v1357
        %v4509 = vunpack.c.l.b16 %v1358
        %v4510 = vunpack.c.h.b16 %v1358
        %v4511 = vunpack.c.l.b16 %v1359
        %v4512 = vunpack.c.h.b16 %v1359
        %v4513 = vunpack.c.l.b16 %v1360
        %v4514 = vunpack.c.h.b16 %v1360
        %v4515 = vunpack.c.l.b16 %v1361
        %v4516 = vunpack.c.h.b16 %v1361
        %v4517 = vunpack.c.l.b16 %v1362
        %v4518 = vunpack.c.h.b16 %v1362
        %v4519 = vunpack.c.l.b16 %v1363
        %v4520 = vunpack.c.h.b16 %v1363
        %v4521 = vunpack.c.l.b16 %v1364
        %v4522 = vunpack.c.h.b16 %v1364
        %v4523 = vunpack.c.l.b16 %v1365
        %v4524 = vunpack.c.h.b16 %v1365
        %v4525 = vunpack.c.l.b16 %v1366
        %v4526 = vunpack.c.h.b16 %v1366
        %v4527 = vunpack.c.l.b16 %v1367
        %v4528 = vunpack.c.h.b16 %v1367
        %v4529 = vunpack.c.l.b16 %v1368
        %v4530 = vunpack.c.h.b16 %v1368
        %v4531 = vunpack.c.l.b16 %v1369
        %v4532 = vunpack.c.h.b16 %v1369
        %v4533 = vunpack.c.l.b16 %v1370
        %v4534 = vunpack.c.h.b16 %v1370
        %v4535 = vunpack.c.l.b16 %v1371
        %v4536 = vunpack.c.h.b16 %v1371
        %v4537 = vunpack.c.l.b16 %v1372
        %v4538 = vunpack.c.h.b16 %v1372
        %v4539 = vunpack.c.l.b16 %v1373
        %v4540 = vunpack.c.h.b16 %v1373
        %v4541 = vunpack.c.l.b16 %v1374
        %v4542 = vunpack.c.h.b16 %v1374
        %v4543 = vunpack.c.l.b16 %v1375
        %v4544 = vunpack.c.h.b16 %v1375
        %v4545 = vunpack.c.l.b16 %v1376
        %v4546 = vunpack.c.h.b16 %v1376
        %v4547 = vunpack.c.l.b16 %v1377
        %v4548 = vunpack.c.h.b16 %v1377
        %v4549 = vunpack.c.l.b16 %v1378
        %v4550 = vunpack.c.h.b16 %v1378
        %v4551 = vunpack.c.l.b16 %v1379
        %v4552 = vunpack.c.h.b16 %v1379
        %v4553 = vunpack.c.l.b16 %v1380
        %v4554 = vunpack.c.h.b16 %v1380
        %v4555 = vunpack.c.l.b16 %v1381
        %v4556 = vunpack.c.h.b16 %v1381
        %v4557 = vunpack.c.l.b16 %v1382
        %v4558 = vunpack.c.h.b16 %v1382
        %v4559 = vunpack.c.l.b16 %v1383
        %v4560 = vunpack.c.h.b16 %v1383
        %v4561 = vunpack.c.l.b16 %v1384
        %v4562 = vunpack.c.h.b16 %v1384
        %v4563 = vunpack.c.l.b16 %v1385
        %v4564 = vunpack.c.h.b16 %v1385
        %v4565 = vunpack.c.l.b16 %v1386
        %v4566 = vunpack.c.h.b16 %v1386
        %v4567 = vunpack.c.l.b16 %v1387
        %v4568 = vunpack.c.h.b16 %v1387
        %v4569 = vunpack.c.l.b16 %v1388
        %v4570 = vunpack.c.h.b16 %v1388
        %v4571 = vunpack.c.l.b16 %v1389
        %v4572 = vunpack.c.h.b16 %v1389
        %v4573 = vunpack.c.l.b16 %v1390
        %v4574 = vunpack.c.h.b16 %v1390
        %v4575 = vunpack.c.l.b16 %v1391
        %v4576 = vunpack.c.h.b16 %v1391
        %v4577 = vunpack.c.l.b16 %v1392
        %v4578 = vunpack.c.h.b16 %v1392
        %v4579 = vunpack.c.l.b16 %v1393
        %v4580 = vunpack.c.h.b16 %v1393
        %v4581 = vunpack.c.l.b16 %v1394
        %v4582 = vunpack.c.h.b16 %v1394
        %v4583 = vunpack.c.l.b16 %v1395
        %v4584 = vunpack.c.h.b16 %v1395
        %v4585 = vunpack.c.l.b16 %v1396
        %v4586 = vunpack.c.h.b16 %v1396
        %v4587 = vunpack.c.l.b16 %v1397
        %v4588 = vunpack.c.h.b16 %v1397
        %v4589 = vunpack.c.l.b16 %v1398
        %v4590 = vunpack.c.h.b16 %v1398
        %v4591 = vunpack.c.l.b16 %v1399
        %v4592 = vunpack.c.h.b16 %v1399
        %v4593 = vunpack.c.l.b16 %v1400
        %v4594 = vunpack.c.h.b16 %v1400
        %v4595 = vunpack.c.l.b16 %v1401
        %v4596 = vunpack.c.h.b16 %v1401
        %v4597 = vunpack.c.l.b16 %v1402
        %v4598 = vunpack.c.h.b16 %v1402
        %v4599 = vunpack.c.l.b16 %v1403
        %v4600 = vunpack.c.h.b16 %v1403
        %v4601 = vunpack.c.l.b16 %v1404
        %v4602 = vunpack.c.h.b16 %v1404
        %v4603 = vunpack.c.l.b16 %v1405
        %v4604 = vunpack.c.h.b16 %v1405
        %v4605 = vunpack.c.l.b16 %v1406
        %v4606 = vunpack.c.h.b16 %v1406
        %v4607 = vunpack.c.l.b16 %v1407
        %v4608 = vunpack.c.h.b16 %v1407
        %v4609 = vunpack.c.l.b16 %v1408
        %v4610 = vunpack.c.h.b16 %v1408
        %v4611 = vunpack.c.l.b16 %v1409
        %v4612 = vunpack.c.h.b16 %v1409
        %v4613 = vunpack.c.l.b16 %v1410
        %v4614 = vunpack.c.h.b16 %v1410
        %v4615 = vunpack.c.l.b16 %v1411
        %v4616 = vunpack.c.h.b16 %v1411
        %v4617 = vunpack.c.l.b16 %v1412
        %v4618 = vunpack.c.h.b16 %v1412
        %v4619 = vunpack.c.l.b16 %v1413
        %v4620 = vunpack.c.h.b16 %v1413
        %v4621 = vunpack.c.l.b16 %v1414
        %v4622 = vunpack.c.h.b16 %v1414
        %v4623 = vunpack.c.l.b16 %v1415
        %v4624 = vunpack.c.h.b16 %v1415
        %v4625 = vunpack.c.l.b16 %v1416
        %v4626 = vunpack.c.h.b16 %v1416
        %v4627 = vunpack.c.l.b16 %v1417
        %v4628 = vunpack.c.h.b16 %v1417
        %v4629 = vunpack.c.l.b16 %v1418
        %v4630 = vunpack.c.h.b16 %v1418
        %v4631 = vunpack.c.l.b16 %v1419
        %v4632 = vunpack.c.h.b16 %v1419
        %v4633 = vunpack.c.l.b16 %v1420
        %v4634 = vunpack.c.h.b16 %v1420
        %v4635 = vunpack.c.l.b16 %v1421
        %v4636 = vunpack.c.h.b16 %v1421
        %v4637 = vunpack.c.l.b16 %v1422
        %v4638 = vunpack.c.h.b16 %v1422
        %v4639 = vunpack.c.l.b16 %v1423
        %v4640 = vunpack.c.h.b16 %v1423
        %v4641 = vunpack.c.l.b16 %v1424
        %v4642 = vunpack.c.h.b16 %v1424
        %v4643 = vunpack.c.l.b16 %v1425
        %v4644 = vunpack.c.h.b16 %v1425
        %v4645 = vunpack.c.l.b16 %v1426
        %v4646 = vunpack.c.h.b16 %v1426
        %v4647 = vunpack.c.l.b16 %v1427
        %v4648 = vunpack.c.h.b16 %v1427
        %v4649 = vunpack.c.l.b16 %v1428
        %v4650 = vunpack.c.h.b16 %v1428
        %v4651 = vunpack.c.l.b16 %v1429
        %v4652 = vunpack.c.h.b16 %v1429
        %v4653 = vunpack.c.l.b16 %v1430
        %v4654 = vunpack.c.h.b16 %v1430
        %v4655 = vunpack.c.l.b16 %v1431
        %v4656 = vunpack.c.h.b16 %v1431
        %v4657 = vunpack.c.l.b16 %v1432
        %v4658 = vunpack.c.h.b16 %v1432
        %v4659 = vunpack.c.l.b16 %v1433
        %v4660 = vunpack.c.h.b16 %v1433
        %v4661 = vunpack.c.l.b16 %v1434
        %v4662 = vunpack.c.h.b16 %v1434
        %v4663 = vunpack.c.l.b16 %v1435
        %v4664 = vunpack.c.h.b16 %v1435
        %v4665 = vunpack.c.l.b16 %v1436
        %v4666 = vunpack.c.h.b16 %v1436
        %v4667 = vunpack.c.l.b16 %v1437
        %v4668 = vunpack.c.h.b16 %v1437
        %v4669 = vunpack.c.l.b16 %v1438
        %v4670 = vunpack.c.h.b16 %v1438
        %v4671 = vpack.c.b16 %v2627, %v2623
        %v4672 = vpack.c.b16 %v2628, %v2624
        %v4673 = vpack.c.b16 %v2629, %v2625
        %v4674 = vpack.c.b16 %v2630, %v2626
        %v4675 = vpack.c.b16 %v2635, %v2631
        %v4676 = vpack.c.b16 %v2636, %v2632
        %v4677 = vpack.c.b16 %v2637, %v2633
        %v4678 = vpack.c.b16 %v2638, %v2634
        %v4679 = vpack.c.b16 %v2643, %v2639
        %v4680 = vpack.c.b16 %v2644, %v2640
        %v4681 = vpack.c.b16 %v2645, %v2641
        %v4682 = vpack.c.b16 %v2646, %v2642
        %v4683 = vpack.c.b16 %v2651, %v2647
        %v4684 = vpack.c.b16 %v2652, %v2648
        %v4685 = vpack.c.b16 %v2653, %v2649
        %v4686 = vpack.c.b16 %v2654, %v2650
        %v4687 = vpack.c.b16 %v2659, %v2655
        %v4688 = vpack.c.b16 %v2660, %v2656
        %v4689 = vpack.c.b16 %v2661, %v2657
        %v4690 = vpack.c.b16 %v2662, %v2658
        %v4691 = vpack.c.b16 %v2667, %v2663
        %v4692 = vpack.c.b16 %v2668, %v2664
        %v4693 = vpack.c.b16 %v2669, %v2665
        %v4694 = vpack.c.b16 %v2670, %v2666
        %v4695 = vpack.c.b16 %v2675, %v2671
        %v4696 = vpack.c.b16 %v2676, %v2672
        %v4697 = vpack.c.b16 %v2677, %v2673
        %v4698 = vpack.c.b16 %v2678, %v2674
        %v4699 = vpack.c.b16 %v2683, %v2679
        %v4700 = vpack.c.b16 %v2684, %v2680
        %v4701 = vpack.c.b16 %v2685, %v2681
        %v4702 = vpack.c.b16 %v2686, %v2682
        %v4703 = vpack.c.b16 %v2691, %v2687
        %v4704 = vpack.c.b16 %v2692, %v2688
        %v4705 = vpack.c.b16 %v2693, %v2689
        %v4706 = vpack.c.b16 %v2694, %v2690
        %v4707 = vpack.c.b16 %v2699, %v2695
        %v4708 = vpack.c.b16 %v2700, %v2696
        %v4709 = vpack.c.b16 %v2701, %v2697
        %v4710 = vpack.c.b16 %v2702, %v2698
        %v4711 = vpack.c.b16 %v2707, %v2703
        %v4712 = vpack.c.b16 %v2708, %v2704
        %v4713 = vpack.c.b16 %v2709, %v2705
        %v4714 = vpack.c.b16 %v2710, %v2706
        %v4715 = vpack.c.b16 %v2715, %v2711
        %v4716 = vpack.c.b16 %v2716, %v2712
        %v4717 = vpack.c.b16 %v2717, %v2713
        %v4718 = vpack.c.b16 %v2718, %v2714
        %v4719 = vpack.c.b16 %v2723, %v2719
        %v4720 = vpack.c.b16 %v2724, %v2720
        %v4721 = vpack.c.b16 %v2725, %v2721
        %v4722 = vpack.c.b16 %v2726, %v2722
        %v4723 = vpack.c.b16 %v2731, %v2727
        %v4724 = vpack.c.b16 %v2732, %v2728
        %v4725 = vpack.c.b16 %v2733, %v2729
        %v4726 = vpack.c.b16 %v2734, %v2730
        %v4727 = vpack.c.b16 %v2739, %v2735
        %v4728 = vpack.c.b16 %v2740, %v2736
        %v4729 = vpack.c.b16 %v2741, %v2737
        %v4730 = vpack.c.b16 %v2742, %v2738
        %v4731 = vpack.c.b16 %v2747, %v2743
        %v4732 = vpack.c.b16 %v2748, %v2744
        %v4733 = vpack.c.b16 %v2749, %v2745
        %v4734 = vpack.c.b16 %v2750, %v2746
        %v4735 = vpack.c.b16 %v2755, %v2751
        %v4736 = vpack.c.b16 %v2756, %v2752
        %v4737 = vpack.c.b16 %v2757, %v2753
        %v4738 = vpack.c.b16 %v2758, %v2754
        %v4739 = vpack.c.b16 %v2763, %v2759
        %v4740 = vpack.c.b16 %v2764, %v2760
        %v4741 = vpack.c.b16 %v2765, %v2761
        %v4742 = vpack.c.b16 %v2766, %v2762
        %v4743 = vpack.c.b16 %v2771, %v2767
        %v4744 = vpack.c.b16 %v2772, %v2768
        %v4745 = vpack.c.b16 %v2773, %v2769
        %v4746 = vpack.c.b16 %v2774, %v2770
        %v4747 = vpack.c.b16 %v2779, %v2775
        %v4748 = vpack.c.b16 %v2780, %v2776
        %v4749 = vpack.c.b16 %v2781, %v2777
        %v4750 = vpack.c.b16 %v2782, %v2778
        %v4751 = vpack.c.b16 %v2787, %v2783
        %v4752 = vpack.c.b16 %v2788, %v2784
        %v4753 = vpack.c.b16 %v2789, %v2785
        %v4754 = vpack.c.b16 %v2790, %v2786
        %v4755 = vpack.c.b16 %v2795, %v2791
        %v4756 = vpack.c.b16 %v2796, %v2792
        %v4757 = vpack.c.b16 %v2797, %v2793
        %v4758 = vpack.c.b16 %v2798, %v2794
        %v4759 = vpack.c.b16 %v2803, %v2799
        %v4760 = vpack.c.b16 %v2804, %v2800
        %v4761 = vpack.c.b16 %v2805, %v2801
        %v4762 = vpack.c.b16 %v2806, %v2802
        %v4763 = vpack.c.b16 %v2811, %v2807
        %v4764 = vpack.c.b16 %v2812, %v2808
        %v4765 = vpack.c.b16 %v2813, %v2809
        %v4766 = vpack.c.b16 %v2814, %v2810
        %v4767 = vpack.c.b16 %v2819, %v2815
        %v4768 = vpack.c.b16 %v2820, %v2816
        %v4769 = vpack.c.b16 %v2821, %v2817
        %v4770 = vpack.c.b16 %v2822, %v2818
        %v4771 = vpack.c.b16 %v2827, %v2823
        %v4772 = vpack.c.b16 %v2828, %v2824
        %v4773 = vpack.c.b16 %v2829, %v2825
        %v4774 = vpack.c.b16 %v2830, %v2826
        %v4775 = vpack.c.b16 %v2835, %v2831
        %v4776 = vpack.c.b16 %v2836, %v2832
        %v4777 = vpack.c.b16 %v2837, %v2833
        %v4778 = vpack.c.b16 %v2838, %v2834
        %v4779 = vpack.c.b16 %v2843, %v2839
        %v4780 = vpack.c.b16 %v2844, %v2840
        %v4781 = vpack.c.b16 %v2845, %v2841
        %v4782 = vpack.c.b16 %v2846, %v2842
        %v4783 = vpack.c.b16 %v2851, %v2847
        %v4784 = vpack.c.b16 %v2852, %v2848
        %v4785 = vpack.c.b16 %v2853, %v2849
        %v4786 = vpack.c.b16 %v2854, %v2850
        %v4787 = vpack.c.b16 %v2859, %v2855
        %v4788 = vpack.c.b16 %v2860, %v2856
        %v4789 = vpack.c.b16 %v2861, %v2857
        %v4790 = vpack.c.b16 %v2862, %v2858
        %v4791 = vpack.c.b16 %v2867, %v2863
        %v4792 = vpack.c.b16 %v2868, %v2864
        %v4793 = vpack.c.b16 %v2869, %v2865
        %v4794 = vpack.c.b16 %v2870, %v2866
        %v4795 = vpack.c.b16 %v2875, %v2871
        %v4796 = vpack.c.b16 %v2876, %v2872
        %v4797 = vpack.c.b16 %v2877, %v2873
        %v4798 = vpack.c.b16 %v2878, %v2874
        %v4799 = vpack.c.b16 %v2883, %v2879
        %v4800 = vpack.c.b16 %v2884, %v2880
        %v4801 = vpack.c.b16 %v2885, %v2881
        %v4802 = vpack.c.b16 %v2886, %v2882
        %v4803 = vpack.c.b16 %v2891, %v2887
        %v4804 = vpack.c.b16 %v2892, %v2888
        %v4805 = vpack.c.b16 %v2893, %v2889
        %v4806 = vpack.c.b16 %v2894, %v2890
        %v4807 = vpack.c.b16 %v2899, %v2895
        %v4808 = vpack.c.b16 %v2900, %v2896
        %v4809 = vpack.c.b16 %v2901, %v2897
        %v4810 = vpack.c.b16 %v2902, %v2898
        %v4811 = vpack.c.b16 %v2907, %v2903
        %v4812 = vpack.c.b16 %v2908, %v2904
        %v4813 = vpack.c.b16 %v2909, %v2905
        %v4814 = vpack.c.b16 %v2910, %v2906
        %v4815 = vpack.c.b16 %v2915, %v2911
        %v4816 = vpack.c.b16 %v2916, %v2912
        %v4817 = vpack.c.b16 %v2917, %v2913
        %v4818 = vpack.c.b16 %v2918, %v2914
        %v4819 = vpack.c.b16 %v2923, %v2919
        %v4820 = vpack.c.b16 %v2924, %v2920
        %v4821 = vpack.c.b16 %v2925, %v2921
        %v4822 = vpack.c.b16 %v2926, %v2922
        %v4823 = vpack.c.b16 %v2931, %v2927
        %v4824 = vpack.c.b16 %v2932, %v2928
        %v4825 = vpack.c.b16 %v2933, %v2929
        %v4826 = vpack.c.b16 %v2934, %v2930
        %v4827 = vpack.c.b16 %v2939, %v2935
        %v4828 = vpack.c.b16 %v2940, %v2936
        %v4829 = vpack.c.b16 %v2941, %v2937
        %v4830 = vpack.c.b16 %v2942, %v2938
        %v4831 = vpack.c.b16 %v2947, %v2943
        %v4832 = vpack.c.b16 %v2948, %v2944
        %v4833 = vpack.c.b16 %v2949, %v2945
        %v4834 = vpack.c.b16 %v2950, %v2946
        %v4835 = vpack.c.b16 %v2955, %v2951
        %v4836 = vpack.c.b16 %v2956, %v2952
        %v4837 = vpack.c.b16 %v2957, %v2953
        %v4838 = vpack.c.b16 %v2958, %v2954
        %v4839 = vpack.c.b16 %v2963, %v2959
        %v4840 = vpack.c.b16 %v2964, %v2960
        %v4841 = vpack.c.b16 %v2965, %v2961
        %v4842 = vpack.c.b16 %v2966, %v2962
        %v4843 = vpack.c.b16 %v2971, %v2967
        %v4844 = vpack.c.b16 %v2972, %v2968
        %v4845 = vpack.c.b16 %v2973, %v2969
        %v4846 = vpack.c.b16 %v2974, %v2970
        %v4847 = vpack.c.b16 %v2979, %v2975
        %v4848 = vpack.c.b16 %v2980, %v2976
        %v4849 = vpack.c.b16 %v2981, %v2977
        %v4850 = vpack.c.b16 %v2982, %v2978
        %v4851 = vpack.c.b16 %v2987, %v2983
        %v4852 = vpack.c.b16 %v2988, %v2984
        %v4853 = vpack.c.b16 %v2989, %v2985
        %v4854 = vpack.c.b16 %v2990, %v2986
        %v4855 = vpack.c.b16 %v2995, %v2991
        %v4856 = vpack.c.b16 %v2996, %v2992
        %v4857 = vpack.c.b16 %v2997, %v2993
        %v4858 = vpack.c.b16 %v2998, %v2994
        %v4859 = vpack.c.b16 %v3003, %v2999
        %v4860 = vpack.c.b16 %v3004, %v3000
        %v4861 = vpack.c.b16 %v3005, %v3001
        %v4862 = vpack.c.b16 %v3006, %v3002
        %v4863 = vpack.c.b16 %v3011, %v3007
        %v4864 = vpack.c.b16 %v3012, %v3008
        %v4865 = vpack.c.b16 %v3013, %v3009
        %v4866 = vpack.c.b16 %v3014, %v3010
        %v4867 = vpack.c.b16 %v3019, %v3015
        %v4868 = vpack.c.b16 %v3020, %v3016
        %v4869 = vpack.c.b16 %v3021, %v3017
        %v4870 = vpack.c.b16 %v3022, %v3018
        %v4871 = vpack.c.b16 %v3027, %v3023
        %v4872 = vpack.c.b16 %v3028, %v3024
        %v4873 = vpack.c.b16 %v3029, %v3025
        %v4874 = vpack.c.b16 %v3030, %v3026
        %v4875 = vpack.c.b16 %v3035, %v3031
        %v4876 = vpack.c.b16 %v3036, %v3032
        %v4877 = vpack.c.b16 %v3037, %v3033
        %v4878 = vpack.c.b16 %v3038, %v3034
        %v4879 = vpack.c.b16 %v3043, %v3039
        %v4880 = vpack.c.b16 %v3044, %v3040
        %v4881 = vpack.c.b16 %v3045, %v3041
        %v4882 = vpack.c.b16 %v3046, %v3042
        %v4883 = vpack.c.b16 %v3051, %v3047
        %v4884 = vpack.c.b16 %v3052, %v3048
        %v4885 = vpack.c.b16 %v3053, %v3049
        %v4886 = vpack.c.b16 %v3054, %v3050
        %v4887 = vpack.c.b16 %v3059, %v3055
        %v4888 = vpack.c.b16 %v3060, %v3056
        %v4889 = vpack.c.b16 %v3061, %v3057
        %v4890 = vpack.c.b16 %v3062, %v3058
        %v4891 = vpack.c.b16 %v3067, %v3063
        %v4892 = vpack.c.b16 %v3068, %v3064
        %v4893 = vpack.c.b16 %v3069, %v3065
        %v4894 = vpack.c.b16 %v3070, %v3066
        %v4895 = vpack.c.b16 %v3075, %v3071
        %v4896 = vpack.c.b16 %v3076, %v3072
        %v4897 = vpack.c.b16 %v3077, %v3073
        %v4898 = vpack.c.b16 %v3078, %v3074
        %v4899 = vpack.c.b16 %v3083, %v3079
        %v4900 = vpack.c.b16 %v3084, %v3080
        %v4901 = vpack.c.b16 %v3085, %v3081
        %v4902 = vpack.c.b16 %v3086, %v3082
        %v4903 = vpack.c.b16 %v3091, %v3087
        %v4904 = vpack.c.b16 %v3092, %v3088
        %v4905 = vpack.c.b16 %v3093, %v3089
        %v4906 = vpack.c.b16 %v3094, %v3090
        %v4907 = vpack.c.b16 %v3099, %v3095
        %v4908 = vpack.c.b16 %v3100, %v3096
        %v4909 = vpack.c.b16 %v3101, %v3097
        %v4910 = vpack.c.b16 %v3102, %v3098
        %v4911 = vpack.c.b16 %v3107, %v3103
        %v4912 = vpack.c.b16 %v3108, %v3104
        %v4913 = vpack.c.b16 %v3109, %v3105
        %v4914 = vpack.c.b16 %v3110, %v3106
        %v4915 = vpack.c.b16 %v3115, %v3111
        %v4916 = vpack.c.b16 %v3116, %v3112
        %v4917 = vpack.c.b16 %v3117, %v3113
        %v4918 = vpack.c.b16 %v3118, %v3114
        %v4919 = vpack.c.b16 %v3123, %v3119
        %v4920 = vpack.c.b16 %v3124, %v3120
        %v4921 = vpack.c.b16 %v3125, %v3121
        %v4922 = vpack.c.b16 %v3126, %v3122
        %v4923 = vpack.c.b16 %v3131, %v3127
        %v4924 = vpack.c.b16 %v3132, %v3128
        %v4925 = vpack.c.b16 %v3133, %v3129
        %v4926 = vpack.c.b16 %v3134, %v3130
        %v4927 = vpack.c.b16 %v3139, %v3135
        %v4928 = vpack.c.b16 %v3140, %v3136
        %v4929 = vpack.c.b16 %v3141, %v3137
        %v4930 = vpack.c.b16 %v3142, %v3138
        %v4931 = vpack.c.b16 %v3147, %v3143
        %v4932 = vpack.c.b16 %v3148, %v3144
        %v4933 = vpack.c.b16 %v3149, %v3145
        %v4934 = vpack.c.b16 %v3150, %v3146
        %v4935 = vpack.c.b16 %v3155, %v3151
        %v4936 = vpack.c.b16 %v3156, %v3152
        %v4937 = vpack.c.b16 %v3157, %v3153
        %v4938 = vpack.c.b16 %v3158, %v3154
        %v4939 = vpack.c.b16 %v3163, %v3159
        %v4940 = vpack.c.b16 %v3164, %v3160
        %v4941 = vpack.c.b16 %v3165, %v3161
        %v4942 = vpack.c.b16 %v3166, %v3162
        %v4943 = vpack.c.b16 %v3171, %v3167
        %v4944 = vpack.c.b16 %v3172, %v3168
        %v4945 = vpack.c.b16 %v3173, %v3169
        %v4946 = vpack.c.b16 %v3174, %v3170
        %v4947 = vpack.c.b16 %v3179, %v3175
        %v4948 = vpack.c.b16 %v3180, %v3176
        %v4949 = vpack.c.b16 %v3181, %v3177
        %v4950 = vpack.c.b16 %v3182, %v3178
        %v4951 = vpack.c.b16 %v3187, %v3183
        %v4952 = vpack.c.b16 %v3188, %v3184
        %v4953 = vpack.c.b16 %v3189, %v3185
        %v4954 = vpack.c.b16 %v3190, %v3186
        %v4955 = vpack.c.b16 %v3195, %v3191
        %v4956 = vpack.c.b16 %v3196, %v3192
        %v4957 = vpack.c.b16 %v3197, %v3193
        %v4958 = vpack.c.b16 %v3198, %v3194
        %v4959 = vpack.c.b16 %v3203, %v3199
        %v4960 = vpack.c.b16 %v3204, %v3200
        %v4961 = vpack.c.b16 %v3205, %v3201
        %v4962 = vpack.c.b16 %v3206, %v3202
        %v4963 = vpack.c.b16 %v3211, %v3207
        %v4964 = vpack.c.b16 %v3212, %v3208
        %v4965 = vpack.c.b16 %v3213, %v3209
        %v4966 = vpack.c.b16 %v3214, %v3210
        %v4967 = vpack.c.b16 %v3219, %v3215
        %v4968 = vpack.c.b16 %v3220, %v3216
        %v4969 = vpack.c.b16 %v3221, %v3217
        %v4970 = vpack.c.b16 %v3222, %v3218
        %v4971 = vpack.c.b16 %v3227, %v3223
        %v4972 = vpack.c.b16 %v3228, %v3224
        %v4973 = vpack.c.b16 %v3229, %v3225
        %v4974 = vpack.c.b16 %v3230, %v3226
        %v4975 = vpack.c.b16 %v3235, %v3231
        %v4976 = vpack.c.b16 %v3236, %v3232
        %v4977 = vpack.c.b16 %v3237, %v3233
        %v4978 = vpack.c.b16 %v3238, %v3234
        %v4979 = vpack.c.b16 %v3243, %v3239
        %v4980 = vpack.c.b16 %v3244, %v3240
        %v4981 = vpack.c.b16 %v3245, %v3241
        %v4982 = vpack.c.b16 %v3246, %v3242
        %v4983 = vpack.c.b16 %v3251, %v3247
        %v4984 = vpack.c.b16 %v3252, %v3248
        %v4985 = vpack.c.b16 %v3253, %v3249
        %v4986 = vpack.c.b16 %v3254, %v3250
        %v4987 = vpack.c.b16 %v3259, %v3255
        %v4988 = vpack.c.b16 %v3260, %v3256
        %v4989 = vpack.c.b16 %v3261, %v3257
        %v4990 = vpack.c.b16 %v3262, %v3258
        %v4991 = vpack.c.b16 %v3267, %v3263
        %v4992 = vpack.c.b16 %v3268, %v3264
        %v4993 = vpack.c.b16 %v3269, %v3265
        %v4994 = vpack.c.b16 %v3270, %v3266
        %v4995 = vpack.c.b16 %v3275, %v3271
        %v4996 = vpack.c.b16 %v3276, %v3272
        %v4997 = vpack.c.b16 %v3277, %v3273
        %v4998 = vpack.c.b16 %v3278, %v3274
        %v4999 = vpack.c.b16 %v3283, %v3279
        %v5000 = vpack.c.b16 %v3284, %v3280
        %v5001 = vpack.c.b16 %v3285, %v3281
        %v5002 = vpack.c.b16 %v3286, %v3282
        %v5003 = vpack.c.b16 %v3291, %v3287
        %v5004 = vpack.c.b16 %v3292, %v3288
        %v5005 = vpack.c.b16 %v3293, %v3289
        %v5006 = vpack.c.b16 %v3294, %v3290
        %v5007 = vpack.c.b16 %v3299, %v3295
        %v5008 = vpack.c.b16 %v3300, %v3296
        %v5009 = vpack.c.b16 %v3301, %v3297
        %v5010 = vpack.c.b16 %v3302, %v3298
        %v5011 = vpack.c.b16 %v3307, %v3303
        %v5012 = vpack.c.b16 %v3308, %v3304
        %v5013 = vpack.c.b16 %v3309, %v3305
        %v5014 = vpack.c.b16 %v3310, %v3306
        %v5015 = vpack.c.b16 %v3315, %v3311
        %v5016 = vpack.c.b16 %v3316, %v3312
        %v5017 = vpack.c.b16 %v3317, %v3313
        %v5018 = vpack.c.b16 %v3318, %v3314
        %v5019 = vpack.c.b16 %v3323, %v3319
        %v5020 = vpack.c.b16 %v3324, %v3320
        %v5021 = vpack.c.b16 %v3325, %v3321
        %v5022 = vpack.c.b16 %v3326, %v3322
        %v5023 = vpack.c.b16 %v3331, %v3327
        %v5024 = vpack.c.b16 %v3332, %v3328
        %v5025 = vpack.c.b16 %v3333, %v3329
        %v5026 = vpack.c.b16 %v3334, %v3330
        %v5027 = vpack.c.b16 %v3339, %v3335
        %v5028 = vpack.c.b16 %v3340, %v3336
        %v5029 = vpack.c.b16 %v3341, %v3337
        %v5030 = vpack.c.b16 %v3342, %v3338
        %v5031 = vpack.c.b16 %v3347, %v3343
        %v5032 = vpack.c.b16 %v3348, %v3344
        %v5033 = vpack.c.b16 %v3349, %v3345
        %v5034 = vpack.c.b16 %v3350, %v3346
        %v5035 = vpack.c.b16 %v3355, %v3351
        %v5036 = vpack.c.b16 %v3356, %v3352
        %v5037 = vpack.c.b16 %v3357, %v3353
        %v5038 = vpack.c.b16 %v3358, %v3354
        %v5039 = vpack.c.b16 %v3363, %v3359
        %v5040 = vpack.c.b16 %v3364, %v3360
        %v5041 = vpack.c.b16 %v3365, %v3361
        %v5042 = vpack.c.b16 %v3366, %v3362
        %v5043 = vpack.c.b16 %v3371, %v3367
        %v5044 = vpack.c.b16 %v3372, %v3368
        %v5045 = vpack.c.b16 %v3373, %v3369
        %v5046 = vpack.c.b16 %v3374, %v3370
        %v5047 = vpack.c.b16 %v3379, %v3375
        %v5048 = vpack.c.b16 %v3380, %v3376
        %v5049 = vpack.c.b16 %v3381, %v3377
        %v5050 = vpack.c.b16 %v3382, %v3378
        %v5051 = vpack.c.b16 %v3387, %v3383
        %v5052 = vpack.c.b16 %v3388, %v3384
        %v5053 = vpack.c.b16 %v3389, %v3385
        %v5054 = vpack.c.b16 %v3390, %v3386
        %v5055 = vpack.c.b16 %v3395, %v3391
        %v5056 = vpack.c.b16 %v3396, %v3392
        %v5057 = vpack.c.b16 %v3397, %v3393
        %v5058 = vpack.c.b16 %v3398, %v3394
        %v5059 = vpack.c.b16 %v3403, %v3399
        %v5060 = vpack.c.b16 %v3404, %v3400
        %v5061 = vpack.c.b16 %v3405, %v3401
        %v5062 = vpack.c.b16 %v3406, %v3402
        %v5063 = vpack.c.b16 %v3411, %v3407
        %v5064 = vpack.c.b16 %v3412, %v3408
        %v5065 = vpack.c.b16 %v3413, %v3409
        %v5066 = vpack.c.b16 %v3414, %v3410
        %v5067 = vpack.c.b16 %v3419, %v3415
        %v5068 = vpack.c.b16 %v3420, %v3416
        %v5069 = vpack.c.b16 %v3421, %v3417
        %v5070 = vpack.c.b16 %v3422, %v3418
        %v5071 = vpack.c.b16 %v3427, %v3423
        %v5072 = vpack.c.b16 %v3428, %v3424
        %v5073 = vpack.c.b16 %v3429, %v3425
        %v5074 = vpack.c.b16 %v3430, %v3426
        %v5075 = vpack.c.b16 %v3435, %v3431
        %v5076 = vpack.c.b16 %v3436, %v3432
        %v5077 = vpack.c.b16 %v3437, %v3433
        %v5078 = vpack.c.b16 %v3438, %v3434
        %v5079 = vpack.c.b16 %v3443, %v3439
        %v5080 = vpack.c.b16 %v3444, %v3440
        %v5081 = vpack.c.b16 %v3445, %v3441
        %v5082 = vpack.c.b16 %v3446, %v3442
        %v5083 = vpack.c.b16 %v3451, %v3447
        %v5084 = vpack.c.b16 %v3452, %v3448
        %v5085 = vpack.c.b16 %v3453, %v3449
        %v5086 = vpack.c.b16 %v3454, %v3450
        %v5087 = vpack.c.b16 %v3459, %v3455
        %v5088 = vpack.c.b16 %v3460, %v3456
        %v5089 = vpack.c.b16 %v3461, %v3457
        %v5090 = vpack.c.b16 %v3462, %v3458
        %v5091 = vpack.c.b16 %v3467, %v3463
        %v5092 = vpack.c.b16 %v3468, %v3464
        %v5093 = vpack.c.b16 %v3469, %v3465
        %v5094 = vpack.c.b16 %v3470, %v3466
        %v5095 = vpack.c.b16 %v3475, %v3471
        %v5096 = vpack.c.b16 %v3476, %v3472
        %v5097 = vpack.c.b16 %v3477, %v3473
        %v5098 = vpack.c.b16 %v3478, %v3474
        %v5099 = vpack.c.b16 %v3483, %v3479
        %v5100 = vpack.c.b16 %v3484, %v3480
        %v5101 = vpack.c.b16 %v3485, %v3481
        %v5102 = vpack.c.b16 %v3486, %v3482
        %v5103 = vpack.c.b16 %v3491, %v3487
        %v5104 = vpack.c.b16 %v3492, %v3488
        %v5105 = vpack.c.b16 %v3493, %v3489
        %v5106 = vpack.c.b16 %v3494, %v3490
        %v5107 = vpack.c.b16 %v3499, %v3495
        %v5108 = vpack.c.b16 %v3500, %v3496
        %v5109 = vpack.c.b16 %v3501, %v3497
        %v5110 = vpack.c.b16 %v3502, %v3498
        %v5111 = vpack.c.b16 %v3507, %v3503
        %v5112 = vpack.c.b16 %v3508, %v3504
        %v5113 = vpack.c.b16 %v3509, %v3505
        %v5114 = vpack.c.b16 %v3510, %v3506
        %v5115 = vpack.c.b16 %v3515, %v3511
        %v5116 = vpack.c.b16 %v3516, %v3512
        %v5117 = vpack.c.b16 %v3517, %v3513
        %v5118 = vpack.c.b16 %v3518, %v3514
        %v5119 = vpack.c.b16 %v3523, %v3519
        %v5120 = vpack.c.b16 %v3524, %v3520
        %v5121 = vpack.c.b16 %v3525, %v3521
        %v5122 = vpack.c.b16 %v3526, %v3522
        %v5123 = vpack.c.b16 %v3531, %v3527
        %v5124 = vpack.c.b16 %v3532, %v3528
        %v5125 = vpack.c.b16 %v3533, %v3529
        %v5126 = vpack.c.b16 %v3534, %v3530
        %v5127 = vpack.c.b16 %v3539, %v3535
        %v5128 = vpack.c.b16 %v3540, %v3536
        %v5129 = vpack.c.b16 %v3541, %v3537
        %v5130 = vpack.c.b16 %v3542, %v3538
        %v5131 = vpack.c.b16 %v3547, %v3543
        %v5132 = vpack.c.b16 %v3548, %v3544
        %v5133 = vpack.c.b16 %v3549, %v3545
        %v5134 = vpack.c.b16 %v3550, %v3546
        %v5135 = vpack.c.b16 %v3555, %v3551
        %v5136 = vpack.c.b16 %v3556, %v3552
        %v5137 = vpack.c.b16 %v3557, %v3553
        %v5138 = vpack.c.b16 %v3558, %v3554
        %v5139 = vpack.c.b16 %v3563, %v3559
        %v5140 = vpack.c.b16 %v3564, %v3560
        %v5141 = vpack.c.b16 %v3565, %v3561
        %v5142 = vpack.c.b16 %v3566, %v3562
        %v5143 = vpack.c.b16 %v3571, %v3567
        %v5144 = vpack.c.b16 %v3572, %v3568
        %v5145 = vpack.c.b16 %v3573, %v3569
        %v5146 = vpack.c.b16 %v3574, %v3570
        %v5147 = vpack.c.b16 %v3579, %v3575
        %v5148 = vpack.c.b16 %v3580, %v3576
        %v5149 = vpack.c.b16 %v3581, %v3577
        %v5150 = vpack.c.b16 %v3582, %v3578
        %v5151 = vpack.c.b16 %v3587, %v3583
        %v5152 = vpack.c.b16 %v3588, %v3584
        %v5153 = vpack.c.b16 %v3589, %v3585
        %v5154 = vpack.c.b16 %v3590, %v3586
        %v5155 = vpack.c.b16 %v3595, %v3591
        %v5156 = vpack.c.b16 %v3596, %v3592
        %v5157 = vpack.c.b16 %v3597, %v3593
        %v5158 = vpack.c.b16 %v3598, %v3594
        %v5159 = vpack.c.b16 %v3603, %v3599
        %v5160 = vpack.c.b16 %v3604, %v3600
        %v5161 = vpack.c.b16 %v3605, %v3601
        %v5162 = vpack.c.b16 %v3606, %v3602
        %v5163 = vpack.c.b16 %v3611, %v3607
        %v5164 = vpack.c.b16 %v3612, %v3608
        %v5165 = vpack.c.b16 %v3613, %v3609
        %v5166 = vpack.c.b16 %v3614, %v3610
        %v5167 = vpack.c.b16 %v3619, %v3615
        %v5168 = vpack.c.b16 %v3620, %v3616
        %v5169 = vpack.c.b16 %v3621, %v3617
        %v5170 = vpack.c.b16 %v3622, %v3618
        %v5171 = vpack.c.b16 %v3627, %v3623
        %v5172 = vpack.c.b16 %v3628, %v3624
        %v5173 = vpack.c.b16 %v3629, %v3625
        %v5174 = vpack.c.b16 %v3630, %v3626
        %v5175 = vpack.c.b16 %v3635, %v3631
        %v5176 = vpack.c.b16 %v3636, %v3632
        %v5177 = vpack.c.b16 %v3637, %v3633
        %v5178 = vpack.c.b16 %v3638, %v3634
        %v5179 = vpack.c.b16 %v3643, %v3639
        %v5180 = vpack.c.b16 %v3644, %v3640
        %v5181 = vpack.c.b16 %v3645, %v3641
        %v5182 = vpack.c.b16 %v3646, %v3642
        %v5183 = vpack.c.b16 %v3651, %v3647
        %v5184 = vpack.c.b16 %v3652, %v3648
        %v5185 = vpack.c.b16 %v3653, %v3649
        %v5186 = vpack.c.b16 %v3654, %v3650
        %v5187 = vpack.c.b16 %v3659, %v3655
        %v5188 = vpack.c.b16 %v3660, %v3656
        %v5189 = vpack.c.b16 %v3661, %v3657
        %v5190 = vpack.c.b16 %v3662, %v3658
        %v5191 = vpack.c.b16 %v3667, %v3663
        %v5192 = vpack.c.b16 %v3668, %v3664
        %v5193 = vpack.c.b16 %v3669, %v3665
        %v5194 = vpack.c.b16 %v3670, %v3666
        %v5195 = vpack.c.b16 %v3675, %v3671
        %v5196 = vpack.c.b16 %v3676, %v3672
        %v5197 = vpack.c.b16 %v3677, %v3673
        %v5198 = vpack.c.b16 %v3678, %v3674
        %v5199 = vpack.c.b16 %v3683, %v3679
        %v5200 = vpack.c.b16 %v3684, %v3680
        %v5201 = vpack.c.b16 %v3685, %v3681
        %v5202 = vpack.c.b16 %v3686, %v3682
        %v5203 = vpack.c.b16 %v3691, %v3687
        %v5204 = vpack.c.b16 %v3692, %v3688
        %v5205 = vpack.c.b16 %v3693, %v3689
        %v5206 = vpack.c.b16 %v3694, %v3690
        %v5207 = vpack.c.b16 %v3699, %v3695
        %v5208 = vpack.c.b16 %v3700, %v3696
        %v5209 = vpack.c.b16 %v3701, %v3697
        %v5210 = vpack.c.b16 %v3702, %v3698
        %v5211 = vpack.c.b16 %v3707, %v3703
        %v5212 = vpack.c.b16 %v3708, %v3704
        %v5213 = vpack.c.b16 %v3709, %v3705
        %v5214 = vpack.c.b16 %v3710, %v3706
        %v5215 = vpack.c.b16 %v3715, %v3711
        %v5216 = vpack.c.b16 %v3716, %v3712
        %v5217 = vpack.c.b16 %v3717, %v3713
        %v5218 = vpack.c.b16 %v3718, %v3714
        %v5219 = vpack.c.b16 %v3723, %v3719
        %v5220 = vpack.c.b16 %v3724, %v3720
        %v5221 = vpack.c.b16 %v3725, %v3721
        %v5222 = vpack.c.b16 %v3726, %v3722
        %v5223 = vpack.c.b16 %v3731, %v3727
        %v5224 = vpack.c.b16 %v3732, %v3728
        %v5225 = vpack.c.b16 %v3733, %v3729
        %v5226 = vpack.c.b16 %v3734, %v3730
        %v5227 = vpack.c.b16 %v3739, %v3735
        %v5228 = vpack.c.b16 %v3740, %v3736
        %v5229 = vpack.c.b16 %v3741, %v3737
        %v5230 = vpack.c.b16 %v3742, %v3738
        %v5231 = vpack.c.b16 %v3747, %v3743
        %v5232 = vpack.c.b16 %v3748, %v3744
        %v5233 = vpack.c.b16 %v3749, %v3745
        %v5234 = vpack.c.b16 %v3750, %v3746
        %v5235 = vpack.c.b16 %v3755, %v3751
        %v5236 = vpack.c.b16 %v3756, %v3752
        %v5237 = vpack.c.b16 %v3757, %v3753
        %v5238 = vpack.c.b16 %v3758, %v3754
        %v5239 = vpack.c.b16 %v3763, %v3759
        %v5240 = vpack.c.b16 %v3764, %v3760
        %v5241 = vpack.c.b16 %v3765, %v3761
        %v5242 = vpack.c.b16 %v3766, %v3762
        %v5243 = vpack.c.b16 %v3771, %v3767
        %v5244 = vpack.c.b16 %v3772, %v3768
        %v5245 = vpack.c.b16 %v3773, %v3769
        %v5246 = vpack.c.b16 %v3774, %v3770
        %v5247 = vpack.c.b16 %v3779, %v3775
        %v5248 = vpack.c.b16 %v3780, %v3776
        %v5249 = vpack.c.b16 %v3781, %v3777
        %v5250 = vpack.c.b16 %v3782, %v3778
        %v5251 = vpack.c.b16 %v3787, %v3783
        %v5252 = vpack.c.b16 %v3788, %v3784
        %v5253 = vpack.c.b16 %v3789, %v3785
        %v5254 = vpack.c.b16 %v3790, %v3786
        %v5255 = vpack.c.b16 %v3795, %v3791
        %v5256 = vpack.c.b16 %v3796, %v3792
        %v5257 = vpack.c.b16 %v3797, %v3793
        %v5258 = vpack.c.b16 %v3798, %v3794
        %v5259 = vpack.c.b16 %v3803, %v3799
        %v5260 = vpack.c.b16 %v3804, %v3800
        %v5261 = vpack.c.b16 %v3805, %v3801
        %v5262 = vpack.c.b16 %v3806, %v3802
        %v5263 = vpack.c.b16 %v3811, %v3807
        %v5264 = vpack.c.b16 %v3812, %v3808
        %v5265 = vpack.c.b16 %v3813, %v3809
        %v5266 = vpack.c.b16 %v3814, %v3810
        %v5267 = vpack.c.b16 %v3819, %v3815
        %v5268 = vpack.c.b16 %v3820, %v3816
        %v5269 = vpack.c.b16 %v3821, %v3817
        %v5270 = vpack.c.b16 %v3822, %v3818
        %v5271 = vpack.c.b16 %v3827, %v3823
        %v5272 = vpack.c.b16 %v3828, %v3824
        %v5273 = vpack.c.b16 %v3829, %v3825
        %v5274 = vpack.c.b16 %v3830, %v3826
        %v5275 = vpack.c.b16 %v3835, %v3831
        %v5276 = vpack.c.b16 %v3836, %v3832
        %v5277 = vpack.c.b16 %v3837, %v3833
        %v5278 = vpack.c.b16 %v3838, %v3834
        %v5279 = vpack.c.b16 %v3843, %v3839
        %v5280 = vpack.c.b16 %v3844, %v3840
        %v5281 = vpack.c.b16 %v3845, %v3841
        %v5282 = vpack.c.b16 %v3846, %v3842
        %v5283 = vpack.c.b16 %v3851, %v3847
        %v5284 = vpack.c.b16 %v3852, %v3848
        %v5285 = vpack.c.b16 %v3853, %v3849
        %v5286 = vpack.c.b16 %v3854, %v3850
        %v5287 = vpack.c.b16 %v3859, %v3855
        %v5288 = vpack.c.b16 %v3860, %v3856
        %v5289 = vpack.c.b16 %v3861, %v3857
        %v5290 = vpack.c.b16 %v3862, %v3858
        %v5291 = vpack.c.b16 %v3867, %v3863
        %v5292 = vpack.c.b16 %v3868, %v3864
        %v5293 = vpack.c.b16 %v3869, %v3865
        %v5294 = vpack.c.b16 %v3870, %v3866
        %v5295 = vpack.c.b16 %v3875, %v3871
        %v5296 = vpack.c.b16 %v3876, %v3872
        %v5297 = vpack.c.b16 %v3877, %v3873
        %v5298 = vpack.c.b16 %v3878, %v3874
        %v5299 = vpack.c.b16 %v3883, %v3879
        %v5300 = vpack.c.b16 %v3884, %v3880
        %v5301 = vpack.c.b16 %v3885, %v3881
        %v5302 = vpack.c.b16 %v3886, %v3882
        %v5303 = vpack.c.b16 %v3891, %v3887
        %v5304 = vpack.c.b16 %v3892, %v3888
        %v5305 = vpack.c.b16 %v3893, %v3889
        %v5306 = vpack.c.b16 %v3894, %v3890
        %v5307 = vpack.c.b16 %v3899, %v3895
        %v5308 = vpack.c.b16 %v3900, %v3896
        %v5309 = vpack.c.b16 %v3901, %v3897
        %v5310 = vpack.c.b16 %v3902, %v3898
        %v5311 = vpack.c.b16 %v3907, %v3903
        %v5312 = vpack.c.b16 %v3908, %v3904
        %v5313 = vpack.c.b16 %v3909, %v3905
        %v5314 = vpack.c.b16 %v3910, %v3906
        %v5315 = vpack.c.b16 %v3915, %v3911
        %v5316 = vpack.c.b16 %v3916, %v3912
        %v5317 = vpack.c.b16 %v3917, %v3913
        %v5318 = vpack.c.b16 %v3918, %v3914
        %v5319 = vpack.c.b16 %v3923, %v3919
        %v5320 = vpack.c.b16 %v3924, %v3920
        %v5321 = vpack.c.b16 %v3925, %v3921
        %v5322 = vpack.c.b16 %v3926, %v3922
        %v5323 = vpack.c.b16 %v3931, %v3927
        %v5324 = vpack.c.b16 %v3932, %v3928
        %v5325 = vpack.c.b16 %v3933, %v3929
        %v5326 = vpack.c.b16 %v3934, %v3930
        %v5327 = vpack.c.b16 %v3939, %v3935
        %v5328 = vpack.c.b16 %v3940, %v3936
        %v5329 = vpack.c.b16 %v3941, %v3937
        %v5330 = vpack.c.b16 %v3942, %v3938
        %v5331 = vpack.c.b16 %v3947, %v3943
        %v5332 = vpack.c.b16 %v3948, %v3944
        %v5333 = vpack.c.b16 %v3949, %v3945
        %v5334 = vpack.c.b16 %v3950, %v3946
        %v5335 = vpack.c.b16 %v3955, %v3951
        %v5336 = vpack.c.b16 %v3956, %v3952
        %v5337 = vpack.c.b16 %v3957, %v3953
        %v5338 = vpack.c.b16 %v3958, %v3954
        %v5339 = vpack.c.b16 %v3963, %v3959
        %v5340 = vpack.c.b16 %v3964, %v3960
        %v5341 = vpack.c.b16 %v3965, %v3961
        %v5342 = vpack.c.b16 %v3966, %v3962
        %v5343 = vpack.c.b16 %v3971, %v3967
        %v5344 = vpack.c.b16 %v3972, %v3968
        %v5345 = vpack.c.b16 %v3973, %v3969
        %v5346 = vpack.c.b16 %v3974, %v3970
        %v5347 = vpack.c.b16 %v3979, %v3975
        %v5348 = vpack.c.b16 %v3980, %v3976
        %v5349 = vpack.c.b16 %v3981, %v3977
        %v5350 = vpack.c.b16 %v3982, %v3978
        %v5351 = vpack.c.b16 %v3987, %v3983
        %v5352 = vpack.c.b16 %v3988, %v3984
        %v5353 = vpack.c.b16 %v3989, %v3985
        %v5354 = vpack.c.b16 %v3990, %v3986
        %v5355 = vpack.c.b16 %v3995, %v3991
        %v5356 = vpack.c.b16 %v3996, %v3992
        %v5357 = vpack.c.b16 %v3997, %v3993
        %v5358 = vpack.c.b16 %v3998, %v3994
        %v5359 = vpack.c.b16 %v4003, %v3999
        %v5360 = vpack.c.b16 %v4004, %v4000
        %v5361 = vpack.c.b16 %v4005, %v4001
        %v5362 = vpack.c.b16 %v4006, %v4002
        %v5363 = vpack.c.b16 %v4011, %v4007
        %v5364 = vpack.c.b16 %v4012, %v4008
        %v5365 = vpack.c.b16 %v4013, %v4009
        %v5366 = vpack.c.b16 %v4014, %v4010
        %v5367 = vpack.c.b16 %v4019, %v4015
        %v5368 = vpack.c.b16 %v4020, %v4016
        %v5369 = vpack.c.b16 %v4021, %v4017
        %v5370 = vpack.c.b16 %v4022, %v4018
        %v5371 = vpack.c.b16 %v4027, %v4023
        %v5372 = vpack.c.b16 %v4028, %v4024
        %v5373 = vpack.c.b16 %v4029, %v4025
        %v5374 = vpack.c.b16 %v4030, %v4026
        %v5375 = vpack.c.b16 %v4035, %v4031
        %v5376 = vpack.c.b16 %v4036, %v4032
        %v5377 = vpack.c.b16 %v4037, %v4033
        %v5378 = vpack.c.b16 %v4038, %v4034
        %v5379 = vpack.c.b16 %v4043, %v4039
        %v5380 = vpack.c.b16 %v4044, %v4040
        %v5381 = vpack.c.b16 %v4045, %v4041
        %v5382 = vpack.c.b16 %v4046, %v4042
        %v5383 = vpack.c.b16 %v4051, %v4047
        %v5384 = vpack.c.b16 %v4052, %v4048
        %v5385 = vpack.c.b16 %v4053, %v4049
        %v5386 = vpack.c.b16 %v4054, %v4050
        %v5387 = vpack.c.b16 %v4059, %v4055
        %v5388 = vpack.c.b16 %v4060, %v4056
        %v5389 = vpack.c.b16 %v4061, %v4057
        %v5390 = vpack.c.b16 %v4062, %v4058
        %v5391 = vpack.c.b16 %v4067, %v4063
        %v5392 = vpack.c.b16 %v4068, %v4064
        %v5393 = vpack.c.b16 %v4069, %v4065
        %v5394 = vpack.c.b16 %v4070, %v4066
        %v5395 = vpack.c.b16 %v4075, %v4071
        %v5396 = vpack.c.b16 %v4076, %v4072
        %v5397 = vpack.c.b16 %v4077, %v4073
        %v5398 = vpack.c.b16 %v4078, %v4074
        %v5399 = vpack.c.b16 %v4083, %v4079
        %v5400 = vpack.c.b16 %v4084, %v4080
        %v5401 = vpack.c.b16 %v4085, %v4081
        %v5402 = vpack.c.b16 %v4086, %v4082
        %v5403 = vpack.c.b16 %v4091, %v4087
        %v5404 = vpack.c.b16 %v4092, %v4088
        %v5405 = vpack.c.b16 %v4093, %v4089
        %v5406 = vpack.c.b16 %v4094, %v4090
        %v5407 = vpack.c.b16 %v4099, %v4095
        %v5408 = vpack.c.b16 %v4100, %v4096
        %v5409 = vpack.c.b16 %v4101, %v4097
        %v5410 = vpack.c.b16 %v4102, %v4098
        %v5411 = vpack.c.b16 %v4107, %v4103
        %v5412 = vpack.c.b16 %v4108, %v4104
        %v5413 = vpack.c.b16 %v4109, %v4105
        %v5414 = vpack.c.b16 %v4110, %v4106
        %v5415 = vpack.c.b16 %v4115, %v4111
        %v5416 = vpack.c.b16 %v4116, %v4112
        %v5417 = vpack.c.b16 %v4117, %v4113
        %v5418 = vpack.c.b16 %v4118, %v4114
        %v5419 = vpack.c.b16 %v4123, %v4119
        %v5420 = vpack.c.b16 %v4124, %v4120
        %v5421 = vpack.c.b16 %v4125, %v4121
        %v5422 = vpack.c.b16 %v4126, %v4122
        %v5423 = vpack.c.b16 %v4131, %v4127
        %v5424 = vpack.c.b16 %v4132, %v4128
        %v5425 = vpack.c.b16 %v4133, %v4129
        %v5426 = vpack.c.b16 %v4134, %v4130
        %v5427 = vpack.c.b16 %v4139, %v4135
        %v5428 = vpack.c.b16 %v4140, %v4136
        %v5429 = vpack.c.b16 %v4141, %v4137
        %v5430 = vpack.c.b16 %v4142, %v4138
        %v5431 = vpack.c.b16 %v4147, %v4143
        %v5432 = vpack.c.b16 %v4148, %v4144
        %v5433 = vpack.c.b16 %v4149, %v4145
        %v5434 = vpack.c.b16 %v4150, %v4146
        %v5435 = vpack.c.b16 %v4155, %v4151
        %v5436 = vpack.c.b16 %v4156, %v4152
        %v5437 = vpack.c.b16 %v4157, %v4153
        %v5438 = vpack.c.b16 %v4158, %v4154
        %v5439 = vpack.c.b16 %v4163, %v4159
        %v5440 = vpack.c.b16 %v4164, %v4160
        %v5441 = vpack.c.b16 %v4165, %v4161
        %v5442 = vpack.c.b16 %v4166, %v4162
        %v5443 = vpack.c.b16 %v4171, %v4167
        %v5444 = vpack.c.b16 %v4172, %v4168
        %v5445 = vpack.c.b16 %v4173, %v4169
        %v5446 = vpack.c.b16 %v4174, %v4170
        %v5447 = vpack.c.b16 %v4179, %v4175
        %v5448 = vpack.c.b16 %v4180, %v4176
        %v5449 = vpack.c.b16 %v4181, %v4177
        %v5450 = vpack.c.b16 %v4182, %v4178
        %v5451 = vpack.c.b16 %v4187, %v4183
        %v5452 = vpack.c.b16 %v4188, %v4184
        %v5453 = vpack.c.b16 %v4189, %v4185
        %v5454 = vpack.c.b16 %v4190, %v4186
        %v5455 = vpack.c.b16 %v4195, %v4191
        %v5456 = vpack.c.b16 %v4196, %v4192
        %v5457 = vpack.c.b16 %v4197, %v4193
        %v5458 = vpack.c.b16 %v4198, %v4194
        %v5459 = vpack.c.b16 %v4203, %v4199
        %v5460 = vpack.c.b16 %v4204, %v4200
        %v5461 = vpack.c.b16 %v4205, %v4201
        %v5462 = vpack.c.b16 %v4206, %v4202
        %v5463 = vpack.c.b16 %v4211, %v4207
        %v5464 = vpack.c.b16 %v4212, %v4208
        %v5465 = vpack.c.b16 %v4213, %v4209
        %v5466 = vpack.c.b16 %v4214, %v4210
        %v5467 = vpack.c.b16 %v4219, %v4215
        %v5468 = vpack.c.b16 %v4220, %v4216
        %v5469 = vpack.c.b16 %v4221, %v4217
        %v5470 = vpack.c.b16 %v4222, %v4218
        %v5471 = vpack.c.b16 %v4227, %v4223
        %v5472 = vpack.c.b16 %v4228, %v4224
        %v5473 = vpack.c.b16 %v4229, %v4225
        %v5474 = vpack.c.b16 %v4230, %v4226
        %v5475 = vpack.c.b16 %v4235, %v4231
        %v5476 = vpack.c.b16 %v4236, %v4232
        %v5477 = vpack.c.b16 %v4237, %v4233
        %v5478 = vpack.c.b16 %v4238, %v4234
        %v5479 = vpack.c.b16 %v4243, %v4239
        %v5480 = vpack.c.b16 %v4244, %v4240
        %v5481 = vpack.c.b16 %v4245, %v4241
        %v5482 = vpack.c.b16 %v4246, %v4242
        %v5483 = vpack.c.b16 %v4251, %v4247
        %v5484 = vpack.c.b16 %v4252, %v4248
        %v5485 = vpack.c.b16 %v4253, %v4249
        %v5486 = vpack.c.b16 %v4254, %v4250
        %v5487 = vpack.c.b16 %v4259, %v4255
        %v5488 = vpack.c.b16 %v4260, %v4256
        %v5489 = vpack.c.b16 %v4261, %v4257
        %v5490 = vpack.c.b16 %v4262, %v4258
        %v5491 = vpack.c.b16 %v4267, %v4263
        %v5492 = vpack.c.b16 %v4268, %v4264
        %v5493 = vpack.c.b16 %v4269, %v4265
        %v5494 = vpack.c.b16 %v4270, %v4266
        %v5495 = vpack.c.b16 %v4275, %v4271
        %v5496 = vpack.c.b16 %v4276, %v4272
        %v5497 = vpack.c.b16 %v4277, %v4273
        %v5498 = vpack.c.b16 %v4278, %v4274
        %v5499 = vpack.c.b16 %v4283, %v4279
        %v5500 = vpack.c.b16 %v4284, %v4280
        %v5501 = vpack.c.b16 %v4285, %v4281
        %v5502 = vpack.c.b16 %v4286, %v4282
        %v5503 = vpack.c.b16 %v4291, %v4287
        %v5504 = vpack.c.b16 %v4292, %v4288
        %v5505 = vpack.c.b16 %v4293, %v4289
        %v5506 = vpack.c.b16 %v4294, %v4290
        %v5507 = vpack.c.b16 %v4299, %v4295
        %v5508 = vpack.c.b16 %v4300, %v4296
        %v5509 = vpack.c.b16 %v4301, %v4297
        %v5510 = vpack.c.b16 %v4302, %v4298
        %v5511 = vpack.c.b16 %v4307, %v4303
        %v5512 = vpack.c.b16 %v4308, %v4304
        %v5513 = vpack.c.b16 %v4309, %v4305
        %v5514 = vpack.c.b16 %v4310, %v4306
        %v5515 = vpack.c.b16 %v4315, %v4311
        %v5516 = vpack.c.b16 %v4316, %v4312
        %v5517 = vpack.c.b16 %v4317, %v4313
        %v5518 = vpack.c.b16 %v4318, %v4314
        %v5519 = vpack.c.b16 %v4323, %v4319
        %v5520 = vpack.c.b16 %v4324, %v4320
        %v5521 = vpack.c.b16 %v4325, %v4321
        %v5522 = vpack.c.b16 %v4326, %v4322
        %v5523 = vpack.c.b16 %v4331, %v4327
        %v5524 = vpack.c.b16 %v4332, %v4328
        %v5525 = vpack.c.b16 %v4333, %v4329
        %v5526 = vpack.c.b16 %v4334, %v4330
        %v5527 = vpack.c.b16 %v4339, %v4335
        %v5528 = vpack.c.b16 %v4340, %v4336
        %v5529 = vpack.c.b16 %v4341, %v4337
        %v5530 = vpack.c.b16 %v4342, %v4338
        %v5531 = vpack.c.b16 %v4347, %v4343
        %v5532 = vpack.c.b16 %v4348, %v4344
        %v5533 = vpack.c.b16 %v4349, %v4345
        %v5534 = vpack.c.b16 %v4350, %v4346
        %v5535 = vpack.c.b16 %v4355, %v4351
        %v5536 = vpack.c.b16 %v4356, %v4352
        %v5537 = vpack.c.b16 %v4357, %v4353
        %v5538 = vpack.c.b16 %v4358, %v4354
        %v5539 = vpack.c.b16 %v4363, %v4359
        %v5540 = vpack.c.b16 %v4364, %v4360
        %v5541 = vpack.c.b16 %v4365, %v4361
        %v5542 = vpack.c.b16 %v4366, %v4362
        %v5543 = vpack.c.b16 %v4371, %v4367
        %v5544 = vpack.c.b16 %v4372, %v4368
        %v5545 = vpack.c.b16 %v4373, %v4369
        %v5546 = vpack.c.b16 %v4374, %v4370
        %v5547 = vpack.c.b16 %v4379, %v4375
        %v5548 = vpack.c.b16 %v4380, %v4376
        %v5549 = vpack.c.b16 %v4381, %v4377
        %v5550 = vpack.c.b16 %v4382, %v4378
        %v5551 = vpack.c.b16 %v4387, %v4383
        %v5552 = vpack.c.b16 %v4388, %v4384
        %v5553 = vpack.c.b16 %v4389, %v4385
        %v5554 = vpack.c.b16 %v4390, %v4386
        %v5555 = vpack.c.b16 %v4395, %v4391
        %v5556 = vpack.c.b16 %v4396, %v4392
        %v5557 = vpack.c.b16 %v4397, %v4393
        %v5558 = vpack.c.b16 %v4398, %v4394
        %v5559 = vpack.c.b16 %v4403, %v4399
        %v5560 = vpack.c.b16 %v4404, %v4400
        %v5561 = vpack.c.b16 %v4405, %v4401
        %v5562 = vpack.c.b16 %v4406, %v4402
        %v5563 = vpack.c.b16 %v4411, %v4407
        %v5564 = vpack.c.b16 %v4412, %v4408
        %v5565 = vpack.c.b16 %v4413, %v4409
        %v5566 = vpack.c.b16 %v4414, %v4410
        %v5567 = vpack.c.b16 %v4419, %v4415
        %v5568 = vpack.c.b16 %v4420, %v4416
        %v5569 = vpack.c.b16 %v4421, %v4417
        %v5570 = vpack.c.b16 %v4422, %v4418
        %v5571 = vpack.c.b16 %v4427, %v4423
        %v5572 = vpack.c.b16 %v4428, %v4424
        %v5573 = vpack.c.b16 %v4429, %v4425
        %v5574 = vpack.c.b16 %v4430, %v4426
        %v5575 = vpack.c.b16 %v4435, %v4431
        %v5576 = vpack.c.b16 %v4436, %v4432
        %v5577 = vpack.c.b16 %v4437, %v4433
        %v5578 = vpack.c.b16 %v4438, %v4434
        %v5579 = vpack.c.b16 %v4443, %v4439
        %v5580 = vpack.c.b16 %v4444, %v4440
        %v5581 = vpack.c.b16 %v4445, %v4441
        %v5582 = vpack.c.b16 %v4446, %v4442
        %v5583 = vpack.c.b16 %v4451, %v4447
        %v5584 = vpack.c.b16 %v4452, %v4448
        %v5585 = vpack.c.b16 %v4453, %v4449
        %v5586 = vpack.c.b16 %v4454, %v4450
        %v5587 = vpack.c.b16 %v4459, %v4455
        %v5588 = vpack.c.b16 %v4460, %v4456
        %v5589 = vpack.c.b16 %v4461, %v4457
        %v5590 = vpack.c.b16 %v4462, %v4458
        %v5591 = vpack.c.b16 %v4467, %v4463
        %v5592 = vpack.c.b16 %v4468, %v4464
        %v5593 = vpack.c.b16 %v4469, %v4465
        %v5594 = vpack.c.b16 %v4470, %v4466
        %v5595 = vpack.c.b16 %v4475, %v4471
        %v5596 = vpack.c.b16 %v4476, %v4472
        %v5597 = vpack.c.b16 %v4477, %v4473
        %v5598 = vpack.c.b16 %v4478, %v4474
        %v5599 = vpack.c.b16 %v4483, %v4479
        %v5600 = vpack.c.b16 %v4484, %v4480
        %v5601 = vpack.c.b16 %v4485, %v4481
        %v5602 = vpack.c.b16 %v4486, %v4482
        %v5603 = vpack.c.b16 %v4491, %v4487
        %v5604 = vpack.c.b16 %v4492, %v4488
        %v5605 = vpack.c.b16 %v4493, %v4489
        %v5606 = vpack.c.b16 %v4494, %v4490
        %v5607 = vpack.c.b16 %v4499, %v4495
        %v5608 = vpack.c.b16 %v4500, %v4496
        %v5609 = vpack.c.b16 %v4501, %v4497
        %v5610 = vpack.c.b16 %v4502, %v4498
        %v5611 = vpack.c.b16 %v4507, %v4503
        %v5612 = vpack.c.b16 %v4508, %v4504
        %v5613 = vpack.c.b16 %v4509, %v4505
        %v5614 = vpack.c.b16 %v4510, %v4506
        %v5615 = vpack.c.b16 %v4515, %v4511
        %v5616 = vpack.c.b16 %v4516, %v4512
        %v5617 = vpack.c.b16 %v4517, %v4513
        %v5618 = vpack.c.b16 %v4518, %v4514
        %v5619 = vpack.c.b16 %v4523, %v4519
        %v5620 = vpack.c.b16 %v4524, %v4520
        %v5621 = vpack.c.b16 %v4525, %v4521
        %v5622 = vpack.c.b16 %v4526, %v4522
        %v5623 = vpack.c.b16 %v4531, %v4527
        %v5624 = vpack.c.b16 %v4532, %v4528
        %v5625 = vpack.c.b16 %v4533, %v4529
        %v5626 = vpack.c.b16 %v4534, %v4530
        %v5627 = vpack.c.b16 %v4539, %v4535
        %v5628 = vpack.c.b16 %v4540, %v4536
        %v5629 = vpack.c.b16 %v4541, %v4537
        %v5630 = vpack.c.b16 %v4542, %v4538
        %v5631 = vpack.c.b16 %v4547, %v4543
        %v5632 = vpack.c.b16 %v4548, %v4544
        %v5633 = vpack.c.b16 %v4549, %v4545
        %v5634 = vpack.c.b16 %v4550, %v4546
        %v5635 = vpack.c.b16 %v4555, %v4551
        %v5636 = vpack.c.b16 %v4556, %v4552
        %v5637 = vpack.c.b16 %v4557, %v4553
        %v5638 = vpack.c.b16 %v4558, %v4554
        %v5639 = vpack.c.b16 %v4563, %v4559
        %v5640 = vpack.c.b16 %v4564, %v4560
        %v5641 = vpack.c.b16 %v4565, %v4561
        %v5642 = vpack.c.b16 %v4566, %v4562
        %v5643 = vpack.c.b16 %v4571, %v4567
        %v5644 = vpack.c.b16 %v4572, %v4568
        %v5645 = vpack.c.b16 %v4573, %v4569
        %v5646 = vpack.c.b16 %v4574, %v4570
        %v5647 = vpack.c.b16 %v4579, %v4575
        %v5648 = vpack.c.b16 %v4580, %v4576
        %v5649 = vpack.c.b16 %v4581, %v4577
        %v5650 = vpack.c.b16 %v4582, %v4578
        %v5651 = vpack.c.b16 %v4587, %v4583
        %v5652 = vpack.c.b16 %v4588, %v4584
        %v5653 = vpack.c.b16 %v4589, %v4585
        %v5654 = vpack.c.b16 %v4590, %v4586
        %v5655 = vpack.c.b16 %v4595, %v4591
        %v5656 = vpack.c.b16 %v4596, %v4592
        %v5657 = vpack.c.b16 %v4597, %v4593
        %v5658 = vpack.c.b16 %v4598, %v4594
        %v5659 = vpack.c.b16 %v4603, %v4599
        %v5660 = vpack.c.b16 %v4604, %v4600
        %v5661 = vpack.c.b16 %v4605, %v4601
        %v5662 = vpack.c.b16 %v4606, %v4602
        %v5663 = vpack.c.b16 %v4611, %v4607
        %v5664 = vpack.c.b16 %v4612, %v4608
        %v5665 = vpack.c.b16 %v4613, %v4609
        %v5666 = vpack.c.b16 %v4614, %v4610
        %v5667 = vpack.c.b16 %v4619, %v4615
        %v5668 = vpack.c.b16 %v4620, %v4616
        %v5669 = vpack.c.b16 %v4621, %v4617
        %v5670 = vpack.c.b16 %v4622, %v4618
        %v5671 = vpack.c.b16 %v4627, %v4623
        %v5672 = vpack.c.b16 %v4628, %v4624
        %v5673 = vpack.c.b16 %v4629, %v4625
        %v5674 = vpack.c.b16 %v4630, %v4626
        %v5675 = vpack.c.b16 %v4635, %v4631
        %v5676 = vpack.c.b16 %v4636, %v4632
        %v5677 = vpack.c.b16 %v4637, %v4633
        %v5678 = vpack.c.b16 %v4638, %v4634
        %v5679 = vpack.c.b16 %v4643, %v4639
        %v5680 = vpack.c.b16 %v4644, %v4640
        %v5681 = vpack.c.b16 %v4645, %v4641
        %v5682 = vpack.c.b16 %v4646, %v4642
        %v5683 = vpack.c.b16 %v4651, %v4647
        %v5684 = vpack.c.b16 %v4652, %v4648
        %v5685 = vpack.c.b16 %v4653, %v4649
        %v5686 = vpack.c.b16 %v4654, %v4650
        %v5687 = vpack.c.b16 %v4659, %v4655
        %v5688 = vpack.c.b16 %v4660, %v4656
        %v5689 = vpack.c.b16 %v4661, %v4657
        %v5690 = vpack.c.b16 %v4662, %v4658
        %v5691 = vpack.c.b16 %v4667, %v4663
        %v5692 = vpack.c.b16 %v4668, %v4664
        %v5693 = vpack.c.b16 %v4669, %v4665
        %v5694 = vpack.c.b16 %v4670, %v4666
        %6719 = vmatprep.subr.bf16.mxu0 %v4700
        %6720 = vmatpush1.bf16.msra.mxu0 %v4699
        %6721 = vmatprep.subr.bf16.mxu0 %v4696
        %6722 = vmatpush1.bf16.msra.mxu0 %v4695
        %6723 = vmatprep.subr.bf16.mxu0 %v4692
        %6724 = vmatpush1.bf16.msra.mxu0 %v4691
        %6725 = vmatprep.subr.bf16.mxu0 %v4688
        %6726 = vmatpush1.bf16.msra.mxu0 %v4687
        %6727 = vmatprep.subr.bf16.mxu0 %v4684
        %6728 = vmatpush1.bf16.msra.mxu0 %v4683
        %6729 = vmatprep.subr.bf16.mxu0 %v4680
        %6730 = vmatpush1.bf16.msra.mxu0 %v4679
        %6731 = vmatprep.subr.bf16.mxu0 %v4676
        %6732 = vmatpush1.bf16.msra.mxu0 %v4675
        %6733 = vmatprep.subr.bf16.mxu0 %v4672
        %6734 = vmatpush1.bf16.msra.mxu0 %v4671
        %6735 = vmatprep.subr.bf16.mxu0 %v4732
        %6736 = vmatpush2.bf16.msra.mxu0 %v4731
        %6737 = vmatprep.subr.bf16.mxu0 %v4728
        %6738 = vmatpush2.bf16.msra.mxu0 %v4727
        %6739 = vmatprep.subr.bf16.mxu0 %v4724
        %6740 = vmatpush2.bf16.msra.mxu0 %v4723
        %6741 = vmatprep.subr.bf16.mxu0 %v4720
        %6742 = vmatpush2.bf16.msra.mxu0 %v4719
        %6743 = vmatprep.subr.bf16.mxu0 %v4716
        %6744 = vmatpush2.bf16.msra.mxu0 %v4715
        %6745 = vmatprep.subr.bf16.mxu0 %v4712
        %6746 = vmatpush2.bf16.msra.mxu0 %v4711
        %6747 = vmatprep.subr.bf16.mxu0 %v4708
        %6748 = vmatpush2.bf16.msra.mxu0 %v4707
        %6749 = vmatprep.subr.bf16.mxu0 %v4704
        %6750 = vmatpush2.bf16.msra.mxu0 %v4703
        %6751 = vmatprep.mubr.bf16.mxu0 %v1536
        %6752 = vmatmul.mubr.bf16.gmra.mxu0 %v1535
        %v6753 = vpop.f32.mrf.mxu0
        %v6754 = vadd.f32 0.0, %v6753
        %v6755 = vpop.f32.mrf.mxu0
        %v6756 = vadd.f32 0.0, %v6755
        %v6757 = vpop.f32.mrf.mxu0
        %v6758 = vadd.f32 0.0, %v6757
        %v6759 = vpop.f32.mrf.mxu0
        %v6760 = vadd.f32 0.0, %v6759
        %6761 = vdwg.mxu0
        %6762 = vmatprep.subr.bf16.mxu0 %v4764
        %6763 = vmatpush1.bf16.msra.mxu0 %v4763
        %6764 = vmatprep.subr.bf16.mxu0 %v4760
        %6765 = vmatpush1.bf16.msra.mxu0 %v4759
        %6766 = vmatprep.subr.bf16.mxu0 %v4756
        %6767 = vmatpush1.bf16.msra.mxu0 %v4755
        %6768 = vmatprep.subr.bf16.mxu0 %v4752
        %6769 = vmatpush1.bf16.msra.mxu0 %v4751
        %6770 = vmatprep.subr.bf16.mxu0 %v4748
        %6771 = vmatpush1.bf16.msra.mxu0 %v4747
        %6772 = vmatprep.subr.bf16.mxu0 %v4744
        %6773 = vmatpush1.bf16.msra.mxu0 %v4743
        %6774 = vmatprep.subr.bf16.mxu0 %v4740
        %6775 = vmatpush1.bf16.msra.mxu0 %v4739
        %6776 = vmatprep.subr.bf16.mxu0 %v4736
        %6777 = vmatpush1.bf16.msra.mxu0 %v4735
        %6778 = vmatprep.subr.bf16.mxu0 %v4796
        %6779 = vmatpush2.bf16.msra.mxu0 %v4795
        %6780 = vmatprep.subr.bf16.mxu0 %v4792
        %6781 = vmatpush2.bf16.msra.mxu0 %v4791
        %6782 = vmatprep.subr.bf16.mxu0 %v4788
        %6783 = vmatpush2.bf16.msra.mxu0 %v4787
        %6784 = vmatprep.subr.bf16.mxu0 %v4784
        %6785 = vmatpush2.bf16.msra.mxu0 %v4783
        %6786 = vmatprep.subr.bf16.mxu0 %v4780
        %6787 = vmatpush2.bf16.msra.mxu0 %v4779
        %6788 = vmatprep.subr.bf16.mxu0 %v4776
        %6789 = vmatpush2.bf16.msra.mxu0 %v4775
        %6790 = vmatprep.subr.bf16.mxu0 %v4772
        %6791 = vmatpush2.bf16.msra.mxu0 %v4771
        %6792 = vmatprep.subr.bf16.mxu0 %v4768
        %6793 = vmatpush2.bf16.msra.mxu0 %v4767
        %6794 = vmatprep.mubr.bf16.mxu0 %v1538
        %6795 = vmatmul.mubr.bf16.gmra.mxu0 %v1537
        %v6796 = vpop.f32.mrf.mxu0
        %v6797 = vadd.f32 %v6754, %v6796
        %v6798 = vpop.f32.mrf.mxu0
        %v6799 = vadd.f32 %v6756, %v6798
        %v6800 = vpop.f32.mrf.mxu0
        %v6801 = vadd.f32 %v6758, %v6800
        %v6802 = vpop.f32.mrf.mxu0
        %v6803 = vadd.f32 %v6760, %v6802
        %6804 = vdwg.mxu0
        %6805 = vmatprep.subr.bf16.mxu0 %v4828
        %6806 = vmatpush1.bf16.msra.mxu0 %v4827
        %6807 = vmatprep.subr.bf16.mxu0 %v4824
        %6808 = vmatpush1.bf16.msra.mxu0 %v4823
        %6809 = vmatprep.subr.bf16.mxu0 %v4820
        %6810 = vmatpush1.bf16.msra.mxu0 %v4819
        %6811 = vmatprep.subr.bf16.mxu0 %v4816
        %6812 = vmatpush1.bf16.msra.mxu0 %v4815
        %6813 = vmatprep.subr.bf16.mxu0 %v4812
        %6814 = vmatpush1.bf16.msra.mxu0 %v4811
        %6815 = vmatprep.subr.bf16.mxu0 %v4808
        %6816 = vmatpush1.bf16.msra.mxu0 %v4807
        %6817 = vmatprep.subr.bf16.mxu0 %v4804
        %6818 = vmatpush1.bf16.msra.mxu0 %v4803
        %6819 = vmatprep.subr.bf16.mxu0 %v4800
        %6820 = vmatpush1.bf16.msra.mxu0 %v4799
        %6821 = vmatprep.subr.bf16.mxu0 %v4860
        %6822 = vmatpush2.bf16.msra.mxu0 %v4859
        %6823 = vmatprep.subr.bf16.mxu0 %v4856
        %6824 = vmatpush2.bf16.msra.mxu0 %v4855
        %6825 = vmatprep.subr.bf16.mxu0 %v4852
        %6826 = vmatpush2.bf16.msra.mxu0 %v4851
        %6827 = vmatprep.subr.bf16.mxu0 %v4848
        %6828 = vmatpush2.bf16.msra.mxu0 %v4847
        %6829 = vmatprep.subr.bf16.mxu0 %v4844
        %6830 = vmatpush2.bf16.msra.mxu0 %v4843
        %6831 = vmatprep.subr.bf16.mxu0 %v4840
        %6832 = vmatpush2.bf16.msra.mxu0 %v4839
        %6833 = vmatprep.subr.bf16.mxu0 %v4836
        %6834 = vmatpush2.bf16.msra.mxu0 %v4835
        %6835 = vmatprep.subr.bf16.mxu0 %v4832
        %6836 = vmatpush2.bf16.msra.mxu0 %v4831
        %6837 = vmatprep.mubr.bf16.mxu0 %v1540
        %6838 = vmatmul.mubr.bf16.gmra.mxu0 %v1539
        %v6839 = vpop.f32.mrf.mxu0
        %v6840 = vadd.f32 %v6797, %v6839
        %v6841 = vpop.f32.mrf.mxu0
        %v6842 = vadd.f32 %v6799, %v6841
        %v6843 = vpop.f32.mrf.mxu0
        %v6844 = vadd.f32 %v6801, %v6843
        %v6845 = vpop.f32.mrf.mxu0
        %v6846 = vadd.f32 %v6803, %v6845
        %6847 = vdwg.mxu0
        %6848 = vmatprep.subr.bf16.mxu0 %v4892
        %6849 = vmatpush1.bf16.msra.mxu0 %v4891
        %6850 = vmatprep.subr.bf16.mxu0 %v4888
        %6851 = vmatpush1.bf16.msra.mxu0 %v4887
        %6852 = vmatprep.subr.bf16.mxu0 %v4884
        %6853 = vmatpush1.bf16.msra.mxu0 %v4883
        %6854 = vmatprep.subr.bf16.mxu0 %v4880
        %6855 = vmatpush1.bf16.msra.mxu0 %v4879
        %6856 = vmatprep.subr.bf16.mxu0 %v4876
        %6857 = vmatpush1.bf16.msra.mxu0 %v4875
        %6858 = vmatprep.subr.bf16.mxu0 %v4872
        %6859 = vmatpush1.bf16.msra.mxu0 %v4871
        %6860 = vmatprep.subr.bf16.mxu0 %v4868
        %6861 = vmatpush1.bf16.msra.mxu0 %v4867
        %6862 = vmatprep.subr.bf16.mxu0 %v4864
        %6863 = vmatpush1.bf16.msra.mxu0 %v4863
        %6864 = vmatprep.subr.bf16.mxu0 %v4924
        %6865 = vmatpush2.bf16.msra.mxu0 %v4923
        %6866 = vmatprep.subr.bf16.mxu0 %v4920
        %6867 = vmatpush2.bf16.msra.mxu0 %v4919
        %6868 = vmatprep.subr.bf16.mxu0 %v4916
        %6869 = vmatpush2.bf16.msra.mxu0 %v4915
        %6870 = vmatprep.subr.bf16.mxu0 %v4912
        %6871 = vmatpush2.bf16.msra.mxu0 %v4911
        %6872 = vmatprep.subr.bf16.mxu0 %v4908
        %6873 = vmatpush2.bf16.msra.mxu0 %v4907
        %6874 = vmatprep.subr.bf16.mxu0 %v4904
        %6875 = vmatpush2.bf16.msra.mxu0 %v4903
        %6876 = vmatprep.subr.bf16.mxu0 %v4900
        %6877 = vmatpush2.bf16.msra.mxu0 %v4899
        %6878 = vmatprep.subr.bf16.mxu0 %v4896
        %6879 = vmatpush2.bf16.msra.mxu0 %v4895
        %6880 = vmatprep.mubr.bf16.mxu0 %v1542
        %6881 = vmatmul.mubr.bf16.gmra.mxu0 %v1541
        %v6882 = vpop.f32.mrf.mxu0
        %v6883 = vadd.f32 %v6840, %v6882
        %v6884 = vpop.f32.mrf.mxu0
        %v6885 = vadd.f32 %v6842, %v6884
        %v6886 = vpop.f32.mrf.mxu0
        %v6887 = vadd.f32 %v6844, %v6886
        %v6888 = vpop.f32.mrf.mxu0
        %v6889 = vadd.f32 %v6846, %v6888
        %6890 = vdwg.mxu0
        %6891 = vmatprep.subr.bf16.mxu0 %v4956
        %6892 = vmatpush1.bf16.msra.mxu0 %v4955
        %6893 = vmatprep.subr.bf16.mxu0 %v4952
        %6894 = vmatpush1.bf16.msra.mxu0 %v4951
        %6895 = vmatprep.subr.bf16.mxu0 %v4948
        %6896 = vmatpush1.bf16.msra.mxu0 %v4947
        %6897 = vmatprep.subr.bf16.mxu0 %v4944
        %6898 = vmatpush1.bf16.msra.mxu0 %v4943
        %6899 = vmatprep.subr.bf16.mxu0 %v4940
        %6900 = vmatpush1.bf16.msra.mxu0 %v4939
        %6901 = vmatprep.subr.bf16.mxu0 %v4936
        %6902 = vmatpush1.bf16.msra.mxu0 %v4935
        %6903 = vmatprep.subr.bf16.mxu0 %v4932
        %6904 = vmatpush1.bf16.msra.mxu0 %v4931
        %6905 = vmatprep.subr.bf16.mxu0 %v4928
        %6906 = vmatpush1.bf16.msra.mxu0 %v4927
        %6907 = vmatprep.subr.bf16.mxu0 %v4988
        %6908 = vmatpush2.bf16.msra.mxu0 %v4987
        %6909 = vmatprep.subr.bf16.mxu0 %v4984
        %6910 = vmatpush2.bf16.msra.mxu0 %v4983
        %6911 = vmatprep.subr.bf16.mxu0 %v4980
        %6912 = vmatpush2.bf16.msra.mxu0 %v4979
        %6913 = vmatprep.subr.bf16.mxu0 %v4976
        %6914 = vmatpush2.bf16.msra.mxu0 %v4975
        %6915 = vmatprep.subr.bf16.mxu0 %v4972
        %6916 = vmatpush2.bf16.msra.mxu0 %v4971
        %6917 = vmatprep.subr.bf16.mxu0 %v4968
        %6918 = vmatpush2.bf16.msra.mxu0 %v4967
        %6919 = vmatprep.subr.bf16.mxu0 %v4964
        %6920 = vmatpush2.bf16.msra.mxu0 %v4963
        %6921 = vmatprep.subr.bf16.mxu0 %v4960
        %6922 = vmatpush2.bf16.msra.mxu0 %v4959
        %6923 = vmatprep.mubr.bf16.mxu0 %v1544
        %6924 = vmatmul.mubr.bf16.gmra.mxu0 %v1543
        %v6925 = vpop.f32.mrf.mxu0
        %v6926 = vadd.f32 %v6883, %v6925
        %v6927 = vpop.f32.mrf.mxu0
        %v6928 = vadd.f32 %v6885, %v6927
        %v6929 = vpop.f32.mrf.mxu0
        %v6930 = vadd.f32 %v6887, %v6929
        %v6931 = vpop.f32.mrf.mxu0
        %v6932 = vadd.f32 %v6889, %v6931
        %6933 = vdwg.mxu0
        %6934 = vmatprep.subr.bf16.mxu0 %v5020
        %6935 = vmatpush1.bf16.msra.mxu0 %v5019
        %6936 = vmatprep.subr.bf16.mxu0 %v5016
        %6937 = vmatpush1.bf16.msra.mxu0 %v5015
        %6938 = vmatprep.subr.bf16.mxu0 %v5012
        %6939 = vmatpush1.bf16.msra.mxu0 %v5011
        %6940 = vmatprep.subr.bf16.mxu0 %v5008
        %6941 = vmatpush1.bf16.msra.mxu0 %v5007
        %6942 = vmatprep.subr.bf16.mxu0 %v5004
        %6943 = vmatpush1.bf16.msra.mxu0 %v5003
        %6944 = vmatprep.subr.bf16.mxu0 %v5000
        %6945 = vmatpush1.bf16.msra.mxu0 %v4999
        %6946 = vmatprep.subr.bf16.mxu0 %v4996
        %6947 = vmatpush1.bf16.msra.mxu0 %v4995
        %6948 = vmatprep.subr.bf16.mxu0 %v4992
        %6949 = vmatpush1.bf16.msra.mxu0 %v4991
        %6950 = vmatprep.subr.bf16.mxu0 %v5052
        %6951 = vmatpush2.bf16.msra.mxu0 %v5051
        %6952 = vmatprep.subr.bf16.mxu0 %v5048
        %6953 = vmatpush2.bf16.msra.mxu0 %v5047
        %6954 = vmatprep.subr.bf16.mxu0 %v5044
        %6955 = vmatpush2.bf16.msra.mxu0 %v5043
        %6956 = vmatprep.subr.bf16.mxu0 %v5040
        %6957 = vmatpush2.bf16.msra.mxu0 %v5039
        %6958 = vmatprep.subr.bf16.mxu0 %v5036
        %6959 = vmatpush2.bf16.msra.mxu0 %v5035
        %6960 = vmatprep.subr.bf16.mxu0 %v5032
        %6961 = vmatpush2.bf16.msra.mxu0 %v5031
        %6962 = vmatprep.subr.bf16.mxu0 %v5028
        %6963 = vmatpush2.bf16.msra.mxu0 %v5027
        %6964 = vmatprep.subr.bf16.mxu0 %v5024
        %6965 = vmatpush2.bf16.msra.mxu0 %v5023
        %6966 = vmatprep.mubr.bf16.mxu0 %v1546
        %6967 = vmatmul.mubr.bf16.gmra.mxu0 %v1545
        %v6968 = vpop.f32.mrf.mxu0
        %v6969 = vadd.f32 %v6926, %v6968
        %v6970 = vpop.f32.mrf.mxu0
        %v6971 = vadd.f32 %v6928, %v6970
        %v6972 = vpop.f32.mrf.mxu0
        %v6973 = vadd.f32 %v6930, %v6972
        %v6974 = vpop.f32.mrf.mxu0
        %v6975 = vadd.f32 %v6932, %v6974
        %6976 = vdwg.mxu0
        %6977 = vmatprep.subr.bf16.mxu0 %v5084
        %6978 = vmatpush1.bf16.msra.mxu0 %v5083
        %6979 = vmatprep.subr.bf16.mxu0 %v5080
        %6980 = vmatpush1.bf16.msra.mxu0 %v5079
        %6981 = vmatprep.subr.bf16.mxu0 %v5076
        %6982 = vmatpush1.bf16.msra.mxu0 %v5075
        %6983 = vmatprep.subr.bf16.mxu0 %v5072
        %6984 = vmatpush1.bf16.msra.mxu0 %v5071
        %6985 = vmatprep.subr.bf16.mxu0 %v5068
        %6986 = vmatpush1.bf16.msra.mxu0 %v5067
        %6987 = vmatprep.subr.bf16.mxu0 %v5064
        %6988 = vmatpush1.bf16.msra.mxu0 %v5063
        %6989 = vmatprep.subr.bf16.mxu0 %v5060
        %6990 = vmatpush1.bf16.msra.mxu0 %v5059
        %6991 = vmatprep.subr.bf16.mxu0 %v5056
        %6992 = vmatpush1.bf16.msra.mxu0 %v5055
        %6993 = vmatprep.subr.bf16.mxu0 %v5116
        %6994 = vmatpush2.bf16.msra.mxu0 %v5115
        %6995 = vmatprep.subr.bf16.mxu0 %v5112
        %6996 = vmatpush2.bf16.msra.mxu0 %v5111
        %6997 = vmatprep.subr.bf16.mxu0 %v5108
        %6998 = vmatpush2.bf16.msra.mxu0 %v5107
        %6999 = vmatprep.subr.bf16.mxu0 %v5104
        %7000 = vmatpush2.bf16.msra.mxu0 %v5103
        %7001 = vmatprep.subr.bf16.mxu0 %v5100
        %7002 = vmatpush2.bf16.msra.mxu0 %v5099
        %7003 = vmatprep.subr.bf16.mxu0 %v5096
        %7004 = vmatpush2.bf16.msra.mxu0 %v5095
        %7005 = vmatprep.subr.bf16.mxu0 %v5092
        %7006 = vmatpush2.bf16.msra.mxu0 %v5091
        %7007 = vmatprep.subr.bf16.mxu0 %v5088
        %7008 = vmatpush2.bf16.msra.mxu0 %v5087
        %7009 = vmatprep.mubr.bf16.mxu0 %v1548
        %7010 = vmatmul.mubr.bf16.gmra.mxu0 %v1547
        %v7011 = vpop.f32.mrf.mxu0
        %v7012 = vadd.f32 %v6969, %v7011
        %v7013 = vpop.f32.mrf.mxu0
        %v7014 = vadd.f32 %v6971, %v7013
        %v7015 = vpop.f32.mrf.mxu0
        %v7016 = vadd.f32 %v6973, %v7015
        %v7017 = vpop.f32.mrf.mxu0
        %v7018 = vadd.f32 %v6975, %v7017
        %7019 = vdwg.mxu0
        %7020 = vmatprep.subr.bf16.mxu0 %v5148
        %7021 = vmatpush1.bf16.msra.mxu0 %v5147
        %7022 = vmatprep.subr.bf16.mxu0 %v5144
        %7023 = vmatpush1.bf16.msra.mxu0 %v5143
        %7024 = vmatprep.subr.bf16.mxu0 %v5140
        %7025 = vmatpush1.bf16.msra.mxu0 %v5139
        %7026 = vmatprep.subr.bf16.mxu0 %v5136
        %7027 = vmatpush1.bf16.msra.mxu0 %v5135
        %7028 = vmatprep.subr.bf16.mxu0 %v5132
        %7029 = vmatpush1.bf16.msra.mxu0 %v5131
        %7030 = vmatprep.subr.bf16.mxu0 %v5128
        %7031 = vmatpush1.bf16.msra.mxu0 %v5127
        %7032 = vmatprep.subr.bf16.mxu0 %v5124
        %7033 = vmatpush1.bf16.msra.mxu0 %v5123
        %7034 = vmatprep.subr.bf16.mxu0 %v5120
        %7035 = vmatpush1.bf16.msra.mxu0 %v5119
        %7036 = vmatprep.subr.bf16.mxu0 %v5180
        %7037 = vmatpush2.bf16.msra.mxu0 %v5179
        %7038 = vmatprep.subr.bf16.mxu0 %v5176
        %7039 = vmatpush2.bf16.msra.mxu0 %v5175
        %7040 = vmatprep.subr.bf16.mxu0 %v5172
        %7041 = vmatpush2.bf16.msra.mxu0 %v5171
        %7042 = vmatprep.subr.bf16.mxu0 %v5168
        %7043 = vmatpush2.bf16.msra.mxu0 %v5167
        %7044 = vmatprep.subr.bf16.mxu0 %v5164
        %7045 = vmatpush2.bf16.msra.mxu0 %v5163
        %7046 = vmatprep.subr.bf16.mxu0 %v5160
        %7047 = vmatpush2.bf16.msra.mxu0 %v5159
        %7048 = vmatprep.subr.bf16.mxu0 %v5156
        %7049 = vmatpush2.bf16.msra.mxu0 %v5155
        %7050 = vmatprep.subr.bf16.mxu0 %v5152
        %7051 = vmatpush2.bf16.msra.mxu0 %v5151
        %7052 = vmatprep.mubr.bf16.mxu0 %v1550
        %7053 = vmatmul.mubr.bf16.gmra.mxu0 %v1549
        %v7054 = vpop.f32.mrf.mxu0
        %v7055 = vadd.f32 %v7012, %v7054
        %v7056 = vpop.f32.mrf.mxu0
        %v7057 = vadd.f32 %v7014, %v7056
        %v7058 = vpop.f32.mrf.mxu0
        %v7059 = vadd.f32 %v7016, %v7058
        %v7060 = vpop.f32.mrf.mxu0
        %v7061 = vadd.f32 %v7018, %v7060
        %7062 = vdwg.mxu0
        %7063 = vmatprep.subr.bf16.mxu0 %v5212
        %7064 = vmatpush1.bf16.msra.mxu0 %v5211
        %7065 = vmatprep.subr.bf16.mxu0 %v5208
        %7066 = vmatpush1.bf16.msra.mxu0 %v5207
        %7067 = vmatprep.subr.bf16.mxu0 %v5204
        %7068 = vmatpush1.bf16.msra.mxu0 %v5203
        %7069 = vmatprep.subr.bf16.mxu0 %v5200
        %7070 = vmatpush1.bf16.msra.mxu0 %v5199
        %7071 = vmatprep.subr.bf16.mxu0 %v5196
        %7072 = vmatpush1.bf16.msra.mxu0 %v5195
        %7073 = vmatprep.subr.bf16.mxu0 %v5192
        %7074 = vmatpush1.bf16.msra.mxu0 %v5191
        %7075 = vmatprep.subr.bf16.mxu0 %v5188
        %7076 = vmatpush1.bf16.msra.mxu0 %v5187
        %7077 = vmatprep.subr.bf16.mxu0 %v5184
        %7078 = vmatpush1.bf16.msra.mxu0 %v5183
        %7079 = vmatprep.subr.bf16.mxu0 %v5244
        %7080 = vmatpush2.bf16.msra.mxu0 %v5243
        %7081 = vmatprep.subr.bf16.mxu0 %v5240
        %7082 = vmatpush2.bf16.msra.mxu0 %v5239
        %7083 = vmatprep.subr.bf16.mxu0 %v5236
        %7084 = vmatpush2.bf16.msra.mxu0 %v5235
        %7085 = vmatprep.subr.bf16.mxu0 %v5232
        %7086 = vmatpush2.bf16.msra.mxu0 %v5231
        %7087 = vmatprep.subr.bf16.mxu0 %v5228
        %7088 = vmatpush2.bf16.msra.mxu0 %v5227
        %7089 = vmatprep.subr.bf16.mxu0 %v5224
        %7090 = vmatpush2.bf16.msra.mxu0 %v5223
        %7091 = vmatprep.subr.bf16.mxu0 %v5220
        %7092 = vmatpush2.bf16.msra.mxu0 %v5219
        %7093 = vmatprep.subr.bf16.mxu0 %v5216
        %7094 = vmatpush2.bf16.msra.mxu0 %v5215
        %7095 = vmatprep.mubr.bf16.mxu0 %v1552
        %7096 = vmatmul.mubr.bf16.gmra.mxu0 %v1551
        %v7097 = vpop.f32.mrf.mxu0
        %v7098 = vadd.f32 %v7055, %v7097
        %v7099 = vpop.f32.mrf.mxu0
        %v7100 = vadd.f32 %v7057, %v7099
        %v7101 = vpop.f32.mrf.mxu0
        %v7102 = vadd.f32 %v7059, %v7101
        %v7103 = vpop.f32.mrf.mxu0
        %v7104 = vadd.f32 %v7061, %v7103
        %7105 = vdwg.mxu0
        %7106 = vmatprep.subr.bf16.mxu0 %v5276
        %7107 = vmatpush1.bf16.msra.mxu0 %v5275
        %7108 = vmatprep.subr.bf16.mxu0 %v5272
        %7109 = vmatpush1.bf16.msra.mxu0 %v5271
        %7110 = vmatprep.subr.bf16.mxu0 %v5268
        %7111 = vmatpush1.bf16.msra.mxu0 %v5267
        %7112 = vmatprep.subr.bf16.mxu0 %v5264
        %7113 = vmatpush1.bf16.msra.mxu0 %v5263
        %7114 = vmatprep.subr.bf16.mxu0 %v5260
        %7115 = vmatpush1.bf16.msra.mxu0 %v5259
        %7116 = vmatprep.subr.bf16.mxu0 %v5256
        %7117 = vmatpush1.bf16.msra.mxu0 %v5255
        %7118 = vmatprep.subr.bf16.mxu0 %v5252
        %7119 = vmatpush1.bf16.msra.mxu0 %v5251
        %7120 = vmatprep.subr.bf16.mxu0 %v5248
        %7121 = vmatpush1.bf16.msra.mxu0 %v5247
        %7122 = vmatprep.subr.bf16.mxu0 %v5308
        %7123 = vmatpush2.bf16.msra.mxu0 %v5307
        %7124 = vmatprep.subr.bf16.mxu0 %v5304
        %7125 = vmatpush2.bf16.msra.mxu0 %v5303
        %7126 = vmatprep.subr.bf16.mxu0 %v5300
        %7127 = vmatpush2.bf16.msra.mxu0 %v5299
        %7128 = vmatprep.subr.bf16.mxu0 %v5296
        %7129 = vmatpush2.bf16.msra.mxu0 %v5295
        %7130 = vmatprep.subr.bf16.mxu0 %v5292
        %7131 = vmatpush2.bf16.msra.mxu0 %v5291
        %7132 = vmatprep.subr.bf16.mxu0 %v5288
        %7133 = vmatpush2.bf16.msra.mxu0 %v5287
        %7134 = vmatprep.subr.bf16.mxu0 %v5284
        %7135 = vmatpush2.bf16.msra.mxu0 %v5283
        %7136 = vmatprep.subr.bf16.mxu0 %v5280
        %7137 = vmatpush2.bf16.msra.mxu0 %v5279
        %7138 = vmatprep.mubr.bf16.mxu0 %v1554
        %7139 = vmatmul.mubr.bf16.gmra.mxu0 %v1553
        %v7140 = vpop.f32.mrf.mxu0
        %v7141 = vadd.f32 %v7098, %v7140
        %v7142 = vpop.f32.mrf.mxu0
        %v7143 = vadd.f32 %v7100, %v7142
        %v7144 = vpop.f32.mrf.mxu0
        %v7145 = vadd.f32 %v7102, %v7144
        %v7146 = vpop.f32.mrf.mxu0
        %v7147 = vadd.f32 %v7104, %v7146
        %7148 = vdwg.mxu0
        %7149 = vmatprep.subr.bf16.mxu0 %v5340
        %7150 = vmatpush1.bf16.msra.mxu0 %v5339
        %7151 = vmatprep.subr.bf16.mxu0 %v5336
        %7152 = vmatpush1.bf16.msra.mxu0 %v5335
        %7153 = vmatprep.subr.bf16.mxu0 %v5332
        %7154 = vmatpush1.bf16.msra.mxu0 %v5331
        %7155 = vmatprep.subr.bf16.mxu0 %v5328
        %7156 = vmatpush1.bf16.msra.mxu0 %v5327
        %7157 = vmatprep.subr.bf16.mxu0 %v5324
        %7158 = vmatpush1.bf16.msra.mxu0 %v5323
        %7159 = vmatprep.subr.bf16.mxu0 %v5320
        %7160 = vmatpush1.bf16.msra.mxu0 %v5319
        %7161 = vmatprep.subr.bf16.mxu0 %v5316
        %7162 = vmatpush1.bf16.msra.mxu0 %v5315
        %7163 = vmatprep.subr.bf16.mxu0 %v5312
        %7164 = vmatpush1.bf16.msra.mxu0 %v5311
        %7165 = vmatprep.subr.bf16.mxu0 %v5372
        %7166 = vmatpush2.bf16.msra.mxu0 %v5371
        %7167 = vmatprep.subr.bf16.mxu0 %v5368
        %7168 = vmatpush2.bf16.msra.mxu0 %v5367
        %7169 = vmatprep.subr.bf16.mxu0 %v5364
        %7170 = vmatpush2.bf16.msra.mxu0 %v5363
        %7171 = vmatprep.subr.bf16.mxu0 %v5360
        %7172 = vmatpush2.bf16.msra.mxu0 %v5359
        %7173 = vmatprep.subr.bf16.mxu0 %v5356
        %7174 = vmatpush2.bf16.msra.mxu0 %v5355
        %7175 = vmatprep.subr.bf16.mxu0 %v5352
        %7176 = vmatpush2.bf16.msra.mxu0 %v5351
        %7177 = vmatprep.subr.bf16.mxu0 %v5348
        %7178 = vmatpush2.bf16.msra.mxu0 %v5347
        %7179 = vmatprep.subr.bf16.mxu0 %v5344
        %7180 = vmatpush2.bf16.msra.mxu0 %v5343
        %7181 = vmatprep.mubr.bf16.mxu0 %v1556
        %7182 = vmatmul.mubr.bf16.gmra.mxu0 %v1555
        %v7183 = vpop.f32.mrf.mxu0
        %v7184 = vadd.f32 %v7141, %v7183
        %v7185 = vpop.f32.mrf.mxu0
        %v7186 = vadd.f32 %v7143, %v7185
        %v7187 = vpop.f32.mrf.mxu0
        %v7188 = vadd.f32 %v7145, %v7187
        %v7189 = vpop.f32.mrf.mxu0
        %v7190 = vadd.f32 %v7147, %v7189
        %7191 = vdwg.mxu0
        %7192 = vmatprep.subr.bf16.mxu0 %v5404
        %7193 = vmatpush1.bf16.msra.mxu0 %v5403
        %7194 = vmatprep.subr.bf16.mxu0 %v5400
        %7195 = vmatpush1.bf16.msra.mxu0 %v5399
        %7196 = vmatprep.subr.bf16.mxu0 %v5396
        %7197 = vmatpush1.bf16.msra.mxu0 %v5395
        %7198 = vmatprep.subr.bf16.mxu0 %v5392
        %7199 = vmatpush1.bf16.msra.mxu0 %v5391
        %7200 = vmatprep.subr.bf16.mxu0 %v5388
        %7201 = vmatpush1.bf16.msra.mxu0 %v5387
        %7202 = vmatprep.subr.bf16.mxu0 %v5384
        %7203 = vmatpush1.bf16.msra.mxu0 %v5383
        %7204 = vmatprep.subr.bf16.mxu0 %v5380
        %7205 = vmatpush1.bf16.msra.mxu0 %v5379
        %7206 = vmatprep.subr.bf16.mxu0 %v5376
        %7207 = vmatpush1.bf16.msra.mxu0 %v5375
        %7208 = vmatprep.subr.bf16.mxu0 %v5436
        %7209 = vmatpush2.bf16.msra.mxu0 %v5435
        %7210 = vmatprep.subr.bf16.mxu0 %v5432
        %7211 = vmatpush2.bf16.msra.mxu0 %v5431
        %7212 = vmatprep.subr.bf16.mxu0 %v5428
        %7213 = vmatpush2.bf16.msra.mxu0 %v5427
        %7214 = vmatprep.subr.bf16.mxu0 %v5424
        %7215 = vmatpush2.bf16.msra.mxu0 %v5423
        %7216 = vmatprep.subr.bf16.mxu0 %v5420
        %7217 = vmatpush2.bf16.msra.mxu0 %v5419
        %7218 = vmatprep.subr.bf16.mxu0 %v5416
        %7219 = vmatpush2.bf16.msra.mxu0 %v5415
        %7220 = vmatprep.subr.bf16.mxu0 %v5412
        %7221 = vmatpush2.bf16.msra.mxu0 %v5411
        %7222 = vmatprep.subr.bf16.mxu0 %v5408
        %7223 = vmatpush2.bf16.msra.mxu0 %v5407
        %7224 = vmatprep.mubr.bf16.mxu0 %v1558
        %7225 = vmatmul.mubr.bf16.gmra.mxu0 %v1557
        %v7226 = vpop.f32.mrf.mxu0
        %v7227 = vadd.f32 %v7184, %v7226
        %v7228 = vpop.f32.mrf.mxu0
        %v7229 = vadd.f32 %v7186, %v7228
        %v7230 = vpop.f32.mrf.mxu0
        %v7231 = vadd.f32 %v7188, %v7230
        %v7232 = vpop.f32.mrf.mxu0
        %v7233 = vadd.f32 %v7190, %v7232
        %7234 = vdwg.mxu0
        %7235 = vmatprep.subr.bf16.mxu0 %v5468
        %7236 = vmatpush1.bf16.msra.mxu0 %v5467
        %7237 = vmatprep.subr.bf16.mxu0 %v5464
        %7238 = vmatpush1.bf16.msra.mxu0 %v5463
        %7239 = vmatprep.subr.bf16.mxu0 %v5460
        %7240 = vmatpush1.bf16.msra.mxu0 %v5459
        %7241 = vmatprep.subr.bf16.mxu0 %v5456
        %7242 = vmatpush1.bf16.msra.mxu0 %v5455
        %7243 = vmatprep.subr.bf16.mxu0 %v5452
        %7244 = vmatpush1.bf16.msra.mxu0 %v5451
        %7245 = vmatprep.subr.bf16.mxu0 %v5448
        %7246 = vmatpush1.bf16.msra.mxu0 %v5447
        %7247 = vmatprep.subr.bf16.mxu0 %v5444
        %7248 = vmatpush1.bf16.msra.mxu0 %v5443
        %7249 = vmatprep.subr.bf16.mxu0 %v5440
        %7250 = vmatpush1.bf16.msra.mxu0 %v5439
        %7251 = vmatprep.subr.bf16.mxu0 %v5500
        %7252 = vmatpush2.bf16.msra.mxu0 %v5499
        %7253 = vmatprep.subr.bf16.mxu0 %v5496
        %7254 = vmatpush2.bf16.msra.mxu0 %v5495
        %7255 = vmatprep.subr.bf16.mxu0 %v5492
        %7256 = vmatpush2.bf16.msra.mxu0 %v5491
        %7257 = vmatprep.subr.bf16.mxu0 %v5488
        %7258 = vmatpush2.bf16.msra.mxu0 %v5487
        %7259 = vmatprep.subr.bf16.mxu0 %v5484
        %7260 = vmatpush2.bf16.msra.mxu0 %v5483
        %7261 = vmatprep.subr.bf16.mxu0 %v5480
        %7262 = vmatpush2.bf16.msra.mxu0 %v5479
        %7263 = vmatprep.subr.bf16.mxu0 %v5476
        %7264 = vmatpush2.bf16.msra.mxu0 %v5475
        %7265 = vmatprep.subr.bf16.mxu0 %v5472
        %7266 = vmatpush2.bf16.msra.mxu0 %v5471
        %7267 = vmatprep.mubr.bf16.mxu0 %v1560
        %7268 = vmatmul.mubr.bf16.gmra.mxu0 %v1559
        %v7269 = vpop.f32.mrf.mxu0
        %v7270 = vadd.f32 %v7227, %v7269
        %v7271 = vpop.f32.mrf.mxu0
        %v7272 = vadd.f32 %v7229, %v7271
        %v7273 = vpop.f32.mrf.mxu0
        %v7274 = vadd.f32 %v7231, %v7273
        %v7275 = vpop.f32.mrf.mxu0
        %v7276 = vadd.f32 %v7233, %v7275
        %7277 = vdwg.mxu0
        %7278 = vmatprep.subr.bf16.mxu0 %v5532
        %7279 = vmatpush1.bf16.msra.mxu0 %v5531
        %7280 = vmatprep.subr.bf16.mxu0 %v5528
        %7281 = vmatpush1.bf16.msra.mxu0 %v5527
        %7282 = vmatprep.subr.bf16.mxu0 %v5524
        %7283 = vmatpush1.bf16.msra.mxu0 %v5523
        %7284 = vmatprep.subr.bf16.mxu0 %v5520
        %7285 = vmatpush1.bf16.msra.mxu0 %v5519
        %7286 = vmatprep.subr.bf16.mxu0 %v5516
        %7287 = vmatpush1.bf16.msra.mxu0 %v5515
        %7288 = vmatprep.subr.bf16.mxu0 %v5512
        %7289 = vmatpush1.bf16.msra.mxu0 %v5511
        %7290 = vmatprep.subr.bf16.mxu0 %v5508
        %7291 = vmatpush1.bf16.msra.mxu0 %v5507
        %7292 = vmatprep.subr.bf16.mxu0 %v5504
        %7293 = vmatpush1.bf16.msra.mxu0 %v5503
        %7294 = vmatprep.subr.bf16.mxu0 %v5564
        %7295 = vmatpush2.bf16.msra.mxu0 %v5563
        %7296 = vmatprep.subr.bf16.mxu0 %v5560
        %7297 = vmatpush2.bf16.msra.mxu0 %v5559
        %7298 = vmatprep.subr.bf16.mxu0 %v5556
        %7299 = vmatpush2.bf16.msra.mxu0 %v5555
        %7300 = vmatprep.subr.bf16.mxu0 %v5552
        %7301 = vmatpush2.bf16.msra.mxu0 %v5551
        %7302 = vmatprep.subr.bf16.mxu0 %v5548
        %7303 = vmatpush2.bf16.msra.mxu0 %v5547
        %7304 = vmatprep.subr.bf16.mxu0 %v5544
        %7305 = vmatpush2.bf16.msra.mxu0 %v5543
        %7306 = vmatprep.subr.bf16.mxu0 %v5540
        %7307 = vmatpush2.bf16.msra.mxu0 %v5539
        %7308 = vmatprep.subr.bf16.mxu0 %v5536
        %7309 = vmatpush2.bf16.msra.mxu0 %v5535
        %7310 = vmatprep.mubr.bf16.mxu0 %v1562
        %7311 = vmatmul.mubr.bf16.gmra.mxu0 %v1561
        %v7312 = vpop.f32.mrf.mxu0
        %v7313 = vadd.f32 %v7270, %v7312
        %v7314 = vpop.f32.mrf.mxu0
        %v7315 = vadd.f32 %v7272, %v7314
        %v7316 = vpop.f32.mrf.mxu0
        %v7317 = vadd.f32 %v7274, %v7316
        %v7318 = vpop.f32.mrf.mxu0
        %v7319 = vadd.f32 %v7276, %v7318
        %7320 = vdwg.mxu0
        %7321 = vmatprep.subr.bf16.mxu0 %v5596
        %7322 = vmatpush1.bf16.msra.mxu0 %v5595
        %7323 = vmatprep.subr.bf16.mxu0 %v5592
        %7324 = vmatpush1.bf16.msra.mxu0 %v5591
        %7325 = vmatprep.subr.bf16.mxu0 %v5588
        %7326 = vmatpush1.bf16.msra.mxu0 %v5587
        %7327 = vmatprep.subr.bf16.mxu0 %v5584
        %7328 = vmatpush1.bf16.msra.mxu0 %v5583
        %7329 = vmatprep.subr.bf16.mxu0 %v5580
        %7330 = vmatpush1.bf16.msra.mxu0 %v5579
        %7331 = vmatprep.subr.bf16.mxu0 %v5576
        %7332 = vmatpush1.bf16.msra.mxu0 %v5575
        %7333 = vmatprep.subr.bf16.mxu0 %v5572
        %7334 = vmatpush1.bf16.msra.mxu0 %v5571
        %7335 = vmatprep.subr.bf16.mxu0 %v5568
        %7336 = vmatpush1.bf16.msra.mxu0 %v5567
        %7337 = vmatprep.subr.bf16.mxu0 %v5628
        %7338 = vmatpush2.bf16.msra.mxu0 %v5627
        %7339 = vmatprep.subr.bf16.mxu0 %v5624
        %7340 = vmatpush2.bf16.msra.mxu0 %v5623
        %7341 = vmatprep.subr.bf16.mxu0 %v5620
        %7342 = vmatpush2.bf16.msra.mxu0 %v5619
        %7343 = vmatprep.subr.bf16.mxu0 %v5616
        %7344 = vmatpush2.bf16.msra.mxu0 %v5615
        %7345 = vmatprep.subr.bf16.mxu0 %v5612
        %7346 = vmatpush2.bf16.msra.mxu0 %v5611
        %7347 = vmatprep.subr.bf16.mxu0 %v5608
        %7348 = vmatpush2.bf16.msra.mxu0 %v5607
        %7349 = vmatprep.subr.bf16.mxu0 %v5604
        %7350 = vmatpush2.bf16.msra.mxu0 %v5603
        %7351 = vmatprep.subr.bf16.mxu0 %v5600
        %7352 = vmatpush2.bf16.msra.mxu0 %v5599
        %7353 = vmatprep.mubr.bf16.mxu0 %v1564
        %7354 = vmatmul.mubr.bf16.gmra.mxu0 %v1563
        %v7355 = vpop.f32.mrf.mxu0
        %v7356 = vadd.f32 %v7313, %v7355
        %v7357 = vpop.f32.mrf.mxu0
        %v7358 = vadd.f32 %v7315, %v7357
        %v7359 = vpop.f32.mrf.mxu0
        %v7360 = vadd.f32 %v7317, %v7359
        %v7361 = vpop.f32.mrf.mxu0
        %v7362 = vadd.f32 %v7319, %v7361
        %7363 = vdwg.mxu0
        %7364 = vmatprep.subr.bf16.mxu0 %v5660
        %7365 = vmatpush1.bf16.msra.mxu0 %v5659
        %7366 = vmatprep.subr.bf16.mxu0 %v5656
        %7367 = vmatpush1.bf16.msra.mxu0 %v5655
        %7368 = vmatprep.subr.bf16.mxu0 %v5652
        %7369 = vmatpush1.bf16.msra.mxu0 %v5651
        %7370 = vmatprep.subr.bf16.mxu0 %v5648
        %7371 = vmatpush1.bf16.msra.mxu0 %v5647
        %7372 = vmatprep.subr.bf16.mxu0 %v5644
        %7373 = vmatpush1.bf16.msra.mxu0 %v5643
        %7374 = vmatprep.subr.bf16.mxu0 %v5640
        %7375 = vmatpush1.bf16.msra.mxu0 %v5639
        %7376 = vmatprep.subr.bf16.mxu0 %v5636
        %7377 = vmatpush1.bf16.msra.mxu0 %v5635
        %7378 = vmatprep.subr.bf16.mxu0 %v5632
        %7379 = vmatpush1.bf16.msra.mxu0 %v5631
        %7380 = vmatprep.subr.bf16.mxu0 %v5692
        %7381 = vmatpush2.bf16.msra.mxu0 %v5691
        %7382 = vmatprep.subr.bf16.mxu0 %v5688
        %7383 = vmatpush2.bf16.msra.mxu0 %v5687
        %7384 = vmatprep.subr.bf16.mxu0 %v5684
        %7385 = vmatpush2.bf16.msra.mxu0 %v5683
        %7386 = vmatprep.subr.bf16.mxu0 %v5680
        %7387 = vmatpush2.bf16.msra.mxu0 %v5679
        %7388 = vmatprep.subr.bf16.mxu0 %v5676
        %7389 = vmatpush2.bf16.msra.mxu0 %v5675
        %7390 = vmatprep.subr.bf16.mxu0 %v5672
        %7391 = vmatpush2.bf16.msra.mxu0 %v5671
        %7392 = vmatprep.subr.bf16.mxu0 %v5668
        %7393 = vmatpush2.bf16.msra.mxu0 %v5667
        %7394 = vmatprep.subr.bf16.mxu0 %v5664
        %7395 = vmatpush2.bf16.msra.mxu0 %v5663
        %7396 = vmatprep.mubr.bf16.mxu0 %v1566
        %7397 = vmatmul.mubr.bf16.gmra.mxu0 %v1565
        %v7398 = vpop.f32.mrf.mxu0
        %v7399 = vadd.f32 %v7356, %v7398
        %v7400 = vpop.f32.mrf.mxu0
        %v7401 = vadd.f32 %v7358, %v7400
        %v7402 = vpop.f32.mrf.mxu0
        %v7403 = vadd.f32 %v7360, %v7402
        %v7404 = vpop.f32.mrf.mxu0
        %v7405 = vadd.f32 %v7362, %v7404
        %7406 = vdwg.mxu0
        %7407 = vmatprep.subr.bf16.mxu0 %v4702
        %7408 = vmatpush1.bf16.msra.mxu0 %v4701
        %7409 = vmatprep.subr.bf16.mxu0 %v4698
        %7410 = vmatpush1.bf16.msra.mxu0 %v4697
        %7411 = vmatprep.subr.bf16.mxu0 %v4694
        %7412 = vmatpush1.bf16.msra.mxu0 %v4693
        %7413 = vmatprep.subr.bf16.mxu0 %v4690
        %7414 = vmatpush1.bf16.msra.mxu0 %v4689
        %7415 = vmatprep.subr.bf16.mxu0 %v4686
        %7416 = vmatpush1.bf16.msra.mxu0 %v4685
        %7417 = vmatprep.subr.bf16.mxu0 %v4682
        %7418 = vmatpush1.bf16.msra.mxu0 %v4681
        %7419 = vmatprep.subr.bf16.mxu0 %v4678
        %7420 = vmatpush1.bf16.msra.mxu0 %v4677
        %7421 = vmatprep.subr.bf16.mxu0 %v4674
        %7422 = vmatpush1.bf16.msra.mxu0 %v4673
        %7423 = vmatprep.subr.bf16.mxu0 %v4734
        %7424 = vmatpush2.bf16.msra.mxu0 %v4733
        %7425 = vmatprep.subr.bf16.mxu0 %v4730
        %7426 = vmatpush2.bf16.msra.mxu0 %v4729
        %7427 = vmatprep.subr.bf16.mxu0 %v4726
        %7428 = vmatpush2.bf16.msra.mxu0 %v4725
        %7429 = vmatprep.subr.bf16.mxu0 %v4722
        %7430 = vmatpush2.bf16.msra.mxu0 %v4721
        %7431 = vmatprep.subr.bf16.mxu0 %v4718
        %7432 = vmatpush2.bf16.msra.mxu0 %v4717
        %7433 = vmatprep.subr.bf16.mxu0 %v4714
        %7434 = vmatpush2.bf16.msra.mxu0 %v4713
        %7435 = vmatprep.subr.bf16.mxu0 %v4710
        %7436 = vmatpush2.bf16.msra.mxu0 %v4709
        %7437 = vmatprep.subr.bf16.mxu0 %v4706
        %7438 = vmatpush2.bf16.msra.mxu0 %v4705
        %7439 = vmatprep.mubr.bf16.mxu0 %v1536
        %7440 = vmatmul.mubr.bf16.gmra.mxu0 %v1535
        %v7441 = vpop.f32.mrf.mxu0
        %v7442 = vadd.f32 0.0, %v7441
        %v7443 = vpop.f32.mrf.mxu0
        %v7444 = vadd.f32 0.0, %v7443
        %v7445 = vpop.f32.mrf.mxu0
        %v7446 = vadd.f32 0.0, %v7445
        %v7447 = vpop.f32.mrf.mxu0
        %v7448 = vadd.f32 0.0, %v7447
        %7449 = vdwg.mxu0
        %7450 = vmatprep.subr.bf16.mxu0 %v4766
        %7451 = vmatpush1.bf16.msra.mxu0 %v4765
        %7452 = vmatprep.subr.bf16.mxu0 %v4762
        %7453 = vmatpush1.bf16.msra.mxu0 %v4761
        %7454 = vmatprep.subr.bf16.mxu0 %v4758
        %7455 = vmatpush1.bf16.msra.mxu0 %v4757
        %7456 = vmatprep.subr.bf16.mxu0 %v4754
        %7457 = vmatpush1.bf16.msra.mxu0 %v4753
        %7458 = vmatprep.subr.bf16.mxu0 %v4750
        %7459 = vmatpush1.bf16.msra.mxu0 %v4749
        %7460 = vmatprep.subr.bf16.mxu0 %v4746
        %7461 = vmatpush1.bf16.msra.mxu0 %v4745
        %7462 = vmatprep.subr.bf16.mxu0 %v4742
        %7463 = vmatpush1.bf16.msra.mxu0 %v4741
        %7464 = vmatprep.subr.bf16.mxu0 %v4738
        %7465 = vmatpush1.bf16.msra.mxu0 %v4737
        %7466 = vmatprep.subr.bf16.mxu0 %v4798
        %7467 = vmatpush2.bf16.msra.mxu0 %v4797
        %7468 = vmatprep.subr.bf16.mxu0 %v4794
        %7469 = vmatpush2.bf16.msra.mxu0 %v4793
        %7470 = vmatprep.subr.bf16.mxu0 %v4790
        %7471 = vmatpush2.bf16.msra.mxu0 %v4789
        %7472 = vmatprep.subr.bf16.mxu0 %v4786
        %7473 = vmatpush2.bf16.msra.mxu0 %v4785
        %7474 = vmatprep.subr.bf16.mxu0 %v4782
        %7475 = vmatpush2.bf16.msra.mxu0 %v4781
        %7476 = vmatprep.subr.bf16.mxu0 %v4778
        %7477 = vmatpush2.bf16.msra.mxu0 %v4777
        %7478 = vmatprep.subr.bf16.mxu0 %v4774
        %7479 = vmatpush2.bf16.msra.mxu0 %v4773
        %7480 = vmatprep.subr.bf16.mxu0 %v4770
        %7481 = vmatpush2.bf16.msra.mxu0 %v4769
        %7482 = vmatprep.mubr.bf16.mxu0 %v1538
        %7483 = vmatmul.mubr.bf16.gmra.mxu0 %v1537
        %v7484 = vpop.f32.mrf.mxu0
        %v7485 = vadd.f32 %v7442, %v7484
        %v7486 = vpop.f32.mrf.mxu0
        %v7487 = vadd.f32 %v7444, %v7486
        %v7488 = vpop.f32.mrf.mxu0
        %v7489 = vadd.f32 %v7446, %v7488
        %v7490 = vpop.f32.mrf.mxu0
        %v7491 = vadd.f32 %v7448, %v7490
        %7492 = vdwg.mxu0
        %7493 = vmatprep.subr.bf16.mxu0 %v4830
        %7494 = vmatpush1.bf16.msra.mxu0 %v4829
        %7495 = vmatprep.subr.bf16.mxu0 %v4826
        %7496 = vmatpush1.bf16.msra.mxu0 %v4825
        %7497 = vmatprep.subr.bf16.mxu0 %v4822
        %7498 = vmatpush1.bf16.msra.mxu0 %v4821
        %7499 = vmatprep.subr.bf16.mxu0 %v4818
        %7500 = vmatpush1.bf16.msra.mxu0 %v4817
        %7501 = vmatprep.subr.bf16.mxu0 %v4814
        %7502 = vmatpush1.bf16.msra.mxu0 %v4813
        %7503 = vmatprep.subr.bf16.mxu0 %v4810
        %7504 = vmatpush1.bf16.msra.mxu0 %v4809
        %7505 = vmatprep.subr.bf16.mxu0 %v4806
        %7506 = vmatpush1.bf16.msra.mxu0 %v4805
        %7507 = vmatprep.subr.bf16.mxu0 %v4802
        %7508 = vmatpush1.bf16.msra.mxu0 %v4801
        %7509 = vmatprep.subr.bf16.mxu0 %v4862
        %7510 = vmatpush2.bf16.msra.mxu0 %v4861
        %7511 = vmatprep.subr.bf16.mxu0 %v4858
        %7512 = vmatpush2.bf16.msra.mxu0 %v4857
        %7513 = vmatprep.subr.bf16.mxu0 %v4854
        %7514 = vmatpush2.bf16.msra.mxu0 %v4853
        %7515 = vmatprep.subr.bf16.mxu0 %v4850
        %7516 = vmatpush2.bf16.msra.mxu0 %v4849
        %7517 = vmatprep.subr.bf16.mxu0 %v4846
        %7518 = vmatpush2.bf16.msra.mxu0 %v4845
        %7519 = vmatprep.subr.bf16.mxu0 %v4842
        %7520 = vmatpush2.bf16.msra.mxu0 %v4841
        %7521 = vmatprep.subr.bf16.mxu0 %v4838
        %7522 = vmatpush2.bf16.msra.mxu0 %v4837
        %7523 = vmatprep.subr.bf16.mxu0 %v4834
        %7524 = vmatpush2.bf16.msra.mxu0 %v4833
        %7525 = vmatprep.mubr.bf16.mxu0 %v1540
        %7526 = vmatmul.mubr.bf16.gmra.mxu0 %v1539
        %v7527 = vpop.f32.mrf.mxu0
        %v7528 = vadd.f32 %v7485, %v7527
        %v7529 = vpop.f32.mrf.mxu0
        %v7530 = vadd.f32 %v7487, %v7529
        %v7531 = vpop.f32.mrf.mxu0
        %v7532 = vadd.f32 %v7489, %v7531
        %v7533 = vpop.f32.mrf.mxu0
        %v7534 = vadd.f32 %v7491, %v7533
        %7535 = vdwg.mxu0
        %7536 = vmatprep.subr.bf16.mxu0 %v4894
        %7537 = vmatpush1.bf16.msra.mxu0 %v4893
        %7538 = vmatprep.subr.bf16.mxu0 %v4890
        %7539 = vmatpush1.bf16.msra.mxu0 %v4889
        %7540 = vmatprep.subr.bf16.mxu0 %v4886
        %7541 = vmatpush1.bf16.msra.mxu0 %v4885
        %7542 = vmatprep.subr.bf16.mxu0 %v4882
        %7543 = vmatpush1.bf16.msra.mxu0 %v4881
        %7544 = vmatprep.subr.bf16.mxu0 %v4878
        %7545 = vmatpush1.bf16.msra.mxu0 %v4877
        %7546 = vmatprep.subr.bf16.mxu0 %v4874
        %7547 = vmatpush1.bf16.msra.mxu0 %v4873
        %7548 = vmatprep.subr.bf16.mxu0 %v4870
        %7549 = vmatpush1.bf16.msra.mxu0 %v4869
        %7550 = vmatprep.subr.bf16.mxu0 %v4866
        %7551 = vmatpush1.bf16.msra.mxu0 %v4865
        %7552 = vmatprep.subr.bf16.mxu0 %v4926
        %7553 = vmatpush2.bf16.msra.mxu0 %v4925
        %7554 = vmatprep.subr.bf16.mxu0 %v4922
        %7555 = vmatpush2.bf16.msra.mxu0 %v4921
        %7556 = vmatprep.subr.bf16.mxu0 %v4918
        %7557 = vmatpush2.bf16.msra.mxu0 %v4917
        %7558 = vmatprep.subr.bf16.mxu0 %v4914
        %7559 = vmatpush2.bf16.msra.mxu0 %v4913
        %7560 = vmatprep.subr.bf16.mxu0 %v4910
        %7561 = vmatpush2.bf16.msra.mxu0 %v4909
        %7562 = vmatprep.subr.bf16.mxu0 %v4906
        %7563 = vmatpush2.bf16.msra.mxu0 %v4905
        %7564 = vmatprep.subr.bf16.mxu0 %v4902
        %7565 = vmatpush2.bf16.msra.mxu0 %v4901
        %7566 = vmatprep.subr.bf16.mxu0 %v4898
        %7567 = vmatpush2.bf16.msra.mxu0 %v4897
        %7568 = vmatprep.mubr.bf16.mxu0 %v1542
        %7569 = vmatmul.mubr.bf16.gmra.mxu0 %v1541
        %v7570 = vpop.f32.mrf.mxu0
        %v7571 = vadd.f32 %v7528, %v7570
        %v7572 = vpop.f32.mrf.mxu0
        %v7573 = vadd.f32 %v7530, %v7572
        %v7574 = vpop.f32.mrf.mxu0
        %v7575 = vadd.f32 %v7532, %v7574
        %v7576 = vpop.f32.mrf.mxu0
        %v7577 = vadd.f32 %v7534, %v7576
        %7578 = vdwg.mxu0
        %7579 = vmatprep.subr.bf16.mxu0 %v4958
        %7580 = vmatpush1.bf16.msra.mxu0 %v4957
        %7581 = vmatprep.subr.bf16.mxu0 %v4954
        %7582 = vmatpush1.bf16.msra.mxu0 %v4953
        %7583 = vmatprep.subr.bf16.mxu0 %v4950
        %7584 = vmatpush1.bf16.msra.mxu0 %v4949
        %7585 = vmatprep.subr.bf16.mxu0 %v4946
        %7586 = vmatpush1.bf16.msra.mxu0 %v4945
        %7587 = vmatprep.subr.bf16.mxu0 %v4942
        %7588 = vmatpush1.bf16.msra.mxu0 %v4941
        %7589 = vmatprep.subr.bf16.mxu0 %v4938
        %7590 = vmatpush1.bf16.msra.mxu0 %v4937
        %7591 = vmatprep.subr.bf16.mxu0 %v4934
        %7592 = vmatpush1.bf16.msra.mxu0 %v4933
        %7593 = vmatprep.subr.bf16.mxu0 %v4930
        %7594 = vmatpush1.bf16.msra.mxu0 %v4929
        %7595 = vmatprep.subr.bf16.mxu0 %v4990
        %7596 = vmatpush2.bf16.msra.mxu0 %v4989
        %7597 = vmatprep.subr.bf16.mxu0 %v4986
        %7598 = vmatpush2.bf16.msra.mxu0 %v4985
        %7599 = vmatprep.subr.bf16.mxu0 %v4982
        %7600 = vmatpush2.bf16.msra.mxu0 %v4981
        %7601 = vmatprep.subr.bf16.mxu0 %v4978
        %7602 = vmatpush2.bf16.msra.mxu0 %v4977
        %7603 = vmatprep.subr.bf16.mxu0 %v4974
        %7604 = vmatpush2.bf16.msra.mxu0 %v4973
        %7605 = vmatprep.subr.bf16.mxu0 %v4970
        %7606 = vmatpush2.bf16.msra.mxu0 %v4969
        %7607 = vmatprep.subr.bf16.mxu0 %v4966
        %7608 = vmatpush2.bf16.msra.mxu0 %v4965
        %7609 = vmatprep.subr.bf16.mxu0 %v4962
        %7610 = vmatpush2.bf16.msra.mxu0 %v4961
        %7611 = vmatprep.mubr.bf16.mxu0 %v1544
        %7612 = vmatmul.mubr.bf16.gmra.mxu0 %v1543
        %v7613 = vpop.f32.mrf.mxu0
        %v7614 = vadd.f32 %v7571, %v7613
        %v7615 = vpop.f32.mrf.mxu0
        %v7616 = vadd.f32 %v7573, %v7615
        %v7617 = vpop.f32.mrf.mxu0
        %v7618 = vadd.f32 %v7575, %v7617
        %v7619 = vpop.f32.mrf.mxu0
        %v7620 = vadd.f32 %v7577, %v7619
        %7621 = vdwg.mxu0
        %7622 = vmatprep.subr.bf16.mxu0 %v5022
        %7623 = vmatpush1.bf16.msra.mxu0 %v5021
        %7624 = vmatprep.subr.bf16.mxu0 %v5018
        %7625 = vmatpush1.bf16.msra.mxu0 %v5017
        %7626 = vmatprep.subr.bf16.mxu0 %v5014
        %7627 = vmatpush1.bf16.msra.mxu0 %v5013
        %7628 = vmatprep.subr.bf16.mxu0 %v5010
        %7629 = vmatpush1.bf16.msra.mxu0 %v5009
        %7630 = vmatprep.subr.bf16.mxu0 %v5006
        %7631 = vmatpush1.bf16.msra.mxu0 %v5005
        %7632 = vmatprep.subr.bf16.mxu0 %v5002
        %7633 = vmatpush1.bf16.msra.mxu0 %v5001
        %7634 = vmatprep.subr.bf16.mxu0 %v4998
        %7635 = vmatpush1.bf16.msra.mxu0 %v4997
        %7636 = vmatprep.subr.bf16.mxu0 %v4994
        %7637 = vmatpush1.bf16.msra.mxu0 %v4993
        %7638 = vmatprep.subr.bf16.mxu0 %v5054
        %7639 = vmatpush2.bf16.msra.mxu0 %v5053
        %7640 = vmatprep.subr.bf16.mxu0 %v5050
        %7641 = vmatpush2.bf16.msra.mxu0 %v5049
        %7642 = vmatprep.subr.bf16.mxu0 %v5046
        %7643 = vmatpush2.bf16.msra.mxu0 %v5045
        %7644 = vmatprep.subr.bf16.mxu0 %v5042
        %7645 = vmatpush2.bf16.msra.mxu0 %v5041
        %7646 = vmatprep.subr.bf16.mxu0 %v5038
        %7647 = vmatpush2.bf16.msra.mxu0 %v5037
        %7648 = vmatprep.subr.bf16.mxu0 %v5034
        %7649 = vmatpush2.bf16.msra.mxu0 %v5033
        %7650 = vmatprep.subr.bf16.mxu0 %v5030
        %7651 = vmatpush2.bf16.msra.mxu0 %v5029
        %7652 = vmatprep.subr.bf16.mxu0 %v5026
        %7653 = vmatpush2.bf16.msra.mxu0 %v5025
        %7654 = vmatprep.mubr.bf16.mxu0 %v1546
        %7655 = vmatmul.mubr.bf16.gmra.mxu0 %v1545
        %v7656 = vpop.f32.mrf.mxu0
        %v7657 = vadd.f32 %v7614, %v7656
        %v7658 = vpop.f32.mrf.mxu0
        %v7659 = vadd.f32 %v7616, %v7658
        %v7660 = vpop.f32.mrf.mxu0
        %v7661 = vadd.f32 %v7618, %v7660
        %v7662 = vpop.f32.mrf.mxu0
        %v7663 = vadd.f32 %v7620, %v7662
        %7664 = vdwg.mxu0
        %7665 = vmatprep.subr.bf16.mxu0 %v5086
        %7666 = vmatpush1.bf16.msra.mxu0 %v5085
        %7667 = vmatprep.subr.bf16.mxu0 %v5082
        %7668 = vmatpush1.bf16.msra.mxu0 %v5081
        %7669 = vmatprep.subr.bf16.mxu0 %v5078
        %7670 = vmatpush1.bf16.msra.mxu0 %v5077
        %7671 = vmatprep.subr.bf16.mxu0 %v5074
        %7672 = vmatpush1.bf16.msra.mxu0 %v5073
        %7673 = vmatprep.subr.bf16.mxu0 %v5070
        %7674 = vmatpush1.bf16.msra.mxu0 %v5069
        %7675 = vmatprep.subr.bf16.mxu0 %v5066
        %7676 = vmatpush1.bf16.msra.mxu0 %v5065
        %7677 = vmatprep.subr.bf16.mxu0 %v5062
        %7678 = vmatpush1.bf16.msra.mxu0 %v5061
        %7679 = vmatprep.subr.bf16.mxu0 %v5058
        %7680 = vmatpush1.bf16.msra.mxu0 %v5057
        %7681 = vmatprep.subr.bf16.mxu0 %v5118
        %7682 = vmatpush2.bf16.msra.mxu0 %v5117
        %7683 = vmatprep.subr.bf16.mxu0 %v5114
        %7684 = vmatpush2.bf16.msra.mxu0 %v5113
        %7685 = vmatprep.subr.bf16.mxu0 %v5110
        %7686 = vmatpush2.bf16.msra.mxu0 %v5109
        %7687 = vmatprep.subr.bf16.mxu0 %v5106
        %7688 = vmatpush2.bf16.msra.mxu0 %v5105
        %7689 = vmatprep.subr.bf16.mxu0 %v5102
        %7690 = vmatpush2.bf16.msra.mxu0 %v5101
        %7691 = vmatprep.subr.bf16.mxu0 %v5098
        %7692 = vmatpush2.bf16.msra.mxu0 %v5097
        %7693 = vmatprep.subr.bf16.mxu0 %v5094
        %7694 = vmatpush2.bf16.msra.mxu0 %v5093
        %7695 = vmatprep.subr.bf16.mxu0 %v5090
        %7696 = vmatpush2.bf16.msra.mxu0 %v5089
        %7697 = vmatprep.mubr.bf16.mxu0 %v1548
        %7698 = vmatmul.mubr.bf16.gmra.mxu0 %v1547
        %v7699 = vpop.f32.mrf.mxu0
        %v7700 = vadd.f32 %v7657, %v7699
        %v7701 = vpop.f32.mrf.mxu0
        %v7702 = vadd.f32 %v7659, %v7701
        %v7703 = vpop.f32.mrf.mxu0
        %v7704 = vadd.f32 %v7661, %v7703
        %v7705 = vpop.f32.mrf.mxu0
        %v7706 = vadd.f32 %v7663, %v7705
        %7707 = vdwg.mxu0
        %7708 = vmatprep.subr.bf16.mxu0 %v5150
        %7709 = vmatpush1.bf16.msra.mxu0 %v5149
        %7710 = vmatprep.subr.bf16.mxu0 %v5146
        %7711 = vmatpush1.bf16.msra.mxu0 %v5145
        %7712 = vmatprep.subr.bf16.mxu0 %v5142
        %7713 = vmatpush1.bf16.msra.mxu0 %v5141
        %7714 = vmatprep.subr.bf16.mxu0 %v5138
        %7715 = vmatpush1.bf16.msra.mxu0 %v5137
        %7716 = vmatprep.subr.bf16.mxu0 %v5134
        %7717 = vmatpush1.bf16.msra.mxu0 %v5133
        %7718 = vmatprep.subr.bf16.mxu0 %v5130
        %7719 = vmatpush1.bf16.msra.mxu0 %v5129
        %7720 = vmatprep.subr.bf16.mxu0 %v5126
        %7721 = vmatpush1.bf16.msra.mxu0 %v5125
        %7722 = vmatprep.subr.bf16.mxu0 %v5122
        %7723 = vmatpush1.bf16.msra.mxu0 %v5121
        %7724 = vmatprep.subr.bf16.mxu0 %v5182
        %7725 = vmatpush2.bf16.msra.mxu0 %v5181
        %7726 = vmatprep.subr.bf16.mxu0 %v5178
        %7727 = vmatpush2.bf16.msra.mxu0 %v5177
        %7728 = vmatprep.subr.bf16.mxu0 %v5174
        %7729 = vmatpush2.bf16.msra.mxu0 %v5173
        %7730 = vmatprep.subr.bf16.mxu0 %v5170
        %7731 = vmatpush2.bf16.msra.mxu0 %v5169
        %7732 = vmatprep.subr.bf16.mxu0 %v5166
        %7733 = vmatpush2.bf16.msra.mxu0 %v5165
        %7734 = vmatprep.subr.bf16.mxu0 %v5162
        %7735 = vmatpush2.bf16.msra.mxu0 %v5161
        %7736 = vmatprep.subr.bf16.mxu0 %v5158
        %7737 = vmatpush2.bf16.msra.mxu0 %v5157
        %7738 = vmatprep.subr.bf16.mxu0 %v5154
        %7739 = vmatpush2.bf16.msra.mxu0 %v5153
        %7740 = vmatprep.mubr.bf16.mxu0 %v1550
        %7741 = vmatmul.mubr.bf16.gmra.mxu0 %v1549
        %v7742 = vpop.f32.mrf.mxu0
        %v7743 = vadd.f32 %v7700, %v7742
        %v7744 = vpop.f32.mrf.mxu0
        %v7745 = vadd.f32 %v7702, %v7744
        %v7746 = vpop.f32.mrf.mxu0
        %v7747 = vadd.f32 %v7704, %v7746
        %v7748 = vpop.f32.mrf.mxu0
        %v7749 = vadd.f32 %v7706, %v7748
        %7750 = vdwg.mxu0
        %7751 = vmatprep.subr.bf16.mxu0 %v5214
        %7752 = vmatpush1.bf16.msra.mxu0 %v5213
        %7753 = vmatprep.subr.bf16.mxu0 %v5210
        %7754 = vmatpush1.bf16.msra.mxu0 %v5209
        %7755 = vmatprep.subr.bf16.mxu0 %v5206
        %7756 = vmatpush1.bf16.msra.mxu0 %v5205
        %7757 = vmatprep.subr.bf16.mxu0 %v5202
        %7758 = vmatpush1.bf16.msra.mxu0 %v5201
        %7759 = vmatprep.subr.bf16.mxu0 %v5198
        %7760 = vmatpush1.bf16.msra.mxu0 %v5197
        %7761 = vmatprep.subr.bf16.mxu0 %v5194
        %7762 = vmatpush1.bf16.msra.mxu0 %v5193
        %7763 = vmatprep.subr.bf16.mxu0 %v5190
        %7764 = vmatpush1.bf16.msra.mxu0 %v5189
        %7765 = vmatprep.subr.bf16.mxu0 %v5186
        %7766 = vmatpush1.bf16.msra.mxu0 %v5185
        %7767 = vmatprep.subr.bf16.mxu0 %v5246
        %7768 = vmatpush2.bf16.msra.mxu0 %v5245
        %7769 = vmatprep.subr.bf16.mxu0 %v5242
        %7770 = vmatpush2.bf16.msra.mxu0 %v5241
        %7771 = vmatprep.subr.bf16.mxu0 %v5238
        %7772 = vmatpush2.bf16.msra.mxu0 %v5237
        %7773 = vmatprep.subr.bf16.mxu0 %v5234
        %7774 = vmatpush2.bf16.msra.mxu0 %v5233
        %7775 = vmatprep.subr.bf16.mxu0 %v5230
        %7776 = vmatpush2.bf16.msra.mxu0 %v5229
        %7777 = vmatprep.subr.bf16.mxu0 %v5226
        %7778 = vmatpush2.bf16.msra.mxu0 %v5225
        %7779 = vmatprep.subr.bf16.mxu0 %v5222
        %7780 = vmatpush2.bf16.msra.mxu0 %v5221
        %7781 = vmatprep.subr.bf16.mxu0 %v5218
        %7782 = vmatpush2.bf16.msra.mxu0 %v5217
        %7783 = vmatprep.mubr.bf16.mxu0 %v1552
        %7784 = vmatmul.mubr.bf16.gmra.mxu0 %v1551
        %v7785 = vpop.f32.mrf.mxu0
        %v7786 = vadd.f32 %v7743, %v7785
        %v7787 = vpop.f32.mrf.mxu0
        %v7788 = vadd.f32 %v7745, %v7787
        %v7789 = vpop.f32.mrf.mxu0
        %v7790 = vadd.f32 %v7747, %v7789
        %v7791 = vpop.f32.mrf.mxu0
        %v7792 = vadd.f32 %v7749, %v7791
        %7793 = vdwg.mxu0
        %7794 = vmatprep.subr.bf16.mxu0 %v5278
        %7795 = vmatpush1.bf16.msra.mxu0 %v5277
        %7796 = vmatprep.subr.bf16.mxu0 %v5274
        %7797 = vmatpush1.bf16.msra.mxu0 %v5273
        %7798 = vmatprep.subr.bf16.mxu0 %v5270
        %7799 = vmatpush1.bf16.msra.mxu0 %v5269
        %7800 = vmatprep.subr.bf16.mxu0 %v5266
        %7801 = vmatpush1.bf16.msra.mxu0 %v5265
        %7802 = vmatprep.subr.bf16.mxu0 %v5262
        %7803 = vmatpush1.bf16.msra.mxu0 %v5261
        %7804 = vmatprep.subr.bf16.mxu0 %v5258
        %7805 = vmatpush1.bf16.msra.mxu0 %v5257
        %7806 = vmatprep.subr.bf16.mxu0 %v5254
        %7807 = vmatpush1.bf16.msra.mxu0 %v5253
        %7808 = vmatprep.subr.bf16.mxu0 %v5250
        %7809 = vmatpush1.bf16.msra.mxu0 %v5249
        %7810 = vmatprep.subr.bf16.mxu0 %v5310
        %7811 = vmatpush2.bf16.msra.mxu0 %v5309
        %7812 = vmatprep.subr.bf16.mxu0 %v5306
        %7813 = vmatpush2.bf16.msra.mxu0 %v5305
        %7814 = vmatprep.subr.bf16.mxu0 %v5302
        %7815 = vmatpush2.bf16.msra.mxu0 %v5301
        %7816 = vmatprep.subr.bf16.mxu0 %v5298
        %7817 = vmatpush2.bf16.msra.mxu0 %v5297
        %7818 = vmatprep.subr.bf16.mxu0 %v5294
        %7819 = vmatpush2.bf16.msra.mxu0 %v5293
        %7820 = vmatprep.subr.bf16.mxu0 %v5290
        %7821 = vmatpush2.bf16.msra.mxu0 %v5289
        %7822 = vmatprep.subr.bf16.mxu0 %v5286
        %7823 = vmatpush2.bf16.msra.mxu0 %v5285
        %7824 = vmatprep.subr.bf16.mxu0 %v5282
        %7825 = vmatpush2.bf16.msra.mxu0 %v5281
        %7826 = vmatprep.mubr.bf16.mxu0 %v1554
        %7827 = vmatmul.mubr.bf16.gmra.mxu0 %v1553
        %v7828 = vpop.f32.mrf.mxu0
        %v7829 = vadd.f32 %v7786, %v7828
        %v7830 = vpop.f32.mrf.mxu0
        %v7831 = vadd.f32 %v7788, %v7830
        %v7832 = vpop.f32.mrf.mxu0
        %v7833 = vadd.f32 %v7790, %v7832
        %v7834 = vpop.f32.mrf.mxu0
        %v7835 = vadd.f32 %v7792, %v7834
        %7836 = vdwg.mxu0
        %7837 = vmatprep.subr.bf16.mxu0 %v5342
        %7838 = vmatpush1.bf16.msra.mxu0 %v5341
        %7839 = vmatprep.subr.bf16.mxu0 %v5338
        %7840 = vmatpush1.bf16.msra.mxu0 %v5337
        %7841 = vmatprep.subr.bf16.mxu0 %v5334
        %7842 = vmatpush1.bf16.msra.mxu0 %v5333
        %7843 = vmatprep.subr.bf16.mxu0 %v5330
        %7844 = vmatpush1.bf16.msra.mxu0 %v5329
        %7845 = vmatprep.subr.bf16.mxu0 %v5326
        %7846 = vmatpush1.bf16.msra.mxu0 %v5325
        %7847 = vmatprep.subr.bf16.mxu0 %v5322
        %7848 = vmatpush1.bf16.msra.mxu0 %v5321
        %7849 = vmatprep.subr.bf16.mxu0 %v5318
        %7850 = vmatpush1.bf16.msra.mxu0 %v5317
        %7851 = vmatprep.subr.bf16.mxu0 %v5314
        %7852 = vmatpush1.bf16.msra.mxu0 %v5313
        %7853 = vmatprep.subr.bf16.mxu0 %v5374
        %7854 = vmatpush2.bf16.msra.mxu0 %v5373
        %7855 = vmatprep.subr.bf16.mxu0 %v5370
        %7856 = vmatpush2.bf16.msra.mxu0 %v5369
        %7857 = vmatprep.subr.bf16.mxu0 %v5366
        %7858 = vmatpush2.bf16.msra.mxu0 %v5365
        %7859 = vmatprep.subr.bf16.mxu0 %v5362
        %7860 = vmatpush2.bf16.msra.mxu0 %v5361
        %7861 = vmatprep.subr.bf16.mxu0 %v5358
        %7862 = vmatpush2.bf16.msra.mxu0 %v5357
        %7863 = vmatprep.subr.bf16.mxu0 %v5354
        %7864 = vmatpush2.bf16.msra.mxu0 %v5353
        %7865 = vmatprep.subr.bf16.mxu0 %v5350
        %7866 = vmatpush2.bf16.msra.mxu0 %v5349
        %7867 = vmatprep.subr.bf16.mxu0 %v5346
        %7868 = vmatpush2.bf16.msra.mxu0 %v5345
        %7869 = vmatprep.mubr.bf16.mxu0 %v1556
        %7870 = vmatmul.mubr.bf16.gmra.mxu0 %v1555
        %v7871 = vpop.f32.mrf.mxu0
        %v7872 = vadd.f32 %v7829, %v7871
        %v7873 = vpop.f32.mrf.mxu0
        %v7874 = vadd.f32 %v7831, %v7873
        %v7875 = vpop.f32.mrf.mxu0
        %v7876 = vadd.f32 %v7833, %v7875
        %v7877 = vpop.f32.mrf.mxu0
        %v7878 = vadd.f32 %v7835, %v7877
        %7879 = vdwg.mxu0
        %7880 = vmatprep.subr.bf16.mxu0 %v5406
        %7881 = vmatpush1.bf16.msra.mxu0 %v5405
        %7882 = vmatprep.subr.bf16.mxu0 %v5402
        %7883 = vmatpush1.bf16.msra.mxu0 %v5401
        %7884 = vmatprep.subr.bf16.mxu0 %v5398
        %7885 = vmatpush1.bf16.msra.mxu0 %v5397
        %7886 = vmatprep.subr.bf16.mxu0 %v5394
        %7887 = vmatpush1.bf16.msra.mxu0 %v5393
        %7888 = vmatprep.subr.bf16.mxu0 %v5390
        %7889 = vmatpush1.bf16.msra.mxu0 %v5389
        %7890 = vmatprep.subr.bf16.mxu0 %v5386
        %7891 = vmatpush1.bf16.msra.mxu0 %v5385
        %7892 = vmatprep.subr.bf16.mxu0 %v5382
        %7893 = vmatpush1.bf16.msra.mxu0 %v5381
        %7894 = vmatprep.subr.bf16.mxu0 %v5378
        %7895 = vmatpush1.bf16.msra.mxu0 %v5377
        %7896 = vmatprep.subr.bf16.mxu0 %v5438
        %7897 = vmatpush2.bf16.msra.mxu0 %v5437
        %7898 = vmatprep.subr.bf16.mxu0 %v5434
        %7899 = vmatpush2.bf16.msra.mxu0 %v5433
        %7900 = vmatprep.subr.bf16.mxu0 %v5430
        %7901 = vmatpush2.bf16.msra.mxu0 %v5429
        %7902 = vmatprep.subr.bf16.mxu0 %v5426
        %7903 = vmatpush2.bf16.msra.mxu0 %v5425
        %7904 = vmatprep.subr.bf16.mxu0 %v5422
        %7905 = vmatpush2.bf16.msra.mxu0 %v5421
        %7906 = vmatprep.subr.bf16.mxu0 %v5418
        %7907 = vmatpush2.bf16.msra.mxu0 %v5417
        %7908 = vmatprep.subr.bf16.mxu0 %v5414
        %7909 = vmatpush2.bf16.msra.mxu0 %v5413
        %7910 = vmatprep.subr.bf16.mxu0 %v5410
        %7911 = vmatpush2.bf16.msra.mxu0 %v5409
        %7912 = vmatprep.mubr.bf16.mxu0 %v1558
        %7913 = vmatmul.mubr.bf16.gmra.mxu0 %v1557
        %v7914 = vpop.f32.mrf.mxu0
        %v7915 = vadd.f32 %v7872, %v7914
        %v7916 = vpop.f32.mrf.mxu0
        %v7917 = vadd.f32 %v7874, %v7916
        %v7918 = vpop.f32.mrf.mxu0
        %v7919 = vadd.f32 %v7876, %v7918
        %v7920 = vpop.f32.mrf.mxu0
        %v7921 = vadd.f32 %v7878, %v7920
        %7922 = vdwg.mxu0
        %7923 = vmatprep.subr.bf16.mxu0 %v5470
        %7924 = vmatpush1.bf16.msra.mxu0 %v5469
        %7925 = vmatprep.subr.bf16.mxu0 %v5466
        %7926 = vmatpush1.bf16.msra.mxu0 %v5465
        %7927 = vmatprep.subr.bf16.mxu0 %v5462
        %7928 = vmatpush1.bf16.msra.mxu0 %v5461
        %7929 = vmatprep.subr.bf16.mxu0 %v5458
        %7930 = vmatpush1.bf16.msra.mxu0 %v5457
        %7931 = vmatprep.subr.bf16.mxu0 %v5454
        %7932 = vmatpush1.bf16.msra.mxu0 %v5453
        %7933 = vmatprep.subr.bf16.mxu0 %v5450
        %7934 = vmatpush1.bf16.msra.mxu0 %v5449
        %7935 = vmatprep.subr.bf16.mxu0 %v5446
        %7936 = vmatpush1.bf16.msra.mxu0 %v5445
        %7937 = vmatprep.subr.bf16.mxu0 %v5442
        %7938 = vmatpush1.bf16.msra.mxu0 %v5441
        %7939 = vmatprep.subr.bf16.mxu0 %v5502
        %7940 = vmatpush2.bf16.msra.mxu0 %v5501
        %7941 = vmatprep.subr.bf16.mxu0 %v5498
        %7942 = vmatpush2.bf16.msra.mxu0 %v5497
        %7943 = vmatprep.subr.bf16.mxu0 %v5494
        %7944 = vmatpush2.bf16.msra.mxu0 %v5493
        %7945 = vmatprep.subr.bf16.mxu0 %v5490
        %7946 = vmatpush2.bf16.msra.mxu0 %v5489
        %7947 = vmatprep.subr.bf16.mxu0 %v5486
        %7948 = vmatpush2.bf16.msra.mxu0 %v5485
        %7949 = vmatprep.subr.bf16.mxu0 %v5482
        %7950 = vmatpush2.bf16.msra.mxu0 %v5481
        %7951 = vmatprep.subr.bf16.mxu0 %v5478
        %7952 = vmatpush2.bf16.msra.mxu0 %v5477
        %7953 = vmatprep.subr.bf16.mxu0 %v5474
        %7954 = vmatpush2.bf16.msra.mxu0 %v5473
        %7955 = vmatprep.mubr.bf16.mxu0 %v1560
        %7956 = vmatmul.mubr.bf16.gmra.mxu0 %v1559
        %v7957 = vpop.f32.mrf.mxu0
        %v7958 = vadd.f32 %v7915, %v7957
        %v7959 = vpop.f32.mrf.mxu0
        %v7960 = vadd.f32 %v7917, %v7959
        %v7961 = vpop.f32.mrf.mxu0
        %v7962 = vadd.f32 %v7919, %v7961
        %v7963 = vpop.f32.mrf.mxu0
        %v7964 = vadd.f32 %v7921, %v7963
        %7965 = vdwg.mxu0
        %7966 = vmatprep.subr.bf16.mxu0 %v5534
        %7967 = vmatpush1.bf16.msra.mxu0 %v5533
        %7968 = vmatprep.subr.bf16.mxu0 %v5530
        %7969 = vmatpush1.bf16.msra.mxu0 %v5529
        %7970 = vmatprep.subr.bf16.mxu0 %v5526
        %7971 = vmatpush1.bf16.msra.mxu0 %v5525
        %7972 = vmatprep.subr.bf16.mxu0 %v5522
        %7973 = vmatpush1.bf16.msra.mxu0 %v5521
        %7974 = vmatprep.subr.bf16.mxu0 %v5518
        %7975 = vmatpush1.bf16.msra.mxu0 %v5517
        %7976 = vmatprep.subr.bf16.mxu0 %v5514
        %7977 = vmatpush1.bf16.msra.mxu0 %v5513
        %7978 = vmatprep.subr.bf16.mxu0 %v5510
        %7979 = vmatpush1.bf16.msra.mxu0 %v5509
        %7980 = vmatprep.subr.bf16.mxu0 %v5506
        %7981 = vmatpush1.bf16.msra.mxu0 %v5505
        %7982 = vmatprep.subr.bf16.mxu0 %v5566
        %7983 = vmatpush2.bf16.msra.mxu0 %v5565
        %7984 = vmatprep.subr.bf16.mxu0 %v5562
        %7985 = vmatpush2.bf16.msra.mxu0 %v5561
        %7986 = vmatprep.subr.bf16.mxu0 %v5558
        %7987 = vmatpush2.bf16.msra.mxu0 %v5557
        %7988 = vmatprep.subr.bf16.mxu0 %v5554
        %7989 = vmatpush2.bf16.msra.mxu0 %v5553
        %7990 = vmatprep.subr.bf16.mxu0 %v5550
        %7991 = vmatpush2.bf16.msra.mxu0 %v5549
        %7992 = vmatprep.subr.bf16.mxu0 %v5546
        %7993 = vmatpush2.bf16.msra.mxu0 %v5545
        %7994 = vmatprep.subr.bf16.mxu0 %v5542
        %7995 = vmatpush2.bf16.msra.mxu0 %v5541
        %7996 = vmatprep.subr.bf16.mxu0 %v5538
        %7997 = vmatpush2.bf16.msra.mxu0 %v5537
        %7998 = vmatprep.mubr.bf16.mxu0 %v1562
        %7999 = vmatmul.mubr.bf16.gmra.mxu0 %v1561
        %v8000 = vpop.f32.mrf.mxu0
        %v8001 = vadd.f32 %v7958, %v8000
        %v8002 = vpop.f32.mrf.mxu0
        %v8003 = vadd.f32 %v7960, %v8002
        %v8004 = vpop.f32.mrf.mxu0
        %v8005 = vadd.f32 %v7962, %v8004
        %v8006 = vpop.f32.mrf.mxu0
        %v8007 = vadd.f32 %v7964, %v8006
        %8008 = vdwg.mxu0
        %8009 = vmatprep.subr.bf16.mxu0 %v5598
        %8010 = vmatpush1.bf16.msra.mxu0 %v5597
        %8011 = vmatprep.subr.bf16.mxu0 %v5594
        %8012 = vmatpush1.bf16.msra.mxu0 %v5593
        %8013 = vmatprep.subr.bf16.mxu0 %v5590
        %8014 = vmatpush1.bf16.msra.mxu0 %v5589
        %8015 = vmatprep.subr.bf16.mxu0 %v5586
        %8016 = vmatpush1.bf16.msra.mxu0 %v5585
        %8017 = vmatprep.subr.bf16.mxu0 %v5582
        %8018 = vmatpush1.bf16.msra.mxu0 %v5581
        %8019 = vmatprep.subr.bf16.mxu0 %v5578
        %8020 = vmatpush1.bf16.msra.mxu0 %v5577
        %8021 = vmatprep.subr.bf16.mxu0 %v5574
        %8022 = vmatpush1.bf16.msra.mxu0 %v5573
        %8023 = vmatprep.subr.bf16.mxu0 %v5570
        %8024 = vmatpush1.bf16.msra.mxu0 %v5569
        %8025 = vmatprep.subr.bf16.mxu0 %v5630
        %8026 = vmatpush2.bf16.msra.mxu0 %v5629
        %8027 = vmatprep.subr.bf16.mxu0 %v5626
        %8028 = vmatpush2.bf16.msra.mxu0 %v5625
        %8029 = vmatprep.subr.bf16.mxu0 %v5622
        %8030 = vmatpush2.bf16.msra.mxu0 %v5621
        %8031 = vmatprep.subr.bf16.mxu0 %v5618
        %8032 = vmatpush2.bf16.msra.mxu0 %v5617
        %8033 = vmatprep.subr.bf16.mxu0 %v5614
        %8034 = vmatpush2.bf16.msra.mxu0 %v5613
        %8035 = vmatprep.subr.bf16.mxu0 %v5610
        %8036 = vmatpush2.bf16.msra.mxu0 %v5609
        %8037 = vmatprep.subr.bf16.mxu0 %v5606
        %8038 = vmatpush2.bf16.msra.mxu0 %v5605
        %8039 = vmatprep.subr.bf16.mxu0 %v5602
        %8040 = vmatpush2.bf16.msra.mxu0 %v5601
        %8041 = vmatprep.mubr.bf16.mxu0 %v1564
        %8042 = vmatmul.mubr.bf16.gmra.mxu0 %v1563
        %v8043 = vpop.f32.mrf.mxu0
        %v8044 = vadd.f32 %v8001, %v8043
        %v8045 = vpop.f32.mrf.mxu0
        %v8046 = vadd.f32 %v8003, %v8045
        %v8047 = vpop.f32.mrf.mxu0
        %v8048 = vadd.f32 %v8005, %v8047
        %v8049 = vpop.f32.mrf.mxu0
        %v8050 = vadd.f32 %v8007, %v8049
        %8051 = vdwg.mxu0
        %8052 = vmatprep.subr.bf16.mxu0 %v5662
        %8053 = vmatpush1.bf16.msra.mxu0 %v5661
        %8054 = vmatprep.subr.bf16.mxu0 %v5658
        %8055 = vmatpush1.bf16.msra.mxu0 %v5657
        %8056 = vmatprep.subr.bf16.mxu0 %v5654
        %8057 = vmatpush1.bf16.msra.mxu0 %v5653
        %8058 = vmatprep.subr.bf16.mxu0 %v5650
        %8059 = vmatpush1.bf16.msra.mxu0 %v5649
        %8060 = vmatprep.subr.bf16.mxu0 %v5646
        %8061 = vmatpush1.bf16.msra.mxu0 %v5645
        %8062 = vmatprep.subr.bf16.mxu0 %v5642
        %8063 = vmatpush1.bf16.msra.mxu0 %v5641
        %8064 = vmatprep.subr.bf16.mxu0 %v5638
        %8065 = vmatpush1.bf16.msra.mxu0 %v5637
        %8066 = vmatprep.subr.bf16.mxu0 %v5634
        %8067 = vmatpush1.bf16.msra.mxu0 %v5633
        %8068 = vmatprep.subr.bf16.mxu0 %v5694
        %8069 = vmatpush2.bf16.msra.mxu0 %v5693
        %8070 = vmatprep.subr.bf16.mxu0 %v5690
        %8071 = vmatpush2.bf16.msra.mxu0 %v5689
        %8072 = vmatprep.subr.bf16.mxu0 %v5686
        %8073 = vmatpush2.bf16.msra.mxu0 %v5685
        %8074 = vmatprep.subr.bf16.mxu0 %v5682
        %8075 = vmatpush2.bf16.msra.mxu0 %v5681
        %8076 = vmatprep.subr.bf16.mxu0 %v5678
        %8077 = vmatpush2.bf16.msra.mxu0 %v5677
        %8078 = vmatprep.subr.bf16.mxu0 %v5674
        %8079 = vmatpush2.bf16.msra.mxu0 %v5673
        %8080 = vmatprep.subr.bf16.mxu0 %v5670
        %8081 = vmatpush2.bf16.msra.mxu0 %v5669
        %8082 = vmatprep.subr.bf16.mxu0 %v5666
        %8083 = vmatpush2.bf16.msra.mxu0 %v5665
        %8084 = vmatprep.mubr.bf16.mxu0 %v1566
        %8085 = vmatmul.mubr.bf16.gmra.mxu0 %v1565
        %v8086 = vpop.f32.mrf.mxu0
        %v8087 = vadd.f32 %v8044, %v8086
        %v8088 = vpop.f32.mrf.mxu0
        %v8089 = vadd.f32 %v8046, %v8088
        %v8090 = vpop.f32.mrf.mxu0
        %v8091 = vadd.f32 %v8048, %v8090
        %v8092 = vpop.f32.mrf.mxu0
        %v8093 = vadd.f32 %v8050, %v8092
        %8094 = vdwg.mxu0
        %v8095 = vadd.f32 %v375, %v7399
        %v8096 = vadd.f32 %v376, %v7401
        %v8097 = vadd.f32 %v377, %v8087
        %v8098 = vadd.f32 %v378, %v8089
        %v8099 = vadd.f32 %v379, %v7403
        %v8100 = vadd.f32 %v380, %v7405
        %v8101 = vadd.f32 %v381, %v8091
        %v8102 = vadd.f32 %v382, %v8093
        %8103 = vst [vmem:[#allocation2] sm:$0xff] %v8095
        %8104 = vst [vmem:[#allocation2 + $0x8] sm:$0xff] %v8096
        %8105 = vst [vmem:[#allocation2 + $0x10] sm:$0xff] %v8097
        %8106 = vst [vmem:[#allocation2 + $0x18] sm:$0xff] %v8098
        %8107 = vst [vmem:[#allocation2 + $0x20] sm:$0xff] %v8099
        %8108 = vst [vmem:[#allocation2 + $0x28] sm:$0xff] %v8100
        %8109 = vst [vmem:[#allocation2 + $0x30] sm:$0xff] %v8101
        %8110 = vst [vmem:[#allocation2 + $0x38] sm:$0xff] %v8102
        %p8111 = scmp.eq.s32.totalorder %s27, 3
        // Predicated region
        $region68: #{forward.4} parent=50 // pred_check
          %p8112 = pneg %p8111
        $region69: #{forward.4} parent=50 // pred_check_branch
          %8114 = sbr.rel (%p8112) target = $region71
        $region70: #{forward.4} parent=50 // pred_region
          %v8115 = vld [vmem:[#allocation2] sm:$0xff]
          %v8116 = vld [vmem:[#allocation2 + $0x8] sm:$0xff]
          %v8117 = vld [vmem:[#allocation2 + $0x10] sm:$0xff]
          %v8118 = vld [vmem:[#allocation2 + $0x18] sm:$0xff]
          %v8119 = vld [vmem:[#allocation2 + $0x20] sm:$0xff]
          %v8120 = vld [vmem:[#allocation2 + $0x28] sm:$0xff]
          %v8121 = vld [vmem:[#allocation2 + $0x30] sm:$0xff]
          %v8122 = vld [vmem:[#allocation2 + $0x38] sm:$0xff]
          %v8123 = vld [vmem:[%s325] sm:$0xf]
          %v8125 = vlaneseq
          %v8126 = vshrl.u32 %v8125, 7
          %v8127 = vsub.s32 0, %v8126
          %v8128 = vrot.slane %v8123, %v8127
          %v8129 = vlaneseq
          %v8130 = vshrl.u32 %v8129, 7
          %v8131 = vsub.s32 1, %v8130
          %v8132 = vrot.slane %v8123, %v8131
          %v8133 = vlaneseq
          %v8134 = vshrl.u32 %v8133, 7
          %v8135 = vsub.s32 2, %v8134
          %v8136 = vrot.slane %v8123, %v8135
          %v8137 = vlaneseq
          %v8138 = vshrl.u32 %v8137, 7
          %v8139 = vsub.s32 3, %v8138
          %v8140 = vrot.slane %v8123, %v8139
          %v8145 = vadd.f32 %v8115, %v8128
          %v8146 = vadd.f32 %v8116, %v8132
          %v8147 = vadd.f32 %v8117, %v8136
          %v8148 = vadd.f32 %v8118, %v8140
          %v8149 = vadd.f32 %v8119, %v8128
          %v8150 = vadd.f32 %v8120, %v8132
          %v8151 = vadd.f32 %v8121, %v8136
          %v8152 = vadd.f32 %v8122, %v8140
          %v8153 = vpack.c.bf16 %v8149, %v8145
          %v8154 = vpack.c.bf16 %v8150, %v8146
          %v8155 = vpack.c.bf16 %v8151, %v8147
          %v8156 = vpack.c.bf16 %v8152, %v8148
          %v8161 = vunpack.c.l.b16 %v8153
          %v8162 = vunpack.c.l.b16 %v8154
          %v8163 = vunpack.c.l.b16 %v8155
          %v8164 = vunpack.c.l.b16 %v8156
          %v8165 = vunpack.c.h.b16 %v8153
          %v8166 = vunpack.c.h.b16 %v8154
          %v8167 = vunpack.c.h.b16 %v8155
          %v8168 = vunpack.c.h.b16 %v8156
          %v8169 = vpack.c.b16 %v8162, %v8161
          %v8170 = vpack.c.b16 %v8164, %v8163
          %v8171 = vpack.c.b16 %v8166, %v8165
          %v8172 = vpack.c.b16 %v8168, %v8167
          %8177 = vst [vmem:[%s355] sm:$0xff] %v8169
          %8178 = vst [vmem:[%s355 + $0x8] sm:$0xff] %v8170
          %8179 = vst [vmem:[%s355 + $0x10] sm:$0xff] %v8171
          %8180 = vst [vmem:[%s355 + $0x18] sm:$0xff] %v8172
        $region71: #{forward.4} parent=50 // pred_fallthru
          _
        %s8181 = sand.u32 %s131, 1
        %s8182 = sand.u32 %s131, 1
        %s8183 = smul.addr %s8182, 32
        %s8184 = scalar_lea.vmem [#allocation8], %s8183
        // Predicated region
        $region72: #{forward.4} parent=50 // pred_check
          %p8185 = pneg %p141
        $region73: #{forward.4} parent=50 // pred_check_branch
          %8187 = sbr.rel (%p8185) target = $region75
        $region74: #{forward.4} parent=50 // pred_region
          %s8188 = smul.u32 2, %s25
          %s8189 = smul.u32 4, %s26
          %s8190 = smul.addr %s8188, 8
          %s8191 = sadd.s32 %s8189, %s8190
          %s8192 = smul.addr %s8191, 4
          %s8193 = scalar_lea.vmem %s3, %s8192
          // Predicated region
          $region76: #{forward.4} parent=74 // pred_check
            _
          $region77: #{forward.4} parent=74 // pred_check_branch
            %8195 = sbr.rel (0) target = $region79
          $region78: #{forward.4} parent=74 // pred_region
            // Predicated region
            $region80: #{forward.4} parent=78 // pred_check
              _
            $region81: #{forward.4} parent=78 // pred_check_branch
              %8197 = sbr.rel (0) target = $region83
            $region82: #{forward.4} parent=78 // pred_region
              loop: start=0, step=1, limit=1
              $region84: #{forward.4} parent=82 // loop_pre_header
                _
              $region85: #{forward.4} parent=82 // loop_header
                %s8199 = sphi 0, %s8203
                %p8200 = scmp.ge.s32.totalorder %s8199, 1
                %s8204 = sphi %s8184, %s8184
                %s8205 = sphi %s8193, %s8193
              $region86: #{forward.4} parent=82 // loop_header_branch
                %8202 = sbr.rel (%p8200) target = $region90
              $region87: #{forward.4} parent=82 // loop_body
                %v8206 = vld [vmem:[%s8204] sm:$0xff]
                %8207 = vst [vmem:[%s8205] sm:$0xff] %v8206
                %v8208 = vld [vmem:[%s8204 + $0x8] sm:$0xff]
                %8209 = vst [vmem:[%s8205 + $0x8] sm:$0xff] %v8208
                %v8210 = vld [vmem:[%s8204 + $0x10] sm:$0xff]
                %8211 = vst [vmem:[%s8205 + $0x20] sm:$0xff] %v8210
                %v8212 = vld [vmem:[%s8204 + $0x18] sm:$0xff]
                %8213 = vst [vmem:[%s8205 + $0x28] sm:$0xff] %v8212
              $region88: #{forward.4} parent=82 // loop_footer
                %s8203 = sadd.s32 1, %s8199
              $region89: #{forward.4} parent=82 // loop_footer_branch
                %8198 = sbr.rel target = $region85
              $region90: #{forward.4} parent=82 // loop_exit
                _
            $region83: #{forward.4} parent=78 // pred_fallthru
              _
            // Predicated region
            $region91: #{forward.4} parent=78 // pred_check
              _
            $region92: #{forward.4} parent=78 // pred_check_branch
              %8215 = sbr.rel target = $region94
            $region93: #{forward.4} parent=78 // pred_region
              _
            $region94: #{forward.4} parent=78 // pred_fallthru
              _
          $region79: #{forward.4} parent=74 // pred_fallthru
            _
          %8216 = vnop
        $region75: #{forward.4} parent=50 // pred_fallthru
          _
      $region51: #{forward.4} parent=5 // pred_fallthru
        _
      %p8217 = scmp.le.s32.totalorder 2, %s15
      // Predicated region
      $region95: #{forward.4} parent=5 // pred_check
        %p8218 = pneg %p8217
      $region96: #{forward.4} parent=5 // pred_check_branch
        %8220 = sbr.rel (%p8218) target = $region98
      $region97: #{forward.4} parent=5 // pred_region
        %s8221 = ssub.s32 %s15, 2
        // Predicated region
        $region99: #{forward.4} parent=97 // pred_check
          %p8222 = pneg %p147
        $region100: #{forward.4} parent=97 // pred_check_branch
          %8224 = sbr.rel (%p8222) target = $region102
        $region101: #{forward.4} parent=97 // pred_region
          %s8225 = sand.u32 %s132, 1
          %s8226 = sand.u32 %s132, 1
          %s8227 = smul.addr %s8226, 32
          %s8228 = scalar_lea.vmem [#allocation8], %s8227
        $region102: #{forward.4} parent=97 // pred_fallthru
          _
      $region98: #{forward.4} parent=5 // pred_fallthru
        _
    $region6: #{forward.4} parent=1 // loop_footer
      %s19 = sadd.s32 1, %s15
    $region7: #{forward.4} parent=1 // loop_footer_branch
      %14 = sbr.rel target = $region3
    $region8: #{forward.4} parent=1 // loop_exit
      _
    %8229 = vsyncpa [#allocation5], 1
    %s8230 = scalar_lea.sflag [#allocation5], 1
    %8231 = vsyncpa %s8230, 1
    %8232 = vsyncpa [#allocation7], 1
    %s8233 = scalar_lea.sflag [#allocation7], 1
    %8234 = vsyncpa %s8233, 1

</llo_original>
